<compile_context>
chip_gen: v7x
topology: tpu7x:2x2x1
jax: 0.10.0
libtpu: 0.0.40
codegen_flags: <defaults>
</compile_context>

<pallas_src>
import functools

import jax
import jax.numpy as jnp
from jax import lax
from jax.experimental import pallas as pl
from jax.experimental.pallas import tpu as pltpu

EPS = 1e-6


def _gelu_tanh(x):
    # TODO(synk): PyTorch F.gelu defaults to the exact (erf) GELU; the tanh
    # approximation (max abs dev ~1e-3) is used because lax.erf has no
    # guaranteed Mosaic lowering. Reference below uses the same formula.
    c = 0.7978845608028654  # sqrt(2/pi)
    return 0.5 * x * (1.0 + jnp.tanh(c * (x + 0.044715 * x * x * x)))


def _layer_norm(h, gamma, beta, eps=EPS):
    # Matches the custom PyTorch LayerNorm: unbiased std (divisor N-1) and eps
    # added to std (not to the variance).
    d = h.shape[-1]
    mean = jnp.mean(h, axis=-1, keepdims=True)
    var = jnp.sum((h - mean) ** 2, axis=-1, keepdims=True) / (d - 1)
    std = jnp.sqrt(var)
    return gamma * (h - mean) / (std + eps) + beta


def _encoder_kernel(num_heads, head_dim,
                    x_ref, g1_ref, be1_ref,
                    wq_ref, wk_ref, wv_ref, wo_ref,
                    g2_ref, be2_ref,
                    w1_ref, b1_ref, w2_ref, b2_ref,
                    o_ref):
    prec = lax.Precision.HIGHEST
    x = x_ref[...]                                             # (S, E) f32

    # ---- LayerNorm1 + multi-head self-attention + residual -----------------
    h = _layer_norm(x, g1_ref[...], be1_ref[...])
    q = jnp.dot(h, wq_ref[...], preferred_element_type=jnp.float32, precision=prec)
    k = jnp.dot(h, wk_ref[...], preferred_element_type=jnp.float32, precision=prec)
    v = jnp.dot(h, wv_ref[...], preferred_element_type=jnp.float32, precision=prec)

    scale = 1.0 / (head_dim ** 0.5)
    head_outs = []
    for hh in range(num_heads):                                # static unroll
        lo = hh * head_dim
        qh = q[:, lo:lo + head_dim]                            # (S, hd)
        kh = k[:, lo:lo + head_dim]
        vh = v[:, lo:lo + head_dim]
        # scores = qh @ kh^T  (contract last dims, no explicit transpose)
        s = lax.dot_general(qh, kh, (((1,), (1,)), ((), ())),
                            preferred_element_type=jnp.float32,
                            precision=prec) * scale            # (S, S)
        s = s - jnp.max(s, axis=-1, keepdims=True)             # stable softmax
        p = jnp.exp(s)
        p = p / jnp.sum(p, axis=-1, keepdims=True)
        head_outs.append(jnp.dot(p, vh, preferred_element_type=jnp.float32,
                                 precision=prec))              # (S, hd)
    ctx = jnp.concatenate(head_outs, axis=-1)                  # (S, E)
    x1 = x + jnp.dot(ctx, wo_ref[...], preferred_element_type=jnp.float32,
                     precision=prec)

    # ---- LayerNorm2 + FeedForward (gelu) + residual -------------------------
    h2 = _layer_norm(x1, g2_ref[...], be2_ref[...])
    f = jnp.dot(h2, w1_ref[...], preferred_element_type=jnp.float32,
                precision=prec) + b1_ref[...]                  # (S, M)
    f = _gelu_tanh(f)
    y = jnp.dot(f, w2_ref[...], preferred_element_type=jnp.float32,
                precision=prec) + b2_ref[...]                  # (S, E)

    o_ref[...] = (x1 + y).astype(o_ref.dtype)


def transformer_encoder_forward(x, params, *, num_heads):
    """x: (B, S, E) f32.  params: dict of weight matrices (applied as x @ W)."""
    B, S, E = x.shape
    assert E % num_heads == 0, "embed_dim must be divisible by num_heads"
    head_dim = E // num_heads

    kernel = functools.partial(_encoder_kernel, num_heads, head_dim)

    def wspec(arr):
        # full-extent 2-D block, constant index -> stays resident across grid.
        return pl.BlockSpec(arr.shape, lambda b: (0, 0))

    arg_order = ("g1", "be1", "wq", "wk", "wv", "wo",
                 "g2", "be2", "w1", "b1", "w2", "b2")
    weight_args = [params[name] for name in arg_order]

    grid_spec = pltpu.PrefetchScalarGridSpec(
        num_scalar_prefetch=0,
        grid=(B,),
        in_specs=[pl.BlockSpec((None, S, E), lambda b: (b, 0, 0))]  # x, per batch
                 + [wspec(w) for w in weight_args],
        out_specs=pl.BlockSpec((None, S, E), lambda b: (b, 0, 0)),
    )

    return pl.pallas_call(
        kernel,
        out_shape=jax.ShapeDtypeStruct((B, S, E), x.dtype),
        grid_spec=grid_spec,
        compiler_params=pltpu.CompilerParams(
            dimension_semantics=("parallel",),
        ),
    )(x, *weight_args)


def reference_forward(x, params, *, num_heads):
    """Plain-JAX reference with identical semantics to the PyTorch module."""
    P = lax.Precision.HIGHEST
    B, S, E = x.shape
    hd = E // num_heads

    h = _layer_norm(x, params["g1"], params["be1"])
    q = jnp.matmul(h, params["wq"], precision=P)
    k = jnp.matmul(h, params["wk"], precision=P)
    v = jnp.matmul(h, params["wv"], precision=P)
    qh = q.reshape(B, S, num_heads, hd).transpose(0, 2, 1, 3)
    kh = k.reshape(B, S, num_heads, hd).transpose(0, 2, 1, 3)
    vh = v.reshape(B, S, num_heads, hd).transpose(0, 2, 1, 3)
    scores = jnp.einsum("bhqd,bhkd->bhqk", qh, kh, precision=P) / (hd ** 0.5)
    attn = jax.nn.softmax(scores, axis=-1)
    ctx = jnp.einsum("bhqk,bhkd->bhqd", attn, vh, precision=P)
    ctx = ctx.transpose(0, 2, 1, 3).reshape(B, S, E)
    x1 = x + jnp.matmul(ctx, params["wo"], precision=P)

    h2 = _layer_norm(x1, params["g2"], params["be2"])
    f = _gelu_tanh(jnp.matmul(h2, params["w1"], precision=P) + params["b1"])
    return x1 + jnp.matmul(f, params["w2"], precision=P) + params["b2"]


if __name__ == "__main__":
    B, S = 2, 8          # batch, sequence (num_patches + 1)
    E, H, M = 32, 4, 64  # embed_dim, num_heads, mlp_dim

    key = jax.random.PRNGKey(0)
    keys = jax.random.split(key, 12)
    se = 1.0 / (E ** 0.5)
    sm = 1.0 / (M ** 0.5)

    x = jax.random.normal(keys[0], (B, S, E), dtype=jnp.float32)
    params = dict(
        g1=1.0 + 0.1 * jax.random.normal(keys[1], (1, E), jnp.float32),
        be1=0.1 * jax.random.normal(keys[2], (1, E), jnp.float32),
        wq=se * jax.random.normal(keys[3], (E, E), jnp.float32),
        wk=se * jax.random.normal(keys[4], (E, E), jnp.float32),
        wv=se * jax.random.normal(keys[5], (E, E), jnp.float32),
        wo=se * jax.random.normal(keys[6], (E, E), jnp.float32),
        g2=1.0 + 0.1 * jax.random.normal(keys[7], (1, E), jnp.float32),
        be2=0.1 * jax.random.normal(keys[8], (1, E), jnp.float32),
        w1=se * jax.random.normal(keys[9], (E, M), jnp.float32),
        b1=0.1 * jax.random.normal(keys[10], (1, M), jnp.float32),
        w2=sm * jax.random.normal(keys[11], (M, E), jnp.float32),
        b2=jnp.zeros((1, E), jnp.float32),
    )

    out = transformer_encoder_forward(x, params, num_heads=H)
    out = jax.block_until_ready(out)

    ref = reference_forward(x, params, num_heads=H)
    max_err = float(jnp.max(jnp.abs(out - ref)))
    assert out.shape == ref.shape
    assert jnp.allclose(out, ref, atol=1e-3, rtol=1e-3), f"max_err={max_err}"

    print("KERNEL_OK")
</pallas_src>

<mosaic_0001>
module attributes {stable_mosaic.version = 11 : i64} {
  func.func @_encoder_kernel(%arg0: i32, %arg1: memref<1x8x32xf32, #tpu.memory_space<vmem>>, %arg2: memref<1x32xf32, #tpu.memory_space<vmem>>, %arg3: memref<1x32xf32, #tpu.memory_space<vmem>>, %arg4: memref<32x32xf32, #tpu.memory_space<vmem>>, %arg5: memref<32x32xf32, #tpu.memory_space<vmem>>, %arg6: memref<32x32xf32, #tpu.memory_space<vmem>>, %arg7: memref<32x32xf32, #tpu.memory_space<vmem>>, %arg8: memref<1x32xf32, #tpu.memory_space<vmem>>, %arg9: memref<1x32xf32, #tpu.memory_space<vmem>>, %arg10: memref<32x64xf32, #tpu.memory_space<vmem>>, %arg11: memref<1x64xf32, #tpu.memory_space<vmem>>, %arg12: memref<64x32xf32, #tpu.memory_space<vmem>>, %arg13: memref<1x32xf32, #tpu.memory_space<vmem>>, %arg14: memref<1x8x32xf32, #tpu.memory_space<vmem>>) attributes {dimension_semantics = [#tpu.dimension_semantics<parallel>], iteration_bounds = array<i64: 2>, scalar_prefetch = 0 : i64, scratch_operands = 0 : i64, tpu.core_type = #tpu.core_type<tc>, window_params = [{transform_indices = @transform_0, window_bounds = array<i64: 1, 8, 32>}, {pipeline_mode = #tpu.pipeline_mode<synchronous>, transform_indices = @transform_1, window_bounds = array<i64: 1, 32>}, {pipeline_mode = #tpu.pipeline_mode<synchronous>, transform_indices = @transform_2, window_bounds = array<i64: 1, 32>}, {pipeline_mode = #tpu.pipeline_mode<synchronous>, transform_indices = @transform_3, window_bounds = array<i64: 32, 32>}, {pipeline_mode = #tpu.pipeline_mode<synchronous>, transform_indices = @transform_4, window_bounds = array<i64: 32, 32>}, {pipeline_mode = #tpu.pipeline_mode<synchronous>, transform_indices = @transform_5, window_bounds = array<i64: 32, 32>}, {pipeline_mode = #tpu.pipeline_mode<synchronous>, transform_indices = @transform_6, window_bounds = array<i64: 32, 32>}, {pipeline_mode = #tpu.pipeline_mode<synchronous>, transform_indices = @transform_7, window_bounds = array<i64: 1, 32>}, {pipeline_mode = #tpu.pipeline_mode<synchronous>, transform_indices = @transform_8, window_bounds = array<i64: 1, 32>}, {pipeline_mode = #tpu.pipeline_mode<synchronous>, transform_indices = @transform_9, window_bounds = array<i64: 32, 64>}, {pipeline_mode = #tpu.pipeline_mode<synchronous>, transform_indices = @transform_10, window_bounds = array<i64: 1, 64>}, {pipeline_mode = #tpu.pipeline_mode<synchronous>, transform_indices = @transform_11, window_bounds = array<i64: 64, 32>}, {pipeline_mode = #tpu.pipeline_mode<synchronous>, transform_indices = @transform_12, window_bounds = array<i64: 1, 32>}, {transform_indices = @transform_13, window_bounds = array<i64: 1, 8, 32>}]} {
    %c0 = arith.constant 0 : index
    %c0_0 = arith.constant 0 : index
    %c0_1 = arith.constant 0 : index
    %0 = vector.load %arg1[%c0, %c0_0, %c0_1] : memref<1x8x32xf32, #tpu.memory_space<vmem>>, vector<1x8x32xf32>
    %1 = vector.shape_cast %0 : vector<1x8x32xf32> to vector<8x32xf32>
    %c0_2 = arith.constant 0 : index
    %c0_3 = arith.constant 0 : index
    %2 = vector.load %arg2[%c0_2, %c0_3] : memref<1x32xf32, #tpu.memory_space<vmem>>, vector<1x32xf32>
    %c0_4 = arith.constant 0 : index
    %c0_5 = arith.constant 0 : index
    %3 = vector.load %arg3[%c0_4, %c0_5] : memref<1x32xf32, #tpu.memory_space<vmem>>, vector<1x32xf32>
    %cst = arith.constant dense<0.000000e+00> : vector<8xf32>
    %4 = vector.multi_reduction <add>, %1, %cst [1] : vector<8x32xf32> to vector<8xf32>
    %5 = vector.shape_cast %4 : vector<8xf32> to vector<8x1xf32>
    %cst_6 = arith.constant 3.200000e+01 : f32
    %6 = vector.broadcast %cst_6 : f32 to vector<8x1xf32>
    %7 = arith.divf %5, %6 : vector<8x1xf32>
    %8 = vector.broadcast %7 : vector<8x1xf32> to vector<8x32xf32>
    %9 = arith.subf %1, %8 : vector<8x32xf32>
    %10 = arith.mulf %9, %9 : vector<8x32xf32>
    %cst_7 = arith.constant dense<0.000000e+00> : vector<8xf32>
    %11 = vector.multi_reduction <add>, %10, %cst_7 [1] : vector<8x32xf32> to vector<8xf32>
    %12 = vector.shape_cast %11 : vector<8xf32> to vector<8x1xf32>
    %cst_8 = arith.constant 3.100000e+01 : f32
    %13 = vector.broadcast %cst_8 : f32 to vector<8x1xf32>
    %14 = arith.divf %12, %13 : vector<8x1xf32>
    %15 = math.sqrt %14 : vector<8x1xf32>
    %16 = vector.broadcast %7 : vector<8x1xf32> to vector<8x32xf32>
    %17 = arith.subf %1, %16 : vector<8x32xf32>
    %18 = vector.broadcast %2 : vector<1x32xf32> to vector<8x32xf32>
    %19 = arith.mulf %18, %17 : vector<8x32xf32>
    %cst_9 = arith.constant 9.99999997E-7 : f32
    %20 = vector.broadcast %cst_9 : f32 to vector<8x1xf32>
    %21 = arith.addf %15, %20 : vector<8x1xf32>
    %22 = vector.broadcast %21 : vector<8x1xf32> to vector<8x32xf32>
    %23 = arith.divf %19, %22 : vector<8x32xf32>
    %24 = vector.broadcast %3 : vector<1x32xf32> to vector<8x32xf32>
    %25 = arith.addf %23, %24 : vector<8x32xf32>
    %c0_10 = arith.constant 0 : index
    %c0_11 = arith.constant 0 : index
    %26 = vector.load %arg4[%c0_10, %c0_11] : memref<32x32xf32, #tpu.memory_space<vmem>>, vector<32x32xf32>
    %cst_12 = arith.constant dense<0.000000e+00> : vector<8x32xf32>
    %27 = tpu.matmul %25, %26, %cst_12 {dimension_numbers = #tpu.dot_dimension_numbers<[1], [0], [0], [1], [0, 0, 1, 1], [], []>, precision = #tpu.contract_precision<fp32>} : vector<8x32xf32>, vector<32x32xf32>, vector<8x32xf32> -> vector<8x32xf32>
    %c0_13 = arith.constant 0 : index
    %c0_14 = arith.constant 0 : index
    %28 = vector.load %arg5[%c0_13, %c0_14] : memref<32x32xf32, #tpu.memory_space<vmem>>, vector<32x32xf32>
    %cst_15 = arith.constant dense<0.000000e+00> : vector<8x32xf32>
    %29 = tpu.matmul %25, %28, %cst_15 {dimension_numbers = #tpu.dot_dimension_numbers<[1], [0], [0], [1], [0, 0, 1, 1], [], []>, precision = #tpu.contract_precision<fp32>} : vector<8x32xf32>, vector<32x32xf32>, vector<8x32xf32> -> vector<8x32xf32>
    %c0_16 = arith.constant 0 : index
    %c0_17 = arith.constant 0 : index
    %30 = vector.load %arg6[%c0_16, %c0_17] : memref<32x32xf32, #tpu.memory_space<vmem>>, vector<32x32xf32>
    %cst_18 = arith.constant dense<0.000000e+00> : vector<8x32xf32>
    %31 = tpu.matmul %25, %30, %cst_18 {dimension_numbers = #tpu.dot_dimension_numbers<[1], [0], [0], [1], [0, 0, 1, 1], [], []>, precision = #tpu.contract_precision<fp32>} : vector<8x32xf32>, vector<32x32xf32>, vector<8x32xf32> -> vector<8x32xf32>
    %32 = vector.extract_strided_slice %27 {offsets = [0, 0], sizes = [8, 8], strides = [1, 1]} : vector<8x32xf32> to vector<8x8xf32>
    %33 = vector.extract_strided_slice %29 {offsets = [0, 0], sizes = [8, 8], strides = [1, 1]} : vector<8x32xf32> to vector<8x8xf32>
    %34 = vector.extract_strided_slice %31 {offsets = [0, 0], sizes = [8, 8], strides = [1, 1]} : vector<8x32xf32> to vector<8x8xf32>
    %cst_19 = arith.constant dense<0.000000e+00> : vector<8x8xf32>
    %35 = tpu.matmul %32, %33, %cst_19 {dimension_numbers = #tpu.dot_dimension_numbers<[1], [1], [0], [0], [0, 0, 1, 0], [], []>, precision = #tpu.contract_precision<fp32>} : vector<8x8xf32>, vector<8x8xf32>, vector<8x8xf32> -> vector<8x8xf32>
    %cst_20 = arith.constant 0.353553385 : f32
    %36 = vector.broadcast %cst_20 : f32 to vector<8x8xf32>
    %37 = arith.mulf %35, %36 : vector<8x8xf32>
    %cst_21 = arith.constant dense<0xFF800000> : vector<8xf32>
    %38 = vector.multi_reduction <maximumf>, %37, %cst_21 [1] : vector<8x8xf32> to vector<8xf32>
    %39 = vector.shape_cast %38 : vector<8xf32> to vector<8x1xf32>
    %40 = vector.broadcast %39 : vector<8x1xf32> to vector<8x8xf32>
    %41 = arith.subf %37, %40 : vector<8x8xf32>
    %42 = math.exp %41 : vector<8x8xf32>
    %cst_22 = arith.constant dense<0.000000e+00> : vector<8xf32>
    %43 = vector.multi_reduction <add>, %42, %cst_22 [1] : vector<8x8xf32> to vector<8xf32>
    %44 = vector.shape_cast %43 : vector<8xf32> to vector<8x1xf32>
    %45 = vector.broadcast %44 : vector<8x1xf32> to vector<8x8xf32>
    %46 = arith.divf %42, %45 : vector<8x8xf32>
    %cst_23 = arith.constant dense<0.000000e+00> : vector<8x8xf32>
    %47 = tpu.matmul %46, %34, %cst_23 {dimension_numbers = #tpu.dot_dimension_numbers<[1], [0], [0], [1], [0, 0, 1, 1], [], []>, precision = #tpu.contract_precision<fp32>} : vector<8x8xf32>, vector<8x8xf32>, vector<8x8xf32> -> vector<8x8xf32>
    %48 = vector.extract_strided_slice %27 {offsets = [0, 8], sizes = [8, 8], strides = [1, 1]} : vector<8x32xf32> to vector<8x8xf32>
    %49 = vector.extract_strided_slice %29 {offsets = [0, 8], sizes = [8, 8], strides = [1, 1]} : vector<8x32xf32> to vector<8x8xf32>
    %50 = vector.extract_strided_slice %31 {offsets = [0, 8], sizes = [8, 8], strides = [1, 1]} : vector<8x32xf32> to vector<8x8xf32>
    %cst_24 = arith.constant dense<0.000000e+00> : vector<8x8xf32>
    %51 = tpu.matmul %48, %49, %cst_24 {dimension_numbers = #tpu.dot_dimension_numbers<[1], [1], [0], [0], [0, 0, 1, 0], [], []>, precision = #tpu.contract_precision<fp32>} : vector<8x8xf32>, vector<8x8xf32>, vector<8x8xf32> -> vector<8x8xf32>
    %cst_25 = arith.constant 0.353553385 : f32
    %52 = vector.broadcast %cst_25 : f32 to vector<8x8xf32>
    %53 = arith.mulf %51, %52 : vector<8x8xf32>
    %cst_26 = arith.constant dense<0xFF800000> : vector<8xf32>
    %54 = vector.multi_reduction <maximumf>, %53, %cst_26 [1] : vector<8x8xf32> to vector<8xf32>
    %55 = vector.shape_cast %54 : vector<8xf32> to vector<8x1xf32>
    %56 = vector.broadcast %55 : vector<8x1xf32> to vector<8x8xf32>
    %57 = arith.subf %53, %56 : vector<8x8xf32>
    %58 = math.exp %57 : vector<8x8xf32>
    %cst_27 = arith.constant dense<0.000000e+00> : vector<8xf32>
    %59 = vector.multi_reduction <add>, %58, %cst_27 [1] : vector<8x8xf32> to vector<8xf32>
    %60 = vector.shape_cast %59 : vector<8xf32> to vector<8x1xf32>
    %61 = vector.broadcast %60 : vector<8x1xf32> to vector<8x8xf32>
    %62 = arith.divf %58, %61 : vector<8x8xf32>
    %cst_28 = arith.constant dense<0.000000e+00> : vector<8x8xf32>
    %63 = tpu.matmul %62, %50, %cst_28 {dimension_numbers = #tpu.dot_dimension_numbers<[1], [0], [0], [1], [0, 0, 1, 1], [], []>, precision = #tpu.contract_precision<fp32>} : vector<8x8xf32>, vector<8x8xf32>, vector<8x8xf32> -> vector<8x8xf32>
    %64 = vector.extract_strided_slice %27 {offsets = [0, 16], sizes = [8, 8], strides = [1, 1]} : vector<8x32xf32> to vector<8x8xf32>
    %65 = vector.extract_strided_slice %29 {offsets = [0, 16], sizes = [8, 8], strides = [1, 1]} : vector<8x32xf32> to vector<8x8xf32>
    %66 = vector.extract_strided_slice %31 {offsets = [0, 16], sizes = [8, 8], strides = [1, 1]} : vector<8x32xf32> to vector<8x8xf32>
    %cst_29 = arith.constant dense<0.000000e+00> : vector<8x8xf32>
    %67 = tpu.matmul %64, %65, %cst_29 {dimension_numbers = #tpu.dot_dimension_numbers<[1], [1], [0], [0], [0, 0, 1, 0], [], []>, precision = #tpu.contract_precision<fp32>} : vector<8x8xf32>, vector<8x8xf32>, vector<8x8xf32> -> vector<8x8xf32>
    %cst_30 = arith.constant 0.353553385 : f32
    %68 = vector.broadcast %cst_30 : f32 to vector<8x8xf32>
    %69 = arith.mulf %67, %68 : vector<8x8xf32>
    %cst_31 = arith.constant dense<0xFF800000> : vector<8xf32>
    %70 = vector.multi_reduction <maximumf>, %69, %cst_31 [1] : vector<8x8xf32> to vector<8xf32>
    %71 = vector.shape_cast %70 : vector<8xf32> to vector<8x1xf32>
    %72 = vector.broadcast %71 : vector<8x1xf32> to vector<8x8xf32>
    %73 = arith.subf %69, %72 : vector<8x8xf32>
    %74 = math.exp %73 : vector<8x8xf32>
    %cst_32 = arith.constant dense<0.000000e+00> : vector<8xf32>
    %75 = vector.multi_reduction <add>, %74, %cst_32 [1] : vector<8x8xf32> to vector<8xf32>
    %76 = vector.shape_cast %75 : vector<8xf32> to vector<8x1xf32>
    %77 = vector.broadcast %76 : vector<8x1xf32> to vector<8x8xf32>
    %78 = arith.divf %74, %77 : vector<8x8xf32>
    %cst_33 = arith.constant dense<0.000000e+00> : vector<8x8xf32>
    %79 = tpu.matmul %78, %66, %cst_33 {dimension_numbers = #tpu.dot_dimension_numbers<[1], [0], [0], [1], [0, 0, 1, 1], [], []>, precision = #tpu.contract_precision<fp32>} : vector<8x8xf32>, vector<8x8xf32>, vector<8x8xf32> -> vector<8x8xf32>
    %80 = vector.extract_strided_slice %27 {offsets = [0, 24], sizes = [8, 8], strides = [1, 1]} : vector<8x32xf32> to vector<8x8xf32>
    %81 = vector.extract_strided_slice %29 {offsets = [0, 24], sizes = [8, 8], strides = [1, 1]} : vector<8x32xf32> to vector<8x8xf32>
    %82 = vector.extract_strided_slice %31 {offsets = [0, 24], sizes = [8, 8], strides = [1, 1]} : vector<8x32xf32> to vector<8x8xf32>
    %cst_34 = arith.constant dense<0.000000e+00> : vector<8x8xf32>
    %83 = tpu.matmul %80, %81, %cst_34 {dimension_numbers = #tpu.dot_dimension_numbers<[1], [1], [0], [0], [0, 0, 1, 0], [], []>, precision = #tpu.contract_precision<fp32>} : vector<8x8xf32>, vector<8x8xf32>, vector<8x8xf32> -> vector<8x8xf32>
    %cst_35 = arith.constant 0.353553385 : f32
    %84 = vector.broadcast %cst_35 : f32 to vector<8x8xf32>
    %85 = arith.mulf %83, %84 : vector<8x8xf32>
    %cst_36 = arith.constant dense<0xFF800000> : vector<8xf32>
    %86 = vector.multi_reduction <maximumf>, %85, %cst_36 [1] : vector<8x8xf32> to vector<8xf32>
    %87 = vector.shape_cast %86 : vector<8xf32> to vector<8x1xf32>
    %88 = vector.broadcast %87 : vector<8x1xf32> to vector<8x8xf32>
    %89 = arith.subf %85, %88 : vector<8x8xf32>
    %90 = math.exp %89 : vector<8x8xf32>
    %cst_37 = arith.constant dense<0.000000e+00> : vector<8xf32>
    %91 = vector.multi_reduction <add>, %90, %cst_37 [1] : vector<8x8xf32> to vector<8xf32>
    %92 = vector.shape_cast %91 : vector<8xf32> to vector<8x1xf32>
    %93 = vector.broadcast %92 : vector<8x1xf32> to vector<8x8xf32>
    %94 = arith.divf %90, %93 : vector<8x8xf32>
    %cst_38 = arith.constant dense<0.000000e+00> : vector<8x8xf32>
    %95 = tpu.matmul %94, %82, %cst_38 {dimension_numbers = #tpu.dot_dimension_numbers<[1], [0], [0], [1], [0, 0, 1, 1], [], []>, precision = #tpu.contract_precision<fp32>} : vector<8x8xf32>, vector<8x8xf32>, vector<8x8xf32> -> vector<8x8xf32>
    %96 = tpu.concatenate %47, %63, %79, %95 in 1 : vector<8x8xf32>, vector<8x8xf32>, vector<8x8xf32>, vector<8x8xf32> -> vector<8x32xf32>
    %c0_39 = arith.constant 0 : index
    %c0_40 = arith.constant 0 : index
    %97 = vector.load %arg7[%c0_39, %c0_40] : memref<32x32xf32, #tpu.memory_space<vmem>>, vector<32x32xf32>
    %cst_41 = arith.constant dense<0.000000e+00> : vector<8x32xf32>
    %98 = tpu.matmul %96, %97, %cst_41 {dimension_numbers = #tpu.dot_dimension_numbers<[1], [0], [0], [1], [0, 0, 1, 1], [], []>, precision = #tpu.contract_precision<fp32>} : vector<8x32xf32>, vector<32x32xf32>, vector<8x32xf32> -> vector<8x32xf32>
    %99 = arith.addf %1, %98 : vector<8x32xf32>
    %c0_42 = arith.constant 0 : index
    %c0_43 = arith.constant 0 : index
    %100 = vector.load %arg8[%c0_42, %c0_43] : memref<1x32xf32, #tpu.memory_space<vmem>>, vector<1x32xf32>
    %c0_44 = arith.constant 0 : index
    %c0_45 = arith.constant 0 : index
    %101 = vector.load %arg9[%c0_44, %c0_45] : memref<1x32xf32, #tpu.memory_space<vmem>>, vector<1x32xf32>
    %cst_46 = arith.constant dense<0.000000e+00> : vector<8xf32>
    %102 = vector.multi_reduction <add>, %99, %cst_46 [1] : vector<8x32xf32> to vector<8xf32>
    %103 = vector.shape_cast %102 : vector<8xf32> to vector<8x1xf32>
    %cst_47 = arith.constant 3.200000e+01 : f32
    %104 = vector.broadcast %cst_47 : f32 to vector<8x1xf32>
    %105 = arith.divf %103, %104 : vector<8x1xf32>
    %106 = vector.broadcast %105 : vector<8x1xf32> to vector<8x32xf32>
    %107 = arith.subf %99, %106 : vector<8x32xf32>
    %108 = arith.mulf %107, %107 : vector<8x32xf32>
    %cst_48 = arith.constant dense<0.000000e+00> : vector<8xf32>
    %109 = vector.multi_reduction <add>, %108, %cst_48 [1] : vector<8x32xf32> to vector<8xf32>
    %110 = vector.shape_cast %109 : vector<8xf32> to vector<8x1xf32>
    %cst_49 = arith.constant 3.100000e+01 : f32
    %111 = vector.broadcast %cst_49 : f32 to vector<8x1xf32>
    %112 = arith.divf %110, %111 : vector<8x1xf32>
    %113 = math.sqrt %112 : vector<8x1xf32>
    %114 = vector.broadcast %105 : vector<8x1xf32> to vector<8x32xf32>
    %115 = arith.subf %99, %114 : vector<8x32xf32>
    %116 = vector.broadcast %100 : vector<1x32xf32> to vector<8x32xf32>
    %117 = arith.mulf %116, %115 : vector<8x32xf32>
    %cst_50 = arith.constant 9.99999997E-7 : f32
    %118 = vector.broadcast %cst_50 : f32 to vector<8x1xf32>
    %119 = arith.addf %113, %118 : vector<8x1xf32>
    %120 = vector.broadcast %119 : vector<8x1xf32> to vector<8x32xf32>
    %121 = arith.divf %117, %120 : vector<8x32xf32>
    %122 = vector.broadcast %101 : vector<1x32xf32> to vector<8x32xf32>
    %123 = arith.addf %121, %122 : vector<8x32xf32>
    %c0_51 = arith.constant 0 : index
    %c0_52 = arith.constant 0 : index
    %124 = vector.load %arg10[%c0_51, %c0_52] : memref<32x64xf32, #tpu.memory_space<vmem>>, vector<32x64xf32>
    %cst_53 = arith.constant dense<0.000000e+00> : vector<8x64xf32>
    %125 = tpu.matmul %123, %124, %cst_53 {dimension_numbers = #tpu.dot_dimension_numbers<[1], [0], [0], [1], [0, 0, 1, 1], [], []>, precision = #tpu.contract_precision<fp32>} : vector<8x32xf32>, vector<32x64xf32>, vector<8x64xf32> -> vector<8x64xf32>
    %c0_54 = arith.constant 0 : index
    %c0_55 = arith.constant 0 : index
    %126 = vector.load %arg11[%c0_54, %c0_55] : memref<1x64xf32, #tpu.memory_space<vmem>>, vector<1x64xf32>
    %127 = vector.broadcast %126 : vector<1x64xf32> to vector<8x64xf32>
    %128 = arith.addf %125, %127 : vector<8x64xf32>
    %cst_56 = arith.constant 5.000000e-01 : f32
    %129 = vector.broadcast %cst_56 : f32 to vector<8x64xf32>
    %130 = arith.mulf %129, %128 : vector<8x64xf32>
    %cst_57 = arith.constant 4.471500e-02 : f32
    %131 = vector.broadcast %cst_57 : f32 to vector<8x64xf32>
    %132 = arith.mulf %131, %128 : vector<8x64xf32>
    %133 = arith.mulf %132, %128 : vector<8x64xf32>
    %134 = arith.mulf %133, %128 : vector<8x64xf32>
    %135 = arith.addf %128, %134 : vector<8x64xf32>
    %cst_58 = arith.constant 0.797884583 : f32
    %136 = vector.broadcast %cst_58 : f32 to vector<8x64xf32>
    %137 = arith.mulf %136, %135 : vector<8x64xf32>
    %138 = math.tanh %137 : vector<8x64xf32>
    %cst_59 = arith.constant 1.000000e+00 : f32
    %139 = vector.broadcast %cst_59 : f32 to vector<8x64xf32>
    %140 = arith.addf %139, %138 : vector<8x64xf32>
    %141 = arith.mulf %130, %140 : vector<8x64xf32>
    %c0_60 = arith.constant 0 : index
    %c0_61 = arith.constant 0 : index
    %142 = vector.load %arg12[%c0_60, %c0_61] : memref<64x32xf32, #tpu.memory_space<vmem>>, vector<64x32xf32>
    %cst_62 = arith.constant dense<0.000000e+00> : vector<8x32xf32>
    %143 = tpu.matmul %141, %142, %cst_62 {dimension_numbers = #tpu.dot_dimension_numbers<[1], [0], [0], [1], [0, 0, 1, 1], [], []>, precision = #tpu.contract_precision<fp32>} : vector<8x64xf32>, vector<64x32xf32>, vector<8x32xf32> -> vector<8x32xf32>
    %c0_63 = arith.constant 0 : index
    %c0_64 = arith.constant 0 : index
    %144 = vector.load %arg13[%c0_63, %c0_64] : memref<1x32xf32, #tpu.memory_space<vmem>>, vector<1x32xf32>
    %145 = vector.broadcast %144 : vector<1x32xf32> to vector<8x32xf32>
    %146 = arith.addf %143, %145 : vector<8x32xf32>
    %147 = arith.addf %99, %146 : vector<8x32xf32>
    %c0_65 = arith.constant 0 : index
    %c0_66 = arith.constant 0 : index
    %c0_67 = arith.constant 0 : index
    %148 = vector.load %arg14[%c0_65, %c0_66, %c0_67] : memref<1x8x32xf32, #tpu.memory_space<vmem>>, vector<1x8x32xf32>
    %149 = vector.shape_cast %148 : vector<1x8x32xf32> to vector<8x32xf32>
    %150 = vector.shape_cast %147 : vector<8x32xf32> to vector<1x8x32xf32>
    tpu.vector_store %arg14[%c0_65, %c0_66, %c0_67], %150 {strides = array<i32>} : memref<1x8x32xf32, #tpu.memory_space<vmem>>, vector<1x8x32xf32>,
    return
  }
  func.func @transform_0(%arg0: i32) -> (i32, i32, i32) {
    %c0_i32 = arith.constant 0 : i32
    %c0_i32_0 = arith.constant 0 : i32
    %c0_i32_1 = arith.constant 0 : i32
    return %arg0, %c0_i32, %c0_i32_0 : i32, i32, i32
  }
  func.func @transform_1(%arg0: i32) -> (i32, i32) {
    %c0_i32 = arith.constant 0 : i32
    %c0_i32_0 = arith.constant 0 : i32
    %c0_i32_1 = arith.constant 0 : i32
    return %c0_i32, %c0_i32_0 : i32, i32
  }
  func.func @transform_2(%arg0: i32) -> (i32, i32) {
    %c0_i32 = arith.constant 0 : i32
    %c0_i32_0 = arith.constant 0 : i32
    %c0_i32_1 = arith.constant 0 : i32
    return %c0_i32, %c0_i32_0 : i32, i32
  }
  func.func @transform_3(%arg0: i32) -> (i32, i32) {
    %c0_i32 = arith.constant 0 : i32
    %c0_i32_0 = arith.constant 0 : i32
    %c0_i32_1 = arith.constant 0 : i32
    return %c0_i32, %c0_i32_0 : i32, i32
  }
  func.func @transform_4(%arg0: i32) -> (i32, i32) {
    %c0_i32 = arith.constant 0 : i32
    %c0_i32_0 = arith.constant 0 : i32
    %c0_i32_1 = arith.constant 0 : i32
    return %c0_i32, %c0_i32_0 : i32, i32
  }
  func.func @transform_5(%arg0: i32) -> (i32, i32) {
    %c0_i32 = arith.constant 0 : i32
    %c0_i32_0 = arith.constant 0 : i32
    %c0_i32_1 = arith.constant 0 : i32
    return %c0_i32, %c0_i32_0 : i32, i32
  }
  func.func @transform_6(%arg0: i32) -> (i32, i32) {
    %c0_i32 = arith.constant 0 : i32
    %c0_i32_0 = arith.constant 0 : i32
    %c0_i32_1 = arith.constant 0 : i32
    return %c0_i32, %c0_i32_0 : i32, i32
  }
  func.func @transform_7(%arg0: i32) -> (i32, i32) {
    %c0_i32 = arith.constant 0 : i32
    %c0_i32_0 = arith.constant 0 : i32
    %c0_i32_1 = arith.constant 0 : i32
    return %c0_i32, %c0_i32_0 : i32, i32
  }
  func.func @transform_8(%arg0: i32) -> (i32, i32) {
    %c0_i32 = arith.constant 0 : i32
    %c0_i32_0 = arith.constant 0 : i32
    %c0_i32_1 = arith.constant 0 : i32
    return %c0_i32, %c0_i32_0 : i32, i32
  }
  func.func @transform_9(%arg0: i32) -> (i32, i32) {
    %c0_i32 = arith.constant 0 : i32
    %c0_i32_0 = arith.constant 0 : i32
    %c0_i32_1 = arith.constant 0 : i32
    return %c0_i32, %c0_i32_0 : i32, i32
  }
  func.func @transform_10(%arg0: i32) -> (i32, i32) {
    %c0_i32 = arith.constant 0 : i32
    %c0_i32_0 = arith.constant 0 : i32
    %c0_i32_1 = arith.constant 0 : i32
    return %c0_i32, %c0_i32_0 : i32, i32
  }
  func.func @transform_11(%arg0: i32) -> (i32, i32) {
    %c0_i32 = arith.constant 0 : i32
    %c0_i32_0 = arith.constant 0 : i32
    %c0_i32_1 = arith.constant 0 : i32
    return %c0_i32, %c0_i32_0 : i32, i32
  }
  func.func @transform_12(%arg0: i32) -> (i32, i32) {
    %c0_i32 = arith.constant 0 : i32
    %c0_i32_0 = arith.constant 0 : i32
    %c0_i32_1 = arith.constant 0 : i32
    return %c0_i32, %c0_i32_0 : i32, i32
  }
  func.func @transform_13(%arg0: i32) -> (i32, i32, i32) {
    %c0_i32 = arith.constant 0 : i32
    %c0_i32_0 = arith.constant 0 : i32
    %c0_i32_1 = arith.constant 0 : i32
    return %arg0, %c0_i32, %c0_i32_0 : i32, i32, i32
  }
}

</mosaic_0001>

<llo_original>
// kernel: tpu_custom_call.1
$region0: #{tpu_custom_call.1}
  #allocation0 [shape = 'u32[]', space=smem, size = 0x4, offset = 0x4, fixed_abs, tag = 'smem constant byte address 0x4 - core index']
  #allocation1 [shape = 'u32[144,128]{1,0:T(1,128)}', space=vmem, size = 0x12000, scoped, tag = 'internal scratch']
  %s0 = inlined_call_operand.hbm [shape: f32[2,8,32], index: 0, kind: input, shape index: {}]
  %s1 = inlined_call_operand.vmem [shape: f32[1,32], index: 1, kind: input, shape index: {}]
  %s2 = inlined_call_operand.vmem [shape: f32[1,32], index: 2, kind: input, shape index: {}]
  %s3 = inlined_call_operand.vmem [shape: f32[32,32], index: 3, kind: input, shape index: {}]
  %s4 = inlined_call_operand.vmem [shape: f32[32,32], index: 4, kind: input, shape index: {}]
  %s5 = inlined_call_operand.vmem [shape: f32[32,32], index: 5, kind: input, shape index: {}]
  %s6 = inlined_call_operand.hbm [shape: f32[32,32], index: 6, kind: input, shape index: {}]
  %s7 = inlined_call_operand.vmem [shape: f32[1,32], index: 7, kind: input, shape index: {}]
  %s8 = inlined_call_operand.vmem [shape: f32[1,32], index: 8, kind: input, shape index: {}]
  %s9 = inlined_call_operand.hbm [shape: f32[32,64], index: 9, kind: input, shape index: {}]
  %s10 = inlined_call_operand.vmem [shape: f32[1,64], index: 10, kind: input, shape index: {}]
  %s11 = inlined_call_operand.vmem [shape: f32[64,32], index: 11, kind: input, shape index: {}]
  %s12 = inlined_call_operand.vmem [shape: f32[1,32], index: 12, kind: input, shape index: {}]
  %s13 = inlined_call_operand.hbm [shape: f32[2,8,32], index: 13, kind: output, shape index: {}]
  %s14 = sld [smem:[#allocation0]]
  $region97: #{tpu_custom_call.1} parent=0
    _
  %s16 = ssub.s32 1, %s14
  %s17 = scalar_select 0, %s16, %s14
  $region1: #{tpu_custom_call.1} parent=0
    #allocation2 [shape = 'u8[8192]{0}', space=vmem, size = 0x2000, scoped, tag = 'input window, operand 0']
    #allocation3 [shape = 's32[2]{0}', space=sflag, size = 0x8, scoped, tag = 'scoped memory for tpu_custom_call.1']
    #allocation4 [shape = 's32[2]{0}', space=sflag, size = 0x8, scoped, tag = 'scoped memory for tpu_custom_call.1']
    #allocation5 [shape = 'u8[16384]{0}', space=vmem, size = 0x4000, scoped, tag = 'input window, operand 6, single buffered']
    #allocation6 [shape = 's32[1]{0}', space=sflag, size = 0x4, scoped, tag = 'scoped memory for tpu_custom_call.1']
    #allocation7 [shape = 'u8[16384]{0}', space=vmem, size = 0x4000, scoped, tag = 'input window, operand 9, single buffered']
    #allocation8 [shape = 'u8[8192]{0}', space=vmem, size = 0x2000, scoped, tag = 'output window, operand 0']
    %18 = vsyncpa [#allocation3], 0
    %s19 = scalar_lea.sflag [#allocation3], 1
    %20 = vsyncpa %s19, 0
    %21 = vsyncpa [#allocation6], 0
    %22 = vsyncpa [#allocation4], 0
    %s23 = scalar_lea.sflag [#allocation4], 1
    %24 = vsyncpa %s23, 0
    loop: start=0, step=1, limit=4
    $region2: #{tpu_custom_call.1} parent=1 // loop_pre_header
      _
    $region3: #{tpu_custom_call.1} parent=1 // loop_header
      %s26 = sphi 0, %s30
      %p27 = scmp.ge.s32.totalorder %s26, 4
      %s36 = sphi 0, %s38
      %s39 = sphi 0, %s36
      %s40 = sphi 0, %s39
      %s56 = sphi 0, %s40
      %s60 = sphi 0, %s60
      %s62 = sphi 0, %s60
      %s63 = sphi 0, %s62
      %s77 = sphi 0, %s63
      %s81 = sphi 0, %s81
      %s83 = sphi 0, %s81
      %s84 = sphi 0, %s83
      %s98 = sphi 0, %s84
      %s102 = sphi 0, %s102
      %s104 = sphi 0, %s102
      %s105 = sphi 0, %s104
      %s119 = sphi 0, %s105
      %s123 = sphi 0, %s123
      %s125 = sphi 0, %s123
      %s126 = sphi 0, %s125
      %s140 = sphi 0, %s126
      %s144 = sphi 0, %s144
      %s146 = sphi 0, %s144
      %s147 = sphi 0, %s146
      %s161 = sphi 0, %s147
      %s165 = sphi 0, %s165
      %s167 = sphi 0, %s165
      %s168 = sphi 0, %s167
      %s182 = sphi 0, %s168
      %s186 = sphi 0, %s186
      %s188 = sphi 0, %s186
      %s189 = sphi 0, %s188
      %s203 = sphi 0, %s189
      %s207 = sphi 0, %s207
      %s209 = sphi 0, %s207
      %s210 = sphi 0, %s209
      %s224 = sphi 0, %s210
      %s228 = sphi 0, %s228
      %s230 = sphi 0, %s228
      %s231 = sphi 0, %s230
      %s245 = sphi 0, %s231
      %s249 = sphi 0, %s249
      %s251 = sphi 0, %s249
      %s252 = sphi 0, %s251
      %s266 = sphi 0, %s252
      %s270 = sphi 0, %s270
      %s272 = sphi 0, %s270
      %s273 = sphi 0, %s272
      %s287 = sphi 0, %s273
      %s291 = sphi 0, %s291
      %s293 = sphi 0, %s291
      %s294 = sphi 0, %s293
      %s308 = sphi 0, %s294
      %s314 = sphi 0, %s316
      %s317 = sphi 0, %s314
      %s318 = sphi 0, %s317
      %s334 = sphi 0, %s318
    $region4: #{tpu_custom_call.1} parent=1 // loop_header_branch
      %29 = sbr.rel (%p27) target = $region8
    $region5: #{tpu_custom_call.1} parent=1 // loop_body
      %s31 = ssub.s32 %s26, 1
      %s32 = ssub.s32 %s26, 2
      %s33 = sadd.s32 %s26, 1
      %s34 = ssub.s32 %s26, %s33
      %p35 = scmp.eq.s32.totalorder %s34, 0
      %s37 = sadd.s32 %s36, 1
      %s38 = scalar_select %p35, %s36, %s37
      %p41 = pneg %p35
      %p42 = scmp.eq.s32.totalorder %s26, 1
      %p43 = por %p41, %p42
      %p44 = scmp.ne.s32.totalorder %s36, %s39
      %p45 = scmp.eq.s32.totalorder %s26, 0
      %p46 = por %p44, %p45
      %p47 = scmp.ne.s32.totalorder %s36, %s39
      %p48 = scmp.eq.s32.totalorder %s31, 1
      %p49 = por %p47, %p48
      %p50 = scmp.ne.s32.totalorder %s39, %s40
      %p51 = scmp.eq.s32.totalorder %s31, 0
      %p52 = por %p50, %p51
      %p53 = scmp.ne.s32.totalorder %s39, %s40
      %p54 = scmp.eq.s32.totalorder %s32, 1
      %p55 = por %p53, %p54
      %p57 = scmp.ne.s32.totalorder %s40, %s56
      %p58 = scmp.eq.s32.totalorder %s32, 0
      %p59 = por %p57, %p58
      %s61 = sadd.s32 %s60, 1
      %p64 = scmp.eq.s32.totalorder %s26, 1
      %p65 = scmp.ne.s32.totalorder %s60, %s62
      %p66 = scmp.eq.s32.totalorder %s26, 0
      %p67 = por %p65, %p66
      %p68 = scmp.ne.s32.totalorder %s60, %s62
      %p69 = scmp.eq.s32.totalorder %s31, 1
      %p70 = por %p68, %p69
      %p71 = scmp.ne.s32.totalorder %s62, %s63
      %p72 = scmp.eq.s32.totalorder %s31, 0
      %p73 = por %p71, %p72
      %p74 = scmp.ne.s32.totalorder %s62, %s63
      %p75 = scmp.eq.s32.totalorder %s32, 1
      %p76 = por %p74, %p75
      %p78 = scmp.ne.s32.totalorder %s63, %s77
      %p79 = scmp.eq.s32.totalorder %s32, 0
      %p80 = por %p78, %p79
      %s82 = sadd.s32 %s81, 1
      %p85 = scmp.eq.s32.totalorder %s26, 1
      %p86 = scmp.ne.s32.totalorder %s81, %s83
      %p87 = scmp.eq.s32.totalorder %s26, 0
      %p88 = por %p86, %p87
      %p89 = scmp.ne.s32.totalorder %s81, %s83
      %p90 = scmp.eq.s32.totalorder %s31, 1
      %p91 = por %p89, %p90
      %p92 = scmp.ne.s32.totalorder %s83, %s84
      %p93 = scmp.eq.s32.totalorder %s31, 0
      %p94 = por %p92, %p93
      %p95 = scmp.ne.s32.totalorder %s83, %s84
      %p96 = scmp.eq.s32.totalorder %s32, 1
      %p97 = por %p95, %p96
      %p99 = scmp.ne.s32.totalorder %s84, %s98
      %p100 = scmp.eq.s32.totalorder %s32, 0
      %p101 = por %p99, %p100
      %s103 = sadd.s32 %s102, 1
      %p106 = scmp.eq.s32.totalorder %s26, 1
      %p107 = scmp.ne.s32.totalorder %s102, %s104
      %p108 = scmp.eq.s32.totalorder %s26, 0
      %p109 = por %p107, %p108
      %p110 = scmp.ne.s32.totalorder %s102, %s104
      %p111 = scmp.eq.s32.totalorder %s31, 1
      %p112 = por %p110, %p111
      %p113 = scmp.ne.s32.totalorder %s104, %s105
      %p114 = scmp.eq.s32.totalorder %s31, 0
      %p115 = por %p113, %p114
      %p116 = scmp.ne.s32.totalorder %s104, %s105
      %p117 = scmp.eq.s32.totalorder %s32, 1
      %p118 = por %p116, %p117
      %p120 = scmp.ne.s32.totalorder %s105, %s119
      %p121 = scmp.eq.s32.totalorder %s32, 0
      %p122 = por %p120, %p121
      %s124 = sadd.s32 %s123, 1
      %p127 = scmp.eq.s32.totalorder %s26, 1
      %p128 = scmp.ne.s32.totalorder %s123, %s125
      %p129 = scmp.eq.s32.totalorder %s26, 0
      %p130 = por %p128, %p129
      %p131 = scmp.ne.s32.totalorder %s123, %s125
      %p132 = scmp.eq.s32.totalorder %s31, 1
      %p133 = por %p131, %p132
      %p134 = scmp.ne.s32.totalorder %s125, %s126
      %p135 = scmp.eq.s32.totalorder %s31, 0
      %p136 = por %p134, %p135
      %p137 = scmp.ne.s32.totalorder %s125, %s126
      %p138 = scmp.eq.s32.totalorder %s32, 1
      %p139 = por %p137, %p138
      %p141 = scmp.ne.s32.totalorder %s126, %s140
      %p142 = scmp.eq.s32.totalorder %s32, 0
      %p143 = por %p141, %p142
      %s145 = sadd.s32 %s144, 1
      %p148 = scmp.eq.s32.totalorder %s26, 1
      %p149 = scmp.ne.s32.totalorder %s144, %s146
      %p150 = scmp.eq.s32.totalorder %s26, 0
      %p151 = por %p149, %p150
      %p152 = scmp.ne.s32.totalorder %s144, %s146
      %p153 = scmp.eq.s32.totalorder %s31, 1
      %p154 = por %p152, %p153
      %p155 = scmp.ne.s32.totalorder %s146, %s147
      %p156 = scmp.eq.s32.totalorder %s31, 0
      %p157 = por %p155, %p156
      %p158 = scmp.ne.s32.totalorder %s146, %s147
      %p159 = scmp.eq.s32.totalorder %s32, 1
      %p160 = por %p158, %p159
      %p162 = scmp.ne.s32.totalorder %s147, %s161
      %p163 = scmp.eq.s32.totalorder %s32, 0
      %p164 = por %p162, %p163
      %s166 = sadd.s32 %s165, 1
      %p169 = scmp.eq.s32.totalorder %s26, 1
      %p170 = scmp.ne.s32.totalorder %s165, %s167
      %p171 = scmp.eq.s32.totalorder %s26, 0
      %p172 = por %p170, %p171
      %p173 = scmp.ne.s32.totalorder %s165, %s167
      %p174 = scmp.eq.s32.totalorder %s31, 1
      %p175 = por %p173, %p174
      %p176 = scmp.ne.s32.totalorder %s167, %s168
      %p177 = scmp.eq.s32.totalorder %s31, 0
      %p178 = por %p176, %p177
      %p179 = scmp.ne.s32.totalorder %s167, %s168
      %p180 = scmp.eq.s32.totalorder %s32, 1
      %p181 = por %p179, %p180
      %p183 = scmp.ne.s32.totalorder %s168, %s182
      %p184 = scmp.eq.s32.totalorder %s32, 0
      %p185 = por %p183, %p184
      %s187 = sadd.s32 %s186, 1
      %p190 = scmp.eq.s32.totalorder %s26, 1
      %p191 = scmp.ne.s32.totalorder %s186, %s188
      %p192 = scmp.eq.s32.totalorder %s26, 0
      %p193 = por %p191, %p192
      %p194 = scmp.ne.s32.totalorder %s186, %s188
      %p195 = scmp.eq.s32.totalorder %s31, 1
      %p196 = por %p194, %p195
      %p197 = scmp.ne.s32.totalorder %s188, %s189
      %p198 = scmp.eq.s32.totalorder %s31, 0
      %p199 = por %p197, %p198
      %p200 = scmp.ne.s32.totalorder %s188, %s189
      %p201 = scmp.eq.s32.totalorder %s32, 1
      %p202 = por %p200, %p201
      %p204 = scmp.ne.s32.totalorder %s189, %s203
      %p205 = scmp.eq.s32.totalorder %s32, 0
      %p206 = por %p204, %p205
      %s208 = sadd.s32 %s207, 1
      %p211 = scmp.eq.s32.totalorder %s26, 1
      %p212 = scmp.ne.s32.totalorder %s207, %s209
      %p213 = scmp.eq.s32.totalorder %s26, 0
      %p214 = por %p212, %p213
      %p215 = scmp.ne.s32.totalorder %s207, %s209
      %p216 = scmp.eq.s32.totalorder %s31, 1
      %p217 = por %p215, %p216
      %p218 = scmp.ne.s32.totalorder %s209, %s210
      %p219 = scmp.eq.s32.totalorder %s31, 0
      %p220 = por %p218, %p219
      %p221 = scmp.ne.s32.totalorder %s209, %s210
      %p222 = scmp.eq.s32.totalorder %s32, 1
      %p223 = por %p221, %p222
      %p225 = scmp.ne.s32.totalorder %s210, %s224
      %p226 = scmp.eq.s32.totalorder %s32, 0
      %p227 = por %p225, %p226
      %s229 = sadd.s32 %s228, 1
      %p232 = scmp.eq.s32.totalorder %s26, 1
      %p233 = scmp.ne.s32.totalorder %s228, %s230
      %p234 = scmp.eq.s32.totalorder %s26, 0
      %p235 = por %p233, %p234
      %p236 = scmp.ne.s32.totalorder %s228, %s230
      %p237 = scmp.eq.s32.totalorder %s31, 1
      %p238 = por %p236, %p237
      %p239 = scmp.ne.s32.totalorder %s230, %s231
      %p240 = scmp.eq.s32.totalorder %s31, 0
      %p241 = por %p239, %p240
      %p242 = scmp.ne.s32.totalorder %s230, %s231
      %p243 = scmp.eq.s32.totalorder %s32, 1
      %p244 = por %p242, %p243
      %p246 = scmp.ne.s32.totalorder %s231, %s245
      %p247 = scmp.eq.s32.totalorder %s32, 0
      %p248 = por %p246, %p247
      %s250 = sadd.s32 %s249, 1
      %p253 = scmp.eq.s32.totalorder %s26, 1
      %p254 = scmp.ne.s32.totalorder %s249, %s251
      %p255 = scmp.eq.s32.totalorder %s26, 0
      %p256 = por %p254, %p255
      %p257 = scmp.ne.s32.totalorder %s249, %s251
      %p258 = scmp.eq.s32.totalorder %s31, 1
      %p259 = por %p257, %p258
      %p260 = scmp.ne.s32.totalorder %s251, %s252
      %p261 = scmp.eq.s32.totalorder %s31, 0
      %p262 = por %p260, %p261
      %p263 = scmp.ne.s32.totalorder %s251, %s252
      %p264 = scmp.eq.s32.totalorder %s32, 1
      %p265 = por %p263, %p264
      %p267 = scmp.ne.s32.totalorder %s252, %s266
      %p268 = scmp.eq.s32.totalorder %s32, 0
      %p269 = por %p267, %p268
      %s271 = sadd.s32 %s270, 1
      %p274 = scmp.eq.s32.totalorder %s26, 1
      %p275 = scmp.ne.s32.totalorder %s270, %s272
      %p276 = scmp.eq.s32.totalorder %s26, 0
      %p277 = por %p275, %p276
      %p278 = scmp.ne.s32.totalorder %s270, %s272
      %p279 = scmp.eq.s32.totalorder %s31, 1
      %p280 = por %p278, %p279
      %p281 = scmp.ne.s32.totalorder %s272, %s273
      %p282 = scmp.eq.s32.totalorder %s31, 0
      %p283 = por %p281, %p282
      %p284 = scmp.ne.s32.totalorder %s272, %s273
      %p285 = scmp.eq.s32.totalorder %s32, 1
      %p286 = por %p284, %p285
      %p288 = scmp.ne.s32.totalorder %s273, %s287
      %p289 = scmp.eq.s32.totalorder %s32, 0
      %p290 = por %p288, %p289
      %s292 = sadd.s32 %s291, 1
      %p295 = scmp.eq.s32.totalorder %s26, 1
      %p296 = scmp.ne.s32.totalorder %s291, %s293
      %p297 = scmp.eq.s32.totalorder %s26, 0
      %p298 = por %p296, %p297
      %p299 = scmp.ne.s32.totalorder %s291, %s293
      %p300 = scmp.eq.s32.totalorder %s31, 1
      %p301 = por %p299, %p300
      %p302 = scmp.ne.s32.totalorder %s293, %s294
      %p303 = scmp.eq.s32.totalorder %s31, 0
      %p304 = por %p302, %p303
      %p305 = scmp.ne.s32.totalorder %s293, %s294
      %p306 = scmp.eq.s32.totalorder %s32, 1
      %p307 = por %p305, %p306
      %p309 = scmp.ne.s32.totalorder %s294, %s308
      %p310 = scmp.eq.s32.totalorder %s32, 0
      %p311 = por %p309, %p310
      %s312 = ssub.s32 %s26, %s33
      %p313 = scmp.eq.s32.totalorder %s312, 0
      %s315 = sadd.s32 %s314, 1
      %s316 = scalar_select %p313, %s314, %s315
      %p319 = pneg %p313
      %p320 = scmp.eq.s32.totalorder %s26, 1
      %p321 = por %p319, %p320
      %p322 = scmp.ne.s32.totalorder %s314, %s317
      %p323 = scmp.eq.s32.totalorder %s26, 0
      %p324 = por %p322, %p323
      %p325 = scmp.ne.s32.totalorder %s314, %s317
      %p326 = scmp.eq.s32.totalorder %s31, 1
      %p327 = por %p325, %p326
      %p328 = scmp.ne.s32.totalorder %s317, %s318
      %p329 = scmp.eq.s32.totalorder %s31, 0
      %p330 = por %p328, %p329
      %p331 = scmp.ne.s32.totalorder %s317, %s318
      %p332 = scmp.eq.s32.totalorder %s32, 1
      %p333 = por %p331, %p332
      %p335 = scmp.ne.s32.totalorder %s318, %s334
      %p336 = scmp.eq.s32.totalorder %s32, 0
      %p337 = por %p335, %p336
      %p338 = scmp.le.s32.totalorder 1, %s26
      %p339 = scmp.lt.s32.totalorder %s26, 3
      %p340 = pnand %p338, %p339
      %p341 = pneg %p340
      // Predicated region
      $region9: #{tpu_custom_call.1} parent=5 // pred_check
        _
      $region10: #{tpu_custom_call.1} parent=5 // pred_check_branch
        %343 = sbr.rel (%p340) target = $region12
      $region11: #{tpu_custom_call.1} parent=5 // pred_region
        %s344 = ssub.s32 %s26, 1
        // Predicated region
        $region13: #{tpu_custom_call.1} parent=11 // pred_check
          %p345 = pneg %p73
        $region14: #{tpu_custom_call.1} parent=11 // pred_check_branch
          %347 = sbr.rel (%p345) target = $region16
        $region15: #{tpu_custom_call.1} parent=11 // pred_region
          _
        $region16: #{tpu_custom_call.1} parent=11 // pred_fallthru
          _
        // Predicated region
        $region17: #{tpu_custom_call.1} parent=11 // pred_check
          %p348 = pneg %p94
        $region18: #{tpu_custom_call.1} parent=11 // pred_check_branch
          %350 = sbr.rel (%p348) target = $region20
        $region19: #{tpu_custom_call.1} parent=11 // pred_region
          _
        $region20: #{tpu_custom_call.1} parent=11 // pred_fallthru
          _
        // Predicated region
        $region21: #{tpu_custom_call.1} parent=11 // pred_check
          %p351 = pneg %p115
        $region22: #{tpu_custom_call.1} parent=11 // pred_check_branch
          %353 = sbr.rel (%p351) target = $region24
        $region23: #{tpu_custom_call.1} parent=11 // pred_region
          _
        $region24: #{tpu_custom_call.1} parent=11 // pred_fallthru
          _
        // Predicated region
        $region25: #{tpu_custom_call.1} parent=11 // pred_check
          %p354 = pneg %p136
        $region26: #{tpu_custom_call.1} parent=11 // pred_check_branch
          %356 = sbr.rel (%p354) target = $region28
        $region27: #{tpu_custom_call.1} parent=11 // pred_region
          _
        $region28: #{tpu_custom_call.1} parent=11 // pred_fallthru
          _
        // Predicated region
        $region29: #{tpu_custom_call.1} parent=11 // pred_check
          %p357 = pneg %p157
        $region30: #{tpu_custom_call.1} parent=11 // pred_check_branch
          %359 = sbr.rel (%p357) target = $region32
        $region31: #{tpu_custom_call.1} parent=11 // pred_region
          _
        $region32: #{tpu_custom_call.1} parent=11 // pred_fallthru
          _
        // Predicated region
        $region33: #{tpu_custom_call.1} parent=11 // pred_check
          %p360 = pneg %p178
        $region34: #{tpu_custom_call.1} parent=11 // pred_check_branch
          %362 = sbr.rel (%p360) target = $region36
        $region35: #{tpu_custom_call.1} parent=11 // pred_region
          %s364 = ssub.s32 512, 512
          %365 = vsyncadd [#allocation6], %s364
          %s366 = sshll.u32 [#allocation5], 4
          %s367 = int_to_ptr.vmem [resolvable:$true] %s366
          %372 = dma.hbm_to_vmem [thread:$0]  %s6, 512, %s367, [#allocation6], 128, 128, 8
        $region36: #{tpu_custom_call.1} parent=11 // pred_fallthru
          _
        // Predicated region
        $region37: #{tpu_custom_call.1} parent=11 // pred_check
          %p373 = pneg %p199
        $region38: #{tpu_custom_call.1} parent=11 // pred_check_branch
          %375 = sbr.rel (%p373) target = $region40
        $region39: #{tpu_custom_call.1} parent=11 // pred_region
          _
        $region40: #{tpu_custom_call.1} parent=11 // pred_fallthru
          _
        // Predicated region
        $region41: #{tpu_custom_call.1} parent=11 // pred_check
          %p376 = pneg %p220
        $region42: #{tpu_custom_call.1} parent=11 // pred_check_branch
          %378 = sbr.rel (%p376) target = $region44
        $region43: #{tpu_custom_call.1} parent=11 // pred_region
          _
        $region44: #{tpu_custom_call.1} parent=11 // pred_fallthru
          _
        // Predicated region
        $region45: #{tpu_custom_call.1} parent=11 // pred_check
          %p379 = pneg %p241
        $region46: #{tpu_custom_call.1} parent=11 // pred_check_branch
          %381 = sbr.rel (%p379) target = $region48
        $region47: #{tpu_custom_call.1} parent=11 // pred_region
          %s383 = ssub.s32 512, 512
          %384 = vsyncadd [#allocation6], %s383
          %s385 = sshll.u32 [#allocation7], 4
          %s386 = int_to_ptr.vmem [resolvable:$true] %s385
          %391 = dma.hbm_to_vmem [thread:$0]  %s9, 512, %s386, [#allocation6], 128, 128, 8
        $region48: #{tpu_custom_call.1} parent=11 // pred_fallthru
          _
        // Predicated region
        $region49: #{tpu_custom_call.1} parent=11 // pred_check
          %p392 = pneg %p262
        $region50: #{tpu_custom_call.1} parent=11 // pred_check_branch
          %394 = sbr.rel (%p392) target = $region52
        $region51: #{tpu_custom_call.1} parent=11 // pred_region
          _
        $region52: #{tpu_custom_call.1} parent=11 // pred_fallthru
          _
        // Predicated region
        $region53: #{tpu_custom_call.1} parent=11 // pred_check
          %p395 = pneg %p283
        $region54: #{tpu_custom_call.1} parent=11 // pred_check_branch
          %397 = sbr.rel (%p395) target = $region56
        $region55: #{tpu_custom_call.1} parent=11 // pred_region
          _
        $region56: #{tpu_custom_call.1} parent=11 // pred_fallthru
          _
        // Predicated region
        $region57: #{tpu_custom_call.1} parent=11 // pred_check
          %p398 = pneg %p304
        $region58: #{tpu_custom_call.1} parent=11 // pred_check_branch
          %400 = sbr.rel (%p398) target = $region60
        $region59: #{tpu_custom_call.1} parent=11 // pred_region
          _
        $region60: #{tpu_custom_call.1} parent=11 // pred_fallthru
          _
      $region12: #{tpu_custom_call.1} parent=5 // pred_fallthru
        _
      %p401 = scmp.lt.s32.totalorder %s26, 2
      // Predicated region
      $region61: #{tpu_custom_call.1} parent=5 // pred_check
        %p402 = pneg %p401
      $region62: #{tpu_custom_call.1} parent=5 // pred_check_branch
        %404 = sbr.rel (%p402) target = $region64
      $region63: #{tpu_custom_call.1} parent=5 // pred_region
        // Predicated region
        $region65: #{tpu_custom_call.1} parent=63 // pred_check
          %p405 = pneg %p46
        $region66: #{tpu_custom_call.1} parent=63 // pred_check_branch
          %407 = sbr.rel (%p405) target = $region68
        $region67: #{tpu_custom_call.1} parent=63 // pred_region
          %s408 = sand.u32 %s36, 1
          %s409 = scalar_lea.sflag [#allocation3], %s408
          %s410 = sand.u32 %s36, 1
          %s411 = smul.addr %s410, 8
          %s412 = scalar_lea.vmem [#allocation2], %s411
          %s414 = ssub.s32 128, 128
          %415 = vsyncadd %s409, %s414
          %s416 = smul.addr %s26, 128
          %s417 = scalar_lea.hbm %s0, %s416
          %s419 = sshll.u32 %s412, 4
          %s420 = int_to_ptr.vmem [resolvable:$true] %s419
          %422 = dma.hbm_to_vmem [thread:$0]  %s417, 128, %s420, %s409
        $region68: #{tpu_custom_call.1} parent=63 // pred_fallthru
          _
      $region64: #{tpu_custom_call.1} parent=5 // pred_fallthru
        _
      %p423 = scmp.le.s32.totalorder 1, %s26
      %p424 = scmp.lt.s32.totalorder %s26, 3
      %p425 = pnand %p423, %p424
      %p426 = pneg %p425
      // Predicated region
      $region69: #{tpu_custom_call.1} parent=5 // pred_check
        _
      $region70: #{tpu_custom_call.1} parent=5 // pred_check_branch
        %428 = sbr.rel (%p425) target = $region72
      $region71: #{tpu_custom_call.1} parent=5 // pred_region
        %s429 = ssub.s32 %s26, 1
        %s430 = sand.u32 %s39, 1
        %s431 = scalar_lea.sflag [#allocation3], %s430
        %s432 = sand.u32 %s39, 1
        %s433 = smul.addr %s432, 8
        %s434 = scalar_lea.vmem [#allocation2], %s433
        // Predicated region
        $region73: #{tpu_custom_call.1} parent=71 // pred_check
          %p435 = pneg %p52
        $region74: #{tpu_custom_call.1} parent=71 // pred_check_branch
          %437 = sbr.rel (%p435) target = $region76
        $region75: #{tpu_custom_call.1} parent=71 // pred_region
          %438 = dma.done %s431, 128
        $region76: #{tpu_custom_call.1} parent=71 // pred_fallthru
          _
        // Predicated region
        $region77: #{tpu_custom_call.1} parent=71 // pred_check
          %p439 = pneg %p178
        $region78: #{tpu_custom_call.1} parent=71 // pred_check_branch
          %441 = sbr.rel (%p439) target = $region80
        $region79: #{tpu_custom_call.1} parent=71 // pred_region
          %442 = dma.done [#allocation6], 512
        $region80: #{tpu_custom_call.1} parent=71 // pred_fallthru
          _
        // Predicated region
        $region81: #{tpu_custom_call.1} parent=71 // pred_check
          %p443 = pneg %p241
        $region82: #{tpu_custom_call.1} parent=71 // pred_check_branch
          %445 = sbr.rel (%p443) target = $region84
        $region83: #{tpu_custom_call.1} parent=71 // pred_region
          %446 = dma.done [#allocation6], 512
        $region84: #{tpu_custom_call.1} parent=71 // pred_fallthru
          _
        %s447 = sand.u32 %s39, 1
        %s448 = scalar_lea.sflag [#allocation3], %s447
        %s449 = sand.u32 %s39, 1
        %s450 = smul.addr %s449, 8
        %s451 = scalar_lea.vmem [#allocation2], %s450
        %p452 = pneg %p52
        %p453 = pneg %p49
        %p454 = pneg %p73
        %p455 = pneg %p70
        %p456 = pneg %p94
        %p457 = pneg %p91
        %p458 = pneg %p115
        %p459 = pneg %p112
        %p460 = pneg %p136
        %p461 = pneg %p133
        %p462 = pneg %p157
        %p463 = pneg %p154
        %p464 = pneg %p178
        %p465 = pneg %p175
        %p466 = pneg %p199
        %p467 = pneg %p196
        %p468 = pneg %p220
        %p469 = pneg %p217
        %p470 = pneg %p241
        %p471 = pneg %p238
        %p472 = pneg %p262
        %p473 = pneg %p259
        %p474 = pneg %p283
        %p475 = pneg %p280
        %p476 = pneg %p304
        %p477 = pneg %p301
        %p478 = pneg %p330
        %p479 = pneg %p327
        %s480 = sand.u32 %s317, 1
        %s481 = scalar_lea.sflag [#allocation4], %s480
        %s482 = sand.u32 %s317, 1
        %s483 = smul.addr %s482, 8
        %s484 = scalar_lea.vmem [#allocation8], %s483
        %v485 = vld [vmem:[%s434] sm:$0xff]
        %v486 = vld [vmem:[%s1] sm:$0x1]
        %v487 = vld [vmem:[%s2] sm:$0x1]
        %vm488 = vcmask 261120
        %v489 = vsel %vm488, %v485, 0.0
        %490 = vadd.xlane.f32.xlu0 %v489
        %v491 = vpop.xlane.xlu0 %490
        %v492 = vrcp.pop 32.0
        %v493 = vmul.f32 %v491, %v492
        %v494 = vsub.f32 %v485, %v493
        %v495 = vmul.f32 %v494, %v494
        %v496 = vsel %vm488, %v495, 0.0
        %497 = vadd.xlane.f32.xlu0 %v496
        %v498 = vpop.xlane.xlu0 %497
        %v499 = vrcp.pop 31.0
        %v500 = vmul.f32 %v498, %v499
        %v501 = vrsqrt.pop %v500
        %v502 = vmul.f32 %v500, %v501
        %vm503 = vcmp.eq.f32.partialorder %v500, inf
        %v504 = vsel %vm503, %v500, %v502
        %vm505 = vcmp.eq.f32.partialorder %v500, 0.0
        %v506 = vand.u32 %v500, 2147483648
        %v507 = vsel %vm505, %v506, %v504
        %v509 = vlaneseq
        %v510 = vshrl.u32 %v509, 7
        %v511 = vsub.s32 0, %v510
        %v512 = vrot.slane %v486, %v511
        %v514 = vmul.f32 %v512, %v494
        %v515 = vadd.f32 %v507, 1e-06
        %v516 = vrcp.pop %v515
        %v517 = vmul.f32 %v514, %v516
        %v519 = vlaneseq
        %v520 = vshrl.u32 %v519, 7
        %v521 = vsub.s32 0, %v520
        %v522 = vrot.slane %v487, %v521
        %v524 = vadd.f32 %v517, %v522
        %v525 = vld [vmem:[%s3] sm:$0xff]
        %v526 = vld [vmem:[%s3 + $0x8] sm:$0xff]
        %v527 = vld [vmem:[%s3 + $0x10] sm:$0xff]
        %v528 = vld [vmem:[%s3 + $0x18] sm:$0xff]
        %v530 = vsel %vm488, %v524, 0
        %532 = vmatprep.subr.mxu0 0.0
        %v533 = vand.u32 %v525, 4294901760
        %534 = vmatpush1.msra.mxu0 %v533
        %535 = vmatprep.subr.mxu0 0.0
        %v536 = vand.u32 %v526, 4294901760
        %537 = vmatpush1.msra.mxu0 %v536
        %538 = vmatprep.subr.mxu0 0.0
        %v539 = vand.u32 %v527, 4294901760
        %540 = vmatpush1.msra.mxu0 %v539
        %541 = vmatprep.subr.mxu0 0.0
        %v542 = vand.u32 %v528, 4294901760
        %543 = vmatpush1.msra.mxu0 %v542
        %544 = vmatprep.subr.mxu0 0.0
        %545 = vmatpush1.msra.mxu0 0.0
        %546 = vmatprep.subr.mxu0 0.0
        %547 = vmatpush1.msra.mxu0 0.0
        %548 = vmatprep.subr.mxu0 0.0
        %549 = vmatpush1.msra.mxu0 0.0
        %550 = vmatprep.subr.mxu0 0.0
        %551 = vmatpush1.msra.mxu0 0.0
        %552 = vmatprep.subr.mxu0 0.0
        %553 = vmatpush1.msra.mxu0 0.0
        %554 = vmatprep.subr.mxu0 0.0
        %555 = vmatpush1.msra.mxu0 0.0
        %556 = vmatprep.subr.mxu0 0.0
        %557 = vmatpush1.msra.mxu0 0.0
        %558 = vmatprep.subr.mxu0 0.0
        %559 = vmatpush1.msra.mxu0 0.0
        %560 = vmatprep.subr.mxu0 0.0
        %561 = vmatpush1.msra.mxu0 0.0
        %562 = vmatprep.subr.mxu0 0.0
        %563 = vmatpush1.msra.mxu0 0.0
        %564 = vmatprep.subr.mxu0 0.0
        %565 = vmatpush1.msra.mxu0 0.0
        %566 = vmatprep.subr.mxu0 0.0
        %567 = vmatpush1.msra.mxu0 0.0
        %568 = vmatprep.subr.mxu0 0.0
        %569 = vmatpush1.msra.mxu0 0.0
        %570 = vmatprep.subr.mxu0 0.0
        %571 = vmatpush1.msra.mxu0 0.0
        %572 = vmatprep.subr.mxu0 0.0
        %573 = vmatpush1.msra.mxu0 0.0
        %574 = vmatprep.subr.mxu0 0.0
        %575 = vmatpush1.msra.mxu0 0.0
        %576 = vmatprep.subr.mxu0 0.0
        %577 = vmatpush1.msra.mxu0 0.0
        %578 = vmatprep.subr.mxu0 0.0
        %579 = vmatpush1.msra.mxu0 0.0
        %580 = vmatprep.subr.mxu0 0.0
        %581 = vmatpush1.msra.mxu0 0.0
        %582 = vmatprep.subr.mxu0 0.0
        %583 = vmatpush1.msra.mxu0 0.0
        %584 = vmatprep.subr.mxu0 0.0
        %585 = vmatpush1.msra.mxu0 0.0
        %586 = vmatprep.subr.mxu0 0.0
        %587 = vmatpush1.msra.mxu0 0.0
        %588 = vmatprep.subr.mxu0 0.0
        %589 = vmatpush1.msra.mxu0 0.0
        %590 = vmatprep.subr.mxu0 0.0
        %591 = vmatpush1.msra.mxu0 0.0
        %592 = vmatprep.subr.mxu0 0.0
        %593 = vmatpush1.msra.mxu0 0.0
        %594 = vmatprep.subr.mxu0 0.0
        %595 = vmatpush1.msra.mxu0 0.0
        %596 = vmatprep.subr.mxu0 0.0
        %597 = vmatpush1.msra.mxu0 0.0
        %598 = vmatprep.subr.mxu0 0.0
        %599 = vmatpush1.msra.mxu0 0.0
        %600 = vmatprep.mubr.f32.mxu0 0.0
        %v601 = vand.u32 %v530, 4294901760
        %v602 = vsub.f32 %v530, %v601
        %v603 = vand.u32 %v602, 4294901760
        %v604 = vsub.f32 %v602, %v603
        %v605 = vand.u32 %v604, 4294901760
        %606 = vmatmul.mubr.f32.gmra.mrb[0].mxu0 %v605
        %v607 = vpop.f32.mrb[0].mxu0
        %v608 = vadd.f32 0.0, %v607
        %v609 = vpop.f32.mrb[0].mxu0
        %610 = vdwg.mxu0
        %611 = vmatprep.subr.mxu0 0.0
        %v612 = vand.u32 %v525, 4294901760
        %v613 = vsub.f32 %v525, %v612
        %v614 = vand.u32 %v613, 4294901760
        %v615 = vsub.f32 %v613, %v614
        %v616 = vand.u32 %v615, 4294901760
        %617 = vmatpush1.msra.mxu0 %v616
        %618 = vmatprep.subr.mxu0 0.0
        %v619 = vand.u32 %v526, 4294901760
        %v620 = vsub.f32 %v526, %v619
        %v621 = vand.u32 %v620, 4294901760
        %v622 = vsub.f32 %v620, %v621
        %v623 = vand.u32 %v622, 4294901760
        %624 = vmatpush1.msra.mxu0 %v623
        %625 = vmatprep.subr.mxu0 0.0
        %v626 = vand.u32 %v527, 4294901760
        %v627 = vsub.f32 %v527, %v626
        %v628 = vand.u32 %v627, 4294901760
        %v629 = vsub.f32 %v627, %v628
        %v630 = vand.u32 %v629, 4294901760
        %631 = vmatpush1.msra.mxu0 %v630
        %632 = vmatprep.subr.mxu0 0.0
        %v633 = vand.u32 %v528, 4294901760
        %v634 = vsub.f32 %v528, %v633
        %v635 = vand.u32 %v634, 4294901760
        %v636 = vsub.f32 %v634, %v635
        %v637 = vand.u32 %v636, 4294901760
        %638 = vmatpush1.msra.mxu0 %v637
        %639 = vmatprep.subr.mxu0 0.0
        %640 = vmatpush1.msra.mxu0 0.0
        %641 = vmatprep.subr.mxu0 0.0
        %642 = vmatpush1.msra.mxu0 0.0
        %643 = vmatprep.subr.mxu0 0.0
        %644 = vmatpush1.msra.mxu0 0.0
        %645 = vmatprep.subr.mxu0 0.0
        %646 = vmatpush1.msra.mxu0 0.0
        %647 = vmatprep.subr.mxu0 0.0
        %648 = vmatpush1.msra.mxu0 0.0
        %649 = vmatprep.subr.mxu0 0.0
        %650 = vmatpush1.msra.mxu0 0.0
        %651 = vmatprep.subr.mxu0 0.0
        %652 = vmatpush1.msra.mxu0 0.0
        %653 = vmatprep.subr.mxu0 0.0
        %654 = vmatpush1.msra.mxu0 0.0
        %655 = vmatprep.subr.mxu0 0.0
        %656 = vmatpush1.msra.mxu0 0.0
        %657 = vmatprep.subr.mxu0 0.0
        %658 = vmatpush1.msra.mxu0 0.0
        %659 = vmatprep.subr.mxu0 0.0
        %660 = vmatpush1.msra.mxu0 0.0
        %661 = vmatprep.subr.mxu0 0.0
        %662 = vmatpush1.msra.mxu0 0.0
        %663 = vmatprep.subr.mxu0 0.0
        %664 = vmatpush1.msra.mxu0 0.0
        %665 = vmatprep.subr.mxu0 0.0
        %666 = vmatpush1.msra.mxu0 0.0
        %667 = vmatprep.subr.mxu0 0.0
        %668 = vmatpush1.msra.mxu0 0.0
        %669 = vmatprep.subr.mxu0 0.0
        %670 = vmatpush1.msra.mxu0 0.0
        %671 = vmatprep.subr.mxu0 0.0
        %672 = vmatpush1.msra.mxu0 0.0
        %673 = vmatprep.subr.mxu0 0.0
        %674 = vmatpush1.msra.mxu0 0.0
        %675 = vmatprep.subr.mxu0 0.0
        %676 = vmatpush1.msra.mxu0 0.0
        %677 = vmatprep.subr.mxu0 0.0
        %678 = vmatpush1.msra.mxu0 0.0
        %679 = vmatprep.subr.mxu0 0.0
        %680 = vmatpush1.msra.mxu0 0.0
        %681 = vmatprep.subr.mxu0 0.0
        %682 = vmatpush1.msra.mxu0 0.0
        %683 = vmatprep.subr.mxu0 0.0
        %684 = vmatpush1.msra.mxu0 0.0
        %685 = vmatprep.subr.mxu0 0.0
        %686 = vmatpush1.msra.mxu0 0.0
        %687 = vmatprep.subr.mxu0 0.0
        %688 = vmatpush1.msra.mxu0 0.0
        %689 = vmatprep.subr.mxu0 0.0
        %690 = vmatpush1.msra.mxu0 0.0
        %691 = vmatprep.subr.mxu0 0.0
        %692 = vmatpush1.msra.mxu0 0.0
        %693 = vmatprep.subr.mxu0 0.0
        %694 = vmatpush1.msra.mxu0 0.0
        %695 = vmatprep.mubr.f32.mxu0 0.0
        %v696 = vand.u32 %v530, 4294901760
        %697 = vmatmul.mubr.f32.gmra.mrb[0].mxu0 %v696
        %v698 = vpop.f32.mrb[0].mxu0
        %v699 = vadd.f32 %v608, %v698
        %v700 = vpop.f32.mrb[0].mxu0
        %701 = vdwg.mxu0
        %702 = vmatprep.subr.mxu0 0.0
        %v703 = vand.u32 %v525, 4294901760
        %v704 = vsub.f32 %v525, %v703
        %705 = vmatpush1.msra.mxu0 %v704
        %706 = vmatprep.subr.mxu0 0.0
        %v707 = vand.u32 %v526, 4294901760
        %v708 = vsub.f32 %v526, %v707
        %709 = vmatpush1.msra.mxu0 %v708
        %710 = vmatprep.subr.mxu0 0.0
        %v711 = vand.u32 %v527, 4294901760
        %v712 = vsub.f32 %v527, %v711
        %713 = vmatpush1.msra.mxu0 %v712
        %714 = vmatprep.subr.mxu0 0.0
        %v715 = vand.u32 %v528, 4294901760
        %v716 = vsub.f32 %v528, %v715
        %717 = vmatpush1.msra.mxu0 %v716
        %718 = vmatprep.subr.mxu0 0.0
        %719 = vmatpush1.msra.mxu0 0.0
        %720 = vmatprep.subr.mxu0 0.0
        %721 = vmatpush1.msra.mxu0 0.0
        %722 = vmatprep.subr.mxu0 0.0
        %723 = vmatpush1.msra.mxu0 0.0
        %724 = vmatprep.subr.mxu0 0.0
        %725 = vmatpush1.msra.mxu0 0.0
        %726 = vmatprep.subr.mxu0 0.0
        %727 = vmatpush1.msra.mxu0 0.0
        %728 = vmatprep.subr.mxu0 0.0
        %729 = vmatpush1.msra.mxu0 0.0
        %730 = vmatprep.subr.mxu0 0.0
        %731 = vmatpush1.msra.mxu0 0.0
        %732 = vmatprep.subr.mxu0 0.0
        %733 = vmatpush1.msra.mxu0 0.0
        %734 = vmatprep.subr.mxu0 0.0
        %735 = vmatpush1.msra.mxu0 0.0
        %736 = vmatprep.subr.mxu0 0.0
        %737 = vmatpush1.msra.mxu0 0.0
        %738 = vmatprep.subr.mxu0 0.0
        %739 = vmatpush1.msra.mxu0 0.0
        %740 = vmatprep.subr.mxu0 0.0
        %741 = vmatpush1.msra.mxu0 0.0
        %742 = vmatprep.subr.mxu0 0.0
        %743 = vmatpush1.msra.mxu0 0.0
        %744 = vmatprep.subr.mxu0 0.0
        %745 = vmatpush1.msra.mxu0 0.0
        %746 = vmatprep.subr.mxu0 0.0
        %747 = vmatpush1.msra.mxu0 0.0
        %748 = vmatprep.subr.mxu0 0.0
        %749 = vmatpush1.msra.mxu0 0.0
        %750 = vmatprep.subr.mxu0 0.0
        %751 = vmatpush1.msra.mxu0 0.0
        %752 = vmatprep.subr.mxu0 0.0
        %753 = vmatpush1.msra.mxu0 0.0
        %754 = vmatprep.subr.mxu0 0.0
        %755 = vmatpush1.msra.mxu0 0.0
        %756 = vmatprep.subr.mxu0 0.0
        %757 = vmatpush1.msra.mxu0 0.0
        %758 = vmatprep.subr.mxu0 0.0
        %759 = vmatpush1.msra.mxu0 0.0
        %760 = vmatprep.subr.mxu0 0.0
        %761 = vmatpush1.msra.mxu0 0.0
        %762 = vmatprep.subr.mxu0 0.0
        %763 = vmatpush1.msra.mxu0 0.0
        %764 = vmatprep.subr.mxu0 0.0
        %765 = vmatpush1.msra.mxu0 0.0
        %766 = vmatprep.subr.mxu0 0.0
        %767 = vmatpush1.msra.mxu0 0.0
        %768 = vmatprep.subr.mxu0 0.0
        %769 = vmatpush1.msra.mxu0 0.0
        %770 = vmatprep.subr.mxu0 0.0
        %771 = vmatpush1.msra.mxu0 0.0
        %772 = vmatprep.subr.mxu0 0.0
        %773 = vmatpush1.msra.mxu0 0.0
        %774 = vmatprep.mubr.f32.mxu0 0.0
        %v775 = vand.u32 %v530, 4294901760
        %v776 = vsub.f32 %v530, %v775
        %777 = vmatmul.mubr.f32.gmra.mrb[0].mxu0 %v776
        %v778 = vpop.f32.mrb[0].mxu0
        %v779 = vadd.f32 %v699, %v778
        %v780 = vpop.f32.mrb[0].mxu0
        %781 = vdwg.mxu0
        %782 = vmatprep.subr.mxu0 0.0
        %v783 = vand.u32 %v525, 4294901760
        %784 = vmatpush1.msra.mxu0 %v783
        %785 = vmatprep.subr.mxu0 0.0
        %v786 = vand.u32 %v526, 4294901760
        %787 = vmatpush1.msra.mxu0 %v786
        %788 = vmatprep.subr.mxu0 0.0
        %v789 = vand.u32 %v527, 4294901760
        %790 = vmatpush1.msra.mxu0 %v789
        %791 = vmatprep.subr.mxu0 0.0
        %v792 = vand.u32 %v528, 4294901760
        %793 = vmatpush1.msra.mxu0 %v792
        %794 = vmatprep.subr.mxu0 0.0
        %795 = vmatpush1.msra.mxu0 0.0
        %796 = vmatprep.subr.mxu0 0.0
        %797 = vmatpush1.msra.mxu0 0.0
        %798 = vmatprep.subr.mxu0 0.0
        %799 = vmatpush1.msra.mxu0 0.0
        %800 = vmatprep.subr.mxu0 0.0
        %801 = vmatpush1.msra.mxu0 0.0
        %802 = vmatprep.subr.mxu0 0.0
        %803 = vmatpush1.msra.mxu0 0.0
        %804 = vmatprep.subr.mxu0 0.0
        %805 = vmatpush1.msra.mxu0 0.0
        %806 = vmatprep.subr.mxu0 0.0
        %807 = vmatpush1.msra.mxu0 0.0
        %808 = vmatprep.subr.mxu0 0.0
        %809 = vmatpush1.msra.mxu0 0.0
        %810 = vmatprep.subr.mxu0 0.0
        %811 = vmatpush1.msra.mxu0 0.0
        %812 = vmatprep.subr.mxu0 0.0
        %813 = vmatpush1.msra.mxu0 0.0
        %814 = vmatprep.subr.mxu0 0.0
        %815 = vmatpush1.msra.mxu0 0.0
        %816 = vmatprep.subr.mxu0 0.0
        %817 = vmatpush1.msra.mxu0 0.0
        %818 = vmatprep.subr.mxu0 0.0
        %819 = vmatpush1.msra.mxu0 0.0
        %820 = vmatprep.subr.mxu0 0.0
        %821 = vmatpush1.msra.mxu0 0.0
        %822 = vmatprep.subr.mxu0 0.0
        %823 = vmatpush1.msra.mxu0 0.0
        %824 = vmatprep.subr.mxu0 0.0
        %825 = vmatpush1.msra.mxu0 0.0
        %826 = vmatprep.subr.mxu0 0.0
        %827 = vmatpush1.msra.mxu0 0.0
        %828 = vmatprep.subr.mxu0 0.0
        %829 = vmatpush1.msra.mxu0 0.0
        %830 = vmatprep.subr.mxu0 0.0
        %831 = vmatpush1.msra.mxu0 0.0
        %832 = vmatprep.subr.mxu0 0.0
        %833 = vmatpush1.msra.mxu0 0.0
        %834 = vmatprep.subr.mxu0 0.0
        %835 = vmatpush1.msra.mxu0 0.0
        %836 = vmatprep.subr.mxu0 0.0
        %837 = vmatpush1.msra.mxu0 0.0
        %838 = vmatprep.subr.mxu0 0.0
        %839 = vmatpush1.msra.mxu0 0.0
        %840 = vmatprep.subr.mxu0 0.0
        %841 = vmatpush1.msra.mxu0 0.0
        %842 = vmatprep.subr.mxu0 0.0
        %843 = vmatpush1.msra.mxu0 0.0
        %844 = vmatprep.subr.mxu0 0.0
        %845 = vmatpush1.msra.mxu0 0.0
        %846 = vmatprep.subr.mxu0 0.0
        %847 = vmatpush1.msra.mxu0 0.0
        %848 = vmatprep.subr.mxu0 0.0
        %849 = vmatpush1.msra.mxu0 0.0
        %850 = vmatprep.mubr.f32.mxu0 0.0
        %v851 = vand.u32 %v530, 4294901760
        %v852 = vsub.f32 %v530, %v851
        %v853 = vand.u32 %v852, 4294901760
        %854 = vmatmul.mubr.f32.gmra.mrb[0].mxu0 %v853
        %v855 = vpop.f32.mrb[0].mxu0
        %v856 = vadd.f32 %v779, %v855
        %v857 = vpop.f32.mrb[0].mxu0
        %858 = vdwg.mxu0
        %859 = vmatprep.subr.mxu0 0.0
        %v860 = vand.u32 %v525, 4294901760
        %v861 = vsub.f32 %v525, %v860
        %v862 = vand.u32 %v861, 4294901760
        %863 = vmatpush1.msra.mxu0 %v862
        %864 = vmatprep.subr.mxu0 0.0
        %v865 = vand.u32 %v526, 4294901760
        %v866 = vsub.f32 %v526, %v865
        %v867 = vand.u32 %v866, 4294901760
        %868 = vmatpush1.msra.mxu0 %v867
        %869 = vmatprep.subr.mxu0 0.0
        %v870 = vand.u32 %v527, 4294901760
        %v871 = vsub.f32 %v527, %v870
        %v872 = vand.u32 %v871, 4294901760
        %873 = vmatpush1.msra.mxu0 %v872
        %874 = vmatprep.subr.mxu0 0.0
        %v875 = vand.u32 %v528, 4294901760
        %v876 = vsub.f32 %v528, %v875
        %v877 = vand.u32 %v876, 4294901760
        %878 = vmatpush1.msra.mxu0 %v877
        %879 = vmatprep.subr.mxu0 0.0
        %880 = vmatpush1.msra.mxu0 0.0
        %881 = vmatprep.subr.mxu0 0.0
        %882 = vmatpush1.msra.mxu0 0.0
        %883 = vmatprep.subr.mxu0 0.0
        %884 = vmatpush1.msra.mxu0 0.0
        %885 = vmatprep.subr.mxu0 0.0
        %886 = vmatpush1.msra.mxu0 0.0
        %887 = vmatprep.subr.mxu0 0.0
        %888 = vmatpush1.msra.mxu0 0.0
        %889 = vmatprep.subr.mxu0 0.0
        %890 = vmatpush1.msra.mxu0 0.0
        %891 = vmatprep.subr.mxu0 0.0
        %892 = vmatpush1.msra.mxu0 0.0
        %893 = vmatprep.subr.mxu0 0.0
        %894 = vmatpush1.msra.mxu0 0.0
        %895 = vmatprep.subr.mxu0 0.0
        %896 = vmatpush1.msra.mxu0 0.0
        %897 = vmatprep.subr.mxu0 0.0
        %898 = vmatpush1.msra.mxu0 0.0
        %899 = vmatprep.subr.mxu0 0.0
        %900 = vmatpush1.msra.mxu0 0.0
        %901 = vmatprep.subr.mxu0 0.0
        %902 = vmatpush1.msra.mxu0 0.0
        %903 = vmatprep.subr.mxu0 0.0
        %904 = vmatpush1.msra.mxu0 0.0
        %905 = vmatprep.subr.mxu0 0.0
        %906 = vmatpush1.msra.mxu0 0.0
        %907 = vmatprep.subr.mxu0 0.0
        %908 = vmatpush1.msra.mxu0 0.0
        %909 = vmatprep.subr.mxu0 0.0
        %910 = vmatpush1.msra.mxu0 0.0
        %911 = vmatprep.subr.mxu0 0.0
        %912 = vmatpush1.msra.mxu0 0.0
        %913 = vmatprep.subr.mxu0 0.0
        %914 = vmatpush1.msra.mxu0 0.0
        %915 = vmatprep.subr.mxu0 0.0
        %916 = vmatpush1.msra.mxu0 0.0
        %917 = vmatprep.subr.mxu0 0.0
        %918 = vmatpush1.msra.mxu0 0.0
        %919 = vmatprep.subr.mxu0 0.0
        %920 = vmatpush1.msra.mxu0 0.0
        %921 = vmatprep.subr.mxu0 0.0
        %922 = vmatpush1.msra.mxu0 0.0
        %923 = vmatprep.subr.mxu0 0.0
        %924 = vmatpush1.msra.mxu0 0.0
        %925 = vmatprep.subr.mxu0 0.0
        %926 = vmatpush1.msra.mxu0 0.0
        %927 = vmatprep.subr.mxu0 0.0
        %928 = vmatpush1.msra.mxu0 0.0
        %929 = vmatprep.subr.mxu0 0.0
        %930 = vmatpush1.msra.mxu0 0.0
        %931 = vmatprep.subr.mxu0 0.0
        %932 = vmatpush1.msra.mxu0 0.0
        %933 = vmatprep.subr.mxu0 0.0
        %934 = vmatpush1.msra.mxu0 0.0
        %935 = vmatprep.mubr.f32.mxu0 0.0
        %v936 = vand.u32 %v530, 4294901760
        %937 = vmatmul.mubr.f32.gmra.mrb[0].mxu0 %v936
        %v938 = vpop.f32.mrb[0].mxu0
        %v939 = vadd.f32 %v856, %v938
        %v940 = vpop.f32.mrb[0].mxu0
        %941 = vdwg.mxu0
        %942 = vmatprep.subr.mxu0 0.0
        %v943 = vand.u32 %v525, 4294901760
        %944 = vmatpush1.msra.mxu0 %v943
        %945 = vmatprep.subr.mxu0 0.0
        %v946 = vand.u32 %v526, 4294901760
        %947 = vmatpush1.msra.mxu0 %v946
        %948 = vmatprep.subr.mxu0 0.0
        %v949 = vand.u32 %v527, 4294901760
        %950 = vmatpush1.msra.mxu0 %v949
        %951 = vmatprep.subr.mxu0 0.0
        %v952 = vand.u32 %v528, 4294901760
        %953 = vmatpush1.msra.mxu0 %v952
        %954 = vmatprep.subr.mxu0 0.0
        %955 = vmatpush1.msra.mxu0 0.0
        %956 = vmatprep.subr.mxu0 0.0
        %957 = vmatpush1.msra.mxu0 0.0
        %958 = vmatprep.subr.mxu0 0.0
        %959 = vmatpush1.msra.mxu0 0.0
        %960 = vmatprep.subr.mxu0 0.0
        %961 = vmatpush1.msra.mxu0 0.0
        %962 = vmatprep.subr.mxu0 0.0
        %963 = vmatpush1.msra.mxu0 0.0
        %964 = vmatprep.subr.mxu0 0.0
        %965 = vmatpush1.msra.mxu0 0.0
        %966 = vmatprep.subr.mxu0 0.0
        %967 = vmatpush1.msra.mxu0 0.0
        %968 = vmatprep.subr.mxu0 0.0
        %969 = vmatpush1.msra.mxu0 0.0
        %970 = vmatprep.subr.mxu0 0.0
        %971 = vmatpush1.msra.mxu0 0.0
        %972 = vmatprep.subr.mxu0 0.0
        %973 = vmatpush1.msra.mxu0 0.0
        %974 = vmatprep.subr.mxu0 0.0
        %975 = vmatpush1.msra.mxu0 0.0
        %976 = vmatprep.subr.mxu0 0.0
        %977 = vmatpush1.msra.mxu0 0.0
        %978 = vmatprep.subr.mxu0 0.0
        %979 = vmatpush1.msra.mxu0 0.0
        %980 = vmatprep.subr.mxu0 0.0
        %981 = vmatpush1.msra.mxu0 0.0
        %982 = vmatprep.subr.mxu0 0.0
        %983 = vmatpush1.msra.mxu0 0.0
        %984 = vmatprep.subr.mxu0 0.0
        %985 = vmatpush1.msra.mxu0 0.0
        %986 = vmatprep.subr.mxu0 0.0
        %987 = vmatpush1.msra.mxu0 0.0
        %988 = vmatprep.subr.mxu0 0.0
        %989 = vmatpush1.msra.mxu0 0.0
        %990 = vmatprep.subr.mxu0 0.0
        %991 = vmatpush1.msra.mxu0 0.0
        %992 = vmatprep.subr.mxu0 0.0
        %993 = vmatpush1.msra.mxu0 0.0
        %994 = vmatprep.subr.mxu0 0.0
        %995 = vmatpush1.msra.mxu0 0.0
        %996 = vmatprep.subr.mxu0 0.0
        %997 = vmatpush1.msra.mxu0 0.0
        %998 = vmatprep.subr.mxu0 0.0
        %999 = vmatpush1.msra.mxu0 0.0
        %1000 = vmatprep.subr.mxu0 0.0
        %1001 = vmatpush1.msra.mxu0 0.0
        %1002 = vmatprep.subr.mxu0 0.0
        %1003 = vmatpush1.msra.mxu0 0.0
        %1004 = vmatprep.subr.mxu0 0.0
        %1005 = vmatpush1.msra.mxu0 0.0
        %1006 = vmatprep.subr.mxu0 0.0
        %1007 = vmatpush1.msra.mxu0 0.0
        %1008 = vmatprep.subr.mxu0 0.0
        %1009 = vmatpush1.msra.mxu0 0.0
        %1010 = vmatprep.mubr.f32.mxu0 0.0
        %v1011 = vand.u32 %v530, 4294901760
        %1012 = vmatmul.mubr.f32.gmra.mrb[0].mxu0 %v1011
        %v1013 = vpop.f32.mrb[0].mxu0
        %v1014 = vadd.f32 %v939, %v1013
        %v1015 = vpop.f32.mrb[0].mxu0
        %1016 = vdwg.mxu0
        %v1017 = vld [vmem:[%s4] sm:$0xff]
        %v1018 = vld [vmem:[%s4 + $0x8] sm:$0xff]
        %v1019 = vld [vmem:[%s4 + $0x10] sm:$0xff]
        %v1020 = vld [vmem:[%s4 + $0x18] sm:$0xff]
        %1021 = vmatprep.subr.mxu0 0.0
        %v1022 = vand.u32 %v1017, 4294901760
        %1023 = vmatpush1.msra.mxu0 %v1022
        %1024 = vmatprep.subr.mxu0 0.0
        %v1025 = vand.u32 %v1018, 4294901760
        %1026 = vmatpush1.msra.mxu0 %v1025
        %1027 = vmatprep.subr.mxu0 0.0
        %v1028 = vand.u32 %v1019, 4294901760
        %1029 = vmatpush1.msra.mxu0 %v1028
        %1030 = vmatprep.subr.mxu0 0.0
        %v1031 = vand.u32 %v1020, 4294901760
        %1032 = vmatpush1.msra.mxu0 %v1031
        %1033 = vmatprep.subr.mxu0 0.0
        %1034 = vmatpush1.msra.mxu0 0.0
        %1035 = vmatprep.subr.mxu0 0.0
        %1036 = vmatpush1.msra.mxu0 0.0
        %1037 = vmatprep.subr.mxu0 0.0
        %1038 = vmatpush1.msra.mxu0 0.0
        %1039 = vmatprep.subr.mxu0 0.0
        %1040 = vmatpush1.msra.mxu0 0.0
        %1041 = vmatprep.subr.mxu0 0.0
        %1042 = vmatpush1.msra.mxu0 0.0
        %1043 = vmatprep.subr.mxu0 0.0
        %1044 = vmatpush1.msra.mxu0 0.0
        %1045 = vmatprep.subr.mxu0 0.0
        %1046 = vmatpush1.msra.mxu0 0.0
        %1047 = vmatprep.subr.mxu0 0.0
        %1048 = vmatpush1.msra.mxu0 0.0
        %1049 = vmatprep.subr.mxu0 0.0
        %1050 = vmatpush1.msra.mxu0 0.0
        %1051 = vmatprep.subr.mxu0 0.0
        %1052 = vmatpush1.msra.mxu0 0.0
        %1053 = vmatprep.subr.mxu0 0.0
        %1054 = vmatpush1.msra.mxu0 0.0
        %1055 = vmatprep.subr.mxu0 0.0
        %1056 = vmatpush1.msra.mxu0 0.0
        %1057 = vmatprep.subr.mxu0 0.0
        %1058 = vmatpush1.msra.mxu0 0.0
        %1059 = vmatprep.subr.mxu0 0.0
        %1060 = vmatpush1.msra.mxu0 0.0
        %1061 = vmatprep.subr.mxu0 0.0
        %1062 = vmatpush1.msra.mxu0 0.0
        %1063 = vmatprep.subr.mxu0 0.0
        %1064 = vmatpush1.msra.mxu0 0.0
        %1065 = vmatprep.subr.mxu0 0.0
        %1066 = vmatpush1.msra.mxu0 0.0
        %1067 = vmatprep.subr.mxu0 0.0
        %1068 = vmatpush1.msra.mxu0 0.0
        %1069 = vmatprep.subr.mxu0 0.0
        %1070 = vmatpush1.msra.mxu0 0.0
        %1071 = vmatprep.subr.mxu0 0.0
        %1072 = vmatpush1.msra.mxu0 0.0
        %1073 = vmatprep.subr.mxu0 0.0
        %1074 = vmatpush1.msra.mxu0 0.0
        %1075 = vmatprep.subr.mxu0 0.0
        %1076 = vmatpush1.msra.mxu0 0.0
        %1077 = vmatprep.subr.mxu0 0.0
        %1078 = vmatpush1.msra.mxu0 0.0
        %1079 = vmatprep.subr.mxu0 0.0
        %1080 = vmatpush1.msra.mxu0 0.0
        %1081 = vmatprep.subr.mxu0 0.0
        %1082 = vmatpush1.msra.mxu0 0.0
        %1083 = vmatprep.subr.mxu0 0.0
        %1084 = vmatpush1.msra.mxu0 0.0
        %1085 = vmatprep.subr.mxu0 0.0
        %1086 = vmatpush1.msra.mxu0 0.0
        %1087 = vmatprep.subr.mxu0 0.0
        %1088 = vmatpush1.msra.mxu0 0.0
        %1089 = vmatprep.mubr.f32.mxu0 0.0
        %v1090 = vand.u32 %v530, 4294901760
        %v1091 = vsub.f32 %v530, %v1090
        %v1092 = vand.u32 %v1091, 4294901760
        %v1093 = vsub.f32 %v1091, %v1092
        %v1094 = vand.u32 %v1093, 4294901760
        %1095 = vmatmul.mubr.f32.gmra.mrb[0].mxu0 %v1094
        %v1096 = vpop.f32.mrb[0].mxu0
        %v1097 = vadd.f32 0.0, %v1096
        %v1098 = vpop.f32.mrb[0].mxu0
        %1099 = vdwg.mxu0
        %1100 = vmatprep.subr.mxu0 0.0
        %v1101 = vand.u32 %v1017, 4294901760
        %v1102 = vsub.f32 %v1017, %v1101
        %v1103 = vand.u32 %v1102, 4294901760
        %v1104 = vsub.f32 %v1102, %v1103
        %v1105 = vand.u32 %v1104, 4294901760
        %1106 = vmatpush1.msra.mxu0 %v1105
        %1107 = vmatprep.subr.mxu0 0.0
        %v1108 = vand.u32 %v1018, 4294901760
        %v1109 = vsub.f32 %v1018, %v1108
        %v1110 = vand.u32 %v1109, 4294901760
        %v1111 = vsub.f32 %v1109, %v1110
        %v1112 = vand.u32 %v1111, 4294901760
        %1113 = vmatpush1.msra.mxu0 %v1112
        %1114 = vmatprep.subr.mxu0 0.0
        %v1115 = vand.u32 %v1019, 4294901760
        %v1116 = vsub.f32 %v1019, %v1115
        %v1117 = vand.u32 %v1116, 4294901760
        %v1118 = vsub.f32 %v1116, %v1117
        %v1119 = vand.u32 %v1118, 4294901760
        %1120 = vmatpush1.msra.mxu0 %v1119
        %1121 = vmatprep.subr.mxu0 0.0
        %v1122 = vand.u32 %v1020, 4294901760
        %v1123 = vsub.f32 %v1020, %v1122
        %v1124 = vand.u32 %v1123, 4294901760
        %v1125 = vsub.f32 %v1123, %v1124
        %v1126 = vand.u32 %v1125, 4294901760
        %1127 = vmatpush1.msra.mxu0 %v1126
        %1128 = vmatprep.subr.mxu0 0.0
        %1129 = vmatpush1.msra.mxu0 0.0
        %1130 = vmatprep.subr.mxu0 0.0
        %1131 = vmatpush1.msra.mxu0 0.0
        %1132 = vmatprep.subr.mxu0 0.0
        %1133 = vmatpush1.msra.mxu0 0.0
        %1134 = vmatprep.subr.mxu0 0.0
        %1135 = vmatpush1.msra.mxu0 0.0
        %1136 = vmatprep.subr.mxu0 0.0
        %1137 = vmatpush1.msra.mxu0 0.0
        %1138 = vmatprep.subr.mxu0 0.0
        %1139 = vmatpush1.msra.mxu0 0.0
        %1140 = vmatprep.subr.mxu0 0.0
        %1141 = vmatpush1.msra.mxu0 0.0
        %1142 = vmatprep.subr.mxu0 0.0
        %1143 = vmatpush1.msra.mxu0 0.0
        %1144 = vmatprep.subr.mxu0 0.0
        %1145 = vmatpush1.msra.mxu0 0.0
        %1146 = vmatprep.subr.mxu0 0.0
        %1147 = vmatpush1.msra.mxu0 0.0
        %1148 = vmatprep.subr.mxu0 0.0
        %1149 = vmatpush1.msra.mxu0 0.0
        %1150 = vmatprep.subr.mxu0 0.0
        %1151 = vmatpush1.msra.mxu0 0.0
        %1152 = vmatprep.subr.mxu0 0.0
        %1153 = vmatpush1.msra.mxu0 0.0
        %1154 = vmatprep.subr.mxu0 0.0
        %1155 = vmatpush1.msra.mxu0 0.0
        %1156 = vmatprep.subr.mxu0 0.0
        %1157 = vmatpush1.msra.mxu0 0.0
        %1158 = vmatprep.subr.mxu0 0.0
        %1159 = vmatpush1.msra.mxu0 0.0
        %1160 = vmatprep.subr.mxu0 0.0
        %1161 = vmatpush1.msra.mxu0 0.0
        %1162 = vmatprep.subr.mxu0 0.0
        %1163 = vmatpush1.msra.mxu0 0.0
        %1164 = vmatprep.subr.mxu0 0.0
        %1165 = vmatpush1.msra.mxu0 0.0
        %1166 = vmatprep.subr.mxu0 0.0
        %1167 = vmatpush1.msra.mxu0 0.0
        %1168 = vmatprep.subr.mxu0 0.0
        %1169 = vmatpush1.msra.mxu0 0.0
        %1170 = vmatprep.subr.mxu0 0.0
        %1171 = vmatpush1.msra.mxu0 0.0
        %1172 = vmatprep.subr.mxu0 0.0
        %1173 = vmatpush1.msra.mxu0 0.0
        %1174 = vmatprep.subr.mxu0 0.0
        %1175 = vmatpush1.msra.mxu0 0.0
        %1176 = vmatprep.subr.mxu0 0.0
        %1177 = vmatpush1.msra.mxu0 0.0
        %1178 = vmatprep.subr.mxu0 0.0
        %1179 = vmatpush1.msra.mxu0 0.0
        %1180 = vmatprep.subr.mxu0 0.0
        %1181 = vmatpush1.msra.mxu0 0.0
        %1182 = vmatprep.subr.mxu0 0.0
        %1183 = vmatpush1.msra.mxu0 0.0
        %1184 = vmatprep.mubr.f32.mxu0 0.0
        %v1185 = vand.u32 %v530, 4294901760
        %1186 = vmatmul.mubr.f32.gmra.mrb[0].mxu0 %v1185
        %v1187 = vpop.f32.mrb[0].mxu0
        %v1188 = vadd.f32 %v1097, %v1187
        %v1189 = vpop.f32.mrb[0].mxu0
        %1190 = vdwg.mxu0
        %1191 = vmatprep.subr.mxu0 0.0
        %v1192 = vand.u32 %v1017, 4294901760
        %v1193 = vsub.f32 %v1017, %v1192
        %1194 = vmatpush1.msra.mxu0 %v1193
        %1195 = vmatprep.subr.mxu0 0.0
        %v1196 = vand.u32 %v1018, 4294901760
        %v1197 = vsub.f32 %v1018, %v1196
        %1198 = vmatpush1.msra.mxu0 %v1197
        %1199 = vmatprep.subr.mxu0 0.0
        %v1200 = vand.u32 %v1019, 4294901760
        %v1201 = vsub.f32 %v1019, %v1200
        %1202 = vmatpush1.msra.mxu0 %v1201
        %1203 = vmatprep.subr.mxu0 0.0
        %v1204 = vand.u32 %v1020, 4294901760
        %v1205 = vsub.f32 %v1020, %v1204
        %1206 = vmatpush1.msra.mxu0 %v1205
        %1207 = vmatprep.subr.mxu0 0.0
        %1208 = vmatpush1.msra.mxu0 0.0
        %1209 = vmatprep.subr.mxu0 0.0
        %1210 = vmatpush1.msra.mxu0 0.0
        %1211 = vmatprep.subr.mxu0 0.0
        %1212 = vmatpush1.msra.mxu0 0.0
        %1213 = vmatprep.subr.mxu0 0.0
        %1214 = vmatpush1.msra.mxu0 0.0
        %1215 = vmatprep.subr.mxu0 0.0
        %1216 = vmatpush1.msra.mxu0 0.0
        %1217 = vmatprep.subr.mxu0 0.0
        %1218 = vmatpush1.msra.mxu0 0.0
        %1219 = vmatprep.subr.mxu0 0.0
        %1220 = vmatpush1.msra.mxu0 0.0
        %1221 = vmatprep.subr.mxu0 0.0
        %1222 = vmatpush1.msra.mxu0 0.0
        %1223 = vmatprep.subr.mxu0 0.0
        %1224 = vmatpush1.msra.mxu0 0.0
        %1225 = vmatprep.subr.mxu0 0.0
        %1226 = vmatpush1.msra.mxu0 0.0
        %1227 = vmatprep.subr.mxu0 0.0
        %1228 = vmatpush1.msra.mxu0 0.0
        %1229 = vmatprep.subr.mxu0 0.0
        %1230 = vmatpush1.msra.mxu0 0.0
        %1231 = vmatprep.subr.mxu0 0.0
        %1232 = vmatpush1.msra.mxu0 0.0
        %1233 = vmatprep.subr.mxu0 0.0
        %1234 = vmatpush1.msra.mxu0 0.0
        %1235 = vmatprep.subr.mxu0 0.0
        %1236 = vmatpush1.msra.mxu0 0.0
        %1237 = vmatprep.subr.mxu0 0.0
        %1238 = vmatpush1.msra.mxu0 0.0
        %1239 = vmatprep.subr.mxu0 0.0
        %1240 = vmatpush1.msra.mxu0 0.0
        %1241 = vmatprep.subr.mxu0 0.0
        %1242 = vmatpush1.msra.mxu0 0.0
        %1243 = vmatprep.subr.mxu0 0.0
        %1244 = vmatpush1.msra.mxu0 0.0
        %1245 = vmatprep.subr.mxu0 0.0
        %1246 = vmatpush1.msra.mxu0 0.0
        %1247 = vmatprep.subr.mxu0 0.0
        %1248 = vmatpush1.msra.mxu0 0.0
        %1249 = vmatprep.subr.mxu0 0.0
        %1250 = vmatpush1.msra.mxu0 0.0
        %1251 = vmatprep.subr.mxu0 0.0
        %1252 = vmatpush1.msra.mxu0 0.0
        %1253 = vmatprep.subr.mxu0 0.0
        %1254 = vmatpush1.msra.mxu0 0.0
        %1255 = vmatprep.subr.mxu0 0.0
        %1256 = vmatpush1.msra.mxu0 0.0
        %1257 = vmatprep.subr.mxu0 0.0
        %1258 = vmatpush1.msra.mxu0 0.0
        %1259 = vmatprep.subr.mxu0 0.0
        %1260 = vmatpush1.msra.mxu0 0.0
        %1261 = vmatprep.subr.mxu0 0.0
        %1262 = vmatpush1.msra.mxu0 0.0
        %1263 = vmatprep.mubr.f32.mxu0 0.0
        %v1264 = vand.u32 %v530, 4294901760
        %v1265 = vsub.f32 %v530, %v1264
        %1266 = vmatmul.mubr.f32.gmra.mrb[0].mxu0 %v1265
        %v1267 = vpop.f32.mrb[0].mxu0
        %v1268 = vadd.f32 %v1188, %v1267
        %v1269 = vpop.f32.mrb[0].mxu0
        %1270 = vdwg.mxu0
        %1271 = vmatprep.subr.mxu0 0.0
        %v1272 = vand.u32 %v1017, 4294901760
        %1273 = vmatpush1.msra.mxu0 %v1272
        %1274 = vmatprep.subr.mxu0 0.0
        %v1275 = vand.u32 %v1018, 4294901760
        %1276 = vmatpush1.msra.mxu0 %v1275
        %1277 = vmatprep.subr.mxu0 0.0
        %v1278 = vand.u32 %v1019, 4294901760
        %1279 = vmatpush1.msra.mxu0 %v1278
        %1280 = vmatprep.subr.mxu0 0.0
        %v1281 = vand.u32 %v1020, 4294901760
        %1282 = vmatpush1.msra.mxu0 %v1281
        %1283 = vmatprep.subr.mxu0 0.0
        %1284 = vmatpush1.msra.mxu0 0.0
        %1285 = vmatprep.subr.mxu0 0.0
        %1286 = vmatpush1.msra.mxu0 0.0
        %1287 = vmatprep.subr.mxu0 0.0
        %1288 = vmatpush1.msra.mxu0 0.0
        %1289 = vmatprep.subr.mxu0 0.0
        %1290 = vmatpush1.msra.mxu0 0.0
        %1291 = vmatprep.subr.mxu0 0.0
        %1292 = vmatpush1.msra.mxu0 0.0
        %1293 = vmatprep.subr.mxu0 0.0
        %1294 = vmatpush1.msra.mxu0 0.0
        %1295 = vmatprep.subr.mxu0 0.0
        %1296 = vmatpush1.msra.mxu0 0.0
        %1297 = vmatprep.subr.mxu0 0.0
        %1298 = vmatpush1.msra.mxu0 0.0
        %1299 = vmatprep.subr.mxu0 0.0
        %1300 = vmatpush1.msra.mxu0 0.0
        %1301 = vmatprep.subr.mxu0 0.0
        %1302 = vmatpush1.msra.mxu0 0.0
        %1303 = vmatprep.subr.mxu0 0.0
        %1304 = vmatpush1.msra.mxu0 0.0
        %1305 = vmatprep.subr.mxu0 0.0
        %1306 = vmatpush1.msra.mxu0 0.0
        %1307 = vmatprep.subr.mxu0 0.0
        %1308 = vmatpush1.msra.mxu0 0.0
        %1309 = vmatprep.subr.mxu0 0.0
        %1310 = vmatpush1.msra.mxu0 0.0
        %1311 = vmatprep.subr.mxu0 0.0
        %1312 = vmatpush1.msra.mxu0 0.0
        %1313 = vmatprep.subr.mxu0 0.0
        %1314 = vmatpush1.msra.mxu0 0.0
        %1315 = vmatprep.subr.mxu0 0.0
        %1316 = vmatpush1.msra.mxu0 0.0
        %1317 = vmatprep.subr.mxu0 0.0
        %1318 = vmatpush1.msra.mxu0 0.0
        %1319 = vmatprep.subr.mxu0 0.0
        %1320 = vmatpush1.msra.mxu0 0.0
        %1321 = vmatprep.subr.mxu0 0.0
        %1322 = vmatpush1.msra.mxu0 0.0
        %1323 = vmatprep.subr.mxu0 0.0
        %1324 = vmatpush1.msra.mxu0 0.0
        %1325 = vmatprep.subr.mxu0 0.0
        %1326 = vmatpush1.msra.mxu0 0.0
        %1327 = vmatprep.subr.mxu0 0.0
        %1328 = vmatpush1.msra.mxu0 0.0
        %1329 = vmatprep.subr.mxu0 0.0
        %1330 = vmatpush1.msra.mxu0 0.0
        %1331 = vmatprep.subr.mxu0 0.0
        %1332 = vmatpush1.msra.mxu0 0.0
        %1333 = vmatprep.subr.mxu0 0.0
        %1334 = vmatpush1.msra.mxu0 0.0
        %1335 = vmatprep.subr.mxu0 0.0
        %1336 = vmatpush1.msra.mxu0 0.0
        %1337 = vmatprep.subr.mxu0 0.0
        %1338 = vmatpush1.msra.mxu0 0.0
        %1339 = vmatprep.mubr.f32.mxu0 0.0
        %v1340 = vand.u32 %v530, 4294901760
        %v1341 = vsub.f32 %v530, %v1340
        %v1342 = vand.u32 %v1341, 4294901760
        %1343 = vmatmul.mubr.f32.gmra.mrb[0].mxu0 %v1342
        %v1344 = vpop.f32.mrb[0].mxu0
        %v1345 = vadd.f32 %v1268, %v1344
        %v1346 = vpop.f32.mrb[0].mxu0
        %1347 = vdwg.mxu0
        %1348 = vmatprep.subr.mxu0 0.0
        %v1349 = vand.u32 %v1017, 4294901760
        %v1350 = vsub.f32 %v1017, %v1349
        %v1351 = vand.u32 %v1350, 4294901760
        %1352 = vmatpush1.msra.mxu0 %v1351
        %1353 = vmatprep.subr.mxu0 0.0
        %v1354 = vand.u32 %v1018, 4294901760
        %v1355 = vsub.f32 %v1018, %v1354
        %v1356 = vand.u32 %v1355, 4294901760
        %1357 = vmatpush1.msra.mxu0 %v1356
        %1358 = vmatprep.subr.mxu0 0.0
        %v1359 = vand.u32 %v1019, 4294901760
        %v1360 = vsub.f32 %v1019, %v1359
        %v1361 = vand.u32 %v1360, 4294901760
        %1362 = vmatpush1.msra.mxu0 %v1361
        %1363 = vmatprep.subr.mxu0 0.0
        %v1364 = vand.u32 %v1020, 4294901760
        %v1365 = vsub.f32 %v1020, %v1364
        %v1366 = vand.u32 %v1365, 4294901760
        %1367 = vmatpush1.msra.mxu0 %v1366
        %1368 = vmatprep.subr.mxu0 0.0
        %1369 = vmatpush1.msra.mxu0 0.0
        %1370 = vmatprep.subr.mxu0 0.0
        %1371 = vmatpush1.msra.mxu0 0.0
        %1372 = vmatprep.subr.mxu0 0.0
        %1373 = vmatpush1.msra.mxu0 0.0
        %1374 = vmatprep.subr.mxu0 0.0
        %1375 = vmatpush1.msra.mxu0 0.0
        %1376 = vmatprep.subr.mxu0 0.0
        %1377 = vmatpush1.msra.mxu0 0.0
        %1378 = vmatprep.subr.mxu0 0.0
        %1379 = vmatpush1.msra.mxu0 0.0
        %1380 = vmatprep.subr.mxu0 0.0
        %1381 = vmatpush1.msra.mxu0 0.0
        %1382 = vmatprep.subr.mxu0 0.0
        %1383 = vmatpush1.msra.mxu0 0.0
        %1384 = vmatprep.subr.mxu0 0.0
        %1385 = vmatpush1.msra.mxu0 0.0
        %1386 = vmatprep.subr.mxu0 0.0
        %1387 = vmatpush1.msra.mxu0 0.0
        %1388 = vmatprep.subr.mxu0 0.0
        %1389 = vmatpush1.msra.mxu0 0.0
        %1390 = vmatprep.subr.mxu0 0.0
        %1391 = vmatpush1.msra.mxu0 0.0
        %1392 = vmatprep.subr.mxu0 0.0
        %1393 = vmatpush1.msra.mxu0 0.0
        %1394 = vmatprep.subr.mxu0 0.0
        %1395 = vmatpush1.msra.mxu0 0.0
        %1396 = vmatprep.subr.mxu0 0.0
        %1397 = vmatpush1.msra.mxu0 0.0
        %1398 = vmatprep.subr.mxu0 0.0
        %1399 = vmatpush1.msra.mxu0 0.0
        %1400 = vmatprep.subr.mxu0 0.0
        %1401 = vmatpush1.msra.mxu0 0.0
        %1402 = vmatprep.subr.mxu0 0.0
        %1403 = vmatpush1.msra.mxu0 0.0
        %1404 = vmatprep.subr.mxu0 0.0
        %1405 = vmatpush1.msra.mxu0 0.0
        %1406 = vmatprep.subr.mxu0 0.0
        %1407 = vmatpush1.msra.mxu0 0.0
        %1408 = vmatprep.subr.mxu0 0.0
        %1409 = vmatpush1.msra.mxu0 0.0
        %1410 = vmatprep.subr.mxu0 0.0
        %1411 = vmatpush1.msra.mxu0 0.0
        %1412 = vmatprep.subr.mxu0 0.0
        %1413 = vmatpush1.msra.mxu0 0.0
        %1414 = vmatprep.subr.mxu0 0.0
        %1415 = vmatpush1.msra.mxu0 0.0
        %1416 = vmatprep.subr.mxu0 0.0
        %1417 = vmatpush1.msra.mxu0 0.0
        %1418 = vmatprep.subr.mxu0 0.0
        %1419 = vmatpush1.msra.mxu0 0.0
        %1420 = vmatprep.subr.mxu0 0.0
        %1421 = vmatpush1.msra.mxu0 0.0
        %1422 = vmatprep.subr.mxu0 0.0
        %1423 = vmatpush1.msra.mxu0 0.0
        %1424 = vmatprep.mubr.f32.mxu0 0.0
        %v1425 = vand.u32 %v530, 4294901760
        %1426 = vmatmul.mubr.f32.gmra.mrb[0].mxu0 %v1425
        %v1427 = vpop.f32.mrb[0].mxu0
        %v1428 = vadd.f32 %v1345, %v1427
        %v1429 = vpop.f32.mrb[0].mxu0
        %1430 = vdwg.mxu0
        %1431 = vmatprep.subr.mxu0 0.0
        %v1432 = vand.u32 %v1017, 4294901760
        %1433 = vmatpush1.msra.mxu0 %v1432
        %1434 = vmatprep.subr.mxu0 0.0
        %v1435 = vand.u32 %v1018, 4294901760
        %1436 = vmatpush1.msra.mxu0 %v1435
        %1437 = vmatprep.subr.mxu0 0.0
        %v1438 = vand.u32 %v1019, 4294901760
        %1439 = vmatpush1.msra.mxu0 %v1438
        %1440 = vmatprep.subr.mxu0 0.0
        %v1441 = vand.u32 %v1020, 4294901760
        %1442 = vmatpush1.msra.mxu0 %v1441
        %1443 = vmatprep.subr.mxu0 0.0
        %1444 = vmatpush1.msra.mxu0 0.0
        %1445 = vmatprep.subr.mxu0 0.0
        %1446 = vmatpush1.msra.mxu0 0.0
        %1447 = vmatprep.subr.mxu0 0.0
        %1448 = vmatpush1.msra.mxu0 0.0
        %1449 = vmatprep.subr.mxu0 0.0
        %1450 = vmatpush1.msra.mxu0 0.0
        %1451 = vmatprep.subr.mxu0 0.0
        %1452 = vmatpush1.msra.mxu0 0.0
        %1453 = vmatprep.subr.mxu0 0.0
        %1454 = vmatpush1.msra.mxu0 0.0
        %1455 = vmatprep.subr.mxu0 0.0
        %1456 = vmatpush1.msra.mxu0 0.0
        %1457 = vmatprep.subr.mxu0 0.0
        %1458 = vmatpush1.msra.mxu0 0.0
        %1459 = vmatprep.subr.mxu0 0.0
        %1460 = vmatpush1.msra.mxu0 0.0
        %1461 = vmatprep.subr.mxu0 0.0
        %1462 = vmatpush1.msra.mxu0 0.0
        %1463 = vmatprep.subr.mxu0 0.0
        %1464 = vmatpush1.msra.mxu0 0.0
        %1465 = vmatprep.subr.mxu0 0.0
        %1466 = vmatpush1.msra.mxu0 0.0
        %1467 = vmatprep.subr.mxu0 0.0
        %1468 = vmatpush1.msra.mxu0 0.0
        %1469 = vmatprep.subr.mxu0 0.0
        %1470 = vmatpush1.msra.mxu0 0.0
        %1471 = vmatprep.subr.mxu0 0.0
        %1472 = vmatpush1.msra.mxu0 0.0
        %1473 = vmatprep.subr.mxu0 0.0
        %1474 = vmatpush1.msra.mxu0 0.0
        %1475 = vmatprep.subr.mxu0 0.0
        %1476 = vmatpush1.msra.mxu0 0.0
        %1477 = vmatprep.subr.mxu0 0.0
        %1478 = vmatpush1.msra.mxu0 0.0
        %1479 = vmatprep.subr.mxu0 0.0
        %1480 = vmatpush1.msra.mxu0 0.0
        %1481 = vmatprep.subr.mxu0 0.0
        %1482 = vmatpush1.msra.mxu0 0.0
        %1483 = vmatprep.subr.mxu0 0.0
        %1484 = vmatpush1.msra.mxu0 0.0
        %1485 = vmatprep.subr.mxu0 0.0
        %1486 = vmatpush1.msra.mxu0 0.0
        %1487 = vmatprep.subr.mxu0 0.0
        %1488 = vmatpush1.msra.mxu0 0.0
        %1489 = vmatprep.subr.mxu0 0.0
        %1490 = vmatpush1.msra.mxu0 0.0
        %1491 = vmatprep.subr.mxu0 0.0
        %1492 = vmatpush1.msra.mxu0 0.0
        %1493 = vmatprep.subr.mxu0 0.0
        %1494 = vmatpush1.msra.mxu0 0.0
        %1495 = vmatprep.subr.mxu0 0.0
        %1496 = vmatpush1.msra.mxu0 0.0
        %1497 = vmatprep.subr.mxu0 0.0
        %1498 = vmatpush1.msra.mxu0 0.0
        %1499 = vmatprep.mubr.f32.mxu0 0.0
        %v1500 = vand.u32 %v530, 4294901760
        %1501 = vmatmul.mubr.f32.gmra.mrb[0].mxu0 %v1500
        %v1502 = vpop.f32.mrb[0].mxu0
        %v1503 = vadd.f32 %v1428, %v1502
        %v1504 = vpop.f32.mrb[0].mxu0
        %1505 = vdwg.mxu0
        %v1506 = vld [vmem:[%s5] sm:$0xff]
        %v1507 = vld [vmem:[%s5 + $0x8] sm:$0xff]
        %v1508 = vld [vmem:[%s5 + $0x10] sm:$0xff]
        %v1509 = vld [vmem:[%s5 + $0x18] sm:$0xff]
        %1510 = vmatprep.subr.mxu0 0.0
        %v1511 = vand.u32 %v1506, 4294901760
        %1512 = vmatpush1.msra.mxu0 %v1511
        %1513 = vmatprep.subr.mxu0 0.0
        %v1514 = vand.u32 %v1507, 4294901760
        %1515 = vmatpush1.msra.mxu0 %v1514
        %1516 = vmatprep.subr.mxu0 0.0
        %v1517 = vand.u32 %v1508, 4294901760
        %1518 = vmatpush1.msra.mxu0 %v1517
        %1519 = vmatprep.subr.mxu0 0.0
        %v1520 = vand.u32 %v1509, 4294901760
        %1521 = vmatpush1.msra.mxu0 %v1520
        %1522 = vmatprep.subr.mxu0 0.0
        %1523 = vmatpush1.msra.mxu0 0.0
        %1524 = vmatprep.subr.mxu0 0.0
        %1525 = vmatpush1.msra.mxu0 0.0
        %1526 = vmatprep.subr.mxu0 0.0
        %1527 = vmatpush1.msra.mxu0 0.0
        %1528 = vmatprep.subr.mxu0 0.0
        %1529 = vmatpush1.msra.mxu0 0.0
        %1530 = vmatprep.subr.mxu0 0.0
        %1531 = vmatpush1.msra.mxu0 0.0
        %1532 = vmatprep.subr.mxu0 0.0
        %1533 = vmatpush1.msra.mxu0 0.0
        %1534 = vmatprep.subr.mxu0 0.0
        %1535 = vmatpush1.msra.mxu0 0.0
        %1536 = vmatprep.subr.mxu0 0.0
        %1537 = vmatpush1.msra.mxu0 0.0
        %1538 = vmatprep.subr.mxu0 0.0
        %1539 = vmatpush1.msra.mxu0 0.0
        %1540 = vmatprep.subr.mxu0 0.0
        %1541 = vmatpush1.msra.mxu0 0.0
        %1542 = vmatprep.subr.mxu0 0.0
        %1543 = vmatpush1.msra.mxu0 0.0
        %1544 = vmatprep.subr.mxu0 0.0
        %1545 = vmatpush1.msra.mxu0 0.0
        %1546 = vmatprep.subr.mxu0 0.0
        %1547 = vmatpush1.msra.mxu0 0.0
        %1548 = vmatprep.subr.mxu0 0.0
        %1549 = vmatpush1.msra.mxu0 0.0
        %1550 = vmatprep.subr.mxu0 0.0
        %1551 = vmatpush1.msra.mxu0 0.0
        %1552 = vmatprep.subr.mxu0 0.0
        %1553 = vmatpush1.msra.mxu0 0.0
        %1554 = vmatprep.subr.mxu0 0.0
        %1555 = vmatpush1.msra.mxu0 0.0
        %1556 = vmatprep.subr.mxu0 0.0
        %1557 = vmatpush1.msra.mxu0 0.0
        %1558 = vmatprep.subr.mxu0 0.0
        %1559 = vmatpush1.msra.mxu0 0.0
        %1560 = vmatprep.subr.mxu0 0.0
        %1561 = vmatpush1.msra.mxu0 0.0
        %1562 = vmatprep.subr.mxu0 0.0
        %1563 = vmatpush1.msra.mxu0 0.0
        %1564 = vmatprep.subr.mxu0 0.0
        %1565 = vmatpush1.msra.mxu0 0.0
        %1566 = vmatprep.subr.mxu0 0.0
        %1567 = vmatpush1.msra.mxu0 0.0
        %1568 = vmatprep.subr.mxu0 0.0
        %1569 = vmatpush1.msra.mxu0 0.0
        %1570 = vmatprep.subr.mxu0 0.0
        %1571 = vmatpush1.msra.mxu0 0.0
        %1572 = vmatprep.subr.mxu0 0.0
        %1573 = vmatpush1.msra.mxu0 0.0
        %1574 = vmatprep.subr.mxu0 0.0
        %1575 = vmatpush1.msra.mxu0 0.0
        %1576 = vmatprep.subr.mxu0 0.0
        %1577 = vmatpush1.msra.mxu0 0.0
        %1578 = vmatprep.mubr.f32.mxu0 0.0
        %v1579 = vand.u32 %v530, 4294901760
        %v1580 = vsub.f32 %v530, %v1579
        %v1581 = vand.u32 %v1580, 4294901760
        %v1582 = vsub.f32 %v1580, %v1581
        %v1583 = vand.u32 %v1582, 4294901760
        %1584 = vmatmul.mubr.f32.gmra.mrb[0].mxu0 %v1583
        %v1585 = vpop.f32.mrb[0].mxu0
        %v1586 = vadd.f32 0.0, %v1585
        %v1587 = vpop.f32.mrb[0].mxu0
        %1588 = vdwg.mxu0
        %1589 = vmatprep.subr.mxu0 0.0
        %v1590 = vand.u32 %v1506, 4294901760
        %v1591 = vsub.f32 %v1506, %v1590
        %v1592 = vand.u32 %v1591, 4294901760
        %v1593 = vsub.f32 %v1591, %v1592
        %v1594 = vand.u32 %v1593, 4294901760
        %1595 = vmatpush1.msra.mxu0 %v1594
        %1596 = vmatprep.subr.mxu0 0.0
        %v1597 = vand.u32 %v1507, 4294901760
        %v1598 = vsub.f32 %v1507, %v1597
        %v1599 = vand.u32 %v1598, 4294901760
        %v1600 = vsub.f32 %v1598, %v1599
        %v1601 = vand.u32 %v1600, 4294901760
        %1602 = vmatpush1.msra.mxu0 %v1601
        %1603 = vmatprep.subr.mxu0 0.0
        %v1604 = vand.u32 %v1508, 4294901760
        %v1605 = vsub.f32 %v1508, %v1604
        %v1606 = vand.u32 %v1605, 4294901760
        %v1607 = vsub.f32 %v1605, %v1606
        %v1608 = vand.u32 %v1607, 4294901760
        %1609 = vmatpush1.msra.mxu0 %v1608
        %1610 = vmatprep.subr.mxu0 0.0
        %v1611 = vand.u32 %v1509, 4294901760
        %v1612 = vsub.f32 %v1509, %v1611
        %v1613 = vand.u32 %v1612, 4294901760
        %v1614 = vsub.f32 %v1612, %v1613
        %v1615 = vand.u32 %v1614, 4294901760
        %1616 = vmatpush1.msra.mxu0 %v1615
        %1617 = vmatprep.subr.mxu0 0.0
        %1618 = vmatpush1.msra.mxu0 0.0
        %1619 = vmatprep.subr.mxu0 0.0
        %1620 = vmatpush1.msra.mxu0 0.0
        %1621 = vmatprep.subr.mxu0 0.0
        %1622 = vmatpush1.msra.mxu0 0.0
        %1623 = vmatprep.subr.mxu0 0.0
        %1624 = vmatpush1.msra.mxu0 0.0
        %1625 = vmatprep.subr.mxu0 0.0
        %1626 = vmatpush1.msra.mxu0 0.0
        %1627 = vmatprep.subr.mxu0 0.0
        %1628 = vmatpush1.msra.mxu0 0.0
        %1629 = vmatprep.subr.mxu0 0.0
        %1630 = vmatpush1.msra.mxu0 0.0
        %1631 = vmatprep.subr.mxu0 0.0
        %1632 = vmatpush1.msra.mxu0 0.0
        %1633 = vmatprep.subr.mxu0 0.0
        %1634 = vmatpush1.msra.mxu0 0.0
        %1635 = vmatprep.subr.mxu0 0.0
        %1636 = vmatpush1.msra.mxu0 0.0
        %1637 = vmatprep.subr.mxu0 0.0
        %1638 = vmatpush1.msra.mxu0 0.0
        %1639 = vmatprep.subr.mxu0 0.0
        %1640 = vmatpush1.msra.mxu0 0.0
        %1641 = vmatprep.subr.mxu0 0.0
        %1642 = vmatpush1.msra.mxu0 0.0
        %1643 = vmatprep.subr.mxu0 0.0
        %1644 = vmatpush1.msra.mxu0 0.0
        %1645 = vmatprep.subr.mxu0 0.0
        %1646 = vmatpush1.msra.mxu0 0.0
        %1647 = vmatprep.subr.mxu0 0.0
        %1648 = vmatpush1.msra.mxu0 0.0
        %1649 = vmatprep.subr.mxu0 0.0
        %1650 = vmatpush1.msra.mxu0 0.0
        %1651 = vmatprep.subr.mxu0 0.0
        %1652 = vmatpush1.msra.mxu0 0.0
        %1653 = vmatprep.subr.mxu0 0.0
        %1654 = vmatpush1.msra.mxu0 0.0
        %1655 = vmatprep.subr.mxu0 0.0
        %1656 = vmatpush1.msra.mxu0 0.0
        %1657 = vmatprep.subr.mxu0 0.0
        %1658 = vmatpush1.msra.mxu0 0.0
        %1659 = vmatprep.subr.mxu0 0.0
        %1660 = vmatpush1.msra.mxu0 0.0
        %1661 = vmatprep.subr.mxu0 0.0
        %1662 = vmatpush1.msra.mxu0 0.0
        %1663 = vmatprep.subr.mxu0 0.0
        %1664 = vmatpush1.msra.mxu0 0.0
        %1665 = vmatprep.subr.mxu0 0.0
        %1666 = vmatpush1.msra.mxu0 0.0
        %1667 = vmatprep.subr.mxu0 0.0
        %1668 = vmatpush1.msra.mxu0 0.0
        %1669 = vmatprep.subr.mxu0 0.0
        %1670 = vmatpush1.msra.mxu0 0.0
        %1671 = vmatprep.subr.mxu0 0.0
        %1672 = vmatpush1.msra.mxu0 0.0
        %1673 = vmatprep.mubr.f32.mxu0 0.0
        %v1674 = vand.u32 %v530, 4294901760
        %1675 = vmatmul.mubr.f32.gmra.mrb[0].mxu0 %v1674
        %v1676 = vpop.f32.mrb[0].mxu0
        %v1677 = vadd.f32 %v1586, %v1676
        %v1678 = vpop.f32.mrb[0].mxu0
        %1679 = vdwg.mxu0
        %1680 = vmatprep.subr.mxu0 0.0
        %v1681 = vand.u32 %v1506, 4294901760
        %v1682 = vsub.f32 %v1506, %v1681
        %1683 = vmatpush1.msra.mxu0 %v1682
        %1684 = vmatprep.subr.mxu0 0.0
        %v1685 = vand.u32 %v1507, 4294901760
        %v1686 = vsub.f32 %v1507, %v1685
        %1687 = vmatpush1.msra.mxu0 %v1686
        %1688 = vmatprep.subr.mxu0 0.0
        %v1689 = vand.u32 %v1508, 4294901760
        %v1690 = vsub.f32 %v1508, %v1689
        %1691 = vmatpush1.msra.mxu0 %v1690
        %1692 = vmatprep.subr.mxu0 0.0
        %v1693 = vand.u32 %v1509, 4294901760
        %v1694 = vsub.f32 %v1509, %v1693
        %1695 = vmatpush1.msra.mxu0 %v1694
        %1696 = vmatprep.subr.mxu0 0.0
        %1697 = vmatpush1.msra.mxu0 0.0
        %1698 = vmatprep.subr.mxu0 0.0
        %1699 = vmatpush1.msra.mxu0 0.0
        %1700 = vmatprep.subr.mxu0 0.0
        %1701 = vmatpush1.msra.mxu0 0.0
        %1702 = vmatprep.subr.mxu0 0.0
        %1703 = vmatpush1.msra.mxu0 0.0
        %1704 = vmatprep.subr.mxu0 0.0
        %1705 = vmatpush1.msra.mxu0 0.0
        %1706 = vmatprep.subr.mxu0 0.0
        %1707 = vmatpush1.msra.mxu0 0.0
        %1708 = vmatprep.subr.mxu0 0.0
        %1709 = vmatpush1.msra.mxu0 0.0
        %1710 = vmatprep.subr.mxu0 0.0
        %1711 = vmatpush1.msra.mxu0 0.0
        %1712 = vmatprep.subr.mxu0 0.0
        %1713 = vmatpush1.msra.mxu0 0.0
        %1714 = vmatprep.subr.mxu0 0.0
        %1715 = vmatpush1.msra.mxu0 0.0
        %1716 = vmatprep.subr.mxu0 0.0
        %1717 = vmatpush1.msra.mxu0 0.0
        %1718 = vmatprep.subr.mxu0 0.0
        %1719 = vmatpush1.msra.mxu0 0.0
        %1720 = vmatprep.subr.mxu0 0.0
        %1721 = vmatpush1.msra.mxu0 0.0
        %1722 = vmatprep.subr.mxu0 0.0
        %1723 = vmatpush1.msra.mxu0 0.0
        %1724 = vmatprep.subr.mxu0 0.0
        %1725 = vmatpush1.msra.mxu0 0.0
        %1726 = vmatprep.subr.mxu0 0.0
        %1727 = vmatpush1.msra.mxu0 0.0
        %1728 = vmatprep.subr.mxu0 0.0
        %1729 = vmatpush1.msra.mxu0 0.0
        %1730 = vmatprep.subr.mxu0 0.0
        %1731 = vmatpush1.msra.mxu0 0.0
        %1732 = vmatprep.subr.mxu0 0.0
        %1733 = vmatpush1.msra.mxu0 0.0
        %1734 = vmatprep.subr.mxu0 0.0
        %1735 = vmatpush1.msra.mxu0 0.0
        %1736 = vmatprep.subr.mxu0 0.0
        %1737 = vmatpush1.msra.mxu0 0.0
        %1738 = vmatprep.subr.mxu0 0.0
        %1739 = vmatpush1.msra.mxu0 0.0
        %1740 = vmatprep.subr.mxu0 0.0
        %1741 = vmatpush1.msra.mxu0 0.0
        %1742 = vmatprep.subr.mxu0 0.0
        %1743 = vmatpush1.msra.mxu0 0.0
        %1744 = vmatprep.subr.mxu0 0.0
        %1745 = vmatpush1.msra.mxu0 0.0
        %1746 = vmatprep.subr.mxu0 0.0
        %1747 = vmatpush1.msra.mxu0 0.0
        %1748 = vmatprep.subr.mxu0 0.0
        %1749 = vmatpush1.msra.mxu0 0.0
        %1750 = vmatprep.subr.mxu0 0.0
        %1751 = vmatpush1.msra.mxu0 0.0
        %1752 = vmatprep.mubr.f32.mxu0 0.0
        %v1753 = vand.u32 %v530, 4294901760
        %v1754 = vsub.f32 %v530, %v1753
        %1755 = vmatmul.mubr.f32.gmra.mrb[0].mxu0 %v1754
        %v1756 = vpop.f32.mrb[0].mxu0
        %v1757 = vadd.f32 %v1677, %v1756
        %v1758 = vpop.f32.mrb[0].mxu0
        %1759 = vdwg.mxu0
        %1760 = vmatprep.subr.mxu0 0.0
        %v1761 = vand.u32 %v1506, 4294901760
        %1762 = vmatpush1.msra.mxu0 %v1761
        %1763 = vmatprep.subr.mxu0 0.0
        %v1764 = vand.u32 %v1507, 4294901760
        %1765 = vmatpush1.msra.mxu0 %v1764
        %1766 = vmatprep.subr.mxu0 0.0
        %v1767 = vand.u32 %v1508, 4294901760
        %1768 = vmatpush1.msra.mxu0 %v1767
        %1769 = vmatprep.subr.mxu0 0.0
        %v1770 = vand.u32 %v1509, 4294901760
        %1771 = vmatpush1.msra.mxu0 %v1770
        %1772 = vmatprep.subr.mxu0 0.0
        %1773 = vmatpush1.msra.mxu0 0.0
        %1774 = vmatprep.subr.mxu0 0.0
        %1775 = vmatpush1.msra.mxu0 0.0
        %1776 = vmatprep.subr.mxu0 0.0
        %1777 = vmatpush1.msra.mxu0 0.0
        %1778 = vmatprep.subr.mxu0 0.0
        %1779 = vmatpush1.msra.mxu0 0.0
        %1780 = vmatprep.subr.mxu0 0.0
        %1781 = vmatpush1.msra.mxu0 0.0
        %1782 = vmatprep.subr.mxu0 0.0
        %1783 = vmatpush1.msra.mxu0 0.0
        %1784 = vmatprep.subr.mxu0 0.0
        %1785 = vmatpush1.msra.mxu0 0.0
        %1786 = vmatprep.subr.mxu0 0.0
        %1787 = vmatpush1.msra.mxu0 0.0
        %1788 = vmatprep.subr.mxu0 0.0
        %1789 = vmatpush1.msra.mxu0 0.0
        %1790 = vmatprep.subr.mxu0 0.0
        %1791 = vmatpush1.msra.mxu0 0.0
        %1792 = vmatprep.subr.mxu0 0.0
        %1793 = vmatpush1.msra.mxu0 0.0
        %1794 = vmatprep.subr.mxu0 0.0
        %1795 = vmatpush1.msra.mxu0 0.0
        %1796 = vmatprep.subr.mxu0 0.0
        %1797 = vmatpush1.msra.mxu0 0.0
        %1798 = vmatprep.subr.mxu0 0.0
        %1799 = vmatpush1.msra.mxu0 0.0
        %1800 = vmatprep.subr.mxu0 0.0
        %1801 = vmatpush1.msra.mxu0 0.0
        %1802 = vmatprep.subr.mxu0 0.0
        %1803 = vmatpush1.msra.mxu0 0.0
        %1804 = vmatprep.subr.mxu0 0.0
        %1805 = vmatpush1.msra.mxu0 0.0
        %1806 = vmatprep.subr.mxu0 0.0
        %1807 = vmatpush1.msra.mxu0 0.0
        %1808 = vmatprep.subr.mxu0 0.0
        %1809 = vmatpush1.msra.mxu0 0.0
        %1810 = vmatprep.subr.mxu0 0.0
        %1811 = vmatpush1.msra.mxu0 0.0
        %1812 = vmatprep.subr.mxu0 0.0
        %1813 = vmatpush1.msra.mxu0 0.0
        %1814 = vmatprep.subr.mxu0 0.0
        %1815 = vmatpush1.msra.mxu0 0.0
        %1816 = vmatprep.subr.mxu0 0.0
        %1817 = vmatpush1.msra.mxu0 0.0
        %1818 = vmatprep.subr.mxu0 0.0
        %1819 = vmatpush1.msra.mxu0 0.0
        %1820 = vmatprep.subr.mxu0 0.0
        %1821 = vmatpush1.msra.mxu0 0.0
        %1822 = vmatprep.subr.mxu0 0.0
        %1823 = vmatpush1.msra.mxu0 0.0
        %1824 = vmatprep.subr.mxu0 0.0
        %1825 = vmatpush1.msra.mxu0 0.0
        %1826 = vmatprep.subr.mxu0 0.0
        %1827 = vmatpush1.msra.mxu0 0.0
        %1828 = vmatprep.mubr.f32.mxu0 0.0
        %v1829 = vand.u32 %v530, 4294901760
        %v1830 = vsub.f32 %v530, %v1829
        %v1831 = vand.u32 %v1830, 4294901760
        %1832 = vmatmul.mubr.f32.gmra.mrb[0].mxu0 %v1831
        %v1833 = vpop.f32.mrb[0].mxu0
        %v1834 = vadd.f32 %v1757, %v1833
        %v1835 = vpop.f32.mrb[0].mxu0
        %1836 = vdwg.mxu0
        %1837 = vmatprep.subr.mxu0 0.0
        %v1838 = vand.u32 %v1506, 4294901760
        %v1839 = vsub.f32 %v1506, %v1838
        %v1840 = vand.u32 %v1839, 4294901760
        %1841 = vmatpush1.msra.mxu0 %v1840
        %1842 = vmatprep.subr.mxu0 0.0
        %v1843 = vand.u32 %v1507, 4294901760
        %v1844 = vsub.f32 %v1507, %v1843
        %v1845 = vand.u32 %v1844, 4294901760
        %1846 = vmatpush1.msra.mxu0 %v1845
        %1847 = vmatprep.subr.mxu0 0.0
        %v1848 = vand.u32 %v1508, 4294901760
        %v1849 = vsub.f32 %v1508, %v1848
        %v1850 = vand.u32 %v1849, 4294901760
        %1851 = vmatpush1.msra.mxu0 %v1850
        %1852 = vmatprep.subr.mxu0 0.0
        %v1853 = vand.u32 %v1509, 4294901760
        %v1854 = vsub.f32 %v1509, %v1853
        %v1855 = vand.u32 %v1854, 4294901760
        %1856 = vmatpush1.msra.mxu0 %v1855
        %1857 = vmatprep.subr.mxu0 0.0
        %1858 = vmatpush1.msra.mxu0 0.0
        %1859 = vmatprep.subr.mxu0 0.0
        %1860 = vmatpush1.msra.mxu0 0.0
        %1861 = vmatprep.subr.mxu0 0.0
        %1862 = vmatpush1.msra.mxu0 0.0
        %1863 = vmatprep.subr.mxu0 0.0
        %1864 = vmatpush1.msra.mxu0 0.0
        %1865 = vmatprep.subr.mxu0 0.0
        %1866 = vmatpush1.msra.mxu0 0.0
        %1867 = vmatprep.subr.mxu0 0.0
        %1868 = vmatpush1.msra.mxu0 0.0
        %1869 = vmatprep.subr.mxu0 0.0
        %1870 = vmatpush1.msra.mxu0 0.0
        %1871 = vmatprep.subr.mxu0 0.0
        %1872 = vmatpush1.msra.mxu0 0.0
        %1873 = vmatprep.subr.mxu0 0.0
        %1874 = vmatpush1.msra.mxu0 0.0
        %1875 = vmatprep.subr.mxu0 0.0
        %1876 = vmatpush1.msra.mxu0 0.0
        %1877 = vmatprep.subr.mxu0 0.0
        %1878 = vmatpush1.msra.mxu0 0.0
        %1879 = vmatprep.subr.mxu0 0.0
        %1880 = vmatpush1.msra.mxu0 0.0
        %1881 = vmatprep.subr.mxu0 0.0
        %1882 = vmatpush1.msra.mxu0 0.0
        %1883 = vmatprep.subr.mxu0 0.0
        %1884 = vmatpush1.msra.mxu0 0.0
        %1885 = vmatprep.subr.mxu0 0.0
        %1886 = vmatpush1.msra.mxu0 0.0
        %1887 = vmatprep.subr.mxu0 0.0
        %1888 = vmatpush1.msra.mxu0 0.0
        %1889 = vmatprep.subr.mxu0 0.0
        %1890 = vmatpush1.msra.mxu0 0.0
        %1891 = vmatprep.subr.mxu0 0.0
        %1892 = vmatpush1.msra.mxu0 0.0
        %1893 = vmatprep.subr.mxu0 0.0
        %1894 = vmatpush1.msra.mxu0 0.0
        %1895 = vmatprep.subr.mxu0 0.0
        %1896 = vmatpush1.msra.mxu0 0.0
        %1897 = vmatprep.subr.mxu0 0.0
        %1898 = vmatpush1.msra.mxu0 0.0
        %1899 = vmatprep.subr.mxu0 0.0
        %1900 = vmatpush1.msra.mxu0 0.0
        %1901 = vmatprep.subr.mxu0 0.0
        %1902 = vmatpush1.msra.mxu0 0.0
        %1903 = vmatprep.subr.mxu0 0.0
        %1904 = vmatpush1.msra.mxu0 0.0
        %1905 = vmatprep.subr.mxu0 0.0
        %1906 = vmatpush1.msra.mxu0 0.0
        %1907 = vmatprep.subr.mxu0 0.0
        %1908 = vmatpush1.msra.mxu0 0.0
        %1909 = vmatprep.subr.mxu0 0.0
        %1910 = vmatpush1.msra.mxu0 0.0
        %1911 = vmatprep.subr.mxu0 0.0
        %1912 = vmatpush1.msra.mxu0 0.0
        %1913 = vmatprep.mubr.f32.mxu0 0.0
        %v1914 = vand.u32 %v530, 4294901760
        %1915 = vmatmul.mubr.f32.gmra.mrb[0].mxu0 %v1914
        %v1916 = vpop.f32.mrb[0].mxu0
        %v1917 = vadd.f32 %v1834, %v1916
        %v1918 = vpop.f32.mrb[0].mxu0
        %1919 = vdwg.mxu0
        %1920 = vmatprep.subr.mxu0 0.0
        %v1921 = vand.u32 %v1506, 4294901760
        %1922 = vmatpush1.msra.mxu0 %v1921
        %1923 = vmatprep.subr.mxu0 0.0
        %v1924 = vand.u32 %v1507, 4294901760
        %1925 = vmatpush1.msra.mxu0 %v1924
        %1926 = vmatprep.subr.mxu0 0.0
        %v1927 = vand.u32 %v1508, 4294901760
        %1928 = vmatpush1.msra.mxu0 %v1927
        %1929 = vmatprep.subr.mxu0 0.0
        %v1930 = vand.u32 %v1509, 4294901760
        %1931 = vmatpush1.msra.mxu0 %v1930
        %1932 = vmatprep.subr.mxu0 0.0
        %1933 = vmatpush1.msra.mxu0 0.0
        %1934 = vmatprep.subr.mxu0 0.0
        %1935 = vmatpush1.msra.mxu0 0.0
        %1936 = vmatprep.subr.mxu0 0.0
        %1937 = vmatpush1.msra.mxu0 0.0
        %1938 = vmatprep.subr.mxu0 0.0
        %1939 = vmatpush1.msra.mxu0 0.0
        %1940 = vmatprep.subr.mxu0 0.0
        %1941 = vmatpush1.msra.mxu0 0.0
        %1942 = vmatprep.subr.mxu0 0.0
        %1943 = vmatpush1.msra.mxu0 0.0
        %1944 = vmatprep.subr.mxu0 0.0
        %1945 = vmatpush1.msra.mxu0 0.0
        %1946 = vmatprep.subr.mxu0 0.0
        %1947 = vmatpush1.msra.mxu0 0.0
        %1948 = vmatprep.subr.mxu0 0.0
        %1949 = vmatpush1.msra.mxu0 0.0
        %1950 = vmatprep.subr.mxu0 0.0
        %1951 = vmatpush1.msra.mxu0 0.0
        %1952 = vmatprep.subr.mxu0 0.0
        %1953 = vmatpush1.msra.mxu0 0.0
        %1954 = vmatprep.subr.mxu0 0.0
        %1955 = vmatpush1.msra.mxu0 0.0
        %1956 = vmatprep.subr.mxu0 0.0
        %1957 = vmatpush1.msra.mxu0 0.0
        %1958 = vmatprep.subr.mxu0 0.0
        %1959 = vmatpush1.msra.mxu0 0.0
        %1960 = vmatprep.subr.mxu0 0.0
        %1961 = vmatpush1.msra.mxu0 0.0
        %1962 = vmatprep.subr.mxu0 0.0
        %1963 = vmatpush1.msra.mxu0 0.0
        %1964 = vmatprep.subr.mxu0 0.0
        %1965 = vmatpush1.msra.mxu0 0.0
        %1966 = vmatprep.subr.mxu0 0.0
        %1967 = vmatpush1.msra.mxu0 0.0
        %1968 = vmatprep.subr.mxu0 0.0
        %1969 = vmatpush1.msra.mxu0 0.0
        %1970 = vmatprep.subr.mxu0 0.0
        %1971 = vmatpush1.msra.mxu0 0.0
        %1972 = vmatprep.subr.mxu0 0.0
        %1973 = vmatpush1.msra.mxu0 0.0
        %1974 = vmatprep.subr.mxu0 0.0
        %1975 = vmatpush1.msra.mxu0 0.0
        %1976 = vmatprep.subr.mxu0 0.0
        %1977 = vmatpush1.msra.mxu0 0.0
        %1978 = vmatprep.subr.mxu0 0.0
        %1979 = vmatpush1.msra.mxu0 0.0
        %1980 = vmatprep.subr.mxu0 0.0
        %1981 = vmatpush1.msra.mxu0 0.0
        %1982 = vmatprep.subr.mxu0 0.0
        %1983 = vmatpush1.msra.mxu0 0.0
        %1984 = vmatprep.subr.mxu0 0.0
        %1985 = vmatpush1.msra.mxu0 0.0
        %1986 = vmatprep.subr.mxu0 0.0
        %1987 = vmatpush1.msra.mxu0 0.0
        %1988 = vmatprep.mubr.f32.mxu0 0.0
        %v1989 = vand.u32 %v530, 4294901760
        %1990 = vmatmul.mubr.f32.gmra.mrb[0].mxu0 %v1989
        %v1991 = vpop.f32.mrb[0].mxu0
        %v1992 = vadd.f32 %v1917, %v1991
        %v1993 = vpop.f32.mrb[0].mxu0
        %1994 = vdwg.mxu0
        %vm1995 = vcmask 64512
        %v1997 = vsel %vm1995, %v1014, 0
        %v2000 = vsel %vm1995, %v1503, 0
        %2002 = vmatprep.subr.mxu0 0.0
        %v2003 = vand.u32 %v2000, 4294901760
        %2004 = vmatpush1.xpose.msra.mxu0 %v2003
        %2005 = vmatprep.subr.mxu0 0.0
        %2006 = vmatpush1.xpose.msra.mxu0 0.0
        %2007 = vmatprep.subr.mxu0 0.0
        %2008 = vmatpush1.xpose.msra.mxu0 0.0
        %2009 = vmatprep.subr.mxu0 0.0
        %2010 = vmatpush1.xpose.msra.mxu0 0.0
        %2011 = vmatprep.subr.mxu0 0.0
        %2012 = vmatpush1.xpose.msra.mxu0 0.0
        %2013 = vmatprep.subr.mxu0 0.0
        %2014 = vmatpush1.xpose.msra.mxu0 0.0
        %2015 = vmatprep.subr.mxu0 0.0
        %2016 = vmatpush1.xpose.msra.mxu0 0.0
        %2017 = vmatprep.subr.mxu0 0.0
        %2018 = vmatpush1.xpose.msra.mxu0 0.0
        %2019 = vmatprep.subr.mxu0 0.0
        %2020 = vmatpush1.xpose.msra.mxu0 0.0
        %2021 = vmatprep.subr.mxu0 0.0
        %2022 = vmatpush1.xpose.msra.mxu0 0.0
        %2023 = vmatprep.subr.mxu0 0.0
        %2024 = vmatpush1.xpose.msra.mxu0 0.0
        %2025 = vmatprep.subr.mxu0 0.0
        %2026 = vmatpush1.xpose.msra.mxu0 0.0
        %2027 = vmatprep.subr.mxu0 0.0
        %2028 = vmatpush1.xpose.msra.mxu0 0.0
        %2029 = vmatprep.subr.mxu0 0.0
        %2030 = vmatpush1.xpose.msra.mxu0 0.0
        %2031 = vmatprep.subr.mxu0 0.0
        %2032 = vmatpush1.xpose.msra.mxu0 0.0
        %2033 = vmatprep.subr.mxu0 0.0
        %2034 = vmatpush1.xpose.msra.mxu0 0.0
        %2035 = vmatprep.subr.mxu0 0.0
        %2036 = vmatpush1.xpose.msra.mxu0 0.0
        %2037 = vmatprep.subr.mxu0 0.0
        %2038 = vmatpush1.xpose.msra.mxu0 0.0
        %2039 = vmatprep.subr.mxu0 0.0
        %2040 = vmatpush1.xpose.msra.mxu0 0.0
        %2041 = vmatprep.subr.mxu0 0.0
        %2042 = vmatpush1.xpose.msra.mxu0 0.0
        %2043 = vmatprep.subr.mxu0 0.0
        %2044 = vmatpush1.xpose.msra.mxu0 0.0
        %2045 = vmatprep.subr.mxu0 0.0
        %2046 = vmatpush1.xpose.msra.mxu0 0.0
        %2047 = vmatprep.subr.mxu0 0.0
        %2048 = vmatpush1.xpose.msra.mxu0 0.0
        %2049 = vmatprep.subr.mxu0 0.0
        %2050 = vmatpush1.xpose.msra.mxu0 0.0
        %2051 = vmatprep.subr.mxu0 0.0
        %2052 = vmatpush1.xpose.msra.mxu0 0.0
        %2053 = vmatprep.subr.mxu0 0.0
        %2054 = vmatpush1.xpose.msra.mxu0 0.0
        %2055 = vmatprep.subr.mxu0 0.0
        %2056 = vmatpush1.xpose.msra.mxu0 0.0
        %2057 = vmatprep.subr.mxu0 0.0
        %2058 = vmatpush1.xpose.msra.mxu0 0.0
        %2059 = vmatprep.subr.mxu0 0.0
        %2060 = vmatpush1.xpose.msra.mxu0 0.0
        %2061 = vmatprep.subr.mxu0 0.0
        %2062 = vmatpush1.xpose.msra.mxu0 0.0
        %2063 = vmatprep.subr.mxu0 0.0
        %2064 = vmatpush1.xpose.msra.mxu0 0.0
        %2065 = vmatprep.subr.mxu0 0.0
        %2066 = vmatpush1.xpose.msra.mxu0 0.0
        %2067 = vmatprep.mubr.f32.mxu0 0.0
        %v2068 = vand.u32 %v1997, 4294901760
        %v2069 = vsub.f32 %v1997, %v2068
        %v2070 = vand.u32 %v2069, 4294901760
        %v2071 = vsub.f32 %v2069, %v2070
        %v2072 = vand.u32 %v2071, 4294901760
        %2073 = vmatmul.mubr.f32.gmra.mrb[0].mxu0 %v2072
        %v2074 = vpop.f32.mrb[0].mxu0
        %v2075 = vadd.f32 0.0, %v2074
        %v2076 = vpop.f32.mrb[0].mxu0
        %2077 = vdwg.mxu0
        %2078 = vmatprep.subr.mxu0 0.0
        %v2079 = vand.u32 %v2000, 4294901760
        %v2080 = vsub.f32 %v2000, %v2079
        %v2081 = vand.u32 %v2080, 4294901760
        %v2082 = vsub.f32 %v2080, %v2081
        %v2083 = vand.u32 %v2082, 4294901760
        %2084 = vmatpush1.xpose.msra.mxu0 %v2083
        %2085 = vmatprep.subr.mxu0 0.0
        %2086 = vmatpush1.xpose.msra.mxu0 0.0
        %2087 = vmatprep.subr.mxu0 0.0
        %2088 = vmatpush1.xpose.msra.mxu0 0.0
        %2089 = vmatprep.subr.mxu0 0.0
        %2090 = vmatpush1.xpose.msra.mxu0 0.0
        %2091 = vmatprep.subr.mxu0 0.0
        %2092 = vmatpush1.xpose.msra.mxu0 0.0
        %2093 = vmatprep.subr.mxu0 0.0
        %2094 = vmatpush1.xpose.msra.mxu0 0.0
        %2095 = vmatprep.subr.mxu0 0.0
        %2096 = vmatpush1.xpose.msra.mxu0 0.0
        %2097 = vmatprep.subr.mxu0 0.0
        %2098 = vmatpush1.xpose.msra.mxu0 0.0
        %2099 = vmatprep.subr.mxu0 0.0
        %2100 = vmatpush1.xpose.msra.mxu0 0.0
        %2101 = vmatprep.subr.mxu0 0.0
        %2102 = vmatpush1.xpose.msra.mxu0 0.0
        %2103 = vmatprep.subr.mxu0 0.0
        %2104 = vmatpush1.xpose.msra.mxu0 0.0
        %2105 = vmatprep.subr.mxu0 0.0
        %2106 = vmatpush1.xpose.msra.mxu0 0.0
        %2107 = vmatprep.subr.mxu0 0.0
        %2108 = vmatpush1.xpose.msra.mxu0 0.0
        %2109 = vmatprep.subr.mxu0 0.0
        %2110 = vmatpush1.xpose.msra.mxu0 0.0
        %2111 = vmatprep.subr.mxu0 0.0
        %2112 = vmatpush1.xpose.msra.mxu0 0.0
        %2113 = vmatprep.subr.mxu0 0.0
        %2114 = vmatpush1.xpose.msra.mxu0 0.0
        %2115 = vmatprep.subr.mxu0 0.0
        %2116 = vmatpush1.xpose.msra.mxu0 0.0
        %2117 = vmatprep.subr.mxu0 0.0
        %2118 = vmatpush1.xpose.msra.mxu0 0.0
        %2119 = vmatprep.subr.mxu0 0.0
        %2120 = vmatpush1.xpose.msra.mxu0 0.0
        %2121 = vmatprep.subr.mxu0 0.0
        %2122 = vmatpush1.xpose.msra.mxu0 0.0
        %2123 = vmatprep.subr.mxu0 0.0
        %2124 = vmatpush1.xpose.msra.mxu0 0.0
        %2125 = vmatprep.subr.mxu0 0.0
        %2126 = vmatpush1.xpose.msra.mxu0 0.0
        %2127 = vmatprep.subr.mxu0 0.0
        %2128 = vmatpush1.xpose.msra.mxu0 0.0
        %2129 = vmatprep.subr.mxu0 0.0
        %2130 = vmatpush1.xpose.msra.mxu0 0.0
        %2131 = vmatprep.subr.mxu0 0.0
        %2132 = vmatpush1.xpose.msra.mxu0 0.0
        %2133 = vmatprep.subr.mxu0 0.0
        %2134 = vmatpush1.xpose.msra.mxu0 0.0
        %2135 = vmatprep.subr.mxu0 0.0
        %2136 = vmatpush1.xpose.msra.mxu0 0.0
        %2137 = vmatprep.subr.mxu0 0.0
        %2138 = vmatpush1.xpose.msra.mxu0 0.0
        %2139 = vmatprep.subr.mxu0 0.0
        %2140 = vmatpush1.xpose.msra.mxu0 0.0
        %2141 = vmatprep.subr.mxu0 0.0
        %2142 = vmatpush1.xpose.msra.mxu0 0.0
        %2143 = vmatprep.subr.mxu0 0.0
        %2144 = vmatpush1.xpose.msra.mxu0 0.0
        %2145 = vmatprep.subr.mxu0 0.0
        %2146 = vmatpush1.xpose.msra.mxu0 0.0
        %2147 = vmatprep.mubr.f32.mxu0 0.0
        %v2148 = vand.u32 %v1997, 4294901760
        %2149 = vmatmul.mubr.f32.gmra.mrb[0].mxu0 %v2148
        %v2150 = vpop.f32.mrb[0].mxu0
        %v2151 = vadd.f32 %v2075, %v2150
        %v2152 = vpop.f32.mrb[0].mxu0
        %2153 = vdwg.mxu0
        %2154 = vmatprep.subr.mxu0 0.0
        %v2155 = vand.u32 %v2000, 4294901760
        %v2156 = vsub.f32 %v2000, %v2155
        %2157 = vmatpush1.xpose.msra.mxu0 %v2156
        %2158 = vmatprep.subr.mxu0 0.0
        %2159 = vmatpush1.xpose.msra.mxu0 0.0
        %2160 = vmatprep.subr.mxu0 0.0
        %2161 = vmatpush1.xpose.msra.mxu0 0.0
        %2162 = vmatprep.subr.mxu0 0.0
        %2163 = vmatpush1.xpose.msra.mxu0 0.0
        %2164 = vmatprep.subr.mxu0 0.0
        %2165 = vmatpush1.xpose.msra.mxu0 0.0
        %2166 = vmatprep.subr.mxu0 0.0
        %2167 = vmatpush1.xpose.msra.mxu0 0.0
        %2168 = vmatprep.subr.mxu0 0.0
        %2169 = vmatpush1.xpose.msra.mxu0 0.0
        %2170 = vmatprep.subr.mxu0 0.0
        %2171 = vmatpush1.xpose.msra.mxu0 0.0
        %2172 = vmatprep.subr.mxu0 0.0
        %2173 = vmatpush1.xpose.msra.mxu0 0.0
        %2174 = vmatprep.subr.mxu0 0.0
        %2175 = vmatpush1.xpose.msra.mxu0 0.0
        %2176 = vmatprep.subr.mxu0 0.0
        %2177 = vmatpush1.xpose.msra.mxu0 0.0
        %2178 = vmatprep.subr.mxu0 0.0
        %2179 = vmatpush1.xpose.msra.mxu0 0.0
        %2180 = vmatprep.subr.mxu0 0.0
        %2181 = vmatpush1.xpose.msra.mxu0 0.0
        %2182 = vmatprep.subr.mxu0 0.0
        %2183 = vmatpush1.xpose.msra.mxu0 0.0
        %2184 = vmatprep.subr.mxu0 0.0
        %2185 = vmatpush1.xpose.msra.mxu0 0.0
        %2186 = vmatprep.subr.mxu0 0.0
        %2187 = vmatpush1.xpose.msra.mxu0 0.0
        %2188 = vmatprep.subr.mxu0 0.0
        %2189 = vmatpush1.xpose.msra.mxu0 0.0
        %2190 = vmatprep.subr.mxu0 0.0
        %2191 = vmatpush1.xpose.msra.mxu0 0.0
        %2192 = vmatprep.subr.mxu0 0.0
        %2193 = vmatpush1.xpose.msra.mxu0 0.0
        %2194 = vmatprep.subr.mxu0 0.0
        %2195 = vmatpush1.xpose.msra.mxu0 0.0
        %2196 = vmatprep.subr.mxu0 0.0
        %2197 = vmatpush1.xpose.msra.mxu0 0.0
        %2198 = vmatprep.subr.mxu0 0.0
        %2199 = vmatpush1.xpose.msra.mxu0 0.0
        %2200 = vmatprep.subr.mxu0 0.0
        %2201 = vmatpush1.xpose.msra.mxu0 0.0
        %2202 = vmatprep.subr.mxu0 0.0
        %2203 = vmatpush1.xpose.msra.mxu0 0.0
        %2204 = vmatprep.subr.mxu0 0.0
        %2205 = vmatpush1.xpose.msra.mxu0 0.0
        %2206 = vmatprep.subr.mxu0 0.0
        %2207 = vmatpush1.xpose.msra.mxu0 0.0
        %2208 = vmatprep.subr.mxu0 0.0
        %2209 = vmatpush1.xpose.msra.mxu0 0.0
        %2210 = vmatprep.subr.mxu0 0.0
        %2211 = vmatpush1.xpose.msra.mxu0 0.0
        %2212 = vmatprep.subr.mxu0 0.0
        %2213 = vmatpush1.xpose.msra.mxu0 0.0
        %2214 = vmatprep.subr.mxu0 0.0
        %2215 = vmatpush1.xpose.msra.mxu0 0.0
        %2216 = vmatprep.subr.mxu0 0.0
        %2217 = vmatpush1.xpose.msra.mxu0 0.0
        %2218 = vmatprep.subr.mxu0 0.0
        %2219 = vmatpush1.xpose.msra.mxu0 0.0
        %2220 = vmatprep.mubr.f32.mxu0 0.0
        %v2221 = vand.u32 %v1997, 4294901760
        %v2222 = vsub.f32 %v1997, %v2221
        %2223 = vmatmul.mubr.f32.gmra.mrb[0].mxu0 %v2222
        %v2224 = vpop.f32.mrb[0].mxu0
        %v2225 = vadd.f32 %v2151, %v2224
        %v2226 = vpop.f32.mrb[0].mxu0
        %2227 = vdwg.mxu0
        %2228 = vmatprep.subr.mxu0 0.0
        %v2229 = vand.u32 %v2000, 4294901760
        %2230 = vmatpush1.xpose.msra.mxu0 %v2229
        %2231 = vmatprep.subr.mxu0 0.0
        %2232 = vmatpush1.xpose.msra.mxu0 0.0
        %2233 = vmatprep.subr.mxu0 0.0
        %2234 = vmatpush1.xpose.msra.mxu0 0.0
        %2235 = vmatprep.subr.mxu0 0.0
        %2236 = vmatpush1.xpose.msra.mxu0 0.0
        %2237 = vmatprep.subr.mxu0 0.0
        %2238 = vmatpush1.xpose.msra.mxu0 0.0
        %2239 = vmatprep.subr.mxu0 0.0
        %2240 = vmatpush1.xpose.msra.mxu0 0.0
        %2241 = vmatprep.subr.mxu0 0.0
        %2242 = vmatpush1.xpose.msra.mxu0 0.0
        %2243 = vmatprep.subr.mxu0 0.0
        %2244 = vmatpush1.xpose.msra.mxu0 0.0
        %2245 = vmatprep.subr.mxu0 0.0
        %2246 = vmatpush1.xpose.msra.mxu0 0.0
        %2247 = vmatprep.subr.mxu0 0.0
        %2248 = vmatpush1.xpose.msra.mxu0 0.0
        %2249 = vmatprep.subr.mxu0 0.0
        %2250 = vmatpush1.xpose.msra.mxu0 0.0
        %2251 = vmatprep.subr.mxu0 0.0
        %2252 = vmatpush1.xpose.msra.mxu0 0.0
        %2253 = vmatprep.subr.mxu0 0.0
        %2254 = vmatpush1.xpose.msra.mxu0 0.0
        %2255 = vmatprep.subr.mxu0 0.0
        %2256 = vmatpush1.xpose.msra.mxu0 0.0
        %2257 = vmatprep.subr.mxu0 0.0
        %2258 = vmatpush1.xpose.msra.mxu0 0.0
        %2259 = vmatprep.subr.mxu0 0.0
        %2260 = vmatpush1.xpose.msra.mxu0 0.0
        %2261 = vmatprep.subr.mxu0 0.0
        %2262 = vmatpush1.xpose.msra.mxu0 0.0
        %2263 = vmatprep.subr.mxu0 0.0
        %2264 = vmatpush1.xpose.msra.mxu0 0.0
        %2265 = vmatprep.subr.mxu0 0.0
        %2266 = vmatpush1.xpose.msra.mxu0 0.0
        %2267 = vmatprep.subr.mxu0 0.0
        %2268 = vmatpush1.xpose.msra.mxu0 0.0
        %2269 = vmatprep.subr.mxu0 0.0
        %2270 = vmatpush1.xpose.msra.mxu0 0.0
        %2271 = vmatprep.subr.mxu0 0.0
        %2272 = vmatpush1.xpose.msra.mxu0 0.0
        %2273 = vmatprep.subr.mxu0 0.0
        %2274 = vmatpush1.xpose.msra.mxu0 0.0
        %2275 = vmatprep.subr.mxu0 0.0
        %2276 = vmatpush1.xpose.msra.mxu0 0.0
        %2277 = vmatprep.subr.mxu0 0.0
        %2278 = vmatpush1.xpose.msra.mxu0 0.0
        %2279 = vmatprep.subr.mxu0 0.0
        %2280 = vmatpush1.xpose.msra.mxu0 0.0
        %2281 = vmatprep.subr.mxu0 0.0
        %2282 = vmatpush1.xpose.msra.mxu0 0.0
        %2283 = vmatprep.subr.mxu0 0.0
        %2284 = vmatpush1.xpose.msra.mxu0 0.0
        %2285 = vmatprep.subr.mxu0 0.0
        %2286 = vmatpush1.xpose.msra.mxu0 0.0
        %2287 = vmatprep.subr.mxu0 0.0
        %2288 = vmatpush1.xpose.msra.mxu0 0.0
        %2289 = vmatprep.subr.mxu0 0.0
        %2290 = vmatpush1.xpose.msra.mxu0 0.0
        %2291 = vmatprep.subr.mxu0 0.0
        %2292 = vmatpush1.xpose.msra.mxu0 0.0
        %2293 = vmatprep.mubr.f32.mxu0 0.0
        %v2294 = vand.u32 %v1997, 4294901760
        %v2295 = vsub.f32 %v1997, %v2294
        %v2296 = vand.u32 %v2295, 4294901760
        %2297 = vmatmul.mubr.f32.gmra.mrb[0].mxu0 %v2296
        %v2298 = vpop.f32.mrb[0].mxu0
        %v2299 = vadd.f32 %v2225, %v2298
        %v2300 = vpop.f32.mrb[0].mxu0
        %2301 = vdwg.mxu0
        %2302 = vmatprep.subr.mxu0 0.0
        %v2303 = vand.u32 %v2000, 4294901760
        %v2304 = vsub.f32 %v2000, %v2303
        %v2305 = vand.u32 %v2304, 4294901760
        %2306 = vmatpush1.xpose.msra.mxu0 %v2305
        %2307 = vmatprep.subr.mxu0 0.0
        %2308 = vmatpush1.xpose.msra.mxu0 0.0
        %2309 = vmatprep.subr.mxu0 0.0
        %2310 = vmatpush1.xpose.msra.mxu0 0.0
        %2311 = vmatprep.subr.mxu0 0.0
        %2312 = vmatpush1.xpose.msra.mxu0 0.0
        %2313 = vmatprep.subr.mxu0 0.0
        %2314 = vmatpush1.xpose.msra.mxu0 0.0
        %2315 = vmatprep.subr.mxu0 0.0
        %2316 = vmatpush1.xpose.msra.mxu0 0.0
        %2317 = vmatprep.subr.mxu0 0.0
        %2318 = vmatpush1.xpose.msra.mxu0 0.0
        %2319 = vmatprep.subr.mxu0 0.0
        %2320 = vmatpush1.xpose.msra.mxu0 0.0
        %2321 = vmatprep.subr.mxu0 0.0
        %2322 = vmatpush1.xpose.msra.mxu0 0.0
        %2323 = vmatprep.subr.mxu0 0.0
        %2324 = vmatpush1.xpose.msra.mxu0 0.0
        %2325 = vmatprep.subr.mxu0 0.0
        %2326 = vmatpush1.xpose.msra.mxu0 0.0
        %2327 = vmatprep.subr.mxu0 0.0
        %2328 = vmatpush1.xpose.msra.mxu0 0.0
        %2329 = vmatprep.subr.mxu0 0.0
        %2330 = vmatpush1.xpose.msra.mxu0 0.0
        %2331 = vmatprep.subr.mxu0 0.0
        %2332 = vmatpush1.xpose.msra.mxu0 0.0
        %2333 = vmatprep.subr.mxu0 0.0
        %2334 = vmatpush1.xpose.msra.mxu0 0.0
        %2335 = vmatprep.subr.mxu0 0.0
        %2336 = vmatpush1.xpose.msra.mxu0 0.0
        %2337 = vmatprep.subr.mxu0 0.0
        %2338 = vmatpush1.xpose.msra.mxu0 0.0
        %2339 = vmatprep.subr.mxu0 0.0
        %2340 = vmatpush1.xpose.msra.mxu0 0.0
        %2341 = vmatprep.subr.mxu0 0.0
        %2342 = vmatpush1.xpose.msra.mxu0 0.0
        %2343 = vmatprep.subr.mxu0 0.0
        %2344 = vmatpush1.xpose.msra.mxu0 0.0
        %2345 = vmatprep.subr.mxu0 0.0
        %2346 = vmatpush1.xpose.msra.mxu0 0.0
        %2347 = vmatprep.subr.mxu0 0.0
        %2348 = vmatpush1.xpose.msra.mxu0 0.0
        %2349 = vmatprep.subr.mxu0 0.0
        %2350 = vmatpush1.xpose.msra.mxu0 0.0
        %2351 = vmatprep.subr.mxu0 0.0
        %2352 = vmatpush1.xpose.msra.mxu0 0.0
        %2353 = vmatprep.subr.mxu0 0.0
        %2354 = vmatpush1.xpose.msra.mxu0 0.0
        %2355 = vmatprep.subr.mxu0 0.0
        %2356 = vmatpush1.xpose.msra.mxu0 0.0
        %2357 = vmatprep.subr.mxu0 0.0
        %2358 = vmatpush1.xpose.msra.mxu0 0.0
        %2359 = vmatprep.subr.mxu0 0.0
        %2360 = vmatpush1.xpose.msra.mxu0 0.0
        %2361 = vmatprep.subr.mxu0 0.0
        %2362 = vmatpush1.xpose.msra.mxu0 0.0
        %2363 = vmatprep.subr.mxu0 0.0
        %2364 = vmatpush1.xpose.msra.mxu0 0.0
        %2365 = vmatprep.subr.mxu0 0.0
        %2366 = vmatpush1.xpose.msra.mxu0 0.0
        %2367 = vmatprep.subr.mxu0 0.0
        %2368 = vmatpush1.xpose.msra.mxu0 0.0
        %2369 = vmatprep.mubr.f32.mxu0 0.0
        %v2370 = vand.u32 %v1997, 4294901760
        %2371 = vmatmul.mubr.f32.gmra.mrb[0].mxu0 %v2370
        %v2372 = vpop.f32.mrb[0].mxu0
        %v2373 = vadd.f32 %v2299, %v2372
        %v2374 = vpop.f32.mrb[0].mxu0
        %2375 = vdwg.mxu0
        %2376 = vmatprep.subr.mxu0 0.0
        %v2377 = vand.u32 %v2000, 4294901760
        %2378 = vmatpush1.xpose.msra.mxu0 %v2377
        %2379 = vmatprep.subr.mxu0 0.0
        %2380 = vmatpush1.xpose.msra.mxu0 0.0
        %2381 = vmatprep.subr.mxu0 0.0
        %2382 = vmatpush1.xpose.msra.mxu0 0.0
        %2383 = vmatprep.subr.mxu0 0.0
        %2384 = vmatpush1.xpose.msra.mxu0 0.0
        %2385 = vmatprep.subr.mxu0 0.0
        %2386 = vmatpush1.xpose.msra.mxu0 0.0
        %2387 = vmatprep.subr.mxu0 0.0
        %2388 = vmatpush1.xpose.msra.mxu0 0.0
        %2389 = vmatprep.subr.mxu0 0.0
        %2390 = vmatpush1.xpose.msra.mxu0 0.0
        %2391 = vmatprep.subr.mxu0 0.0
        %2392 = vmatpush1.xpose.msra.mxu0 0.0
        %2393 = vmatprep.subr.mxu0 0.0
        %2394 = vmatpush1.xpose.msra.mxu0 0.0
        %2395 = vmatprep.subr.mxu0 0.0
        %2396 = vmatpush1.xpose.msra.mxu0 0.0
        %2397 = vmatprep.subr.mxu0 0.0
        %2398 = vmatpush1.xpose.msra.mxu0 0.0
        %2399 = vmatprep.subr.mxu0 0.0
        %2400 = vmatpush1.xpose.msra.mxu0 0.0
        %2401 = vmatprep.subr.mxu0 0.0
        %2402 = vmatpush1.xpose.msra.mxu0 0.0
        %2403 = vmatprep.subr.mxu0 0.0
        %2404 = vmatpush1.xpose.msra.mxu0 0.0
        %2405 = vmatprep.subr.mxu0 0.0
        %2406 = vmatpush1.xpose.msra.mxu0 0.0
        %2407 = vmatprep.subr.mxu0 0.0
        %2408 = vmatpush1.xpose.msra.mxu0 0.0
        %2409 = vmatprep.subr.mxu0 0.0
        %2410 = vmatpush1.xpose.msra.mxu0 0.0
        %2411 = vmatprep.subr.mxu0 0.0
        %2412 = vmatpush1.xpose.msra.mxu0 0.0
        %2413 = vmatprep.subr.mxu0 0.0
        %2414 = vmatpush1.xpose.msra.mxu0 0.0
        %2415 = vmatprep.subr.mxu0 0.0
        %2416 = vmatpush1.xpose.msra.mxu0 0.0
        %2417 = vmatprep.subr.mxu0 0.0
        %2418 = vmatpush1.xpose.msra.mxu0 0.0
        %2419 = vmatprep.subr.mxu0 0.0
        %2420 = vmatpush1.xpose.msra.mxu0 0.0
        %2421 = vmatprep.subr.mxu0 0.0
        %2422 = vmatpush1.xpose.msra.mxu0 0.0
        %2423 = vmatprep.subr.mxu0 0.0
        %2424 = vmatpush1.xpose.msra.mxu0 0.0
        %2425 = vmatprep.subr.mxu0 0.0
        %2426 = vmatpush1.xpose.msra.mxu0 0.0
        %2427 = vmatprep.subr.mxu0 0.0
        %2428 = vmatpush1.xpose.msra.mxu0 0.0
        %2429 = vmatprep.subr.mxu0 0.0
        %2430 = vmatpush1.xpose.msra.mxu0 0.0
        %2431 = vmatprep.subr.mxu0 0.0
        %2432 = vmatpush1.xpose.msra.mxu0 0.0
        %2433 = vmatprep.subr.mxu0 0.0
        %2434 = vmatpush1.xpose.msra.mxu0 0.0
        %2435 = vmatprep.subr.mxu0 0.0
        %2436 = vmatpush1.xpose.msra.mxu0 0.0
        %2437 = vmatprep.subr.mxu0 0.0
        %2438 = vmatpush1.xpose.msra.mxu0 0.0
        %2439 = vmatprep.subr.mxu0 0.0
        %2440 = vmatpush1.xpose.msra.mxu0 0.0
        %2441 = vmatprep.mubr.f32.mxu0 0.0
        %v2442 = vand.u32 %v1997, 4294901760
        %2443 = vmatmul.mubr.f32.gmra.mrb[0].mxu0 %v2442
        %v2444 = vpop.f32.mrb[0].mxu0
        %v2445 = vadd.f32 %v2373, %v2444
        %v2446 = vpop.f32.mrb[0].mxu0
        %2447 = vdwg.mxu0
        %v2448 = vmul.f32 %v2445, 0.35355338
        %v2449 = vsel %vm1995, %v2448, -inf
        %2450 = vmax.xlane.f32.xlu0 %v2449
        %v2451 = vpop.xlane.xlu0 %2450
        %v2452 = vsub.f32 %v2448, %v2451
        %v2453 = vmul.f32 %v2452, 1.442695
        %v2454 = vpow.pop %v2453
        %v2455 = vsel %vm1995, %v2454, 0.0
        %2456 = vadd.xlane.f32.xlu0 %v2455
        %v2457 = vpop.xlane.xlu0 %2456
        %v2458 = vrcp.pop %v2457
        %v2459 = vmul.f32 %v2454, %v2458
        %v2461 = vsel %vm1995, %v2459, 0
        %2463 = vmatprep.subr.mxu0 0.0
        %v2464 = vand.u32 %v1992, 4294901760
        %2465 = vmatpush1.msra.mxu0 %v2464
        %2466 = vmatprep.subr.mxu0 0.0
        %2467 = vmatpush1.msra.mxu0 0.0
        %2468 = vmatprep.subr.mxu0 0.0
        %2469 = vmatpush1.msra.mxu0 0.0
        %2470 = vmatprep.subr.mxu0 0.0
        %2471 = vmatpush1.msra.mxu0 0.0
        %2472 = vmatprep.subr.mxu0 0.0
        %2473 = vmatpush1.msra.mxu0 0.0
        %2474 = vmatprep.subr.mxu0 0.0
        %2475 = vmatpush1.msra.mxu0 0.0
        %2476 = vmatprep.subr.mxu0 0.0
        %2477 = vmatpush1.msra.mxu0 0.0
        %2478 = vmatprep.subr.mxu0 0.0
        %2479 = vmatpush1.msra.mxu0 0.0
        %2480 = vmatprep.subr.mxu0 0.0
        %2481 = vmatpush1.msra.mxu0 0.0
        %2482 = vmatprep.subr.mxu0 0.0
        %2483 = vmatpush1.msra.mxu0 0.0
        %2484 = vmatprep.subr.mxu0 0.0
        %2485 = vmatpush1.msra.mxu0 0.0
        %2486 = vmatprep.subr.mxu0 0.0
        %2487 = vmatpush1.msra.mxu0 0.0
        %2488 = vmatprep.subr.mxu0 0.0
        %2489 = vmatpush1.msra.mxu0 0.0
        %2490 = vmatprep.subr.mxu0 0.0
        %2491 = vmatpush1.msra.mxu0 0.0
        %2492 = vmatprep.subr.mxu0 0.0
        %2493 = vmatpush1.msra.mxu0 0.0
        %2494 = vmatprep.subr.mxu0 0.0
        %2495 = vmatpush1.msra.mxu0 0.0
        %2496 = vmatprep.subr.mxu0 0.0
        %2497 = vmatpush1.msra.mxu0 0.0
        %2498 = vmatprep.subr.mxu0 0.0
        %2499 = vmatpush1.msra.mxu0 0.0
        %2500 = vmatprep.subr.mxu0 0.0
        %2501 = vmatpush1.msra.mxu0 0.0
        %2502 = vmatprep.subr.mxu0 0.0
        %2503 = vmatpush1.msra.mxu0 0.0
        %2504 = vmatprep.subr.mxu0 0.0
        %2505 = vmatpush1.msra.mxu0 0.0
        %2506 = vmatprep.subr.mxu0 0.0
        %2507 = vmatpush1.msra.mxu0 0.0
        %2508 = vmatprep.subr.mxu0 0.0
        %2509 = vmatpush1.msra.mxu0 0.0
        %2510 = vmatprep.subr.mxu0 0.0
        %2511 = vmatpush1.msra.mxu0 0.0
        %2512 = vmatprep.subr.mxu0 0.0
        %2513 = vmatpush1.msra.mxu0 0.0
        %2514 = vmatprep.subr.mxu0 0.0
        %2515 = vmatpush1.msra.mxu0 0.0
        %2516 = vmatprep.subr.mxu0 0.0
        %2517 = vmatpush1.msra.mxu0 0.0
        %2518 = vmatprep.subr.mxu0 0.0
        %2519 = vmatpush1.msra.mxu0 0.0
        %2520 = vmatprep.subr.mxu0 0.0
        %2521 = vmatpush1.msra.mxu0 0.0
        %2522 = vmatprep.subr.mxu0 0.0
        %2523 = vmatpush1.msra.mxu0 0.0
        %2524 = vmatprep.subr.mxu0 0.0
        %2525 = vmatpush1.msra.mxu0 0.0
        %2526 = vmatprep.subr.mxu0 0.0
        %2527 = vmatpush1.msra.mxu0 0.0
        %2528 = vmatprep.mubr.f32.mxu0 0.0
        %v2529 = vand.u32 %v2461, 4294901760
        %v2530 = vsub.f32 %v2461, %v2529
        %v2531 = vand.u32 %v2530, 4294901760
        %v2532 = vsub.f32 %v2530, %v2531
        %v2533 = vand.u32 %v2532, 4294901760
        %2534 = vmatmul.mubr.f32.gmra.mrb[0].mxu0 %v2533
        %v2535 = vpop.f32.mrb[0].mxu0
        %v2536 = vadd.f32 0.0, %v2535
        %v2537 = vpop.f32.mrb[0].mxu0
        %2538 = vdwg.mxu0
        %2539 = vmatprep.subr.mxu0 0.0
        %v2540 = vand.u32 %v1992, 4294901760
        %v2541 = vsub.f32 %v1992, %v2540
        %v2542 = vand.u32 %v2541, 4294901760
        %v2543 = vsub.f32 %v2541, %v2542
        %v2544 = vand.u32 %v2543, 4294901760
        %2545 = vmatpush1.msra.mxu0 %v2544
        %2546 = vmatprep.subr.mxu0 0.0
        %2547 = vmatpush1.msra.mxu0 0.0
        %2548 = vmatprep.subr.mxu0 0.0
        %2549 = vmatpush1.msra.mxu0 0.0
        %2550 = vmatprep.subr.mxu0 0.0
        %2551 = vmatpush1.msra.mxu0 0.0
        %2552 = vmatprep.subr.mxu0 0.0
        %2553 = vmatpush1.msra.mxu0 0.0
        %2554 = vmatprep.subr.mxu0 0.0
        %2555 = vmatpush1.msra.mxu0 0.0
        %2556 = vmatprep.subr.mxu0 0.0
        %2557 = vmatpush1.msra.mxu0 0.0
        %2558 = vmatprep.subr.mxu0 0.0
        %2559 = vmatpush1.msra.mxu0 0.0
        %2560 = vmatprep.subr.mxu0 0.0
        %2561 = vmatpush1.msra.mxu0 0.0
        %2562 = vmatprep.subr.mxu0 0.0
        %2563 = vmatpush1.msra.mxu0 0.0
        %2564 = vmatprep.subr.mxu0 0.0
        %2565 = vmatpush1.msra.mxu0 0.0
        %2566 = vmatprep.subr.mxu0 0.0
        %2567 = vmatpush1.msra.mxu0 0.0
        %2568 = vmatprep.subr.mxu0 0.0
        %2569 = vmatpush1.msra.mxu0 0.0
        %2570 = vmatprep.subr.mxu0 0.0
        %2571 = vmatpush1.msra.mxu0 0.0
        %2572 = vmatprep.subr.mxu0 0.0
        %2573 = vmatpush1.msra.mxu0 0.0
        %2574 = vmatprep.subr.mxu0 0.0
        %2575 = vmatpush1.msra.mxu0 0.0
        %2576 = vmatprep.subr.mxu0 0.0
        %2577 = vmatpush1.msra.mxu0 0.0
        %2578 = vmatprep.subr.mxu0 0.0
        %2579 = vmatpush1.msra.mxu0 0.0
        %2580 = vmatprep.subr.mxu0 0.0
        %2581 = vmatpush1.msra.mxu0 0.0
        %2582 = vmatprep.subr.mxu0 0.0
        %2583 = vmatpush1.msra.mxu0 0.0
        %2584 = vmatprep.subr.mxu0 0.0
        %2585 = vmatpush1.msra.mxu0 0.0
        %2586 = vmatprep.subr.mxu0 0.0
        %2587 = vmatpush1.msra.mxu0 0.0
        %2588 = vmatprep.subr.mxu0 0.0
        %2589 = vmatpush1.msra.mxu0 0.0
        %2590 = vmatprep.subr.mxu0 0.0
        %2591 = vmatpush1.msra.mxu0 0.0
        %2592 = vmatprep.subr.mxu0 0.0
        %2593 = vmatpush1.msra.mxu0 0.0
        %2594 = vmatprep.subr.mxu0 0.0
        %2595 = vmatpush1.msra.mxu0 0.0
        %2596 = vmatprep.subr.mxu0 0.0
        %2597 = vmatpush1.msra.mxu0 0.0
        %2598 = vmatprep.subr.mxu0 0.0
        %2599 = vmatpush1.msra.mxu0 0.0
        %2600 = vmatprep.subr.mxu0 0.0
        %2601 = vmatpush1.msra.mxu0 0.0
        %2602 = vmatprep.subr.mxu0 0.0
        %2603 = vmatpush1.msra.mxu0 0.0
        %2604 = vmatprep.subr.mxu0 0.0
        %2605 = vmatpush1.msra.mxu0 0.0
        %2606 = vmatprep.subr.mxu0 0.0
        %2607 = vmatpush1.msra.mxu0 0.0
        %2608 = vmatprep.mubr.f32.mxu0 0.0
        %v2609 = vand.u32 %v2461, 4294901760
        %2610 = vmatmul.mubr.f32.gmra.mrb[0].mxu0 %v2609
        %v2611 = vpop.f32.mrb[0].mxu0
        %v2612 = vadd.f32 %v2536, %v2611
        %v2613 = vpop.f32.mrb[0].mxu0
        %2614 = vdwg.mxu0
        %2615 = vmatprep.subr.mxu0 0.0
        %v2616 = vand.u32 %v1992, 4294901760
        %v2617 = vsub.f32 %v1992, %v2616
        %2618 = vmatpush1.msra.mxu0 %v2617
        %2619 = vmatprep.subr.mxu0 0.0
        %2620 = vmatpush1.msra.mxu0 0.0
        %2621 = vmatprep.subr.mxu0 0.0
        %2622 = vmatpush1.msra.mxu0 0.0
        %2623 = vmatprep.subr.mxu0 0.0
        %2624 = vmatpush1.msra.mxu0 0.0
        %2625 = vmatprep.subr.mxu0 0.0
        %2626 = vmatpush1.msra.mxu0 0.0
        %2627 = vmatprep.subr.mxu0 0.0
        %2628 = vmatpush1.msra.mxu0 0.0
        %2629 = vmatprep.subr.mxu0 0.0
        %2630 = vmatpush1.msra.mxu0 0.0
        %2631 = vmatprep.subr.mxu0 0.0
        %2632 = vmatpush1.msra.mxu0 0.0
        %2633 = vmatprep.subr.mxu0 0.0
        %2634 = vmatpush1.msra.mxu0 0.0
        %2635 = vmatprep.subr.mxu0 0.0
        %2636 = vmatpush1.msra.mxu0 0.0
        %2637 = vmatprep.subr.mxu0 0.0
        %2638 = vmatpush1.msra.mxu0 0.0
        %2639 = vmatprep.subr.mxu0 0.0
        %2640 = vmatpush1.msra.mxu0 0.0
        %2641 = vmatprep.subr.mxu0 0.0
        %2642 = vmatpush1.msra.mxu0 0.0
        %2643 = vmatprep.subr.mxu0 0.0
        %2644 = vmatpush1.msra.mxu0 0.0
        %2645 = vmatprep.subr.mxu0 0.0
        %2646 = vmatpush1.msra.mxu0 0.0
        %2647 = vmatprep.subr.mxu0 0.0
        %2648 = vmatpush1.msra.mxu0 0.0
        %2649 = vmatprep.subr.mxu0 0.0
        %2650 = vmatpush1.msra.mxu0 0.0
        %2651 = vmatprep.subr.mxu0 0.0
        %2652 = vmatpush1.msra.mxu0 0.0
        %2653 = vmatprep.subr.mxu0 0.0
        %2654 = vmatpush1.msra.mxu0 0.0
        %2655 = vmatprep.subr.mxu0 0.0
        %2656 = vmatpush1.msra.mxu0 0.0
        %2657 = vmatprep.subr.mxu0 0.0
        %2658 = vmatpush1.msra.mxu0 0.0
        %2659 = vmatprep.subr.mxu0 0.0
        %2660 = vmatpush1.msra.mxu0 0.0
        %2661 = vmatprep.subr.mxu0 0.0
        %2662 = vmatpush1.msra.mxu0 0.0
        %2663 = vmatprep.subr.mxu0 0.0
        %2664 = vmatpush1.msra.mxu0 0.0
        %2665 = vmatprep.subr.mxu0 0.0
        %2666 = vmatpush1.msra.mxu0 0.0
        %2667 = vmatprep.subr.mxu0 0.0
        %2668 = vmatpush1.msra.mxu0 0.0
        %2669 = vmatprep.subr.mxu0 0.0
        %2670 = vmatpush1.msra.mxu0 0.0
        %2671 = vmatprep.subr.mxu0 0.0
        %2672 = vmatpush1.msra.mxu0 0.0
        %2673 = vmatprep.subr.mxu0 0.0
        %2674 = vmatpush1.msra.mxu0 0.0
        %2675 = vmatprep.subr.mxu0 0.0
        %2676 = vmatpush1.msra.mxu0 0.0
        %2677 = vmatprep.subr.mxu0 0.0
        %2678 = vmatpush1.msra.mxu0 0.0
        %2679 = vmatprep.subr.mxu0 0.0
        %2680 = vmatpush1.msra.mxu0 0.0
        %2681 = vmatprep.mubr.f32.mxu0 0.0
        %v2682 = vand.u32 %v2461, 4294901760
        %v2683 = vsub.f32 %v2461, %v2682
        %2684 = vmatmul.mubr.f32.gmra.mrb[0].mxu0 %v2683
        %v2685 = vpop.f32.mrb[0].mxu0
        %v2686 = vadd.f32 %v2612, %v2685
        %v2687 = vpop.f32.mrb[0].mxu0
        %2688 = vdwg.mxu0
        %2689 = vmatprep.subr.mxu0 0.0
        %v2690 = vand.u32 %v1992, 4294901760
        %2691 = vmatpush1.msra.mxu0 %v2690
        %2692 = vmatprep.subr.mxu0 0.0
        %2693 = vmatpush1.msra.mxu0 0.0
        %2694 = vmatprep.subr.mxu0 0.0
        %2695 = vmatpush1.msra.mxu0 0.0
        %2696 = vmatprep.subr.mxu0 0.0
        %2697 = vmatpush1.msra.mxu0 0.0
        %2698 = vmatprep.subr.mxu0 0.0
        %2699 = vmatpush1.msra.mxu0 0.0
        %2700 = vmatprep.subr.mxu0 0.0
        %2701 = vmatpush1.msra.mxu0 0.0
        %2702 = vmatprep.subr.mxu0 0.0
        %2703 = vmatpush1.msra.mxu0 0.0
        %2704 = vmatprep.subr.mxu0 0.0
        %2705 = vmatpush1.msra.mxu0 0.0
        %2706 = vmatprep.subr.mxu0 0.0
        %2707 = vmatpush1.msra.mxu0 0.0
        %2708 = vmatprep.subr.mxu0 0.0
        %2709 = vmatpush1.msra.mxu0 0.0
        %2710 = vmatprep.subr.mxu0 0.0
        %2711 = vmatpush1.msra.mxu0 0.0
        %2712 = vmatprep.subr.mxu0 0.0
        %2713 = vmatpush1.msra.mxu0 0.0
        %2714 = vmatprep.subr.mxu0 0.0
        %2715 = vmatpush1.msra.mxu0 0.0
        %2716 = vmatprep.subr.mxu0 0.0
        %2717 = vmatpush1.msra.mxu0 0.0
        %2718 = vmatprep.subr.mxu0 0.0
        %2719 = vmatpush1.msra.mxu0 0.0
        %2720 = vmatprep.subr.mxu0 0.0
        %2721 = vmatpush1.msra.mxu0 0.0
        %2722 = vmatprep.subr.mxu0 0.0
        %2723 = vmatpush1.msra.mxu0 0.0
        %2724 = vmatprep.subr.mxu0 0.0
        %2725 = vmatpush1.msra.mxu0 0.0
        %2726 = vmatprep.subr.mxu0 0.0
        %2727 = vmatpush1.msra.mxu0 0.0
        %2728 = vmatprep.subr.mxu0 0.0
        %2729 = vmatpush1.msra.mxu0 0.0
        %2730 = vmatprep.subr.mxu0 0.0
        %2731 = vmatpush1.msra.mxu0 0.0
        %2732 = vmatprep.subr.mxu0 0.0
        %2733 = vmatpush1.msra.mxu0 0.0
        %2734 = vmatprep.subr.mxu0 0.0
        %2735 = vmatpush1.msra.mxu0 0.0
        %2736 = vmatprep.subr.mxu0 0.0
        %2737 = vmatpush1.msra.mxu0 0.0
        %2738 = vmatprep.subr.mxu0 0.0
        %2739 = vmatpush1.msra.mxu0 0.0
        %2740 = vmatprep.subr.mxu0 0.0
        %2741 = vmatpush1.msra.mxu0 0.0
        %2742 = vmatprep.subr.mxu0 0.0
        %2743 = vmatpush1.msra.mxu0 0.0
        %2744 = vmatprep.subr.mxu0 0.0
        %2745 = vmatpush1.msra.mxu0 0.0
        %2746 = vmatprep.subr.mxu0 0.0
        %2747 = vmatpush1.msra.mxu0 0.0
        %2748 = vmatprep.subr.mxu0 0.0
        %2749 = vmatpush1.msra.mxu0 0.0
        %2750 = vmatprep.subr.mxu0 0.0
        %2751 = vmatpush1.msra.mxu0 0.0
        %2752 = vmatprep.subr.mxu0 0.0
        %2753 = vmatpush1.msra.mxu0 0.0
        %2754 = vmatprep.mubr.f32.mxu0 0.0
        %v2755 = vand.u32 %v2461, 4294901760
        %v2756 = vsub.f32 %v2461, %v2755
        %v2757 = vand.u32 %v2756, 4294901760
        %2758 = vmatmul.mubr.f32.gmra.mrb[0].mxu0 %v2757
        %v2759 = vpop.f32.mrb[0].mxu0
        %v2760 = vadd.f32 %v2686, %v2759
        %v2761 = vpop.f32.mrb[0].mxu0
        %2762 = vdwg.mxu0
        %2763 = vmatprep.subr.mxu0 0.0
        %v2764 = vand.u32 %v1992, 4294901760
        %v2765 = vsub.f32 %v1992, %v2764
        %v2766 = vand.u32 %v2765, 4294901760
        %2767 = vmatpush1.msra.mxu0 %v2766
        %2768 = vmatprep.subr.mxu0 0.0
        %2769 = vmatpush1.msra.mxu0 0.0
        %2770 = vmatprep.subr.mxu0 0.0
        %2771 = vmatpush1.msra.mxu0 0.0
        %2772 = vmatprep.subr.mxu0 0.0
        %2773 = vmatpush1.msra.mxu0 0.0
        %2774 = vmatprep.subr.mxu0 0.0
        %2775 = vmatpush1.msra.mxu0 0.0
        %2776 = vmatprep.subr.mxu0 0.0
        %2777 = vmatpush1.msra.mxu0 0.0
        %2778 = vmatprep.subr.mxu0 0.0
        %2779 = vmatpush1.msra.mxu0 0.0
        %2780 = vmatprep.subr.mxu0 0.0
        %2781 = vmatpush1.msra.mxu0 0.0
        %2782 = vmatprep.subr.mxu0 0.0
        %2783 = vmatpush1.msra.mxu0 0.0
        %2784 = vmatprep.subr.mxu0 0.0
        %2785 = vmatpush1.msra.mxu0 0.0
        %2786 = vmatprep.subr.mxu0 0.0
        %2787 = vmatpush1.msra.mxu0 0.0
        %2788 = vmatprep.subr.mxu0 0.0
        %2789 = vmatpush1.msra.mxu0 0.0
        %2790 = vmatprep.subr.mxu0 0.0
        %2791 = vmatpush1.msra.mxu0 0.0
        %2792 = vmatprep.subr.mxu0 0.0
        %2793 = vmatpush1.msra.mxu0 0.0
        %2794 = vmatprep.subr.mxu0 0.0
        %2795 = vmatpush1.msra.mxu0 0.0
        %2796 = vmatprep.subr.mxu0 0.0
        %2797 = vmatpush1.msra.mxu0 0.0
        %2798 = vmatprep.subr.mxu0 0.0
        %2799 = vmatpush1.msra.mxu0 0.0
        %2800 = vmatprep.subr.mxu0 0.0
        %2801 = vmatpush1.msra.mxu0 0.0
        %2802 = vmatprep.subr.mxu0 0.0
        %2803 = vmatpush1.msra.mxu0 0.0
        %2804 = vmatprep.subr.mxu0 0.0
        %2805 = vmatpush1.msra.mxu0 0.0
        %2806 = vmatprep.subr.mxu0 0.0
        %2807 = vmatpush1.msra.mxu0 0.0
        %2808 = vmatprep.subr.mxu0 0.0
        %2809 = vmatpush1.msra.mxu0 0.0
        %2810 = vmatprep.subr.mxu0 0.0
        %2811 = vmatpush1.msra.mxu0 0.0
        %2812 = vmatprep.subr.mxu0 0.0
        %2813 = vmatpush1.msra.mxu0 0.0
        %2814 = vmatprep.subr.mxu0 0.0
        %2815 = vmatpush1.msra.mxu0 0.0
        %2816 = vmatprep.subr.mxu0 0.0
        %2817 = vmatpush1.msra.mxu0 0.0
        %2818 = vmatprep.subr.mxu0 0.0
        %2819 = vmatpush1.msra.mxu0 0.0
        %2820 = vmatprep.subr.mxu0 0.0
        %2821 = vmatpush1.msra.mxu0 0.0
        %2822 = vmatprep.subr.mxu0 0.0
        %2823 = vmatpush1.msra.mxu0 0.0
        %2824 = vmatprep.subr.mxu0 0.0
        %2825 = vmatpush1.msra.mxu0 0.0
        %2826 = vmatprep.subr.mxu0 0.0
        %2827 = vmatpush1.msra.mxu0 0.0
        %2828 = vmatprep.subr.mxu0 0.0
        %2829 = vmatpush1.msra.mxu0 0.0
        %2830 = vmatprep.mubr.f32.mxu0 0.0
        %v2831 = vand.u32 %v2461, 4294901760
        %2832 = vmatmul.mubr.f32.gmra.mrb[0].mxu0 %v2831
        %v2833 = vpop.f32.mrb[0].mxu0
        %v2834 = vadd.f32 %v2760, %v2833
        %v2835 = vpop.f32.mrb[0].mxu0
        %2836 = vdwg.mxu0
        %2837 = vmatprep.subr.mxu0 0.0
        %v2838 = vand.u32 %v1992, 4294901760
        %2839 = vmatpush1.msra.mxu0 %v2838
        %2840 = vmatprep.subr.mxu0 0.0
        %2841 = vmatpush1.msra.mxu0 0.0
        %2842 = vmatprep.subr.mxu0 0.0
        %2843 = vmatpush1.msra.mxu0 0.0
        %2844 = vmatprep.subr.mxu0 0.0
        %2845 = vmatpush1.msra.mxu0 0.0
        %2846 = vmatprep.subr.mxu0 0.0
        %2847 = vmatpush1.msra.mxu0 0.0
        %2848 = vmatprep.subr.mxu0 0.0
        %2849 = vmatpush1.msra.mxu0 0.0
        %2850 = vmatprep.subr.mxu0 0.0
        %2851 = vmatpush1.msra.mxu0 0.0
        %2852 = vmatprep.subr.mxu0 0.0
        %2853 = vmatpush1.msra.mxu0 0.0
        %2854 = vmatprep.subr.mxu0 0.0
        %2855 = vmatpush1.msra.mxu0 0.0
        %2856 = vmatprep.subr.mxu0 0.0
        %2857 = vmatpush1.msra.mxu0 0.0
        %2858 = vmatprep.subr.mxu0 0.0
        %2859 = vmatpush1.msra.mxu0 0.0
        %2860 = vmatprep.subr.mxu0 0.0
        %2861 = vmatpush1.msra.mxu0 0.0
        %2862 = vmatprep.subr.mxu0 0.0
        %2863 = vmatpush1.msra.mxu0 0.0
        %2864 = vmatprep.subr.mxu0 0.0
        %2865 = vmatpush1.msra.mxu0 0.0
        %2866 = vmatprep.subr.mxu0 0.0
        %2867 = vmatpush1.msra.mxu0 0.0
        %2868 = vmatprep.subr.mxu0 0.0
        %2869 = vmatpush1.msra.mxu0 0.0
        %2870 = vmatprep.subr.mxu0 0.0
        %2871 = vmatpush1.msra.mxu0 0.0
        %2872 = vmatprep.subr.mxu0 0.0
        %2873 = vmatpush1.msra.mxu0 0.0
        %2874 = vmatprep.subr.mxu0 0.0
        %2875 = vmatpush1.msra.mxu0 0.0
        %2876 = vmatprep.subr.mxu0 0.0
        %2877 = vmatpush1.msra.mxu0 0.0
        %2878 = vmatprep.subr.mxu0 0.0
        %2879 = vmatpush1.msra.mxu0 0.0
        %2880 = vmatprep.subr.mxu0 0.0
        %2881 = vmatpush1.msra.mxu0 0.0
        %2882 = vmatprep.subr.mxu0 0.0
        %2883 = vmatpush1.msra.mxu0 0.0
        %2884 = vmatprep.subr.mxu0 0.0
        %2885 = vmatpush1.msra.mxu0 0.0
        %2886 = vmatprep.subr.mxu0 0.0
        %2887 = vmatpush1.msra.mxu0 0.0
        %2888 = vmatprep.subr.mxu0 0.0
        %2889 = vmatpush1.msra.mxu0 0.0
        %2890 = vmatprep.subr.mxu0 0.0
        %2891 = vmatpush1.msra.mxu0 0.0
        %2892 = vmatprep.subr.mxu0 0.0
        %2893 = vmatpush1.msra.mxu0 0.0
        %2894 = vmatprep.subr.mxu0 0.0
        %2895 = vmatpush1.msra.mxu0 0.0
        %2896 = vmatprep.subr.mxu0 0.0
        %2897 = vmatpush1.msra.mxu0 0.0
        %2898 = vmatprep.subr.mxu0 0.0
        %2899 = vmatpush1.msra.mxu0 0.0
        %2900 = vmatprep.subr.mxu0 0.0
        %2901 = vmatpush1.msra.mxu0 0.0
        %2902 = vmatprep.mubr.f32.mxu0 0.0
        %v2903 = vand.u32 %v2461, 4294901760
        %2904 = vmatmul.mubr.f32.gmra.mrb[0].mxu0 %v2903
        %v2905 = vpop.f32.mrb[0].mxu0
        %v2906 = vadd.f32 %v2834, %v2905
        %v2907 = vpop.f32.mrb[0].mxu0
        %2908 = vdwg.mxu0
        %2909 = vrot.lane.b32.xlu0 %v1014, 120
        %v2910 = vpop.permute.xlu0 %2909
        %2911 = vrot.lane.b32.xlu0 %v1503, 120
        %v2912 = vpop.permute.xlu0 %2911
        %v2913 = vsel %vm1995, %v2910, 0
        %v2915 = vsel %vm1995, %v2912, 0
        %2917 = vmatprep.subr.mxu0 0.0
        %v2918 = vand.u32 %v2915, 4294901760
        %2919 = vmatpush1.xpose.msra.mxu0 %v2918
        %2920 = vmatprep.subr.mxu0 0.0
        %2921 = vmatpush1.xpose.msra.mxu0 0.0
        %2922 = vmatprep.subr.mxu0 0.0
        %2923 = vmatpush1.xpose.msra.mxu0 0.0
        %2924 = vmatprep.subr.mxu0 0.0
        %2925 = vmatpush1.xpose.msra.mxu0 0.0
        %2926 = vmatprep.subr.mxu0 0.0
        %2927 = vmatpush1.xpose.msra.mxu0 0.0
        %2928 = vmatprep.subr.mxu0 0.0
        %2929 = vmatpush1.xpose.msra.mxu0 0.0
        %2930 = vmatprep.subr.mxu0 0.0
        %2931 = vmatpush1.xpose.msra.mxu0 0.0
        %2932 = vmatprep.subr.mxu0 0.0
        %2933 = vmatpush1.xpose.msra.mxu0 0.0
        %2934 = vmatprep.subr.mxu0 0.0
        %2935 = vmatpush1.xpose.msra.mxu0 0.0
        %2936 = vmatprep.subr.mxu0 0.0
        %2937 = vmatpush1.xpose.msra.mxu0 0.0
        %2938 = vmatprep.subr.mxu0 0.0
        %2939 = vmatpush1.xpose.msra.mxu0 0.0
        %2940 = vmatprep.subr.mxu0 0.0
        %2941 = vmatpush1.xpose.msra.mxu0 0.0
        %2942 = vmatprep.subr.mxu0 0.0
        %2943 = vmatpush1.xpose.msra.mxu0 0.0
        %2944 = vmatprep.subr.mxu0 0.0
        %2945 = vmatpush1.xpose.msra.mxu0 0.0
        %2946 = vmatprep.subr.mxu0 0.0
        %2947 = vmatpush1.xpose.msra.mxu0 0.0
        %2948 = vmatprep.subr.mxu0 0.0
        %2949 = vmatpush1.xpose.msra.mxu0 0.0
        %2950 = vmatprep.subr.mxu0 0.0
        %2951 = vmatpush1.xpose.msra.mxu0 0.0
        %2952 = vmatprep.subr.mxu0 0.0
        %2953 = vmatpush1.xpose.msra.mxu0 0.0
        %2954 = vmatprep.subr.mxu0 0.0
        %2955 = vmatpush1.xpose.msra.mxu0 0.0
        %2956 = vmatprep.subr.mxu0 0.0
        %2957 = vmatpush1.xpose.msra.mxu0 0.0
        %2958 = vmatprep.subr.mxu0 0.0
        %2959 = vmatpush1.xpose.msra.mxu0 0.0
        %2960 = vmatprep.subr.mxu0 0.0
        %2961 = vmatpush1.xpose.msra.mxu0 0.0
        %2962 = vmatprep.subr.mxu0 0.0
        %2963 = vmatpush1.xpose.msra.mxu0 0.0
        %2964 = vmatprep.subr.mxu0 0.0
        %2965 = vmatpush1.xpose.msra.mxu0 0.0
        %2966 = vmatprep.subr.mxu0 0.0
        %2967 = vmatpush1.xpose.msra.mxu0 0.0
        %2968 = vmatprep.subr.mxu0 0.0
        %2969 = vmatpush1.xpose.msra.mxu0 0.0
        %2970 = vmatprep.subr.mxu0 0.0
        %2971 = vmatpush1.xpose.msra.mxu0 0.0
        %2972 = vmatprep.subr.mxu0 0.0
        %2973 = vmatpush1.xpose.msra.mxu0 0.0
        %2974 = vmatprep.subr.mxu0 0.0
        %2975 = vmatpush1.xpose.msra.mxu0 0.0
        %2976 = vmatprep.subr.mxu0 0.0
        %2977 = vmatpush1.xpose.msra.mxu0 0.0
        %2978 = vmatprep.subr.mxu0 0.0
        %2979 = vmatpush1.xpose.msra.mxu0 0.0
        %2980 = vmatprep.subr.mxu0 0.0
        %2981 = vmatpush1.xpose.msra.mxu0 0.0
        %2982 = vmatprep.mubr.f32.mxu0 0.0
        %v2983 = vand.u32 %v2913, 4294901760
        %v2984 = vsub.f32 %v2913, %v2983
        %v2985 = vand.u32 %v2984, 4294901760
        %v2986 = vsub.f32 %v2984, %v2985
        %v2987 = vand.u32 %v2986, 4294901760
        %2988 = vmatmul.mubr.f32.gmra.mrb[0].mxu0 %v2987
        %v2989 = vpop.f32.mrb[0].mxu0
        %v2990 = vadd.f32 0.0, %v2989
        %v2991 = vpop.f32.mrb[0].mxu0
        %2992 = vdwg.mxu0
        %2993 = vmatprep.subr.mxu0 0.0
        %v2994 = vand.u32 %v2915, 4294901760
        %v2995 = vsub.f32 %v2915, %v2994
        %v2996 = vand.u32 %v2995, 4294901760
        %v2997 = vsub.f32 %v2995, %v2996
        %v2998 = vand.u32 %v2997, 4294901760
        %2999 = vmatpush1.xpose.msra.mxu0 %v2998
        %3000 = vmatprep.subr.mxu0 0.0
        %3001 = vmatpush1.xpose.msra.mxu0 0.0
        %3002 = vmatprep.subr.mxu0 0.0
        %3003 = vmatpush1.xpose.msra.mxu0 0.0
        %3004 = vmatprep.subr.mxu0 0.0
        %3005 = vmatpush1.xpose.msra.mxu0 0.0
        %3006 = vmatprep.subr.mxu0 0.0
        %3007 = vmatpush1.xpose.msra.mxu0 0.0
        %3008 = vmatprep.subr.mxu0 0.0
        %3009 = vmatpush1.xpose.msra.mxu0 0.0
        %3010 = vmatprep.subr.mxu0 0.0
        %3011 = vmatpush1.xpose.msra.mxu0 0.0
        %3012 = vmatprep.subr.mxu0 0.0
        %3013 = vmatpush1.xpose.msra.mxu0 0.0
        %3014 = vmatprep.subr.mxu0 0.0
        %3015 = vmatpush1.xpose.msra.mxu0 0.0
        %3016 = vmatprep.subr.mxu0 0.0
        %3017 = vmatpush1.xpose.msra.mxu0 0.0
        %3018 = vmatprep.subr.mxu0 0.0
        %3019 = vmatpush1.xpose.msra.mxu0 0.0
        %3020 = vmatprep.subr.mxu0 0.0
        %3021 = vmatpush1.xpose.msra.mxu0 0.0
        %3022 = vmatprep.subr.mxu0 0.0
        %3023 = vmatpush1.xpose.msra.mxu0 0.0
        %3024 = vmatprep.subr.mxu0 0.0
        %3025 = vmatpush1.xpose.msra.mxu0 0.0
        %3026 = vmatprep.subr.mxu0 0.0
        %3027 = vmatpush1.xpose.msra.mxu0 0.0
        %3028 = vmatprep.subr.mxu0 0.0
        %3029 = vmatpush1.xpose.msra.mxu0 0.0
        %3030 = vmatprep.subr.mxu0 0.0
        %3031 = vmatpush1.xpose.msra.mxu0 0.0
        %3032 = vmatprep.subr.mxu0 0.0
        %3033 = vmatpush1.xpose.msra.mxu0 0.0
        %3034 = vmatprep.subr.mxu0 0.0
        %3035 = vmatpush1.xpose.msra.mxu0 0.0
        %3036 = vmatprep.subr.mxu0 0.0
        %3037 = vmatpush1.xpose.msra.mxu0 0.0
        %3038 = vmatprep.subr.mxu0 0.0
        %3039 = vmatpush1.xpose.msra.mxu0 0.0
        %3040 = vmatprep.subr.mxu0 0.0
        %3041 = vmatpush1.xpose.msra.mxu0 0.0
        %3042 = vmatprep.subr.mxu0 0.0
        %3043 = vmatpush1.xpose.msra.mxu0 0.0
        %3044 = vmatprep.subr.mxu0 0.0
        %3045 = vmatpush1.xpose.msra.mxu0 0.0
        %3046 = vmatprep.subr.mxu0 0.0
        %3047 = vmatpush1.xpose.msra.mxu0 0.0
        %3048 = vmatprep.subr.mxu0 0.0
        %3049 = vmatpush1.xpose.msra.mxu0 0.0
        %3050 = vmatprep.subr.mxu0 0.0
        %3051 = vmatpush1.xpose.msra.mxu0 0.0
        %3052 = vmatprep.subr.mxu0 0.0
        %3053 = vmatpush1.xpose.msra.mxu0 0.0
        %3054 = vmatprep.subr.mxu0 0.0
        %3055 = vmatpush1.xpose.msra.mxu0 0.0
        %3056 = vmatprep.subr.mxu0 0.0
        %3057 = vmatpush1.xpose.msra.mxu0 0.0
        %3058 = vmatprep.subr.mxu0 0.0
        %3059 = vmatpush1.xpose.msra.mxu0 0.0
        %3060 = vmatprep.subr.mxu0 0.0
        %3061 = vmatpush1.xpose.msra.mxu0 0.0
        %3062 = vmatprep.mubr.f32.mxu0 0.0
        %v3063 = vand.u32 %v2913, 4294901760
        %3064 = vmatmul.mubr.f32.gmra.mrb[0].mxu0 %v3063
        %v3065 = vpop.f32.mrb[0].mxu0
        %v3066 = vadd.f32 %v2990, %v3065
        %v3067 = vpop.f32.mrb[0].mxu0
        %3068 = vdwg.mxu0
        %3069 = vmatprep.subr.mxu0 0.0
        %v3070 = vand.u32 %v2915, 4294901760
        %v3071 = vsub.f32 %v2915, %v3070
        %3072 = vmatpush1.xpose.msra.mxu0 %v3071
        %3073 = vmatprep.subr.mxu0 0.0
        %3074 = vmatpush1.xpose.msra.mxu0 0.0
        %3075 = vmatprep.subr.mxu0 0.0
        %3076 = vmatpush1.xpose.msra.mxu0 0.0
        %3077 = vmatprep.subr.mxu0 0.0
        %3078 = vmatpush1.xpose.msra.mxu0 0.0
        %3079 = vmatprep.subr.mxu0 0.0
        %3080 = vmatpush1.xpose.msra.mxu0 0.0
        %3081 = vmatprep.subr.mxu0 0.0
        %3082 = vmatpush1.xpose.msra.mxu0 0.0
        %3083 = vmatprep.subr.mxu0 0.0
        %3084 = vmatpush1.xpose.msra.mxu0 0.0
        %3085 = vmatprep.subr.mxu0 0.0
        %3086 = vmatpush1.xpose.msra.mxu0 0.0
        %3087 = vmatprep.subr.mxu0 0.0
        %3088 = vmatpush1.xpose.msra.mxu0 0.0
        %3089 = vmatprep.subr.mxu0 0.0
        %3090 = vmatpush1.xpose.msra.mxu0 0.0
        %3091 = vmatprep.subr.mxu0 0.0
        %3092 = vmatpush1.xpose.msra.mxu0 0.0
        %3093 = vmatprep.subr.mxu0 0.0
        %3094 = vmatpush1.xpose.msra.mxu0 0.0
        %3095 = vmatprep.subr.mxu0 0.0
        %3096 = vmatpush1.xpose.msra.mxu0 0.0
        %3097 = vmatprep.subr.mxu0 0.0
        %3098 = vmatpush1.xpose.msra.mxu0 0.0
        %3099 = vmatprep.subr.mxu0 0.0
        %3100 = vmatpush1.xpose.msra.mxu0 0.0
        %3101 = vmatprep.subr.mxu0 0.0
        %3102 = vmatpush1.xpose.msra.mxu0 0.0
        %3103 = vmatprep.subr.mxu0 0.0
        %3104 = vmatpush1.xpose.msra.mxu0 0.0
        %3105 = vmatprep.subr.mxu0 0.0
        %3106 = vmatpush1.xpose.msra.mxu0 0.0
        %3107 = vmatprep.subr.mxu0 0.0
        %3108 = vmatpush1.xpose.msra.mxu0 0.0
        %3109 = vmatprep.subr.mxu0 0.0
        %3110 = vmatpush1.xpose.msra.mxu0 0.0
        %3111 = vmatprep.subr.mxu0 0.0
        %3112 = vmatpush1.xpose.msra.mxu0 0.0
        %3113 = vmatprep.subr.mxu0 0.0
        %3114 = vmatpush1.xpose.msra.mxu0 0.0
        %3115 = vmatprep.subr.mxu0 0.0
        %3116 = vmatpush1.xpose.msra.mxu0 0.0
        %3117 = vmatprep.subr.mxu0 0.0
        %3118 = vmatpush1.xpose.msra.mxu0 0.0
        %3119 = vmatprep.subr.mxu0 0.0
        %3120 = vmatpush1.xpose.msra.mxu0 0.0
        %3121 = vmatprep.subr.mxu0 0.0
        %3122 = vmatpush1.xpose.msra.mxu0 0.0
        %3123 = vmatprep.subr.mxu0 0.0
        %3124 = vmatpush1.xpose.msra.mxu0 0.0
        %3125 = vmatprep.subr.mxu0 0.0
        %3126 = vmatpush1.xpose.msra.mxu0 0.0
        %3127 = vmatprep.subr.mxu0 0.0
        %3128 = vmatpush1.xpose.msra.mxu0 0.0
        %3129 = vmatprep.subr.mxu0 0.0
        %3130 = vmatpush1.xpose.msra.mxu0 0.0
        %3131 = vmatprep.subr.mxu0 0.0
        %3132 = vmatpush1.xpose.msra.mxu0 0.0
        %3133 = vmatprep.subr.mxu0 0.0
        %3134 = vmatpush1.xpose.msra.mxu0 0.0
        %3135 = vmatprep.mubr.f32.mxu0 0.0
        %v3136 = vand.u32 %v2913, 4294901760
        %v3137 = vsub.f32 %v2913, %v3136
        %3138 = vmatmul.mubr.f32.gmra.mrb[0].mxu0 %v3137
        %v3139 = vpop.f32.mrb[0].mxu0
        %v3140 = vadd.f32 %v3066, %v3139
        %v3141 = vpop.f32.mrb[0].mxu0
        %3142 = vdwg.mxu0
        %3143 = vmatprep.subr.mxu0 0.0
        %v3144 = vand.u32 %v2915, 4294901760
        %3145 = vmatpush1.xpose.msra.mxu0 %v3144
        %3146 = vmatprep.subr.mxu0 0.0
        %3147 = vmatpush1.xpose.msra.mxu0 0.0
        %3148 = vmatprep.subr.mxu0 0.0
        %3149 = vmatpush1.xpose.msra.mxu0 0.0
        %3150 = vmatprep.subr.mxu0 0.0
        %3151 = vmatpush1.xpose.msra.mxu0 0.0
        %3152 = vmatprep.subr.mxu0 0.0
        %3153 = vmatpush1.xpose.msra.mxu0 0.0
        %3154 = vmatprep.subr.mxu0 0.0
        %3155 = vmatpush1.xpose.msra.mxu0 0.0
        %3156 = vmatprep.subr.mxu0 0.0
        %3157 = vmatpush1.xpose.msra.mxu0 0.0
        %3158 = vmatprep.subr.mxu0 0.0
        %3159 = vmatpush1.xpose.msra.mxu0 0.0
        %3160 = vmatprep.subr.mxu0 0.0
        %3161 = vmatpush1.xpose.msra.mxu0 0.0
        %3162 = vmatprep.subr.mxu0 0.0
        %3163 = vmatpush1.xpose.msra.mxu0 0.0
        %3164 = vmatprep.subr.mxu0 0.0
        %3165 = vmatpush1.xpose.msra.mxu0 0.0
        %3166 = vmatprep.subr.mxu0 0.0
        %3167 = vmatpush1.xpose.msra.mxu0 0.0
        %3168 = vmatprep.subr.mxu0 0.0
        %3169 = vmatpush1.xpose.msra.mxu0 0.0
        %3170 = vmatprep.subr.mxu0 0.0
        %3171 = vmatpush1.xpose.msra.mxu0 0.0
        %3172 = vmatprep.subr.mxu0 0.0
        %3173 = vmatpush1.xpose.msra.mxu0 0.0
        %3174 = vmatprep.subr.mxu0 0.0
        %3175 = vmatpush1.xpose.msra.mxu0 0.0
        %3176 = vmatprep.subr.mxu0 0.0
        %3177 = vmatpush1.xpose.msra.mxu0 0.0
        %3178 = vmatprep.subr.mxu0 0.0
        %3179 = vmatpush1.xpose.msra.mxu0 0.0
        %3180 = vmatprep.subr.mxu0 0.0
        %3181 = vmatpush1.xpose.msra.mxu0 0.0
        %3182 = vmatprep.subr.mxu0 0.0
        %3183 = vmatpush1.xpose.msra.mxu0 0.0
        %3184 = vmatprep.subr.mxu0 0.0
        %3185 = vmatpush1.xpose.msra.mxu0 0.0
        %3186 = vmatprep.subr.mxu0 0.0
        %3187 = vmatpush1.xpose.msra.mxu0 0.0
        %3188 = vmatprep.subr.mxu0 0.0
        %3189 = vmatpush1.xpose.msra.mxu0 0.0
        %3190 = vmatprep.subr.mxu0 0.0
        %3191 = vmatpush1.xpose.msra.mxu0 0.0
        %3192 = vmatprep.subr.mxu0 0.0
        %3193 = vmatpush1.xpose.msra.mxu0 0.0
        %3194 = vmatprep.subr.mxu0 0.0
        %3195 = vmatpush1.xpose.msra.mxu0 0.0
        %3196 = vmatprep.subr.mxu0 0.0
        %3197 = vmatpush1.xpose.msra.mxu0 0.0
        %3198 = vmatprep.subr.mxu0 0.0
        %3199 = vmatpush1.xpose.msra.mxu0 0.0
        %3200 = vmatprep.subr.mxu0 0.0
        %3201 = vmatpush1.xpose.msra.mxu0 0.0
        %3202 = vmatprep.subr.mxu0 0.0
        %3203 = vmatpush1.xpose.msra.mxu0 0.0
        %3204 = vmatprep.subr.mxu0 0.0
        %3205 = vmatpush1.xpose.msra.mxu0 0.0
        %3206 = vmatprep.subr.mxu0 0.0
        %3207 = vmatpush1.xpose.msra.mxu0 0.0
        %3208 = vmatprep.mubr.f32.mxu0 0.0
        %v3209 = vand.u32 %v2913, 4294901760
        %v3210 = vsub.f32 %v2913, %v3209
        %v3211 = vand.u32 %v3210, 4294901760
        %3212 = vmatmul.mubr.f32.gmra.mrb[0].mxu0 %v3211
        %v3213 = vpop.f32.mrb[0].mxu0
        %v3214 = vadd.f32 %v3140, %v3213
        %v3215 = vpop.f32.mrb[0].mxu0
        %3216 = vdwg.mxu0
        %3217 = vmatprep.subr.mxu0 0.0
        %v3218 = vand.u32 %v2915, 4294901760
        %v3219 = vsub.f32 %v2915, %v3218
        %v3220 = vand.u32 %v3219, 4294901760
        %3221 = vmatpush1.xpose.msra.mxu0 %v3220
        %3222 = vmatprep.subr.mxu0 0.0
        %3223 = vmatpush1.xpose.msra.mxu0 0.0
        %3224 = vmatprep.subr.mxu0 0.0
        %3225 = vmatpush1.xpose.msra.mxu0 0.0
        %3226 = vmatprep.subr.mxu0 0.0
        %3227 = vmatpush1.xpose.msra.mxu0 0.0
        %3228 = vmatprep.subr.mxu0 0.0
        %3229 = vmatpush1.xpose.msra.mxu0 0.0
        %3230 = vmatprep.subr.mxu0 0.0
        %3231 = vmatpush1.xpose.msra.mxu0 0.0
        %3232 = vmatprep.subr.mxu0 0.0
        %3233 = vmatpush1.xpose.msra.mxu0 0.0
        %3234 = vmatprep.subr.mxu0 0.0
        %3235 = vmatpush1.xpose.msra.mxu0 0.0
        %3236 = vmatprep.subr.mxu0 0.0
        %3237 = vmatpush1.xpose.msra.mxu0 0.0
        %3238 = vmatprep.subr.mxu0 0.0
        %3239 = vmatpush1.xpose.msra.mxu0 0.0
        %3240 = vmatprep.subr.mxu0 0.0
        %3241 = vmatpush1.xpose.msra.mxu0 0.0
        %3242 = vmatprep.subr.mxu0 0.0
        %3243 = vmatpush1.xpose.msra.mxu0 0.0
        %3244 = vmatprep.subr.mxu0 0.0
        %3245 = vmatpush1.xpose.msra.mxu0 0.0
        %3246 = vmatprep.subr.mxu0 0.0
        %3247 = vmatpush1.xpose.msra.mxu0 0.0
        %3248 = vmatprep.subr.mxu0 0.0
        %3249 = vmatpush1.xpose.msra.mxu0 0.0
        %3250 = vmatprep.subr.mxu0 0.0
        %3251 = vmatpush1.xpose.msra.mxu0 0.0
        %3252 = vmatprep.subr.mxu0 0.0
        %3253 = vmatpush1.xpose.msra.mxu0 0.0
        %3254 = vmatprep.subr.mxu0 0.0
        %3255 = vmatpush1.xpose.msra.mxu0 0.0
        %3256 = vmatprep.subr.mxu0 0.0
        %3257 = vmatpush1.xpose.msra.mxu0 0.0
        %3258 = vmatprep.subr.mxu0 0.0
        %3259 = vmatpush1.xpose.msra.mxu0 0.0
        %3260 = vmatprep.subr.mxu0 0.0
        %3261 = vmatpush1.xpose.msra.mxu0 0.0
        %3262 = vmatprep.subr.mxu0 0.0
        %3263 = vmatpush1.xpose.msra.mxu0 0.0
        %3264 = vmatprep.subr.mxu0 0.0
        %3265 = vmatpush1.xpose.msra.mxu0 0.0
        %3266 = vmatprep.subr.mxu0 0.0
        %3267 = vmatpush1.xpose.msra.mxu0 0.0
        %3268 = vmatprep.subr.mxu0 0.0
        %3269 = vmatpush1.xpose.msra.mxu0 0.0
        %3270 = vmatprep.subr.mxu0 0.0
        %3271 = vmatpush1.xpose.msra.mxu0 0.0
        %3272 = vmatprep.subr.mxu0 0.0
        %3273 = vmatpush1.xpose.msra.mxu0 0.0
        %3274 = vmatprep.subr.mxu0 0.0
        %3275 = vmatpush1.xpose.msra.mxu0 0.0
        %3276 = vmatprep.subr.mxu0 0.0
        %3277 = vmatpush1.xpose.msra.mxu0 0.0
        %3278 = vmatprep.subr.mxu0 0.0
        %3279 = vmatpush1.xpose.msra.mxu0 0.0
        %3280 = vmatprep.subr.mxu0 0.0
        %3281 = vmatpush1.xpose.msra.mxu0 0.0
        %3282 = vmatprep.subr.mxu0 0.0
        %3283 = vmatpush1.xpose.msra.mxu0 0.0
        %3284 = vmatprep.mubr.f32.mxu0 0.0
        %v3285 = vand.u32 %v2913, 4294901760
        %3286 = vmatmul.mubr.f32.gmra.mrb[0].mxu0 %v3285
        %v3287 = vpop.f32.mrb[0].mxu0
        %v3288 = vadd.f32 %v3214, %v3287
        %v3289 = vpop.f32.mrb[0].mxu0
        %3290 = vdwg.mxu0
        %3291 = vmatprep.subr.mxu0 0.0
        %v3292 = vand.u32 %v2915, 4294901760
        %3293 = vmatpush1.xpose.msra.mxu0 %v3292
        %3294 = vmatprep.subr.mxu0 0.0
        %3295 = vmatpush1.xpose.msra.mxu0 0.0
        %3296 = vmatprep.subr.mxu0 0.0
        %3297 = vmatpush1.xpose.msra.mxu0 0.0
        %3298 = vmatprep.subr.mxu0 0.0
        %3299 = vmatpush1.xpose.msra.mxu0 0.0
        %3300 = vmatprep.subr.mxu0 0.0
        %3301 = vmatpush1.xpose.msra.mxu0 0.0
        %3302 = vmatprep.subr.mxu0 0.0
        %3303 = vmatpush1.xpose.msra.mxu0 0.0
        %3304 = vmatprep.subr.mxu0 0.0
        %3305 = vmatpush1.xpose.msra.mxu0 0.0
        %3306 = vmatprep.subr.mxu0 0.0
        %3307 = vmatpush1.xpose.msra.mxu0 0.0
        %3308 = vmatprep.subr.mxu0 0.0
        %3309 = vmatpush1.xpose.msra.mxu0 0.0
        %3310 = vmatprep.subr.mxu0 0.0
        %3311 = vmatpush1.xpose.msra.mxu0 0.0
        %3312 = vmatprep.subr.mxu0 0.0
        %3313 = vmatpush1.xpose.msra.mxu0 0.0
        %3314 = vmatprep.subr.mxu0 0.0
        %3315 = vmatpush1.xpose.msra.mxu0 0.0
        %3316 = vmatprep.subr.mxu0 0.0
        %3317 = vmatpush1.xpose.msra.mxu0 0.0
        %3318 = vmatprep.subr.mxu0 0.0
        %3319 = vmatpush1.xpose.msra.mxu0 0.0
        %3320 = vmatprep.subr.mxu0 0.0
        %3321 = vmatpush1.xpose.msra.mxu0 0.0
        %3322 = vmatprep.subr.mxu0 0.0
        %3323 = vmatpush1.xpose.msra.mxu0 0.0
        %3324 = vmatprep.subr.mxu0 0.0
        %3325 = vmatpush1.xpose.msra.mxu0 0.0
        %3326 = vmatprep.subr.mxu0 0.0
        %3327 = vmatpush1.xpose.msra.mxu0 0.0
        %3328 = vmatprep.subr.mxu0 0.0
        %3329 = vmatpush1.xpose.msra.mxu0 0.0
        %3330 = vmatprep.subr.mxu0 0.0
        %3331 = vmatpush1.xpose.msra.mxu0 0.0
        %3332 = vmatprep.subr.mxu0 0.0
        %3333 = vmatpush1.xpose.msra.mxu0 0.0
        %3334 = vmatprep.subr.mxu0 0.0
        %3335 = vmatpush1.xpose.msra.mxu0 0.0
        %3336 = vmatprep.subr.mxu0 0.0
        %3337 = vmatpush1.xpose.msra.mxu0 0.0
        %3338 = vmatprep.subr.mxu0 0.0
        %3339 = vmatpush1.xpose.msra.mxu0 0.0
        %3340 = vmatprep.subr.mxu0 0.0
        %3341 = vmatpush1.xpose.msra.mxu0 0.0
        %3342 = vmatprep.subr.mxu0 0.0
        %3343 = vmatpush1.xpose.msra.mxu0 0.0
        %3344 = vmatprep.subr.mxu0 0.0
        %3345 = vmatpush1.xpose.msra.mxu0 0.0
        %3346 = vmatprep.subr.mxu0 0.0
        %3347 = vmatpush1.xpose.msra.mxu0 0.0
        %3348 = vmatprep.subr.mxu0 0.0
        %3349 = vmatpush1.xpose.msra.mxu0 0.0
        %3350 = vmatprep.subr.mxu0 0.0
        %3351 = vmatpush1.xpose.msra.mxu0 0.0
        %3352 = vmatprep.subr.mxu0 0.0
        %3353 = vmatpush1.xpose.msra.mxu0 0.0
        %3354 = vmatprep.subr.mxu0 0.0
        %3355 = vmatpush1.xpose.msra.mxu0 0.0
        %3356 = vmatprep.mubr.f32.mxu0 0.0
        %v3357 = vand.u32 %v2913, 4294901760
        %3358 = vmatmul.mubr.f32.gmra.mrb[0].mxu0 %v3357
        %v3359 = vpop.f32.mrb[0].mxu0
        %v3360 = vadd.f32 %v3288, %v3359
        %v3361 = vpop.f32.mrb[0].mxu0
        %3362 = vdwg.mxu0
        %v3363 = vmul.f32 %v3360, 0.35355338
        %v3364 = vsel %vm1995, %v3363, -inf
        %3365 = vmax.xlane.f32.xlu0 %v3364
        %v3366 = vpop.xlane.xlu0 %3365
        %v3367 = vsub.f32 %v3363, %v3366
        %v3368 = vmul.f32 %v3367, 1.442695
        %v3369 = vpow.pop %v3368
        %v3370 = vsel %vm1995, %v3369, 0.0
        %3371 = vadd.xlane.f32.xlu0 %v3370
        %v3372 = vpop.xlane.xlu0 %3371
        %v3373 = vrcp.pop %v3372
        %v3374 = vmul.f32 %v3369, %v3373
        %3376 = vrot.lane.b32.xlu0 %v1992, 120
        %v3377 = vpop.permute.xlu0 %3376
        %v3380 = vsel %vm1995, %v3374, 0
        %3382 = vmatprep.subr.mxu0 0.0
        %v3383 = vand.u32 %v3377, 4294901760
        %3384 = vmatpush1.msra.mxu0 %v3383
        %3385 = vmatprep.subr.mxu0 0.0
        %3386 = vmatpush1.msra.mxu0 0.0
        %3387 = vmatprep.subr.mxu0 0.0
        %3388 = vmatpush1.msra.mxu0 0.0
        %3389 = vmatprep.subr.mxu0 0.0
        %3390 = vmatpush1.msra.mxu0 0.0
        %3391 = vmatprep.subr.mxu0 0.0
        %3392 = vmatpush1.msra.mxu0 0.0
        %3393 = vmatprep.subr.mxu0 0.0
        %3394 = vmatpush1.msra.mxu0 0.0
        %3395 = vmatprep.subr.mxu0 0.0
        %3396 = vmatpush1.msra.mxu0 0.0
        %3397 = vmatprep.subr.mxu0 0.0
        %3398 = vmatpush1.msra.mxu0 0.0
        %3399 = vmatprep.subr.mxu0 0.0
        %3400 = vmatpush1.msra.mxu0 0.0
        %3401 = vmatprep.subr.mxu0 0.0
        %3402 = vmatpush1.msra.mxu0 0.0
        %3403 = vmatprep.subr.mxu0 0.0
        %3404 = vmatpush1.msra.mxu0 0.0
        %3405 = vmatprep.subr.mxu0 0.0
        %3406 = vmatpush1.msra.mxu0 0.0
        %3407 = vmatprep.subr.mxu0 0.0
        %3408 = vmatpush1.msra.mxu0 0.0
        %3409 = vmatprep.subr.mxu0 0.0
        %3410 = vmatpush1.msra.mxu0 0.0
        %3411 = vmatprep.subr.mxu0 0.0
        %3412 = vmatpush1.msra.mxu0 0.0
        %3413 = vmatprep.subr.mxu0 0.0
        %3414 = vmatpush1.msra.mxu0 0.0
        %3415 = vmatprep.subr.mxu0 0.0
        %3416 = vmatpush1.msra.mxu0 0.0
        %3417 = vmatprep.subr.mxu0 0.0
        %3418 = vmatpush1.msra.mxu0 0.0
        %3419 = vmatprep.subr.mxu0 0.0
        %3420 = vmatpush1.msra.mxu0 0.0
        %3421 = vmatprep.subr.mxu0 0.0
        %3422 = vmatpush1.msra.mxu0 0.0
        %3423 = vmatprep.subr.mxu0 0.0
        %3424 = vmatpush1.msra.mxu0 0.0
        %3425 = vmatprep.subr.mxu0 0.0
        %3426 = vmatpush1.msra.mxu0 0.0
        %3427 = vmatprep.subr.mxu0 0.0
        %3428 = vmatpush1.msra.mxu0 0.0
        %3429 = vmatprep.subr.mxu0 0.0
        %3430 = vmatpush1.msra.mxu0 0.0
        %3431 = vmatprep.subr.mxu0 0.0
        %3432 = vmatpush1.msra.mxu0 0.0
        %3433 = vmatprep.subr.mxu0 0.0
        %3434 = vmatpush1.msra.mxu0 0.0
        %3435 = vmatprep.subr.mxu0 0.0
        %3436 = vmatpush1.msra.mxu0 0.0
        %3437 = vmatprep.subr.mxu0 0.0
        %3438 = vmatpush1.msra.mxu0 0.0
        %3439 = vmatprep.subr.mxu0 0.0
        %3440 = vmatpush1.msra.mxu0 0.0
        %3441 = vmatprep.subr.mxu0 0.0
        %3442 = vmatpush1.msra.mxu0 0.0
        %3443 = vmatprep.subr.mxu0 0.0
        %3444 = vmatpush1.msra.mxu0 0.0
        %3445 = vmatprep.subr.mxu0 0.0
        %3446 = vmatpush1.msra.mxu0 0.0
        %3447 = vmatprep.mubr.f32.mxu0 0.0
        %v3448 = vand.u32 %v3380, 4294901760
        %v3449 = vsub.f32 %v3380, %v3448
        %v3450 = vand.u32 %v3449, 4294901760
        %v3451 = vsub.f32 %v3449, %v3450
        %v3452 = vand.u32 %v3451, 4294901760
        %3453 = vmatmul.mubr.f32.gmra.mrb[0].mxu0 %v3452
        %v3454 = vpop.f32.mrb[0].mxu0
        %v3455 = vadd.f32 0.0, %v3454
        %v3456 = vpop.f32.mrb[0].mxu0
        %3457 = vdwg.mxu0
        %3458 = vmatprep.subr.mxu0 0.0
        %v3459 = vand.u32 %v3377, 4294901760
        %v3460 = vsub.f32 %v3377, %v3459
        %v3461 = vand.u32 %v3460, 4294901760
        %v3462 = vsub.f32 %v3460, %v3461
        %v3463 = vand.u32 %v3462, 4294901760
        %3464 = vmatpush1.msra.mxu0 %v3463
        %3465 = vmatprep.subr.mxu0 0.0
        %3466 = vmatpush1.msra.mxu0 0.0
        %3467 = vmatprep.subr.mxu0 0.0
        %3468 = vmatpush1.msra.mxu0 0.0
        %3469 = vmatprep.subr.mxu0 0.0
        %3470 = vmatpush1.msra.mxu0 0.0
        %3471 = vmatprep.subr.mxu0 0.0
        %3472 = vmatpush1.msra.mxu0 0.0
        %3473 = vmatprep.subr.mxu0 0.0
        %3474 = vmatpush1.msra.mxu0 0.0
        %3475 = vmatprep.subr.mxu0 0.0
        %3476 = vmatpush1.msra.mxu0 0.0
        %3477 = vmatprep.subr.mxu0 0.0
        %3478 = vmatpush1.msra.mxu0 0.0
        %3479 = vmatprep.subr.mxu0 0.0
        %3480 = vmatpush1.msra.mxu0 0.0
        %3481 = vmatprep.subr.mxu0 0.0
        %3482 = vmatpush1.msra.mxu0 0.0
        %3483 = vmatprep.subr.mxu0 0.0
        %3484 = vmatpush1.msra.mxu0 0.0
        %3485 = vmatprep.subr.mxu0 0.0
        %3486 = vmatpush1.msra.mxu0 0.0
        %3487 = vmatprep.subr.mxu0 0.0
        %3488 = vmatpush1.msra.mxu0 0.0
        %3489 = vmatprep.subr.mxu0 0.0
        %3490 = vmatpush1.msra.mxu0 0.0
        %3491 = vmatprep.subr.mxu0 0.0
        %3492 = vmatpush1.msra.mxu0 0.0
        %3493 = vmatprep.subr.mxu0 0.0
        %3494 = vmatpush1.msra.mxu0 0.0
        %3495 = vmatprep.subr.mxu0 0.0
        %3496 = vmatpush1.msra.mxu0 0.0
        %3497 = vmatprep.subr.mxu0 0.0
        %3498 = vmatpush1.msra.mxu0 0.0
        %3499 = vmatprep.subr.mxu0 0.0
        %3500 = vmatpush1.msra.mxu0 0.0
        %3501 = vmatprep.subr.mxu0 0.0
        %3502 = vmatpush1.msra.mxu0 0.0
        %3503 = vmatprep.subr.mxu0 0.0
        %3504 = vmatpush1.msra.mxu0 0.0
        %3505 = vmatprep.subr.mxu0 0.0
        %3506 = vmatpush1.msra.mxu0 0.0
        %3507 = vmatprep.subr.mxu0 0.0
        %3508 = vmatpush1.msra.mxu0 0.0
        %3509 = vmatprep.subr.mxu0 0.0
        %3510 = vmatpush1.msra.mxu0 0.0
        %3511 = vmatprep.subr.mxu0 0.0
        %3512 = vmatpush1.msra.mxu0 0.0
        %3513 = vmatprep.subr.mxu0 0.0
        %3514 = vmatpush1.msra.mxu0 0.0
        %3515 = vmatprep.subr.mxu0 0.0
        %3516 = vmatpush1.msra.mxu0 0.0
        %3517 = vmatprep.subr.mxu0 0.0
        %3518 = vmatpush1.msra.mxu0 0.0
        %3519 = vmatprep.subr.mxu0 0.0
        %3520 = vmatpush1.msra.mxu0 0.0
        %3521 = vmatprep.subr.mxu0 0.0
        %3522 = vmatpush1.msra.mxu0 0.0
        %3523 = vmatprep.subr.mxu0 0.0
        %3524 = vmatpush1.msra.mxu0 0.0
        %3525 = vmatprep.subr.mxu0 0.0
        %3526 = vmatpush1.msra.mxu0 0.0
        %3527 = vmatprep.mubr.f32.mxu0 0.0
        %v3528 = vand.u32 %v3380, 4294901760
        %3529 = vmatmul.mubr.f32.gmra.mrb[0].mxu0 %v3528
        %v3530 = vpop.f32.mrb[0].mxu0
        %v3531 = vadd.f32 %v3455, %v3530
        %v3532 = vpop.f32.mrb[0].mxu0
        %3533 = vdwg.mxu0
        %3534 = vmatprep.subr.mxu0 0.0
        %v3535 = vand.u32 %v3377, 4294901760
        %v3536 = vsub.f32 %v3377, %v3535
        %3537 = vmatpush1.msra.mxu0 %v3536
        %3538 = vmatprep.subr.mxu0 0.0
        %3539 = vmatpush1.msra.mxu0 0.0
        %3540 = vmatprep.subr.mxu0 0.0
        %3541 = vmatpush1.msra.mxu0 0.0
        %3542 = vmatprep.subr.mxu0 0.0
        %3543 = vmatpush1.msra.mxu0 0.0
        %3544 = vmatprep.subr.mxu0 0.0
        %3545 = vmatpush1.msra.mxu0 0.0
        %3546 = vmatprep.subr.mxu0 0.0
        %3547 = vmatpush1.msra.mxu0 0.0
        %3548 = vmatprep.subr.mxu0 0.0
        %3549 = vmatpush1.msra.mxu0 0.0
        %3550 = vmatprep.subr.mxu0 0.0
        %3551 = vmatpush1.msra.mxu0 0.0
        %3552 = vmatprep.subr.mxu0 0.0
        %3553 = vmatpush1.msra.mxu0 0.0
        %3554 = vmatprep.subr.mxu0 0.0
        %3555 = vmatpush1.msra.mxu0 0.0
        %3556 = vmatprep.subr.mxu0 0.0
        %3557 = vmatpush1.msra.mxu0 0.0
        %3558 = vmatprep.subr.mxu0 0.0
        %3559 = vmatpush1.msra.mxu0 0.0
        %3560 = vmatprep.subr.mxu0 0.0
        %3561 = vmatpush1.msra.mxu0 0.0
        %3562 = vmatprep.subr.mxu0 0.0
        %3563 = vmatpush1.msra.mxu0 0.0
        %3564 = vmatprep.subr.mxu0 0.0
        %3565 = vmatpush1.msra.mxu0 0.0
        %3566 = vmatprep.subr.mxu0 0.0
        %3567 = vmatpush1.msra.mxu0 0.0
        %3568 = vmatprep.subr.mxu0 0.0
        %3569 = vmatpush1.msra.mxu0 0.0
        %3570 = vmatprep.subr.mxu0 0.0
        %3571 = vmatpush1.msra.mxu0 0.0
        %3572 = vmatprep.subr.mxu0 0.0
        %3573 = vmatpush1.msra.mxu0 0.0
        %3574 = vmatprep.subr.mxu0 0.0
        %3575 = vmatpush1.msra.mxu0 0.0
        %3576 = vmatprep.subr.mxu0 0.0
        %3577 = vmatpush1.msra.mxu0 0.0
        %3578 = vmatprep.subr.mxu0 0.0
        %3579 = vmatpush1.msra.mxu0 0.0
        %3580 = vmatprep.subr.mxu0 0.0
        %3581 = vmatpush1.msra.mxu0 0.0
        %3582 = vmatprep.subr.mxu0 0.0
        %3583 = vmatpush1.msra.mxu0 0.0
        %3584 = vmatprep.subr.mxu0 0.0
        %3585 = vmatpush1.msra.mxu0 0.0
        %3586 = vmatprep.subr.mxu0 0.0
        %3587 = vmatpush1.msra.mxu0 0.0
        %3588 = vmatprep.subr.mxu0 0.0
        %3589 = vmatpush1.msra.mxu0 0.0
        %3590 = vmatprep.subr.mxu0 0.0
        %3591 = vmatpush1.msra.mxu0 0.0
        %3592 = vmatprep.subr.mxu0 0.0
        %3593 = vmatpush1.msra.mxu0 0.0
        %3594 = vmatprep.subr.mxu0 0.0
        %3595 = vmatpush1.msra.mxu0 0.0
        %3596 = vmatprep.subr.mxu0 0.0
        %3597 = vmatpush1.msra.mxu0 0.0
        %3598 = vmatprep.subr.mxu0 0.0
        %3599 = vmatpush1.msra.mxu0 0.0
        %3600 = vmatprep.mubr.f32.mxu0 0.0
        %v3601 = vand.u32 %v3380, 4294901760
        %v3602 = vsub.f32 %v3380, %v3601
        %3603 = vmatmul.mubr.f32.gmra.mrb[0].mxu0 %v3602
        %v3604 = vpop.f32.mrb[0].mxu0
        %v3605 = vadd.f32 %v3531, %v3604
        %v3606 = vpop.f32.mrb[0].mxu0
        %3607 = vdwg.mxu0
        %3608 = vmatprep.subr.mxu0 0.0
        %v3609 = vand.u32 %v3377, 4294901760
        %3610 = vmatpush1.msra.mxu0 %v3609
        %3611 = vmatprep.subr.mxu0 0.0
        %3612 = vmatpush1.msra.mxu0 0.0
        %3613 = vmatprep.subr.mxu0 0.0
        %3614 = vmatpush1.msra.mxu0 0.0
        %3615 = vmatprep.subr.mxu0 0.0
        %3616 = vmatpush1.msra.mxu0 0.0
        %3617 = vmatprep.subr.mxu0 0.0
        %3618 = vmatpush1.msra.mxu0 0.0
        %3619 = vmatprep.subr.mxu0 0.0
        %3620 = vmatpush1.msra.mxu0 0.0
        %3621 = vmatprep.subr.mxu0 0.0
        %3622 = vmatpush1.msra.mxu0 0.0
        %3623 = vmatprep.subr.mxu0 0.0
        %3624 = vmatpush1.msra.mxu0 0.0
        %3625 = vmatprep.subr.mxu0 0.0
        %3626 = vmatpush1.msra.mxu0 0.0
        %3627 = vmatprep.subr.mxu0 0.0
        %3628 = vmatpush1.msra.mxu0 0.0
        %3629 = vmatprep.subr.mxu0 0.0
        %3630 = vmatpush1.msra.mxu0 0.0
        %3631 = vmatprep.subr.mxu0 0.0
        %3632 = vmatpush1.msra.mxu0 0.0
        %3633 = vmatprep.subr.mxu0 0.0
        %3634 = vmatpush1.msra.mxu0 0.0
        %3635 = vmatprep.subr.mxu0 0.0
        %3636 = vmatpush1.msra.mxu0 0.0
        %3637 = vmatprep.subr.mxu0 0.0
        %3638 = vmatpush1.msra.mxu0 0.0
        %3639 = vmatprep.subr.mxu0 0.0
        %3640 = vmatpush1.msra.mxu0 0.0
        %3641 = vmatprep.subr.mxu0 0.0
        %3642 = vmatpush1.msra.mxu0 0.0
        %3643 = vmatprep.subr.mxu0 0.0
        %3644 = vmatpush1.msra.mxu0 0.0
        %3645 = vmatprep.subr.mxu0 0.0
        %3646 = vmatpush1.msra.mxu0 0.0
        %3647 = vmatprep.subr.mxu0 0.0
        %3648 = vmatpush1.msra.mxu0 0.0
        %3649 = vmatprep.subr.mxu0 0.0
        %3650 = vmatpush1.msra.mxu0 0.0
        %3651 = vmatprep.subr.mxu0 0.0
        %3652 = vmatpush1.msra.mxu0 0.0
        %3653 = vmatprep.subr.mxu0 0.0
        %3654 = vmatpush1.msra.mxu0 0.0
        %3655 = vmatprep.subr.mxu0 0.0
        %3656 = vmatpush1.msra.mxu0 0.0
        %3657 = vmatprep.subr.mxu0 0.0
        %3658 = vmatpush1.msra.mxu0 0.0
        %3659 = vmatprep.subr.mxu0 0.0
        %3660 = vmatpush1.msra.mxu0 0.0
        %3661 = vmatprep.subr.mxu0 0.0
        %3662 = vmatpush1.msra.mxu0 0.0
        %3663 = vmatprep.subr.mxu0 0.0
        %3664 = vmatpush1.msra.mxu0 0.0
        %3665 = vmatprep.subr.mxu0 0.0
        %3666 = vmatpush1.msra.mxu0 0.0
        %3667 = vmatprep.subr.mxu0 0.0
        %3668 = vmatpush1.msra.mxu0 0.0
        %3669 = vmatprep.subr.mxu0 0.0
        %3670 = vmatpush1.msra.mxu0 0.0
        %3671 = vmatprep.subr.mxu0 0.0
        %3672 = vmatpush1.msra.mxu0 0.0
        %3673 = vmatprep.mubr.f32.mxu0 0.0
        %v3674 = vand.u32 %v3380, 4294901760
        %v3675 = vsub.f32 %v3380, %v3674
        %v3676 = vand.u32 %v3675, 4294901760
        %3677 = vmatmul.mubr.f32.gmra.mrb[0].mxu0 %v3676
        %v3678 = vpop.f32.mrb[0].mxu0
        %v3679 = vadd.f32 %v3605, %v3678
        %v3680 = vpop.f32.mrb[0].mxu0
        %3681 = vdwg.mxu0
        %3682 = vmatprep.subr.mxu0 0.0
        %v3683 = vand.u32 %v3377, 4294901760
        %v3684 = vsub.f32 %v3377, %v3683
        %v3685 = vand.u32 %v3684, 4294901760
        %3686 = vmatpush1.msra.mxu0 %v3685
        %3687 = vmatprep.subr.mxu0 0.0
        %3688 = vmatpush1.msra.mxu0 0.0
        %3689 = vmatprep.subr.mxu0 0.0
        %3690 = vmatpush1.msra.mxu0 0.0
        %3691 = vmatprep.subr.mxu0 0.0
        %3692 = vmatpush1.msra.mxu0 0.0
        %3693 = vmatprep.subr.mxu0 0.0
        %3694 = vmatpush1.msra.mxu0 0.0
        %3695 = vmatprep.subr.mxu0 0.0
        %3696 = vmatpush1.msra.mxu0 0.0
        %3697 = vmatprep.subr.mxu0 0.0
        %3698 = vmatpush1.msra.mxu0 0.0
        %3699 = vmatprep.subr.mxu0 0.0
        %3700 = vmatpush1.msra.mxu0 0.0
        %3701 = vmatprep.subr.mxu0 0.0
        %3702 = vmatpush1.msra.mxu0 0.0
        %3703 = vmatprep.subr.mxu0 0.0
        %3704 = vmatpush1.msra.mxu0 0.0
        %3705 = vmatprep.subr.mxu0 0.0
        %3706 = vmatpush1.msra.mxu0 0.0
        %3707 = vmatprep.subr.mxu0 0.0
        %3708 = vmatpush1.msra.mxu0 0.0
        %3709 = vmatprep.subr.mxu0 0.0
        %3710 = vmatpush1.msra.mxu0 0.0
        %3711 = vmatprep.subr.mxu0 0.0
        %3712 = vmatpush1.msra.mxu0 0.0
        %3713 = vmatprep.subr.mxu0 0.0
        %3714 = vmatpush1.msra.mxu0 0.0
        %3715 = vmatprep.subr.mxu0 0.0
        %3716 = vmatpush1.msra.mxu0 0.0
        %3717 = vmatprep.subr.mxu0 0.0
        %3718 = vmatpush1.msra.mxu0 0.0
        %3719 = vmatprep.subr.mxu0 0.0
        %3720 = vmatpush1.msra.mxu0 0.0
        %3721 = vmatprep.subr.mxu0 0.0
        %3722 = vmatpush1.msra.mxu0 0.0
        %3723 = vmatprep.subr.mxu0 0.0
        %3724 = vmatpush1.msra.mxu0 0.0
        %3725 = vmatprep.subr.mxu0 0.0
        %3726 = vmatpush1.msra.mxu0 0.0
        %3727 = vmatprep.subr.mxu0 0.0
        %3728 = vmatpush1.msra.mxu0 0.0
        %3729 = vmatprep.subr.mxu0 0.0
        %3730 = vmatpush1.msra.mxu0 0.0
        %3731 = vmatprep.subr.mxu0 0.0
        %3732 = vmatpush1.msra.mxu0 0.0
        %3733 = vmatprep.subr.mxu0 0.0
        %3734 = vmatpush1.msra.mxu0 0.0
        %3735 = vmatprep.subr.mxu0 0.0
        %3736 = vmatpush1.msra.mxu0 0.0
        %3737 = vmatprep.subr.mxu0 0.0
        %3738 = vmatpush1.msra.mxu0 0.0
        %3739 = vmatprep.subr.mxu0 0.0
        %3740 = vmatpush1.msra.mxu0 0.0
        %3741 = vmatprep.subr.mxu0 0.0
        %3742 = vmatpush1.msra.mxu0 0.0
        %3743 = vmatprep.subr.mxu0 0.0
        %3744 = vmatpush1.msra.mxu0 0.0
        %3745 = vmatprep.subr.mxu0 0.0
        %3746 = vmatpush1.msra.mxu0 0.0
        %3747 = vmatprep.subr.mxu0 0.0
        %3748 = vmatpush1.msra.mxu0 0.0
        %3749 = vmatprep.mubr.f32.mxu0 0.0
        %v3750 = vand.u32 %v3380, 4294901760
        %3751 = vmatmul.mubr.f32.gmra.mrb[0].mxu0 %v3750
        %v3752 = vpop.f32.mrb[0].mxu0
        %v3753 = vadd.f32 %v3679, %v3752
        %v3754 = vpop.f32.mrb[0].mxu0
        %3755 = vdwg.mxu0
        %3756 = vmatprep.subr.mxu0 0.0
        %v3757 = vand.u32 %v3377, 4294901760
        %3758 = vmatpush1.msra.mxu0 %v3757
        %3759 = vmatprep.subr.mxu0 0.0
        %3760 = vmatpush1.msra.mxu0 0.0
        %3761 = vmatprep.subr.mxu0 0.0
        %3762 = vmatpush1.msra.mxu0 0.0
        %3763 = vmatprep.subr.mxu0 0.0
        %3764 = vmatpush1.msra.mxu0 0.0
        %3765 = vmatprep.subr.mxu0 0.0
        %3766 = vmatpush1.msra.mxu0 0.0
        %3767 = vmatprep.subr.mxu0 0.0
        %3768 = vmatpush1.msra.mxu0 0.0
        %3769 = vmatprep.subr.mxu0 0.0
        %3770 = vmatpush1.msra.mxu0 0.0
        %3771 = vmatprep.subr.mxu0 0.0
        %3772 = vmatpush1.msra.mxu0 0.0
        %3773 = vmatprep.subr.mxu0 0.0
        %3774 = vmatpush1.msra.mxu0 0.0
        %3775 = vmatprep.subr.mxu0 0.0
        %3776 = vmatpush1.msra.mxu0 0.0
        %3777 = vmatprep.subr.mxu0 0.0
        %3778 = vmatpush1.msra.mxu0 0.0
        %3779 = vmatprep.subr.mxu0 0.0
        %3780 = vmatpush1.msra.mxu0 0.0
        %3781 = vmatprep.subr.mxu0 0.0
        %3782 = vmatpush1.msra.mxu0 0.0
        %3783 = vmatprep.subr.mxu0 0.0
        %3784 = vmatpush1.msra.mxu0 0.0
        %3785 = vmatprep.subr.mxu0 0.0
        %3786 = vmatpush1.msra.mxu0 0.0
        %3787 = vmatprep.subr.mxu0 0.0
        %3788 = vmatpush1.msra.mxu0 0.0
        %3789 = vmatprep.subr.mxu0 0.0
        %3790 = vmatpush1.msra.mxu0 0.0
        %3791 = vmatprep.subr.mxu0 0.0
        %3792 = vmatpush1.msra.mxu0 0.0
        %3793 = vmatprep.subr.mxu0 0.0
        %3794 = vmatpush1.msra.mxu0 0.0
        %3795 = vmatprep.subr.mxu0 0.0
        %3796 = vmatpush1.msra.mxu0 0.0
        %3797 = vmatprep.subr.mxu0 0.0
        %3798 = vmatpush1.msra.mxu0 0.0
        %3799 = vmatprep.subr.mxu0 0.0
        %3800 = vmatpush1.msra.mxu0 0.0
        %3801 = vmatprep.subr.mxu0 0.0
        %3802 = vmatpush1.msra.mxu0 0.0
        %3803 = vmatprep.subr.mxu0 0.0
        %3804 = vmatpush1.msra.mxu0 0.0
        %3805 = vmatprep.subr.mxu0 0.0
        %3806 = vmatpush1.msra.mxu0 0.0
        %3807 = vmatprep.subr.mxu0 0.0
        %3808 = vmatpush1.msra.mxu0 0.0
        %3809 = vmatprep.subr.mxu0 0.0
        %3810 = vmatpush1.msra.mxu0 0.0
        %3811 = vmatprep.subr.mxu0 0.0
        %3812 = vmatpush1.msra.mxu0 0.0
        %3813 = vmatprep.subr.mxu0 0.0
        %3814 = vmatpush1.msra.mxu0 0.0
        %3815 = vmatprep.subr.mxu0 0.0
        %3816 = vmatpush1.msra.mxu0 0.0
        %3817 = vmatprep.subr.mxu0 0.0
        %3818 = vmatpush1.msra.mxu0 0.0
        %3819 = vmatprep.subr.mxu0 0.0
        %3820 = vmatpush1.msra.mxu0 0.0
        %3821 = vmatprep.mubr.f32.mxu0 0.0
        %v3822 = vand.u32 %v3380, 4294901760
        %3823 = vmatmul.mubr.f32.gmra.mrb[0].mxu0 %v3822
        %v3824 = vpop.f32.mrb[0].mxu0
        %v3825 = vadd.f32 %v3753, %v3824
        %v3826 = vpop.f32.mrb[0].mxu0
        %3827 = vdwg.mxu0
        %3828 = vrot.lane.b32.xlu0 %v1014, 112
        %v3829 = vpop.permute.xlu0 %3828
        %3830 = vrot.lane.b32.xlu0 %v1503, 112
        %v3831 = vpop.permute.xlu0 %3830
        %v3832 = vsel %vm1995, %v3829, 0
        %v3834 = vsel %vm1995, %v3831, 0
        %3836 = vmatprep.subr.mxu0 0.0
        %v3837 = vand.u32 %v3834, 4294901760
        %3838 = vmatpush1.xpose.msra.mxu0 %v3837
        %3839 = vmatprep.subr.mxu0 0.0
        %3840 = vmatpush1.xpose.msra.mxu0 0.0
        %3841 = vmatprep.subr.mxu0 0.0
        %3842 = vmatpush1.xpose.msra.mxu0 0.0
        %3843 = vmatprep.subr.mxu0 0.0
        %3844 = vmatpush1.xpose.msra.mxu0 0.0
        %3845 = vmatprep.subr.mxu0 0.0
        %3846 = vmatpush1.xpose.msra.mxu0 0.0
        %3847 = vmatprep.subr.mxu0 0.0
        %3848 = vmatpush1.xpose.msra.mxu0 0.0
        %3849 = vmatprep.subr.mxu0 0.0
        %3850 = vmatpush1.xpose.msra.mxu0 0.0
        %3851 = vmatprep.subr.mxu0 0.0
        %3852 = vmatpush1.xpose.msra.mxu0 0.0
        %3853 = vmatprep.subr.mxu0 0.0
        %3854 = vmatpush1.xpose.msra.mxu0 0.0
        %3855 = vmatprep.subr.mxu0 0.0
        %3856 = vmatpush1.xpose.msra.mxu0 0.0
        %3857 = vmatprep.subr.mxu0 0.0
        %3858 = vmatpush1.xpose.msra.mxu0 0.0
        %3859 = vmatprep.subr.mxu0 0.0
        %3860 = vmatpush1.xpose.msra.mxu0 0.0
        %3861 = vmatprep.subr.mxu0 0.0
        %3862 = vmatpush1.xpose.msra.mxu0 0.0
        %3863 = vmatprep.subr.mxu0 0.0
        %3864 = vmatpush1.xpose.msra.mxu0 0.0
        %3865 = vmatprep.subr.mxu0 0.0
        %3866 = vmatpush1.xpose.msra.mxu0 0.0
        %3867 = vmatprep.subr.mxu0 0.0
        %3868 = vmatpush1.xpose.msra.mxu0 0.0
        %3869 = vmatprep.subr.mxu0 0.0
        %3870 = vmatpush1.xpose.msra.mxu0 0.0
        %3871 = vmatprep.subr.mxu0 0.0
        %3872 = vmatpush1.xpose.msra.mxu0 0.0
        %3873 = vmatprep.subr.mxu0 0.0
        %3874 = vmatpush1.xpose.msra.mxu0 0.0
        %3875 = vmatprep.subr.mxu0 0.0
        %3876 = vmatpush1.xpose.msra.mxu0 0.0
        %3877 = vmatprep.subr.mxu0 0.0
        %3878 = vmatpush1.xpose.msra.mxu0 0.0
        %3879 = vmatprep.subr.mxu0 0.0
        %3880 = vmatpush1.xpose.msra.mxu0 0.0
        %3881 = vmatprep.subr.mxu0 0.0
        %3882 = vmatpush1.xpose.msra.mxu0 0.0
        %3883 = vmatprep.subr.mxu0 0.0
        %3884 = vmatpush1.xpose.msra.mxu0 0.0
        %3885 = vmatprep.subr.mxu0 0.0
        %3886 = vmatpush1.xpose.msra.mxu0 0.0
        %3887 = vmatprep.subr.mxu0 0.0
        %3888 = vmatpush1.xpose.msra.mxu0 0.0
        %3889 = vmatprep.subr.mxu0 0.0
        %3890 = vmatpush1.xpose.msra.mxu0 0.0
        %3891 = vmatprep.subr.mxu0 0.0
        %3892 = vmatpush1.xpose.msra.mxu0 0.0
        %3893 = vmatprep.subr.mxu0 0.0
        %3894 = vmatpush1.xpose.msra.mxu0 0.0
        %3895 = vmatprep.subr.mxu0 0.0
        %3896 = vmatpush1.xpose.msra.mxu0 0.0
        %3897 = vmatprep.subr.mxu0 0.0
        %3898 = vmatpush1.xpose.msra.mxu0 0.0
        %3899 = vmatprep.subr.mxu0 0.0
        %3900 = vmatpush1.xpose.msra.mxu0 0.0
        %3901 = vmatprep.mubr.f32.mxu0 0.0
        %v3902 = vand.u32 %v3832, 4294901760
        %v3903 = vsub.f32 %v3832, %v3902
        %v3904 = vand.u32 %v3903, 4294901760
        %v3905 = vsub.f32 %v3903, %v3904
        %v3906 = vand.u32 %v3905, 4294901760
        %3907 = vmatmul.mubr.f32.gmra.mrb[0].mxu0 %v3906
        %v3908 = vpop.f32.mrb[0].mxu0
        %v3909 = vadd.f32 0.0, %v3908
        %v3910 = vpop.f32.mrb[0].mxu0
        %3911 = vdwg.mxu0
        %3912 = vmatprep.subr.mxu0 0.0
        %v3913 = vand.u32 %v3834, 4294901760
        %v3914 = vsub.f32 %v3834, %v3913
        %v3915 = vand.u32 %v3914, 4294901760
        %v3916 = vsub.f32 %v3914, %v3915
        %v3917 = vand.u32 %v3916, 4294901760
        %3918 = vmatpush1.xpose.msra.mxu0 %v3917
        %3919 = vmatprep.subr.mxu0 0.0
        %3920 = vmatpush1.xpose.msra.mxu0 0.0
        %3921 = vmatprep.subr.mxu0 0.0
        %3922 = vmatpush1.xpose.msra.mxu0 0.0
        %3923 = vmatprep.subr.mxu0 0.0
        %3924 = vmatpush1.xpose.msra.mxu0 0.0
        %3925 = vmatprep.subr.mxu0 0.0
        %3926 = vmatpush1.xpose.msra.mxu0 0.0
        %3927 = vmatprep.subr.mxu0 0.0
        %3928 = vmatpush1.xpose.msra.mxu0 0.0
        %3929 = vmatprep.subr.mxu0 0.0
        %3930 = vmatpush1.xpose.msra.mxu0 0.0
        %3931 = vmatprep.subr.mxu0 0.0
        %3932 = vmatpush1.xpose.msra.mxu0 0.0
        %3933 = vmatprep.subr.mxu0 0.0
        %3934 = vmatpush1.xpose.msra.mxu0 0.0
        %3935 = vmatprep.subr.mxu0 0.0
        %3936 = vmatpush1.xpose.msra.mxu0 0.0
        %3937 = vmatprep.subr.mxu0 0.0
        %3938 = vmatpush1.xpose.msra.mxu0 0.0
        %3939 = vmatprep.subr.mxu0 0.0
        %3940 = vmatpush1.xpose.msra.mxu0 0.0
        %3941 = vmatprep.subr.mxu0 0.0
        %3942 = vmatpush1.xpose.msra.mxu0 0.0
        %3943 = vmatprep.subr.mxu0 0.0
        %3944 = vmatpush1.xpose.msra.mxu0 0.0
        %3945 = vmatprep.subr.mxu0 0.0
        %3946 = vmatpush1.xpose.msra.mxu0 0.0
        %3947 = vmatprep.subr.mxu0 0.0
        %3948 = vmatpush1.xpose.msra.mxu0 0.0
        %3949 = vmatprep.subr.mxu0 0.0
        %3950 = vmatpush1.xpose.msra.mxu0 0.0
        %3951 = vmatprep.subr.mxu0 0.0
        %3952 = vmatpush1.xpose.msra.mxu0 0.0
        %3953 = vmatprep.subr.mxu0 0.0
        %3954 = vmatpush1.xpose.msra.mxu0 0.0
        %3955 = vmatprep.subr.mxu0 0.0
        %3956 = vmatpush1.xpose.msra.mxu0 0.0
        %3957 = vmatprep.subr.mxu0 0.0
        %3958 = vmatpush1.xpose.msra.mxu0 0.0
        %3959 = vmatprep.subr.mxu0 0.0
        %3960 = vmatpush1.xpose.msra.mxu0 0.0
        %3961 = vmatprep.subr.mxu0 0.0
        %3962 = vmatpush1.xpose.msra.mxu0 0.0
        %3963 = vmatprep.subr.mxu0 0.0
        %3964 = vmatpush1.xpose.msra.mxu0 0.0
        %3965 = vmatprep.subr.mxu0 0.0
        %3966 = vmatpush1.xpose.msra.mxu0 0.0
        %3967 = vmatprep.subr.mxu0 0.0
        %3968 = vmatpush1.xpose.msra.mxu0 0.0
        %3969 = vmatprep.subr.mxu0 0.0
        %3970 = vmatpush1.xpose.msra.mxu0 0.0
        %3971 = vmatprep.subr.mxu0 0.0
        %3972 = vmatpush1.xpose.msra.mxu0 0.0
        %3973 = vmatprep.subr.mxu0 0.0
        %3974 = vmatpush1.xpose.msra.mxu0 0.0
        %3975 = vmatprep.subr.mxu0 0.0
        %3976 = vmatpush1.xpose.msra.mxu0 0.0
        %3977 = vmatprep.subr.mxu0 0.0
        %3978 = vmatpush1.xpose.msra.mxu0 0.0
        %3979 = vmatprep.subr.mxu0 0.0
        %3980 = vmatpush1.xpose.msra.mxu0 0.0
        %3981 = vmatprep.mubr.f32.mxu0 0.0
        %v3982 = vand.u32 %v3832, 4294901760
        %3983 = vmatmul.mubr.f32.gmra.mrb[0].mxu0 %v3982
        %v3984 = vpop.f32.mrb[0].mxu0
        %v3985 = vadd.f32 %v3909, %v3984
        %v3986 = vpop.f32.mrb[0].mxu0
        %3987 = vdwg.mxu0
        %3988 = vmatprep.subr.mxu0 0.0
        %v3989 = vand.u32 %v3834, 4294901760
        %v3990 = vsub.f32 %v3834, %v3989
        %3991 = vmatpush1.xpose.msra.mxu0 %v3990
        %3992 = vmatprep.subr.mxu0 0.0
        %3993 = vmatpush1.xpose.msra.mxu0 0.0
        %3994 = vmatprep.subr.mxu0 0.0
        %3995 = vmatpush1.xpose.msra.mxu0 0.0
        %3996 = vmatprep.subr.mxu0 0.0
        %3997 = vmatpush1.xpose.msra.mxu0 0.0
        %3998 = vmatprep.subr.mxu0 0.0
        %3999 = vmatpush1.xpose.msra.mxu0 0.0
        %4000 = vmatprep.subr.mxu0 0.0
        %4001 = vmatpush1.xpose.msra.mxu0 0.0
        %4002 = vmatprep.subr.mxu0 0.0
        %4003 = vmatpush1.xpose.msra.mxu0 0.0
        %4004 = vmatprep.subr.mxu0 0.0
        %4005 = vmatpush1.xpose.msra.mxu0 0.0
        %4006 = vmatprep.subr.mxu0 0.0
        %4007 = vmatpush1.xpose.msra.mxu0 0.0
        %4008 = vmatprep.subr.mxu0 0.0
        %4009 = vmatpush1.xpose.msra.mxu0 0.0
        %4010 = vmatprep.subr.mxu0 0.0
        %4011 = vmatpush1.xpose.msra.mxu0 0.0
        %4012 = vmatprep.subr.mxu0 0.0
        %4013 = vmatpush1.xpose.msra.mxu0 0.0
        %4014 = vmatprep.subr.mxu0 0.0
        %4015 = vmatpush1.xpose.msra.mxu0 0.0
        %4016 = vmatprep.subr.mxu0 0.0
        %4017 = vmatpush1.xpose.msra.mxu0 0.0
        %4018 = vmatprep.subr.mxu0 0.0
        %4019 = vmatpush1.xpose.msra.mxu0 0.0
        %4020 = vmatprep.subr.mxu0 0.0
        %4021 = vmatpush1.xpose.msra.mxu0 0.0
        %4022 = vmatprep.subr.mxu0 0.0
        %4023 = vmatpush1.xpose.msra.mxu0 0.0
        %4024 = vmatprep.subr.mxu0 0.0
        %4025 = vmatpush1.xpose.msra.mxu0 0.0
        %4026 = vmatprep.subr.mxu0 0.0
        %4027 = vmatpush1.xpose.msra.mxu0 0.0
        %4028 = vmatprep.subr.mxu0 0.0
        %4029 = vmatpush1.xpose.msra.mxu0 0.0
        %4030 = vmatprep.subr.mxu0 0.0
        %4031 = vmatpush1.xpose.msra.mxu0 0.0
        %4032 = vmatprep.subr.mxu0 0.0
        %4033 = vmatpush1.xpose.msra.mxu0 0.0
        %4034 = vmatprep.subr.mxu0 0.0
        %4035 = vmatpush1.xpose.msra.mxu0 0.0
        %4036 = vmatprep.subr.mxu0 0.0
        %4037 = vmatpush1.xpose.msra.mxu0 0.0
        %4038 = vmatprep.subr.mxu0 0.0
        %4039 = vmatpush1.xpose.msra.mxu0 0.0
        %4040 = vmatprep.subr.mxu0 0.0
        %4041 = vmatpush1.xpose.msra.mxu0 0.0
        %4042 = vmatprep.subr.mxu0 0.0
        %4043 = vmatpush1.xpose.msra.mxu0 0.0
        %4044 = vmatprep.subr.mxu0 0.0
        %4045 = vmatpush1.xpose.msra.mxu0 0.0
        %4046 = vmatprep.subr.mxu0 0.0
        %4047 = vmatpush1.xpose.msra.mxu0 0.0
        %4048 = vmatprep.subr.mxu0 0.0
        %4049 = vmatpush1.xpose.msra.mxu0 0.0
        %4050 = vmatprep.subr.mxu0 0.0
        %4051 = vmatpush1.xpose.msra.mxu0 0.0
        %4052 = vmatprep.subr.mxu0 0.0
        %4053 = vmatpush1.xpose.msra.mxu0 0.0
        %4054 = vmatprep.mubr.f32.mxu0 0.0
        %v4055 = vand.u32 %v3832, 4294901760
        %v4056 = vsub.f32 %v3832, %v4055
        %4057 = vmatmul.mubr.f32.gmra.mrb[0].mxu0 %v4056
        %v4058 = vpop.f32.mrb[0].mxu0
        %v4059 = vadd.f32 %v3985, %v4058
        %v4060 = vpop.f32.mrb[0].mxu0
        %4061 = vdwg.mxu0
        %4062 = vmatprep.subr.mxu0 0.0
        %v4063 = vand.u32 %v3834, 4294901760
        %4064 = vmatpush1.xpose.msra.mxu0 %v4063
        %4065 = vmatprep.subr.mxu0 0.0
        %4066 = vmatpush1.xpose.msra.mxu0 0.0
        %4067 = vmatprep.subr.mxu0 0.0
        %4068 = vmatpush1.xpose.msra.mxu0 0.0
        %4069 = vmatprep.subr.mxu0 0.0
        %4070 = vmatpush1.xpose.msra.mxu0 0.0
        %4071 = vmatprep.subr.mxu0 0.0
        %4072 = vmatpush1.xpose.msra.mxu0 0.0
        %4073 = vmatprep.subr.mxu0 0.0
        %4074 = vmatpush1.xpose.msra.mxu0 0.0
        %4075 = vmatprep.subr.mxu0 0.0
        %4076 = vmatpush1.xpose.msra.mxu0 0.0
        %4077 = vmatprep.subr.mxu0 0.0
        %4078 = vmatpush1.xpose.msra.mxu0 0.0
        %4079 = vmatprep.subr.mxu0 0.0
        %4080 = vmatpush1.xpose.msra.mxu0 0.0
        %4081 = vmatprep.subr.mxu0 0.0
        %4082 = vmatpush1.xpose.msra.mxu0 0.0
        %4083 = vmatprep.subr.mxu0 0.0
        %4084 = vmatpush1.xpose.msra.mxu0 0.0
        %4085 = vmatprep.subr.mxu0 0.0
        %4086 = vmatpush1.xpose.msra.mxu0 0.0
        %4087 = vmatprep.subr.mxu0 0.0
        %4088 = vmatpush1.xpose.msra.mxu0 0.0
        %4089 = vmatprep.subr.mxu0 0.0
        %4090 = vmatpush1.xpose.msra.mxu0 0.0
        %4091 = vmatprep.subr.mxu0 0.0
        %4092 = vmatpush1.xpose.msra.mxu0 0.0
        %4093 = vmatprep.subr.mxu0 0.0
        %4094 = vmatpush1.xpose.msra.mxu0 0.0
        %4095 = vmatprep.subr.mxu0 0.0
        %4096 = vmatpush1.xpose.msra.mxu0 0.0
        %4097 = vmatprep.subr.mxu0 0.0
        %4098 = vmatpush1.xpose.msra.mxu0 0.0
        %4099 = vmatprep.subr.mxu0 0.0
        %4100 = vmatpush1.xpose.msra.mxu0 0.0
        %4101 = vmatprep.subr.mxu0 0.0
        %4102 = vmatpush1.xpose.msra.mxu0 0.0
        %4103 = vmatprep.subr.mxu0 0.0
        %4104 = vmatpush1.xpose.msra.mxu0 0.0
        %4105 = vmatprep.subr.mxu0 0.0
        %4106 = vmatpush1.xpose.msra.mxu0 0.0
        %4107 = vmatprep.subr.mxu0 0.0
        %4108 = vmatpush1.xpose.msra.mxu0 0.0
        %4109 = vmatprep.subr.mxu0 0.0
        %4110 = vmatpush1.xpose.msra.mxu0 0.0
        %4111 = vmatprep.subr.mxu0 0.0
        %4112 = vmatpush1.xpose.msra.mxu0 0.0
        %4113 = vmatprep.subr.mxu0 0.0
        %4114 = vmatpush1.xpose.msra.mxu0 0.0
        %4115 = vmatprep.subr.mxu0 0.0
        %4116 = vmatpush1.xpose.msra.mxu0 0.0
        %4117 = vmatprep.subr.mxu0 0.0
        %4118 = vmatpush1.xpose.msra.mxu0 0.0
        %4119 = vmatprep.subr.mxu0 0.0
        %4120 = vmatpush1.xpose.msra.mxu0 0.0
        %4121 = vmatprep.subr.mxu0 0.0
        %4122 = vmatpush1.xpose.msra.mxu0 0.0
        %4123 = vmatprep.subr.mxu0 0.0
        %4124 = vmatpush1.xpose.msra.mxu0 0.0
        %4125 = vmatprep.subr.mxu0 0.0
        %4126 = vmatpush1.xpose.msra.mxu0 0.0
        %4127 = vmatprep.mubr.f32.mxu0 0.0
        %v4128 = vand.u32 %v3832, 4294901760
        %v4129 = vsub.f32 %v3832, %v4128
        %v4130 = vand.u32 %v4129, 4294901760
        %4131 = vmatmul.mubr.f32.gmra.mrb[0].mxu0 %v4130
        %v4132 = vpop.f32.mrb[0].mxu0
        %v4133 = vadd.f32 %v4059, %v4132
        %v4134 = vpop.f32.mrb[0].mxu0
        %4135 = vdwg.mxu0
        %4136 = vmatprep.subr.mxu0 0.0
        %v4137 = vand.u32 %v3834, 4294901760
        %v4138 = vsub.f32 %v3834, %v4137
        %v4139 = vand.u32 %v4138, 4294901760
        %4140 = vmatpush1.xpose.msra.mxu0 %v4139
        %4141 = vmatprep.subr.mxu0 0.0
        %4142 = vmatpush1.xpose.msra.mxu0 0.0
        %4143 = vmatprep.subr.mxu0 0.0
        %4144 = vmatpush1.xpose.msra.mxu0 0.0
        %4145 = vmatprep.subr.mxu0 0.0
        %4146 = vmatpush1.xpose.msra.mxu0 0.0
        %4147 = vmatprep.subr.mxu0 0.0
        %4148 = vmatpush1.xpose.msra.mxu0 0.0
        %4149 = vmatprep.subr.mxu0 0.0
        %4150 = vmatpush1.xpose.msra.mxu0 0.0
        %4151 = vmatprep.subr.mxu0 0.0
        %4152 = vmatpush1.xpose.msra.mxu0 0.0
        %4153 = vmatprep.subr.mxu0 0.0
        %4154 = vmatpush1.xpose.msra.mxu0 0.0
        %4155 = vmatprep.subr.mxu0 0.0
        %4156 = vmatpush1.xpose.msra.mxu0 0.0
        %4157 = vmatprep.subr.mxu0 0.0
        %4158 = vmatpush1.xpose.msra.mxu0 0.0
        %4159 = vmatprep.subr.mxu0 0.0
        %4160 = vmatpush1.xpose.msra.mxu0 0.0
        %4161 = vmatprep.subr.mxu0 0.0
        %4162 = vmatpush1.xpose.msra.mxu0 0.0
        %4163 = vmatprep.subr.mxu0 0.0
        %4164 = vmatpush1.xpose.msra.mxu0 0.0
        %4165 = vmatprep.subr.mxu0 0.0
        %4166 = vmatpush1.xpose.msra.mxu0 0.0
        %4167 = vmatprep.subr.mxu0 0.0
        %4168 = vmatpush1.xpose.msra.mxu0 0.0
        %4169 = vmatprep.subr.mxu0 0.0
        %4170 = vmatpush1.xpose.msra.mxu0 0.0
        %4171 = vmatprep.subr.mxu0 0.0
        %4172 = vmatpush1.xpose.msra.mxu0 0.0
        %4173 = vmatprep.subr.mxu0 0.0
        %4174 = vmatpush1.xpose.msra.mxu0 0.0
        %4175 = vmatprep.subr.mxu0 0.0
        %4176 = vmatpush1.xpose.msra.mxu0 0.0
        %4177 = vmatprep.subr.mxu0 0.0
        %4178 = vmatpush1.xpose.msra.mxu0 0.0
        %4179 = vmatprep.subr.mxu0 0.0
        %4180 = vmatpush1.xpose.msra.mxu0 0.0
        %4181 = vmatprep.subr.mxu0 0.0
        %4182 = vmatpush1.xpose.msra.mxu0 0.0
        %4183 = vmatprep.subr.mxu0 0.0
        %4184 = vmatpush1.xpose.msra.mxu0 0.0
        %4185 = vmatprep.subr.mxu0 0.0
        %4186 = vmatpush1.xpose.msra.mxu0 0.0
        %4187 = vmatprep.subr.mxu0 0.0
        %4188 = vmatpush1.xpose.msra.mxu0 0.0
        %4189 = vmatprep.subr.mxu0 0.0
        %4190 = vmatpush1.xpose.msra.mxu0 0.0
        %4191 = vmatprep.subr.mxu0 0.0
        %4192 = vmatpush1.xpose.msra.mxu0 0.0
        %4193 = vmatprep.subr.mxu0 0.0
        %4194 = vmatpush1.xpose.msra.mxu0 0.0
        %4195 = vmatprep.subr.mxu0 0.0
        %4196 = vmatpush1.xpose.msra.mxu0 0.0
        %4197 = vmatprep.subr.mxu0 0.0
        %4198 = vmatpush1.xpose.msra.mxu0 0.0
        %4199 = vmatprep.subr.mxu0 0.0
        %4200 = vmatpush1.xpose.msra.mxu0 0.0
        %4201 = vmatprep.subr.mxu0 0.0
        %4202 = vmatpush1.xpose.msra.mxu0 0.0
        %4203 = vmatprep.mubr.f32.mxu0 0.0
        %v4204 = vand.u32 %v3832, 4294901760
        %4205 = vmatmul.mubr.f32.gmra.mrb[0].mxu0 %v4204
        %v4206 = vpop.f32.mrb[0].mxu0
        %v4207 = vadd.f32 %v4133, %v4206
        %v4208 = vpop.f32.mrb[0].mxu0
        %4209 = vdwg.mxu0
        %4210 = vmatprep.subr.mxu0 0.0
        %v4211 = vand.u32 %v3834, 4294901760
        %4212 = vmatpush1.xpose.msra.mxu0 %v4211
        %4213 = vmatprep.subr.mxu0 0.0
        %4214 = vmatpush1.xpose.msra.mxu0 0.0
        %4215 = vmatprep.subr.mxu0 0.0
        %4216 = vmatpush1.xpose.msra.mxu0 0.0
        %4217 = vmatprep.subr.mxu0 0.0
        %4218 = vmatpush1.xpose.msra.mxu0 0.0
        %4219 = vmatprep.subr.mxu0 0.0
        %4220 = vmatpush1.xpose.msra.mxu0 0.0
        %4221 = vmatprep.subr.mxu0 0.0
        %4222 = vmatpush1.xpose.msra.mxu0 0.0
        %4223 = vmatprep.subr.mxu0 0.0
        %4224 = vmatpush1.xpose.msra.mxu0 0.0
        %4225 = vmatprep.subr.mxu0 0.0
        %4226 = vmatpush1.xpose.msra.mxu0 0.0
        %4227 = vmatprep.subr.mxu0 0.0
        %4228 = vmatpush1.xpose.msra.mxu0 0.0
        %4229 = vmatprep.subr.mxu0 0.0
        %4230 = vmatpush1.xpose.msra.mxu0 0.0
        %4231 = vmatprep.subr.mxu0 0.0
        %4232 = vmatpush1.xpose.msra.mxu0 0.0
        %4233 = vmatprep.subr.mxu0 0.0
        %4234 = vmatpush1.xpose.msra.mxu0 0.0
        %4235 = vmatprep.subr.mxu0 0.0
        %4236 = vmatpush1.xpose.msra.mxu0 0.0
        %4237 = vmatprep.subr.mxu0 0.0
        %4238 = vmatpush1.xpose.msra.mxu0 0.0
        %4239 = vmatprep.subr.mxu0 0.0
        %4240 = vmatpush1.xpose.msra.mxu0 0.0
        %4241 = vmatprep.subr.mxu0 0.0
        %4242 = vmatpush1.xpose.msra.mxu0 0.0
        %4243 = vmatprep.subr.mxu0 0.0
        %4244 = vmatpush1.xpose.msra.mxu0 0.0
        %4245 = vmatprep.subr.mxu0 0.0
        %4246 = vmatpush1.xpose.msra.mxu0 0.0
        %4247 = vmatprep.subr.mxu0 0.0
        %4248 = vmatpush1.xpose.msra.mxu0 0.0
        %4249 = vmatprep.subr.mxu0 0.0
        %4250 = vmatpush1.xpose.msra.mxu0 0.0
        %4251 = vmatprep.subr.mxu0 0.0
        %4252 = vmatpush1.xpose.msra.mxu0 0.0
        %4253 = vmatprep.subr.mxu0 0.0
        %4254 = vmatpush1.xpose.msra.mxu0 0.0
        %4255 = vmatprep.subr.mxu0 0.0
        %4256 = vmatpush1.xpose.msra.mxu0 0.0
        %4257 = vmatprep.subr.mxu0 0.0
        %4258 = vmatpush1.xpose.msra.mxu0 0.0
        %4259 = vmatprep.subr.mxu0 0.0
        %4260 = vmatpush1.xpose.msra.mxu0 0.0
        %4261 = vmatprep.subr.mxu0 0.0
        %4262 = vmatpush1.xpose.msra.mxu0 0.0
        %4263 = vmatprep.subr.mxu0 0.0
        %4264 = vmatpush1.xpose.msra.mxu0 0.0
        %4265 = vmatprep.subr.mxu0 0.0
        %4266 = vmatpush1.xpose.msra.mxu0 0.0
        %4267 = vmatprep.subr.mxu0 0.0
        %4268 = vmatpush1.xpose.msra.mxu0 0.0
        %4269 = vmatprep.subr.mxu0 0.0
        %4270 = vmatpush1.xpose.msra.mxu0 0.0
        %4271 = vmatprep.subr.mxu0 0.0
        %4272 = vmatpush1.xpose.msra.mxu0 0.0
        %4273 = vmatprep.subr.mxu0 0.0
        %4274 = vmatpush1.xpose.msra.mxu0 0.0
        %4275 = vmatprep.mubr.f32.mxu0 0.0
        %v4276 = vand.u32 %v3832, 4294901760
        %4277 = vmatmul.mubr.f32.gmra.mrb[0].mxu0 %v4276
        %v4278 = vpop.f32.mrb[0].mxu0
        %v4279 = vadd.f32 %v4207, %v4278
        %v4280 = vpop.f32.mrb[0].mxu0
        %4281 = vdwg.mxu0
        %v4282 = vmul.f32 %v4279, 0.35355338
        %v4283 = vsel %vm1995, %v4282, -inf
        %4284 = vmax.xlane.f32.xlu0 %v4283
        %v4285 = vpop.xlane.xlu0 %4284
        %v4286 = vsub.f32 %v4282, %v4285
        %v4287 = vmul.f32 %v4286, 1.442695
        %v4288 = vpow.pop %v4287
        %v4289 = vsel %vm1995, %v4288, 0.0
        %4290 = vadd.xlane.f32.xlu0 %v4289
        %v4291 = vpop.xlane.xlu0 %4290
        %v4292 = vrcp.pop %v4291
        %v4293 = vmul.f32 %v4288, %v4292
        %4294 = vrot.lane.b32.xlu0 %v1992, 112
        %v4295 = vpop.permute.xlu0 %4294
        %v4298 = vsel %vm1995, %v4293, 0
        %4300 = vmatprep.subr.mxu0 0.0
        %v4301 = vand.u32 %v4295, 4294901760
        %4302 = vmatpush1.msra.mxu0 %v4301
        %4303 = vmatprep.subr.mxu0 0.0
        %4304 = vmatpush1.msra.mxu0 0.0
        %4305 = vmatprep.subr.mxu0 0.0
        %4306 = vmatpush1.msra.mxu0 0.0
        %4307 = vmatprep.subr.mxu0 0.0
        %4308 = vmatpush1.msra.mxu0 0.0
        %4309 = vmatprep.subr.mxu0 0.0
        %4310 = vmatpush1.msra.mxu0 0.0
        %4311 = vmatprep.subr.mxu0 0.0
        %4312 = vmatpush1.msra.mxu0 0.0
        %4313 = vmatprep.subr.mxu0 0.0
        %4314 = vmatpush1.msra.mxu0 0.0
        %4315 = vmatprep.subr.mxu0 0.0
        %4316 = vmatpush1.msra.mxu0 0.0
        %4317 = vmatprep.subr.mxu0 0.0
        %4318 = vmatpush1.msra.mxu0 0.0
        %4319 = vmatprep.subr.mxu0 0.0
        %4320 = vmatpush1.msra.mxu0 0.0
        %4321 = vmatprep.subr.mxu0 0.0
        %4322 = vmatpush1.msra.mxu0 0.0
        %4323 = vmatprep.subr.mxu0 0.0
        %4324 = vmatpush1.msra.mxu0 0.0
        %4325 = vmatprep.subr.mxu0 0.0
        %4326 = vmatpush1.msra.mxu0 0.0
        %4327 = vmatprep.subr.mxu0 0.0
        %4328 = vmatpush1.msra.mxu0 0.0
        %4329 = vmatprep.subr.mxu0 0.0
        %4330 = vmatpush1.msra.mxu0 0.0
        %4331 = vmatprep.subr.mxu0 0.0
        %4332 = vmatpush1.msra.mxu0 0.0
        %4333 = vmatprep.subr.mxu0 0.0
        %4334 = vmatpush1.msra.mxu0 0.0
        %4335 = vmatprep.subr.mxu0 0.0
        %4336 = vmatpush1.msra.mxu0 0.0
        %4337 = vmatprep.subr.mxu0 0.0
        %4338 = vmatpush1.msra.mxu0 0.0
        %4339 = vmatprep.subr.mxu0 0.0
        %4340 = vmatpush1.msra.mxu0 0.0
        %4341 = vmatprep.subr.mxu0 0.0
        %4342 = vmatpush1.msra.mxu0 0.0
        %4343 = vmatprep.subr.mxu0 0.0
        %4344 = vmatpush1.msra.mxu0 0.0
        %4345 = vmatprep.subr.mxu0 0.0
        %4346 = vmatpush1.msra.mxu0 0.0
        %4347 = vmatprep.subr.mxu0 0.0
        %4348 = vmatpush1.msra.mxu0 0.0
        %4349 = vmatprep.subr.mxu0 0.0
        %4350 = vmatpush1.msra.mxu0 0.0
        %4351 = vmatprep.subr.mxu0 0.0
        %4352 = vmatpush1.msra.mxu0 0.0
        %4353 = vmatprep.subr.mxu0 0.0
        %4354 = vmatpush1.msra.mxu0 0.0
        %4355 = vmatprep.subr.mxu0 0.0
        %4356 = vmatpush1.msra.mxu0 0.0
        %4357 = vmatprep.subr.mxu0 0.0
        %4358 = vmatpush1.msra.mxu0 0.0
        %4359 = vmatprep.subr.mxu0 0.0
        %4360 = vmatpush1.msra.mxu0 0.0
        %4361 = vmatprep.subr.mxu0 0.0
        %4362 = vmatpush1.msra.mxu0 0.0
        %4363 = vmatprep.subr.mxu0 0.0
        %4364 = vmatpush1.msra.mxu0 0.0
        %4365 = vmatprep.mubr.f32.mxu0 0.0
        %v4366 = vand.u32 %v4298, 4294901760
        %v4367 = vsub.f32 %v4298, %v4366
        %v4368 = vand.u32 %v4367, 4294901760
        %v4369 = vsub.f32 %v4367, %v4368
        %v4370 = vand.u32 %v4369, 4294901760
        %4371 = vmatmul.mubr.f32.gmra.mrb[0].mxu0 %v4370
        %v4372 = vpop.f32.mrb[0].mxu0
        %v4373 = vadd.f32 0.0, %v4372
        %v4374 = vpop.f32.mrb[0].mxu0
        %4375 = vdwg.mxu0
        %4376 = vmatprep.subr.mxu0 0.0
        %v4377 = vand.u32 %v4295, 4294901760
        %v4378 = vsub.f32 %v4295, %v4377
        %v4379 = vand.u32 %v4378, 4294901760
        %v4380 = vsub.f32 %v4378, %v4379
        %v4381 = vand.u32 %v4380, 4294901760
        %4382 = vmatpush1.msra.mxu0 %v4381
        %4383 = vmatprep.subr.mxu0 0.0
        %4384 = vmatpush1.msra.mxu0 0.0
        %4385 = vmatprep.subr.mxu0 0.0
        %4386 = vmatpush1.msra.mxu0 0.0
        %4387 = vmatprep.subr.mxu0 0.0
        %4388 = vmatpush1.msra.mxu0 0.0
        %4389 = vmatprep.subr.mxu0 0.0
        %4390 = vmatpush1.msra.mxu0 0.0
        %4391 = vmatprep.subr.mxu0 0.0
        %4392 = vmatpush1.msra.mxu0 0.0
        %4393 = vmatprep.subr.mxu0 0.0
        %4394 = vmatpush1.msra.mxu0 0.0
        %4395 = vmatprep.subr.mxu0 0.0
        %4396 = vmatpush1.msra.mxu0 0.0
        %4397 = vmatprep.subr.mxu0 0.0
        %4398 = vmatpush1.msra.mxu0 0.0
        %4399 = vmatprep.subr.mxu0 0.0
        %4400 = vmatpush1.msra.mxu0 0.0
        %4401 = vmatprep.subr.mxu0 0.0
        %4402 = vmatpush1.msra.mxu0 0.0
        %4403 = vmatprep.subr.mxu0 0.0
        %4404 = vmatpush1.msra.mxu0 0.0
        %4405 = vmatprep.subr.mxu0 0.0
        %4406 = vmatpush1.msra.mxu0 0.0
        %4407 = vmatprep.subr.mxu0 0.0
        %4408 = vmatpush1.msra.mxu0 0.0
        %4409 = vmatprep.subr.mxu0 0.0
        %4410 = vmatpush1.msra.mxu0 0.0
        %4411 = vmatprep.subr.mxu0 0.0
        %4412 = vmatpush1.msra.mxu0 0.0
        %4413 = vmatprep.subr.mxu0 0.0
        %4414 = vmatpush1.msra.mxu0 0.0
        %4415 = vmatprep.subr.mxu0 0.0
        %4416 = vmatpush1.msra.mxu0 0.0
        %4417 = vmatprep.subr.mxu0 0.0
        %4418 = vmatpush1.msra.mxu0 0.0
        %4419 = vmatprep.subr.mxu0 0.0
        %4420 = vmatpush1.msra.mxu0 0.0
        %4421 = vmatprep.subr.mxu0 0.0
        %4422 = vmatpush1.msra.mxu0 0.0
        %4423 = vmatprep.subr.mxu0 0.0
        %4424 = vmatpush1.msra.mxu0 0.0
        %4425 = vmatprep.subr.mxu0 0.0
        %4426 = vmatpush1.msra.mxu0 0.0
        %4427 = vmatprep.subr.mxu0 0.0
        %4428 = vmatpush1.msra.mxu0 0.0
        %4429 = vmatprep.subr.mxu0 0.0
        %4430 = vmatpush1.msra.mxu0 0.0
        %4431 = vmatprep.subr.mxu0 0.0
        %4432 = vmatpush1.msra.mxu0 0.0
        %4433 = vmatprep.subr.mxu0 0.0
        %4434 = vmatpush1.msra.mxu0 0.0
        %4435 = vmatprep.subr.mxu0 0.0
        %4436 = vmatpush1.msra.mxu0 0.0
        %4437 = vmatprep.subr.mxu0 0.0
        %4438 = vmatpush1.msra.mxu0 0.0
        %4439 = vmatprep.subr.mxu0 0.0
        %4440 = vmatpush1.msra.mxu0 0.0
        %4441 = vmatprep.subr.mxu0 0.0
        %4442 = vmatpush1.msra.mxu0 0.0
        %4443 = vmatprep.subr.mxu0 0.0
        %4444 = vmatpush1.msra.mxu0 0.0
        %4445 = vmatprep.mubr.f32.mxu0 0.0
        %v4446 = vand.u32 %v4298, 4294901760
        %4447 = vmatmul.mubr.f32.gmra.mrb[0].mxu0 %v4446
        %v4448 = vpop.f32.mrb[0].mxu0
        %v4449 = vadd.f32 %v4373, %v4448
        %v4450 = vpop.f32.mrb[0].mxu0
        %4451 = vdwg.mxu0
        %4452 = vmatprep.subr.mxu0 0.0
        %v4453 = vand.u32 %v4295, 4294901760
        %v4454 = vsub.f32 %v4295, %v4453
        %4455 = vmatpush1.msra.mxu0 %v4454
        %4456 = vmatprep.subr.mxu0 0.0
        %4457 = vmatpush1.msra.mxu0 0.0
        %4458 = vmatprep.subr.mxu0 0.0
        %4459 = vmatpush1.msra.mxu0 0.0
        %4460 = vmatprep.subr.mxu0 0.0
        %4461 = vmatpush1.msra.mxu0 0.0
        %4462 = vmatprep.subr.mxu0 0.0
        %4463 = vmatpush1.msra.mxu0 0.0
        %4464 = vmatprep.subr.mxu0 0.0
        %4465 = vmatpush1.msra.mxu0 0.0
        %4466 = vmatprep.subr.mxu0 0.0
        %4467 = vmatpush1.msra.mxu0 0.0
        %4468 = vmatprep.subr.mxu0 0.0
        %4469 = vmatpush1.msra.mxu0 0.0
        %4470 = vmatprep.subr.mxu0 0.0
        %4471 = vmatpush1.msra.mxu0 0.0
        %4472 = vmatprep.subr.mxu0 0.0
        %4473 = vmatpush1.msra.mxu0 0.0
        %4474 = vmatprep.subr.mxu0 0.0
        %4475 = vmatpush1.msra.mxu0 0.0
        %4476 = vmatprep.subr.mxu0 0.0
        %4477 = vmatpush1.msra.mxu0 0.0
        %4478 = vmatprep.subr.mxu0 0.0
        %4479 = vmatpush1.msra.mxu0 0.0
        %4480 = vmatprep.subr.mxu0 0.0
        %4481 = vmatpush1.msra.mxu0 0.0
        %4482 = vmatprep.subr.mxu0 0.0
        %4483 = vmatpush1.msra.mxu0 0.0
        %4484 = vmatprep.subr.mxu0 0.0
        %4485 = vmatpush1.msra.mxu0 0.0
        %4486 = vmatprep.subr.mxu0 0.0
        %4487 = vmatpush1.msra.mxu0 0.0
        %4488 = vmatprep.subr.mxu0 0.0
        %4489 = vmatpush1.msra.mxu0 0.0
        %4490 = vmatprep.subr.mxu0 0.0
        %4491 = vmatpush1.msra.mxu0 0.0
        %4492 = vmatprep.subr.mxu0 0.0
        %4493 = vmatpush1.msra.mxu0 0.0
        %4494 = vmatprep.subr.mxu0 0.0
        %4495 = vmatpush1.msra.mxu0 0.0
        %4496 = vmatprep.subr.mxu0 0.0
        %4497 = vmatpush1.msra.mxu0 0.0
        %4498 = vmatprep.subr.mxu0 0.0
        %4499 = vmatpush1.msra.mxu0 0.0
        %4500 = vmatprep.subr.mxu0 0.0
        %4501 = vmatpush1.msra.mxu0 0.0
        %4502 = vmatprep.subr.mxu0 0.0
        %4503 = vmatpush1.msra.mxu0 0.0
        %4504 = vmatprep.subr.mxu0 0.0
        %4505 = vmatpush1.msra.mxu0 0.0
        %4506 = vmatprep.subr.mxu0 0.0
        %4507 = vmatpush1.msra.mxu0 0.0
        %4508 = vmatprep.subr.mxu0 0.0
        %4509 = vmatpush1.msra.mxu0 0.0
        %4510 = vmatprep.subr.mxu0 0.0
        %4511 = vmatpush1.msra.mxu0 0.0
        %4512 = vmatprep.subr.mxu0 0.0
        %4513 = vmatpush1.msra.mxu0 0.0
        %4514 = vmatprep.subr.mxu0 0.0
        %4515 = vmatpush1.msra.mxu0 0.0
        %4516 = vmatprep.subr.mxu0 0.0
        %4517 = vmatpush1.msra.mxu0 0.0
        %4518 = vmatprep.mubr.f32.mxu0 0.0
        %v4519 = vand.u32 %v4298, 4294901760
        %v4520 = vsub.f32 %v4298, %v4519
        %4521 = vmatmul.mubr.f32.gmra.mrb[0].mxu0 %v4520
        %v4522 = vpop.f32.mrb[0].mxu0
        %v4523 = vadd.f32 %v4449, %v4522
        %v4524 = vpop.f32.mrb[0].mxu0
        %4525 = vdwg.mxu0
        %4526 = vmatprep.subr.mxu0 0.0
        %v4527 = vand.u32 %v4295, 4294901760
        %4528 = vmatpush1.msra.mxu0 %v4527
        %4529 = vmatprep.subr.mxu0 0.0
        %4530 = vmatpush1.msra.mxu0 0.0
        %4531 = vmatprep.subr.mxu0 0.0
        %4532 = vmatpush1.msra.mxu0 0.0
        %4533 = vmatprep.subr.mxu0 0.0
        %4534 = vmatpush1.msra.mxu0 0.0
        %4535 = vmatprep.subr.mxu0 0.0
        %4536 = vmatpush1.msra.mxu0 0.0
        %4537 = vmatprep.subr.mxu0 0.0
        %4538 = vmatpush1.msra.mxu0 0.0
        %4539 = vmatprep.subr.mxu0 0.0
        %4540 = vmatpush1.msra.mxu0 0.0
        %4541 = vmatprep.subr.mxu0 0.0
        %4542 = vmatpush1.msra.mxu0 0.0
        %4543 = vmatprep.subr.mxu0 0.0
        %4544 = vmatpush1.msra.mxu0 0.0
        %4545 = vmatprep.subr.mxu0 0.0
        %4546 = vmatpush1.msra.mxu0 0.0
        %4547 = vmatprep.subr.mxu0 0.0
        %4548 = vmatpush1.msra.mxu0 0.0
        %4549 = vmatprep.subr.mxu0 0.0
        %4550 = vmatpush1.msra.mxu0 0.0
        %4551 = vmatprep.subr.mxu0 0.0
        %4552 = vmatpush1.msra.mxu0 0.0
        %4553 = vmatprep.subr.mxu0 0.0
        %4554 = vmatpush1.msra.mxu0 0.0
        %4555 = vmatprep.subr.mxu0 0.0
        %4556 = vmatpush1.msra.mxu0 0.0
        %4557 = vmatprep.subr.mxu0 0.0
        %4558 = vmatpush1.msra.mxu0 0.0
        %4559 = vmatprep.subr.mxu0 0.0
        %4560 = vmatpush1.msra.mxu0 0.0
        %4561 = vmatprep.subr.mxu0 0.0
        %4562 = vmatpush1.msra.mxu0 0.0
        %4563 = vmatprep.subr.mxu0 0.0
        %4564 = vmatpush1.msra.mxu0 0.0
        %4565 = vmatprep.subr.mxu0 0.0
        %4566 = vmatpush1.msra.mxu0 0.0
        %4567 = vmatprep.subr.mxu0 0.0
        %4568 = vmatpush1.msra.mxu0 0.0
        %4569 = vmatprep.subr.mxu0 0.0
        %4570 = vmatpush1.msra.mxu0 0.0
        %4571 = vmatprep.subr.mxu0 0.0
        %4572 = vmatpush1.msra.mxu0 0.0
        %4573 = vmatprep.subr.mxu0 0.0
        %4574 = vmatpush1.msra.mxu0 0.0
        %4575 = vmatprep.subr.mxu0 0.0
        %4576 = vmatpush1.msra.mxu0 0.0
        %4577 = vmatprep.subr.mxu0 0.0
        %4578 = vmatpush1.msra.mxu0 0.0
        %4579 = vmatprep.subr.mxu0 0.0
        %4580 = vmatpush1.msra.mxu0 0.0
        %4581 = vmatprep.subr.mxu0 0.0
        %4582 = vmatpush1.msra.mxu0 0.0
        %4583 = vmatprep.subr.mxu0 0.0
        %4584 = vmatpush1.msra.mxu0 0.0
        %4585 = vmatprep.subr.mxu0 0.0
        %4586 = vmatpush1.msra.mxu0 0.0
        %4587 = vmatprep.subr.mxu0 0.0
        %4588 = vmatpush1.msra.mxu0 0.0
        %4589 = vmatprep.subr.mxu0 0.0
        %4590 = vmatpush1.msra.mxu0 0.0
        %4591 = vmatprep.mubr.f32.mxu0 0.0
        %v4592 = vand.u32 %v4298, 4294901760
        %v4593 = vsub.f32 %v4298, %v4592
        %v4594 = vand.u32 %v4593, 4294901760
        %4595 = vmatmul.mubr.f32.gmra.mrb[0].mxu0 %v4594
        %v4596 = vpop.f32.mrb[0].mxu0
        %v4597 = vadd.f32 %v4523, %v4596
        %v4598 = vpop.f32.mrb[0].mxu0
        %4599 = vdwg.mxu0
        %4600 = vmatprep.subr.mxu0 0.0
        %v4601 = vand.u32 %v4295, 4294901760
        %v4602 = vsub.f32 %v4295, %v4601
        %v4603 = vand.u32 %v4602, 4294901760
        %4604 = vmatpush1.msra.mxu0 %v4603
        %4605 = vmatprep.subr.mxu0 0.0
        %4606 = vmatpush1.msra.mxu0 0.0
        %4607 = vmatprep.subr.mxu0 0.0
        %4608 = vmatpush1.msra.mxu0 0.0
        %4609 = vmatprep.subr.mxu0 0.0
        %4610 = vmatpush1.msra.mxu0 0.0
        %4611 = vmatprep.subr.mxu0 0.0
        %4612 = vmatpush1.msra.mxu0 0.0
        %4613 = vmatprep.subr.mxu0 0.0
        %4614 = vmatpush1.msra.mxu0 0.0
        %4615 = vmatprep.subr.mxu0 0.0
        %4616 = vmatpush1.msra.mxu0 0.0
        %4617 = vmatprep.subr.mxu0 0.0
        %4618 = vmatpush1.msra.mxu0 0.0
        %4619 = vmatprep.subr.mxu0 0.0
        %4620 = vmatpush1.msra.mxu0 0.0
        %4621 = vmatprep.subr.mxu0 0.0
        %4622 = vmatpush1.msra.mxu0 0.0
        %4623 = vmatprep.subr.mxu0 0.0
        %4624 = vmatpush1.msra.mxu0 0.0
        %4625 = vmatprep.subr.mxu0 0.0
        %4626 = vmatpush1.msra.mxu0 0.0
        %4627 = vmatprep.subr.mxu0 0.0
        %4628 = vmatpush1.msra.mxu0 0.0
        %4629 = vmatprep.subr.mxu0 0.0
        %4630 = vmatpush1.msra.mxu0 0.0
        %4631 = vmatprep.subr.mxu0 0.0
        %4632 = vmatpush1.msra.mxu0 0.0
        %4633 = vmatprep.subr.mxu0 0.0
        %4634 = vmatpush1.msra.mxu0 0.0
        %4635 = vmatprep.subr.mxu0 0.0
        %4636 = vmatpush1.msra.mxu0 0.0
        %4637 = vmatprep.subr.mxu0 0.0
        %4638 = vmatpush1.msra.mxu0 0.0
        %4639 = vmatprep.subr.mxu0 0.0
        %4640 = vmatpush1.msra.mxu0 0.0
        %4641 = vmatprep.subr.mxu0 0.0
        %4642 = vmatpush1.msra.mxu0 0.0
        %4643 = vmatprep.subr.mxu0 0.0
        %4644 = vmatpush1.msra.mxu0 0.0
        %4645 = vmatprep.subr.mxu0 0.0
        %4646 = vmatpush1.msra.mxu0 0.0
        %4647 = vmatprep.subr.mxu0 0.0
        %4648 = vmatpush1.msra.mxu0 0.0
        %4649 = vmatprep.subr.mxu0 0.0
        %4650 = vmatpush1.msra.mxu0 0.0
        %4651 = vmatprep.subr.mxu0 0.0
        %4652 = vmatpush1.msra.mxu0 0.0
        %4653 = vmatprep.subr.mxu0 0.0
        %4654 = vmatpush1.msra.mxu0 0.0
        %4655 = vmatprep.subr.mxu0 0.0
        %4656 = vmatpush1.msra.mxu0 0.0
        %4657 = vmatprep.subr.mxu0 0.0
        %4658 = vmatpush1.msra.mxu0 0.0
        %4659 = vmatprep.subr.mxu0 0.0
        %4660 = vmatpush1.msra.mxu0 0.0
        %4661 = vmatprep.subr.mxu0 0.0
        %4662 = vmatpush1.msra.mxu0 0.0
        %4663 = vmatprep.subr.mxu0 0.0
        %4664 = vmatpush1.msra.mxu0 0.0
        %4665 = vmatprep.subr.mxu0 0.0
        %4666 = vmatpush1.msra.mxu0 0.0
        %4667 = vmatprep.mubr.f32.mxu0 0.0
        %v4668 = vand.u32 %v4298, 4294901760
        %4669 = vmatmul.mubr.f32.gmra.mrb[0].mxu0 %v4668
        %v4670 = vpop.f32.mrb[0].mxu0
        %v4671 = vadd.f32 %v4597, %v4670
        %v4672 = vpop.f32.mrb[0].mxu0
        %4673 = vdwg.mxu0
        %4674 = vmatprep.subr.mxu0 0.0
        %v4675 = vand.u32 %v4295, 4294901760
        %4676 = vmatpush1.msra.mxu0 %v4675
        %4677 = vmatprep.subr.mxu0 0.0
        %4678 = vmatpush1.msra.mxu0 0.0
        %4679 = vmatprep.subr.mxu0 0.0
        %4680 = vmatpush1.msra.mxu0 0.0
        %4681 = vmatprep.subr.mxu0 0.0
        %4682 = vmatpush1.msra.mxu0 0.0
        %4683 = vmatprep.subr.mxu0 0.0
        %4684 = vmatpush1.msra.mxu0 0.0
        %4685 = vmatprep.subr.mxu0 0.0
        %4686 = vmatpush1.msra.mxu0 0.0
        %4687 = vmatprep.subr.mxu0 0.0
        %4688 = vmatpush1.msra.mxu0 0.0
        %4689 = vmatprep.subr.mxu0 0.0
        %4690 = vmatpush1.msra.mxu0 0.0
        %4691 = vmatprep.subr.mxu0 0.0
        %4692 = vmatpush1.msra.mxu0 0.0
        %4693 = vmatprep.subr.mxu0 0.0
        %4694 = vmatpush1.msra.mxu0 0.0
        %4695 = vmatprep.subr.mxu0 0.0
        %4696 = vmatpush1.msra.mxu0 0.0
        %4697 = vmatprep.subr.mxu0 0.0
        %4698 = vmatpush1.msra.mxu0 0.0
        %4699 = vmatprep.subr.mxu0 0.0
        %4700 = vmatpush1.msra.mxu0 0.0
        %4701 = vmatprep.subr.mxu0 0.0
        %4702 = vmatpush1.msra.mxu0 0.0
        %4703 = vmatprep.subr.mxu0 0.0
        %4704 = vmatpush1.msra.mxu0 0.0
        %4705 = vmatprep.subr.mxu0 0.0
        %4706 = vmatpush1.msra.mxu0 0.0
        %4707 = vmatprep.subr.mxu0 0.0
        %4708 = vmatpush1.msra.mxu0 0.0
        %4709 = vmatprep.subr.mxu0 0.0
        %4710 = vmatpush1.msra.mxu0 0.0
        %4711 = vmatprep.subr.mxu0 0.0
        %4712 = vmatpush1.msra.mxu0 0.0
        %4713 = vmatprep.subr.mxu0 0.0
        %4714 = vmatpush1.msra.mxu0 0.0
        %4715 = vmatprep.subr.mxu0 0.0
        %4716 = vmatpush1.msra.mxu0 0.0
        %4717 = vmatprep.subr.mxu0 0.0
        %4718 = vmatpush1.msra.mxu0 0.0
        %4719 = vmatprep.subr.mxu0 0.0
        %4720 = vmatpush1.msra.mxu0 0.0
        %4721 = vmatprep.subr.mxu0 0.0
        %4722 = vmatpush1.msra.mxu0 0.0
        %4723 = vmatprep.subr.mxu0 0.0
        %4724 = vmatpush1.msra.mxu0 0.0
        %4725 = vmatprep.subr.mxu0 0.0
        %4726 = vmatpush1.msra.mxu0 0.0
        %4727 = vmatprep.subr.mxu0 0.0
        %4728 = vmatpush1.msra.mxu0 0.0
        %4729 = vmatprep.subr.mxu0 0.0
        %4730 = vmatpush1.msra.mxu0 0.0
        %4731 = vmatprep.subr.mxu0 0.0
        %4732 = vmatpush1.msra.mxu0 0.0
        %4733 = vmatprep.subr.mxu0 0.0
        %4734 = vmatpush1.msra.mxu0 0.0
        %4735 = vmatprep.subr.mxu0 0.0
        %4736 = vmatpush1.msra.mxu0 0.0
        %4737 = vmatprep.subr.mxu0 0.0
        %4738 = vmatpush1.msra.mxu0 0.0
        %4739 = vmatprep.mubr.f32.mxu0 0.0
        %v4740 = vand.u32 %v4298, 4294901760
        %4741 = vmatmul.mubr.f32.gmra.mrb[0].mxu0 %v4740
        %v4742 = vpop.f32.mrb[0].mxu0
        %v4743 = vadd.f32 %v4671, %v4742
        %v4744 = vpop.f32.mrb[0].mxu0
        %4745 = vdwg.mxu0
        %4746 = vrot.lane.b32.xlu0 %v1014, 104
        %v4747 = vpop.permute.xlu0 %4746
        %4748 = vrot.lane.b32.xlu0 %v1503, 104
        %v4749 = vpop.permute.xlu0 %4748
        %v4750 = vsel %vm1995, %v4747, 0
        %v4752 = vsel %vm1995, %v4749, 0
        %4754 = vmatprep.subr.mxu0 0.0
        %v4755 = vand.u32 %v4752, 4294901760
        %4756 = vmatpush1.xpose.msra.mxu0 %v4755
        %4757 = vmatprep.subr.mxu0 0.0
        %4758 = vmatpush1.xpose.msra.mxu0 0.0
        %4759 = vmatprep.subr.mxu0 0.0
        %4760 = vmatpush1.xpose.msra.mxu0 0.0
        %4761 = vmatprep.subr.mxu0 0.0
        %4762 = vmatpush1.xpose.msra.mxu0 0.0
        %4763 = vmatprep.subr.mxu0 0.0
        %4764 = vmatpush1.xpose.msra.mxu0 0.0
        %4765 = vmatprep.subr.mxu0 0.0
        %4766 = vmatpush1.xpose.msra.mxu0 0.0
        %4767 = vmatprep.subr.mxu0 0.0
        %4768 = vmatpush1.xpose.msra.mxu0 0.0
        %4769 = vmatprep.subr.mxu0 0.0
        %4770 = vmatpush1.xpose.msra.mxu0 0.0
        %4771 = vmatprep.subr.mxu0 0.0
        %4772 = vmatpush1.xpose.msra.mxu0 0.0
        %4773 = vmatprep.subr.mxu0 0.0
        %4774 = vmatpush1.xpose.msra.mxu0 0.0
        %4775 = vmatprep.subr.mxu0 0.0
        %4776 = vmatpush1.xpose.msra.mxu0 0.0
        %4777 = vmatprep.subr.mxu0 0.0
        %4778 = vmatpush1.xpose.msra.mxu0 0.0
        %4779 = vmatprep.subr.mxu0 0.0
        %4780 = vmatpush1.xpose.msra.mxu0 0.0
        %4781 = vmatprep.subr.mxu0 0.0
        %4782 = vmatpush1.xpose.msra.mxu0 0.0
        %4783 = vmatprep.subr.mxu0 0.0
        %4784 = vmatpush1.xpose.msra.mxu0 0.0
        %4785 = vmatprep.subr.mxu0 0.0
        %4786 = vmatpush1.xpose.msra.mxu0 0.0
        %4787 = vmatprep.subr.mxu0 0.0
        %4788 = vmatpush1.xpose.msra.mxu0 0.0
        %4789 = vmatprep.subr.mxu0 0.0
        %4790 = vmatpush1.xpose.msra.mxu0 0.0
        %4791 = vmatprep.subr.mxu0 0.0
        %4792 = vmatpush1.xpose.msra.mxu0 0.0
        %4793 = vmatprep.subr.mxu0 0.0
        %4794 = vmatpush1.xpose.msra.mxu0 0.0
        %4795 = vmatprep.subr.mxu0 0.0
        %4796 = vmatpush1.xpose.msra.mxu0 0.0
        %4797 = vmatprep.subr.mxu0 0.0
        %4798 = vmatpush1.xpose.msra.mxu0 0.0
        %4799 = vmatprep.subr.mxu0 0.0
        %4800 = vmatpush1.xpose.msra.mxu0 0.0
        %4801 = vmatprep.subr.mxu0 0.0
        %4802 = vmatpush1.xpose.msra.mxu0 0.0
        %4803 = vmatprep.subr.mxu0 0.0
        %4804 = vmatpush1.xpose.msra.mxu0 0.0
        %4805 = vmatprep.subr.mxu0 0.0
        %4806 = vmatpush1.xpose.msra.mxu0 0.0
        %4807 = vmatprep.subr.mxu0 0.0
        %4808 = vmatpush1.xpose.msra.mxu0 0.0
        %4809 = vmatprep.subr.mxu0 0.0
        %4810 = vmatpush1.xpose.msra.mxu0 0.0
        %4811 = vmatprep.subr.mxu0 0.0
        %4812 = vmatpush1.xpose.msra.mxu0 0.0
        %4813 = vmatprep.subr.mxu0 0.0
        %4814 = vmatpush1.xpose.msra.mxu0 0.0
        %4815 = vmatprep.subr.mxu0 0.0
        %4816 = vmatpush1.xpose.msra.mxu0 0.0
        %4817 = vmatprep.subr.mxu0 0.0
        %4818 = vmatpush1.xpose.msra.mxu0 0.0
        %4819 = vmatprep.mubr.f32.mxu0 0.0
        %v4820 = vand.u32 %v4750, 4294901760
        %v4821 = vsub.f32 %v4750, %v4820
        %v4822 = vand.u32 %v4821, 4294901760
        %v4823 = vsub.f32 %v4821, %v4822
        %v4824 = vand.u32 %v4823, 4294901760
        %4825 = vmatmul.mubr.f32.gmra.mrb[0].mxu0 %v4824
        %v4826 = vpop.f32.mrb[0].mxu0
        %v4827 = vadd.f32 0.0, %v4826
        %v4828 = vpop.f32.mrb[0].mxu0
        %4829 = vdwg.mxu0
        %4830 = vmatprep.subr.mxu0 0.0
        %v4831 = vand.u32 %v4752, 4294901760
        %v4832 = vsub.f32 %v4752, %v4831
        %v4833 = vand.u32 %v4832, 4294901760
        %v4834 = vsub.f32 %v4832, %v4833
        %v4835 = vand.u32 %v4834, 4294901760
        %4836 = vmatpush1.xpose.msra.mxu0 %v4835
        %4837 = vmatprep.subr.mxu0 0.0
        %4838 = vmatpush1.xpose.msra.mxu0 0.0
        %4839 = vmatprep.subr.mxu0 0.0
        %4840 = vmatpush1.xpose.msra.mxu0 0.0
        %4841 = vmatprep.subr.mxu0 0.0
        %4842 = vmatpush1.xpose.msra.mxu0 0.0
        %4843 = vmatprep.subr.mxu0 0.0
        %4844 = vmatpush1.xpose.msra.mxu0 0.0
        %4845 = vmatprep.subr.mxu0 0.0
        %4846 = vmatpush1.xpose.msra.mxu0 0.0
        %4847 = vmatprep.subr.mxu0 0.0
        %4848 = vmatpush1.xpose.msra.mxu0 0.0
        %4849 = vmatprep.subr.mxu0 0.0
        %4850 = vmatpush1.xpose.msra.mxu0 0.0
        %4851 = vmatprep.subr.mxu0 0.0
        %4852 = vmatpush1.xpose.msra.mxu0 0.0
        %4853 = vmatprep.subr.mxu0 0.0
        %4854 = vmatpush1.xpose.msra.mxu0 0.0
        %4855 = vmatprep.subr.mxu0 0.0
        %4856 = vmatpush1.xpose.msra.mxu0 0.0
        %4857 = vmatprep.subr.mxu0 0.0
        %4858 = vmatpush1.xpose.msra.mxu0 0.0
        %4859 = vmatprep.subr.mxu0 0.0
        %4860 = vmatpush1.xpose.msra.mxu0 0.0
        %4861 = vmatprep.subr.mxu0 0.0
        %4862 = vmatpush1.xpose.msra.mxu0 0.0
        %4863 = vmatprep.subr.mxu0 0.0
        %4864 = vmatpush1.xpose.msra.mxu0 0.0
        %4865 = vmatprep.subr.mxu0 0.0
        %4866 = vmatpush1.xpose.msra.mxu0 0.0
        %4867 = vmatprep.subr.mxu0 0.0
        %4868 = vmatpush1.xpose.msra.mxu0 0.0
        %4869 = vmatprep.subr.mxu0 0.0
        %4870 = vmatpush1.xpose.msra.mxu0 0.0
        %4871 = vmatprep.subr.mxu0 0.0
        %4872 = vmatpush1.xpose.msra.mxu0 0.0
        %4873 = vmatprep.subr.mxu0 0.0
        %4874 = vmatpush1.xpose.msra.mxu0 0.0
        %4875 = vmatprep.subr.mxu0 0.0
        %4876 = vmatpush1.xpose.msra.mxu0 0.0
        %4877 = vmatprep.subr.mxu0 0.0
        %4878 = vmatpush1.xpose.msra.mxu0 0.0
        %4879 = vmatprep.subr.mxu0 0.0
        %4880 = vmatpush1.xpose.msra.mxu0 0.0
        %4881 = vmatprep.subr.mxu0 0.0
        %4882 = vmatpush1.xpose.msra.mxu0 0.0
        %4883 = vmatprep.subr.mxu0 0.0
        %4884 = vmatpush1.xpose.msra.mxu0 0.0
        %4885 = vmatprep.subr.mxu0 0.0
        %4886 = vmatpush1.xpose.msra.mxu0 0.0
        %4887 = vmatprep.subr.mxu0 0.0
        %4888 = vmatpush1.xpose.msra.mxu0 0.0
        %4889 = vmatprep.subr.mxu0 0.0
        %4890 = vmatpush1.xpose.msra.mxu0 0.0
        %4891 = vmatprep.subr.mxu0 0.0
        %4892 = vmatpush1.xpose.msra.mxu0 0.0
        %4893 = vmatprep.subr.mxu0 0.0
        %4894 = vmatpush1.xpose.msra.mxu0 0.0
        %4895 = vmatprep.subr.mxu0 0.0
        %4896 = vmatpush1.xpose.msra.mxu0 0.0
        %4897 = vmatprep.subr.mxu0 0.0
        %4898 = vmatpush1.xpose.msra.mxu0 0.0
        %4899 = vmatprep.mubr.f32.mxu0 0.0
        %v4900 = vand.u32 %v4750, 4294901760
        %4901 = vmatmul.mubr.f32.gmra.mrb[0].mxu0 %v4900
        %v4902 = vpop.f32.mrb[0].mxu0
        %v4903 = vadd.f32 %v4827, %v4902
        %v4904 = vpop.f32.mrb[0].mxu0
        %4905 = vdwg.mxu0
        %4906 = vmatprep.subr.mxu0 0.0
        %v4907 = vand.u32 %v4752, 4294901760
        %v4908 = vsub.f32 %v4752, %v4907
        %4909 = vmatpush1.xpose.msra.mxu0 %v4908
        %4910 = vmatprep.subr.mxu0 0.0
        %4911 = vmatpush1.xpose.msra.mxu0 0.0
        %4912 = vmatprep.subr.mxu0 0.0
        %4913 = vmatpush1.xpose.msra.mxu0 0.0
        %4914 = vmatprep.subr.mxu0 0.0
        %4915 = vmatpush1.xpose.msra.mxu0 0.0
        %4916 = vmatprep.subr.mxu0 0.0
        %4917 = vmatpush1.xpose.msra.mxu0 0.0
        %4918 = vmatprep.subr.mxu0 0.0
        %4919 = vmatpush1.xpose.msra.mxu0 0.0
        %4920 = vmatprep.subr.mxu0 0.0
        %4921 = vmatpush1.xpose.msra.mxu0 0.0
        %4922 = vmatprep.subr.mxu0 0.0
        %4923 = vmatpush1.xpose.msra.mxu0 0.0
        %4924 = vmatprep.subr.mxu0 0.0
        %4925 = vmatpush1.xpose.msra.mxu0 0.0
        %4926 = vmatprep.subr.mxu0 0.0
        %4927 = vmatpush1.xpose.msra.mxu0 0.0
        %4928 = vmatprep.subr.mxu0 0.0
        %4929 = vmatpush1.xpose.msra.mxu0 0.0
        %4930 = vmatprep.subr.mxu0 0.0
        %4931 = vmatpush1.xpose.msra.mxu0 0.0
        %4932 = vmatprep.subr.mxu0 0.0
        %4933 = vmatpush1.xpose.msra.mxu0 0.0
        %4934 = vmatprep.subr.mxu0 0.0
        %4935 = vmatpush1.xpose.msra.mxu0 0.0
        %4936 = vmatprep.subr.mxu0 0.0
        %4937 = vmatpush1.xpose.msra.mxu0 0.0
        %4938 = vmatprep.subr.mxu0 0.0
        %4939 = vmatpush1.xpose.msra.mxu0 0.0
        %4940 = vmatprep.subr.mxu0 0.0
        %4941 = vmatpush1.xpose.msra.mxu0 0.0
        %4942 = vmatprep.subr.mxu0 0.0
        %4943 = vmatpush1.xpose.msra.mxu0 0.0
        %4944 = vmatprep.subr.mxu0 0.0
        %4945 = vmatpush1.xpose.msra.mxu0 0.0
        %4946 = vmatprep.subr.mxu0 0.0
        %4947 = vmatpush1.xpose.msra.mxu0 0.0
        %4948 = vmatprep.subr.mxu0 0.0
        %4949 = vmatpush1.xpose.msra.mxu0 0.0
        %4950 = vmatprep.subr.mxu0 0.0
        %4951 = vmatpush1.xpose.msra.mxu0 0.0
        %4952 = vmatprep.subr.mxu0 0.0
        %4953 = vmatpush1.xpose.msra.mxu0 0.0
        %4954 = vmatprep.subr.mxu0 0.0
        %4955 = vmatpush1.xpose.msra.mxu0 0.0
        %4956 = vmatprep.subr.mxu0 0.0
        %4957 = vmatpush1.xpose.msra.mxu0 0.0
        %4958 = vmatprep.subr.mxu0 0.0
        %4959 = vmatpush1.xpose.msra.mxu0 0.0
        %4960 = vmatprep.subr.mxu0 0.0
        %4961 = vmatpush1.xpose.msra.mxu0 0.0
        %4962 = vmatprep.subr.mxu0 0.0
        %4963 = vmatpush1.xpose.msra.mxu0 0.0
        %4964 = vmatprep.subr.mxu0 0.0
        %4965 = vmatpush1.xpose.msra.mxu0 0.0
        %4966 = vmatprep.subr.mxu0 0.0
        %4967 = vmatpush1.xpose.msra.mxu0 0.0
        %4968 = vmatprep.subr.mxu0 0.0
        %4969 = vmatpush1.xpose.msra.mxu0 0.0
        %4970 = vmatprep.subr.mxu0 0.0
        %4971 = vmatpush1.xpose.msra.mxu0 0.0
        %4972 = vmatprep.mubr.f32.mxu0 0.0
        %v4973 = vand.u32 %v4750, 4294901760
        %v4974 = vsub.f32 %v4750, %v4973
        %4975 = vmatmul.mubr.f32.gmra.mrb[0].mxu0 %v4974
        %v4976 = vpop.f32.mrb[0].mxu0
        %v4977 = vadd.f32 %v4903, %v4976
        %v4978 = vpop.f32.mrb[0].mxu0
        %4979 = vdwg.mxu0
        %4980 = vmatprep.subr.mxu0 0.0
        %v4981 = vand.u32 %v4752, 4294901760
        %4982 = vmatpush1.xpose.msra.mxu0 %v4981
        %4983 = vmatprep.subr.mxu0 0.0
        %4984 = vmatpush1.xpose.msra.mxu0 0.0
        %4985 = vmatprep.subr.mxu0 0.0
        %4986 = vmatpush1.xpose.msra.mxu0 0.0
        %4987 = vmatprep.subr.mxu0 0.0
        %4988 = vmatpush1.xpose.msra.mxu0 0.0
        %4989 = vmatprep.subr.mxu0 0.0
        %4990 = vmatpush1.xpose.msra.mxu0 0.0
        %4991 = vmatprep.subr.mxu0 0.0
        %4992 = vmatpush1.xpose.msra.mxu0 0.0
        %4993 = vmatprep.subr.mxu0 0.0
        %4994 = vmatpush1.xpose.msra.mxu0 0.0
        %4995 = vmatprep.subr.mxu0 0.0
        %4996 = vmatpush1.xpose.msra.mxu0 0.0
        %4997 = vmatprep.subr.mxu0 0.0
        %4998 = vmatpush1.xpose.msra.mxu0 0.0
        %4999 = vmatprep.subr.mxu0 0.0
        %5000 = vmatpush1.xpose.msra.mxu0 0.0
        %5001 = vmatprep.subr.mxu0 0.0
        %5002 = vmatpush1.xpose.msra.mxu0 0.0
        %5003 = vmatprep.subr.mxu0 0.0
        %5004 = vmatpush1.xpose.msra.mxu0 0.0
        %5005 = vmatprep.subr.mxu0 0.0
        %5006 = vmatpush1.xpose.msra.mxu0 0.0
        %5007 = vmatprep.subr.mxu0 0.0
        %5008 = vmatpush1.xpose.msra.mxu0 0.0
        %5009 = vmatprep.subr.mxu0 0.0
        %5010 = vmatpush1.xpose.msra.mxu0 0.0
        %5011 = vmatprep.subr.mxu0 0.0
        %5012 = vmatpush1.xpose.msra.mxu0 0.0
        %5013 = vmatprep.subr.mxu0 0.0
        %5014 = vmatpush1.xpose.msra.mxu0 0.0
        %5015 = vmatprep.subr.mxu0 0.0
        %5016 = vmatpush1.xpose.msra.mxu0 0.0
        %5017 = vmatprep.subr.mxu0 0.0
        %5018 = vmatpush1.xpose.msra.mxu0 0.0
        %5019 = vmatprep.subr.mxu0 0.0
        %5020 = vmatpush1.xpose.msra.mxu0 0.0
        %5021 = vmatprep.subr.mxu0 0.0
        %5022 = vmatpush1.xpose.msra.mxu0 0.0
        %5023 = vmatprep.subr.mxu0 0.0
        %5024 = vmatpush1.xpose.msra.mxu0 0.0
        %5025 = vmatprep.subr.mxu0 0.0
        %5026 = vmatpush1.xpose.msra.mxu0 0.0
        %5027 = vmatprep.subr.mxu0 0.0
        %5028 = vmatpush1.xpose.msra.mxu0 0.0
        %5029 = vmatprep.subr.mxu0 0.0
        %5030 = vmatpush1.xpose.msra.mxu0 0.0
        %5031 = vmatprep.subr.mxu0 0.0
        %5032 = vmatpush1.xpose.msra.mxu0 0.0
        %5033 = vmatprep.subr.mxu0 0.0
        %5034 = vmatpush1.xpose.msra.mxu0 0.0
        %5035 = vmatprep.subr.mxu0 0.0
        %5036 = vmatpush1.xpose.msra.mxu0 0.0
        %5037 = vmatprep.subr.mxu0 0.0
        %5038 = vmatpush1.xpose.msra.mxu0 0.0
        %5039 = vmatprep.subr.mxu0 0.0
        %5040 = vmatpush1.xpose.msra.mxu0 0.0
        %5041 = vmatprep.subr.mxu0 0.0
        %5042 = vmatpush1.xpose.msra.mxu0 0.0
        %5043 = vmatprep.subr.mxu0 0.0
        %5044 = vmatpush1.xpose.msra.mxu0 0.0
        %5045 = vmatprep.mubr.f32.mxu0 0.0
        %v5046 = vand.u32 %v4750, 4294901760
        %v5047 = vsub.f32 %v4750, %v5046
        %v5048 = vand.u32 %v5047, 4294901760
        %5049 = vmatmul.mubr.f32.gmra.mrb[0].mxu0 %v5048
        %v5050 = vpop.f32.mrb[0].mxu0
        %v5051 = vadd.f32 %v4977, %v5050
        %v5052 = vpop.f32.mrb[0].mxu0
        %5053 = vdwg.mxu0
        %5054 = vmatprep.subr.mxu0 0.0
        %v5055 = vand.u32 %v4752, 4294901760
        %v5056 = vsub.f32 %v4752, %v5055
        %v5057 = vand.u32 %v5056, 4294901760
        %5058 = vmatpush1.xpose.msra.mxu0 %v5057
        %5059 = vmatprep.subr.mxu0 0.0
        %5060 = vmatpush1.xpose.msra.mxu0 0.0
        %5061 = vmatprep.subr.mxu0 0.0
        %5062 = vmatpush1.xpose.msra.mxu0 0.0
        %5063 = vmatprep.subr.mxu0 0.0
        %5064 = vmatpush1.xpose.msra.mxu0 0.0
        %5065 = vmatprep.subr.mxu0 0.0
        %5066 = vmatpush1.xpose.msra.mxu0 0.0
        %5067 = vmatprep.subr.mxu0 0.0
        %5068 = vmatpush1.xpose.msra.mxu0 0.0
        %5069 = vmatprep.subr.mxu0 0.0
        %5070 = vmatpush1.xpose.msra.mxu0 0.0
        %5071 = vmatprep.subr.mxu0 0.0
        %5072 = vmatpush1.xpose.msra.mxu0 0.0
        %5073 = vmatprep.subr.mxu0 0.0
        %5074 = vmatpush1.xpose.msra.mxu0 0.0
        %5075 = vmatprep.subr.mxu0 0.0
        %5076 = vmatpush1.xpose.msra.mxu0 0.0
        %5077 = vmatprep.subr.mxu0 0.0
        %5078 = vmatpush1.xpose.msra.mxu0 0.0
        %5079 = vmatprep.subr.mxu0 0.0
        %5080 = vmatpush1.xpose.msra.mxu0 0.0
        %5081 = vmatprep.subr.mxu0 0.0
        %5082 = vmatpush1.xpose.msra.mxu0 0.0
        %5083 = vmatprep.subr.mxu0 0.0
        %5084 = vmatpush1.xpose.msra.mxu0 0.0
        %5085 = vmatprep.subr.mxu0 0.0
        %5086 = vmatpush1.xpose.msra.mxu0 0.0
        %5087 = vmatprep.subr.mxu0 0.0
        %5088 = vmatpush1.xpose.msra.mxu0 0.0
        %5089 = vmatprep.subr.mxu0 0.0
        %5090 = vmatpush1.xpose.msra.mxu0 0.0
        %5091 = vmatprep.subr.mxu0 0.0
        %5092 = vmatpush1.xpose.msra.mxu0 0.0
        %5093 = vmatprep.subr.mxu0 0.0
        %5094 = vmatpush1.xpose.msra.mxu0 0.0
        %5095 = vmatprep.subr.mxu0 0.0
        %5096 = vmatpush1.xpose.msra.mxu0 0.0
        %5097 = vmatprep.subr.mxu0 0.0
        %5098 = vmatpush1.xpose.msra.mxu0 0.0
        %5099 = vmatprep.subr.mxu0 0.0
        %5100 = vmatpush1.xpose.msra.mxu0 0.0
        %5101 = vmatprep.subr.mxu0 0.0
        %5102 = vmatpush1.xpose.msra.mxu0 0.0
        %5103 = vmatprep.subr.mxu0 0.0
        %5104 = vmatpush1.xpose.msra.mxu0 0.0
        %5105 = vmatprep.subr.mxu0 0.0
        %5106 = vmatpush1.xpose.msra.mxu0 0.0
        %5107 = vmatprep.subr.mxu0 0.0
        %5108 = vmatpush1.xpose.msra.mxu0 0.0
        %5109 = vmatprep.subr.mxu0 0.0
        %5110 = vmatpush1.xpose.msra.mxu0 0.0
        %5111 = vmatprep.subr.mxu0 0.0
        %5112 = vmatpush1.xpose.msra.mxu0 0.0
        %5113 = vmatprep.subr.mxu0 0.0
        %5114 = vmatpush1.xpose.msra.mxu0 0.0
        %5115 = vmatprep.subr.mxu0 0.0
        %5116 = vmatpush1.xpose.msra.mxu0 0.0
        %5117 = vmatprep.subr.mxu0 0.0
        %5118 = vmatpush1.xpose.msra.mxu0 0.0
        %5119 = vmatprep.subr.mxu0 0.0
        %5120 = vmatpush1.xpose.msra.mxu0 0.0
        %5121 = vmatprep.mubr.f32.mxu0 0.0
        %v5122 = vand.u32 %v4750, 4294901760
        %5123 = vmatmul.mubr.f32.gmra.mrb[0].mxu0 %v5122
        %v5124 = vpop.f32.mrb[0].mxu0
        %v5125 = vadd.f32 %v5051, %v5124
        %v5126 = vpop.f32.mrb[0].mxu0
        %5127 = vdwg.mxu0
        %5128 = vmatprep.subr.mxu0 0.0
        %v5129 = vand.u32 %v4752, 4294901760
        %5130 = vmatpush1.xpose.msra.mxu0 %v5129
        %5131 = vmatprep.subr.mxu0 0.0
        %5132 = vmatpush1.xpose.msra.mxu0 0.0
        %5133 = vmatprep.subr.mxu0 0.0
        %5134 = vmatpush1.xpose.msra.mxu0 0.0
        %5135 = vmatprep.subr.mxu0 0.0
        %5136 = vmatpush1.xpose.msra.mxu0 0.0
        %5137 = vmatprep.subr.mxu0 0.0
        %5138 = vmatpush1.xpose.msra.mxu0 0.0
        %5139 = vmatprep.subr.mxu0 0.0
        %5140 = vmatpush1.xpose.msra.mxu0 0.0
        %5141 = vmatprep.subr.mxu0 0.0
        %5142 = vmatpush1.xpose.msra.mxu0 0.0
        %5143 = vmatprep.subr.mxu0 0.0
        %5144 = vmatpush1.xpose.msra.mxu0 0.0
        %5145 = vmatprep.subr.mxu0 0.0
        %5146 = vmatpush1.xpose.msra.mxu0 0.0
        %5147 = vmatprep.subr.mxu0 0.0
        %5148 = vmatpush1.xpose.msra.mxu0 0.0
        %5149 = vmatprep.subr.mxu0 0.0
        %5150 = vmatpush1.xpose.msra.mxu0 0.0
        %5151 = vmatprep.subr.mxu0 0.0
        %5152 = vmatpush1.xpose.msra.mxu0 0.0
        %5153 = vmatprep.subr.mxu0 0.0
        %5154 = vmatpush1.xpose.msra.mxu0 0.0
        %5155 = vmatprep.subr.mxu0 0.0
        %5156 = vmatpush1.xpose.msra.mxu0 0.0
        %5157 = vmatprep.subr.mxu0 0.0
        %5158 = vmatpush1.xpose.msra.mxu0 0.0
        %5159 = vmatprep.subr.mxu0 0.0
        %5160 = vmatpush1.xpose.msra.mxu0 0.0
        %5161 = vmatprep.subr.mxu0 0.0
        %5162 = vmatpush1.xpose.msra.mxu0 0.0
        %5163 = vmatprep.subr.mxu0 0.0
        %5164 = vmatpush1.xpose.msra.mxu0 0.0
        %5165 = vmatprep.subr.mxu0 0.0
        %5166 = vmatpush1.xpose.msra.mxu0 0.0
        %5167 = vmatprep.subr.mxu0 0.0
        %5168 = vmatpush1.xpose.msra.mxu0 0.0
        %5169 = vmatprep.subr.mxu0 0.0
        %5170 = vmatpush1.xpose.msra.mxu0 0.0
        %5171 = vmatprep.subr.mxu0 0.0
        %5172 = vmatpush1.xpose.msra.mxu0 0.0
        %5173 = vmatprep.subr.mxu0 0.0
        %5174 = vmatpush1.xpose.msra.mxu0 0.0
        %5175 = vmatprep.subr.mxu0 0.0
        %5176 = vmatpush1.xpose.msra.mxu0 0.0
        %5177 = vmatprep.subr.mxu0 0.0
        %5178 = vmatpush1.xpose.msra.mxu0 0.0
        %5179 = vmatprep.subr.mxu0 0.0
        %5180 = vmatpush1.xpose.msra.mxu0 0.0
        %5181 = vmatprep.subr.mxu0 0.0
        %5182 = vmatpush1.xpose.msra.mxu0 0.0
        %5183 = vmatprep.subr.mxu0 0.0
        %5184 = vmatpush1.xpose.msra.mxu0 0.0
        %5185 = vmatprep.subr.mxu0 0.0
        %5186 = vmatpush1.xpose.msra.mxu0 0.0
        %5187 = vmatprep.subr.mxu0 0.0
        %5188 = vmatpush1.xpose.msra.mxu0 0.0
        %5189 = vmatprep.subr.mxu0 0.0
        %5190 = vmatpush1.xpose.msra.mxu0 0.0
        %5191 = vmatprep.subr.mxu0 0.0
        %5192 = vmatpush1.xpose.msra.mxu0 0.0
        %5193 = vmatprep.mubr.f32.mxu0 0.0
        %v5194 = vand.u32 %v4750, 4294901760
        %5195 = vmatmul.mubr.f32.gmra.mrb[0].mxu0 %v5194
        %v5196 = vpop.f32.mrb[0].mxu0
        %v5197 = vadd.f32 %v5125, %v5196
        %v5198 = vpop.f32.mrb[0].mxu0
        %5199 = vdwg.mxu0
        %v5200 = vmul.f32 %v5197, 0.35355338
        %v5201 = vsel %vm1995, %v5200, -inf
        %5202 = vmax.xlane.f32.xlu0 %v5201
        %v5203 = vpop.xlane.xlu0 %5202
        %v5204 = vsub.f32 %v5200, %v5203
        %v5205 = vmul.f32 %v5204, 1.442695
        %v5206 = vpow.pop %v5205
        %v5207 = vsel %vm1995, %v5206, 0.0
        %5208 = vadd.xlane.f32.xlu0 %v5207
        %v5209 = vpop.xlane.xlu0 %5208
        %v5210 = vrcp.pop %v5209
        %v5211 = vmul.f32 %v5206, %v5210
        %5212 = vrot.lane.b32.xlu0 %v1992, 104
        %v5213 = vpop.permute.xlu0 %5212
        %v5216 = vsel %vm1995, %v5211, 0
        %5218 = vmatprep.subr.mxu0 0.0
        %v5219 = vand.u32 %v5213, 4294901760
        %5220 = vmatpush1.msra.mxu0 %v5219
        %5221 = vmatprep.subr.mxu0 0.0
        %5222 = vmatpush1.msra.mxu0 0.0
        %5223 = vmatprep.subr.mxu0 0.0
        %5224 = vmatpush1.msra.mxu0 0.0
        %5225 = vmatprep.subr.mxu0 0.0
        %5226 = vmatpush1.msra.mxu0 0.0
        %5227 = vmatprep.subr.mxu0 0.0
        %5228 = vmatpush1.msra.mxu0 0.0
        %5229 = vmatprep.subr.mxu0 0.0
        %5230 = vmatpush1.msra.mxu0 0.0
        %5231 = vmatprep.subr.mxu0 0.0
        %5232 = vmatpush1.msra.mxu0 0.0
        %5233 = vmatprep.subr.mxu0 0.0
        %5234 = vmatpush1.msra.mxu0 0.0
        %5235 = vmatprep.subr.mxu0 0.0
        %5236 = vmatpush1.msra.mxu0 0.0
        %5237 = vmatprep.subr.mxu0 0.0
        %5238 = vmatpush1.msra.mxu0 0.0
        %5239 = vmatprep.subr.mxu0 0.0
        %5240 = vmatpush1.msra.mxu0 0.0
        %5241 = vmatprep.subr.mxu0 0.0
        %5242 = vmatpush1.msra.mxu0 0.0
        %5243 = vmatprep.subr.mxu0 0.0
        %5244 = vmatpush1.msra.mxu0 0.0
        %5245 = vmatprep.subr.mxu0 0.0
        %5246 = vmatpush1.msra.mxu0 0.0
        %5247 = vmatprep.subr.mxu0 0.0
        %5248 = vmatpush1.msra.mxu0 0.0
        %5249 = vmatprep.subr.mxu0 0.0
        %5250 = vmatpush1.msra.mxu0 0.0
        %5251 = vmatprep.subr.mxu0 0.0
        %5252 = vmatpush1.msra.mxu0 0.0
        %5253 = vmatprep.subr.mxu0 0.0
        %5254 = vmatpush1.msra.mxu0 0.0
        %5255 = vmatprep.subr.mxu0 0.0
        %5256 = vmatpush1.msra.mxu0 0.0
        %5257 = vmatprep.subr.mxu0 0.0
        %5258 = vmatpush1.msra.mxu0 0.0
        %5259 = vmatprep.subr.mxu0 0.0
        %5260 = vmatpush1.msra.mxu0 0.0
        %5261 = vmatprep.subr.mxu0 0.0
        %5262 = vmatpush1.msra.mxu0 0.0
        %5263 = vmatprep.subr.mxu0 0.0
        %5264 = vmatpush1.msra.mxu0 0.0
        %5265 = vmatprep.subr.mxu0 0.0
        %5266 = vmatpush1.msra.mxu0 0.0
        %5267 = vmatprep.subr.mxu0 0.0
        %5268 = vmatpush1.msra.mxu0 0.0
        %5269 = vmatprep.subr.mxu0 0.0
        %5270 = vmatpush1.msra.mxu0 0.0
        %5271 = vmatprep.subr.mxu0 0.0
        %5272 = vmatpush1.msra.mxu0 0.0
        %5273 = vmatprep.subr.mxu0 0.0
        %5274 = vmatpush1.msra.mxu0 0.0
        %5275 = vmatprep.subr.mxu0 0.0
        %5276 = vmatpush1.msra.mxu0 0.0
        %5277 = vmatprep.subr.mxu0 0.0
        %5278 = vmatpush1.msra.mxu0 0.0
        %5279 = vmatprep.subr.mxu0 0.0
        %5280 = vmatpush1.msra.mxu0 0.0
        %5281 = vmatprep.subr.mxu0 0.0
        %5282 = vmatpush1.msra.mxu0 0.0
        %5283 = vmatprep.mubr.f32.mxu0 0.0
        %v5284 = vand.u32 %v5216, 4294901760
        %v5285 = vsub.f32 %v5216, %v5284
        %v5286 = vand.u32 %v5285, 4294901760
        %v5287 = vsub.f32 %v5285, %v5286
        %v5288 = vand.u32 %v5287, 4294901760
        %5289 = vmatmul.mubr.f32.gmra.mrb[0].mxu0 %v5288
        %v5290 = vpop.f32.mrb[0].mxu0
        %v5291 = vadd.f32 0.0, %v5290
        %v5292 = vpop.f32.mrb[0].mxu0
        %5293 = vdwg.mxu0
        %5294 = vmatprep.subr.mxu0 0.0
        %v5295 = vand.u32 %v5213, 4294901760
        %v5296 = vsub.f32 %v5213, %v5295
        %v5297 = vand.u32 %v5296, 4294901760
        %v5298 = vsub.f32 %v5296, %v5297
        %v5299 = vand.u32 %v5298, 4294901760
        %5300 = vmatpush1.msra.mxu0 %v5299
        %5301 = vmatprep.subr.mxu0 0.0
        %5302 = vmatpush1.msra.mxu0 0.0
        %5303 = vmatprep.subr.mxu0 0.0
        %5304 = vmatpush1.msra.mxu0 0.0
        %5305 = vmatprep.subr.mxu0 0.0
        %5306 = vmatpush1.msra.mxu0 0.0
        %5307 = vmatprep.subr.mxu0 0.0
        %5308 = vmatpush1.msra.mxu0 0.0
        %5309 = vmatprep.subr.mxu0 0.0
        %5310 = vmatpush1.msra.mxu0 0.0
        %5311 = vmatprep.subr.mxu0 0.0
        %5312 = vmatpush1.msra.mxu0 0.0
        %5313 = vmatprep.subr.mxu0 0.0
        %5314 = vmatpush1.msra.mxu0 0.0
        %5315 = vmatprep.subr.mxu0 0.0
        %5316 = vmatpush1.msra.mxu0 0.0
        %5317 = vmatprep.subr.mxu0 0.0
        %5318 = vmatpush1.msra.mxu0 0.0
        %5319 = vmatprep.subr.mxu0 0.0
        %5320 = vmatpush1.msra.mxu0 0.0
        %5321 = vmatprep.subr.mxu0 0.0
        %5322 = vmatpush1.msra.mxu0 0.0
        %5323 = vmatprep.subr.mxu0 0.0
        %5324 = vmatpush1.msra.mxu0 0.0
        %5325 = vmatprep.subr.mxu0 0.0
        %5326 = vmatpush1.msra.mxu0 0.0
        %5327 = vmatprep.subr.mxu0 0.0
        %5328 = vmatpush1.msra.mxu0 0.0
        %5329 = vmatprep.subr.mxu0 0.0
        %5330 = vmatpush1.msra.mxu0 0.0
        %5331 = vmatprep.subr.mxu0 0.0
        %5332 = vmatpush1.msra.mxu0 0.0
        %5333 = vmatprep.subr.mxu0 0.0
        %5334 = vmatpush1.msra.mxu0 0.0
        %5335 = vmatprep.subr.mxu0 0.0
        %5336 = vmatpush1.msra.mxu0 0.0
        %5337 = vmatprep.subr.mxu0 0.0
        %5338 = vmatpush1.msra.mxu0 0.0
        %5339 = vmatprep.subr.mxu0 0.0
        %5340 = vmatpush1.msra.mxu0 0.0
        %5341 = vmatprep.subr.mxu0 0.0
        %5342 = vmatpush1.msra.mxu0 0.0
        %5343 = vmatprep.subr.mxu0 0.0
        %5344 = vmatpush1.msra.mxu0 0.0
        %5345 = vmatprep.subr.mxu0 0.0
        %5346 = vmatpush1.msra.mxu0 0.0
        %5347 = vmatprep.subr.mxu0 0.0
        %5348 = vmatpush1.msra.mxu0 0.0
        %5349 = vmatprep.subr.mxu0 0.0
        %5350 = vmatpush1.msra.mxu0 0.0
        %5351 = vmatprep.subr.mxu0 0.0
        %5352 = vmatpush1.msra.mxu0 0.0
        %5353 = vmatprep.subr.mxu0 0.0
        %5354 = vmatpush1.msra.mxu0 0.0
        %5355 = vmatprep.subr.mxu0 0.0
        %5356 = vmatpush1.msra.mxu0 0.0
        %5357 = vmatprep.subr.mxu0 0.0
        %5358 = vmatpush1.msra.mxu0 0.0
        %5359 = vmatprep.subr.mxu0 0.0
        %5360 = vmatpush1.msra.mxu0 0.0
        %5361 = vmatprep.subr.mxu0 0.0
        %5362 = vmatpush1.msra.mxu0 0.0
        %5363 = vmatprep.mubr.f32.mxu0 0.0
        %v5364 = vand.u32 %v5216, 4294901760
        %5365 = vmatmul.mubr.f32.gmra.mrb[0].mxu0 %v5364
        %v5366 = vpop.f32.mrb[0].mxu0
        %v5367 = vadd.f32 %v5291, %v5366
        %v5368 = vpop.f32.mrb[0].mxu0
        %5369 = vdwg.mxu0
        %5370 = vmatprep.subr.mxu0 0.0
        %v5371 = vand.u32 %v5213, 4294901760
        %v5372 = vsub.f32 %v5213, %v5371
        %5373 = vmatpush1.msra.mxu0 %v5372
        %5374 = vmatprep.subr.mxu0 0.0
        %5375 = vmatpush1.msra.mxu0 0.0
        %5376 = vmatprep.subr.mxu0 0.0
        %5377 = vmatpush1.msra.mxu0 0.0
        %5378 = vmatprep.subr.mxu0 0.0
        %5379 = vmatpush1.msra.mxu0 0.0
        %5380 = vmatprep.subr.mxu0 0.0
        %5381 = vmatpush1.msra.mxu0 0.0
        %5382 = vmatprep.subr.mxu0 0.0
        %5383 = vmatpush1.msra.mxu0 0.0
        %5384 = vmatprep.subr.mxu0 0.0
        %5385 = vmatpush1.msra.mxu0 0.0
        %5386 = vmatprep.subr.mxu0 0.0
        %5387 = vmatpush1.msra.mxu0 0.0
        %5388 = vmatprep.subr.mxu0 0.0
        %5389 = vmatpush1.msra.mxu0 0.0
        %5390 = vmatprep.subr.mxu0 0.0
        %5391 = vmatpush1.msra.mxu0 0.0
        %5392 = vmatprep.subr.mxu0 0.0
        %5393 = vmatpush1.msra.mxu0 0.0
        %5394 = vmatprep.subr.mxu0 0.0
        %5395 = vmatpush1.msra.mxu0 0.0
        %5396 = vmatprep.subr.mxu0 0.0
        %5397 = vmatpush1.msra.mxu0 0.0
        %5398 = vmatprep.subr.mxu0 0.0
        %5399 = vmatpush1.msra.mxu0 0.0
        %5400 = vmatprep.subr.mxu0 0.0
        %5401 = vmatpush1.msra.mxu0 0.0
        %5402 = vmatprep.subr.mxu0 0.0
        %5403 = vmatpush1.msra.mxu0 0.0
        %5404 = vmatprep.subr.mxu0 0.0
        %5405 = vmatpush1.msra.mxu0 0.0
        %5406 = vmatprep.subr.mxu0 0.0
        %5407 = vmatpush1.msra.mxu0 0.0
        %5408 = vmatprep.subr.mxu0 0.0
        %5409 = vmatpush1.msra.mxu0 0.0
        %5410 = vmatprep.subr.mxu0 0.0
        %5411 = vmatpush1.msra.mxu0 0.0
        %5412 = vmatprep.subr.mxu0 0.0
        %5413 = vmatpush1.msra.mxu0 0.0
        %5414 = vmatprep.subr.mxu0 0.0
        %5415 = vmatpush1.msra.mxu0 0.0
        %5416 = vmatprep.subr.mxu0 0.0
        %5417 = vmatpush1.msra.mxu0 0.0
        %5418 = vmatprep.subr.mxu0 0.0
        %5419 = vmatpush1.msra.mxu0 0.0
        %5420 = vmatprep.subr.mxu0 0.0
        %5421 = vmatpush1.msra.mxu0 0.0
        %5422 = vmatprep.subr.mxu0 0.0
        %5423 = vmatpush1.msra.mxu0 0.0
        %5424 = vmatprep.subr.mxu0 0.0
        %5425 = vmatpush1.msra.mxu0 0.0
        %5426 = vmatprep.subr.mxu0 0.0
        %5427 = vmatpush1.msra.mxu0 0.0
        %5428 = vmatprep.subr.mxu0 0.0
        %5429 = vmatpush1.msra.mxu0 0.0
        %5430 = vmatprep.subr.mxu0 0.0
        %5431 = vmatpush1.msra.mxu0 0.0
        %5432 = vmatprep.subr.mxu0 0.0
        %5433 = vmatpush1.msra.mxu0 0.0
        %5434 = vmatprep.subr.mxu0 0.0
        %5435 = vmatpush1.msra.mxu0 0.0
        %5436 = vmatprep.mubr.f32.mxu0 0.0
        %v5437 = vand.u32 %v5216, 4294901760
        %v5438 = vsub.f32 %v5216, %v5437
        %5439 = vmatmul.mubr.f32.gmra.mrb[0].mxu0 %v5438
        %v5440 = vpop.f32.mrb[0].mxu0
        %v5441 = vadd.f32 %v5367, %v5440
        %v5442 = vpop.f32.mrb[0].mxu0
        %5443 = vdwg.mxu0
        %5444 = vmatprep.subr.mxu0 0.0
        %v5445 = vand.u32 %v5213, 4294901760
        %5446 = vmatpush1.msra.mxu0 %v5445
        %5447 = vmatprep.subr.mxu0 0.0
        %5448 = vmatpush1.msra.mxu0 0.0
        %5449 = vmatprep.subr.mxu0 0.0
        %5450 = vmatpush1.msra.mxu0 0.0
        %5451 = vmatprep.subr.mxu0 0.0
        %5452 = vmatpush1.msra.mxu0 0.0
        %5453 = vmatprep.subr.mxu0 0.0
        %5454 = vmatpush1.msra.mxu0 0.0
        %5455 = vmatprep.subr.mxu0 0.0
        %5456 = vmatpush1.msra.mxu0 0.0
        %5457 = vmatprep.subr.mxu0 0.0
        %5458 = vmatpush1.msra.mxu0 0.0
        %5459 = vmatprep.subr.mxu0 0.0
        %5460 = vmatpush1.msra.mxu0 0.0
        %5461 = vmatprep.subr.mxu0 0.0
        %5462 = vmatpush1.msra.mxu0 0.0
        %5463 = vmatprep.subr.mxu0 0.0
        %5464 = vmatpush1.msra.mxu0 0.0
        %5465 = vmatprep.subr.mxu0 0.0
        %5466 = vmatpush1.msra.mxu0 0.0
        %5467 = vmatprep.subr.mxu0 0.0
        %5468 = vmatpush1.msra.mxu0 0.0
        %5469 = vmatprep.subr.mxu0 0.0
        %5470 = vmatpush1.msra.mxu0 0.0
        %5471 = vmatprep.subr.mxu0 0.0
        %5472 = vmatpush1.msra.mxu0 0.0
        %5473 = vmatprep.subr.mxu0 0.0
        %5474 = vmatpush1.msra.mxu0 0.0
        %5475 = vmatprep.subr.mxu0 0.0
        %5476 = vmatpush1.msra.mxu0 0.0
        %5477 = vmatprep.subr.mxu0 0.0
        %5478 = vmatpush1.msra.mxu0 0.0
        %5479 = vmatprep.subr.mxu0 0.0
        %5480 = vmatpush1.msra.mxu0 0.0
        %5481 = vmatprep.subr.mxu0 0.0
        %5482 = vmatpush1.msra.mxu0 0.0
        %5483 = vmatprep.subr.mxu0 0.0
        %5484 = vmatpush1.msra.mxu0 0.0
        %5485 = vmatprep.subr.mxu0 0.0
        %5486 = vmatpush1.msra.mxu0 0.0
        %5487 = vmatprep.subr.mxu0 0.0
        %5488 = vmatpush1.msra.mxu0 0.0
        %5489 = vmatprep.subr.mxu0 0.0
        %5490 = vmatpush1.msra.mxu0 0.0
        %5491 = vmatprep.subr.mxu0 0.0
        %5492 = vmatpush1.msra.mxu0 0.0
        %5493 = vmatprep.subr.mxu0 0.0
        %5494 = vmatpush1.msra.mxu0 0.0
        %5495 = vmatprep.subr.mxu0 0.0
        %5496 = vmatpush1.msra.mxu0 0.0
        %5497 = vmatprep.subr.mxu0 0.0
        %5498 = vmatpush1.msra.mxu0 0.0
        %5499 = vmatprep.subr.mxu0 0.0
        %5500 = vmatpush1.msra.mxu0 0.0
        %5501 = vmatprep.subr.mxu0 0.0
        %5502 = vmatpush1.msra.mxu0 0.0
        %5503 = vmatprep.subr.mxu0 0.0
        %5504 = vmatpush1.msra.mxu0 0.0
        %5505 = vmatprep.subr.mxu0 0.0
        %5506 = vmatpush1.msra.mxu0 0.0
        %5507 = vmatprep.subr.mxu0 0.0
        %5508 = vmatpush1.msra.mxu0 0.0
        %5509 = vmatprep.mubr.f32.mxu0 0.0
        %v5510 = vand.u32 %v5216, 4294901760
        %v5511 = vsub.f32 %v5216, %v5510
        %v5512 = vand.u32 %v5511, 4294901760
        %5513 = vmatmul.mubr.f32.gmra.mrb[0].mxu0 %v5512
        %v5514 = vpop.f32.mrb[0].mxu0
        %v5515 = vadd.f32 %v5441, %v5514
        %v5516 = vpop.f32.mrb[0].mxu0
        %5517 = vdwg.mxu0
        %5518 = vmatprep.subr.mxu0 0.0
        %v5519 = vand.u32 %v5213, 4294901760
        %v5520 = vsub.f32 %v5213, %v5519
        %v5521 = vand.u32 %v5520, 4294901760
        %5522 = vmatpush1.msra.mxu0 %v5521
        %5523 = vmatprep.subr.mxu0 0.0
        %5524 = vmatpush1.msra.mxu0 0.0
        %5525 = vmatprep.subr.mxu0 0.0
        %5526 = vmatpush1.msra.mxu0 0.0
        %5527 = vmatprep.subr.mxu0 0.0
        %5528 = vmatpush1.msra.mxu0 0.0
        %5529 = vmatprep.subr.mxu0 0.0
        %5530 = vmatpush1.msra.mxu0 0.0
        %5531 = vmatprep.subr.mxu0 0.0
        %5532 = vmatpush1.msra.mxu0 0.0
        %5533 = vmatprep.subr.mxu0 0.0
        %5534 = vmatpush1.msra.mxu0 0.0
        %5535 = vmatprep.subr.mxu0 0.0
        %5536 = vmatpush1.msra.mxu0 0.0
        %5537 = vmatprep.subr.mxu0 0.0
        %5538 = vmatpush1.msra.mxu0 0.0
        %5539 = vmatprep.subr.mxu0 0.0
        %5540 = vmatpush1.msra.mxu0 0.0
        %5541 = vmatprep.subr.mxu0 0.0
        %5542 = vmatpush1.msra.mxu0 0.0
        %5543 = vmatprep.subr.mxu0 0.0
        %5544 = vmatpush1.msra.mxu0 0.0
        %5545 = vmatprep.subr.mxu0 0.0
        %5546 = vmatpush1.msra.mxu0 0.0
        %5547 = vmatprep.subr.mxu0 0.0
        %5548 = vmatpush1.msra.mxu0 0.0
        %5549 = vmatprep.subr.mxu0 0.0
        %5550 = vmatpush1.msra.mxu0 0.0
        %5551 = vmatprep.subr.mxu0 0.0
        %5552 = vmatpush1.msra.mxu0 0.0
        %5553 = vmatprep.subr.mxu0 0.0
        %5554 = vmatpush1.msra.mxu0 0.0
        %5555 = vmatprep.subr.mxu0 0.0
        %5556 = vmatpush1.msra.mxu0 0.0
        %5557 = vmatprep.subr.mxu0 0.0
        %5558 = vmatpush1.msra.mxu0 0.0
        %5559 = vmatprep.subr.mxu0 0.0
        %5560 = vmatpush1.msra.mxu0 0.0
        %5561 = vmatprep.subr.mxu0 0.0
        %5562 = vmatpush1.msra.mxu0 0.0
        %5563 = vmatprep.subr.mxu0 0.0
        %5564 = vmatpush1.msra.mxu0 0.0
        %5565 = vmatprep.subr.mxu0 0.0
        %5566 = vmatpush1.msra.mxu0 0.0
        %5567 = vmatprep.subr.mxu0 0.0
        %5568 = vmatpush1.msra.mxu0 0.0
        %5569 = vmatprep.subr.mxu0 0.0
        %5570 = vmatpush1.msra.mxu0 0.0
        %5571 = vmatprep.subr.mxu0 0.0
        %5572 = vmatpush1.msra.mxu0 0.0
        %5573 = vmatprep.subr.mxu0 0.0
        %5574 = vmatpush1.msra.mxu0 0.0
        %5575 = vmatprep.subr.mxu0 0.0
        %5576 = vmatpush1.msra.mxu0 0.0
        %5577 = vmatprep.subr.mxu0 0.0
        %5578 = vmatpush1.msra.mxu0 0.0
        %5579 = vmatprep.subr.mxu0 0.0
        %5580 = vmatpush1.msra.mxu0 0.0
        %5581 = vmatprep.subr.mxu0 0.0
        %5582 = vmatpush1.msra.mxu0 0.0
        %5583 = vmatprep.subr.mxu0 0.0
        %5584 = vmatpush1.msra.mxu0 0.0
        %5585 = vmatprep.mubr.f32.mxu0 0.0
        %v5586 = vand.u32 %v5216, 4294901760
        %5587 = vmatmul.mubr.f32.gmra.mrb[0].mxu0 %v5586
        %v5588 = vpop.f32.mrb[0].mxu0
        %v5589 = vadd.f32 %v5515, %v5588
        %v5590 = vpop.f32.mrb[0].mxu0
        %5591 = vdwg.mxu0
        %5592 = vmatprep.subr.mxu0 0.0
        %v5593 = vand.u32 %v5213, 4294901760
        %5594 = vmatpush1.msra.mxu0 %v5593
        %5595 = vmatprep.subr.mxu0 0.0
        %5596 = vmatpush1.msra.mxu0 0.0
        %5597 = vmatprep.subr.mxu0 0.0
        %5598 = vmatpush1.msra.mxu0 0.0
        %5599 = vmatprep.subr.mxu0 0.0
        %5600 = vmatpush1.msra.mxu0 0.0
        %5601 = vmatprep.subr.mxu0 0.0
        %5602 = vmatpush1.msra.mxu0 0.0
        %5603 = vmatprep.subr.mxu0 0.0
        %5604 = vmatpush1.msra.mxu0 0.0
        %5605 = vmatprep.subr.mxu0 0.0
        %5606 = vmatpush1.msra.mxu0 0.0
        %5607 = vmatprep.subr.mxu0 0.0
        %5608 = vmatpush1.msra.mxu0 0.0
        %5609 = vmatprep.subr.mxu0 0.0
        %5610 = vmatpush1.msra.mxu0 0.0
        %5611 = vmatprep.subr.mxu0 0.0
        %5612 = vmatpush1.msra.mxu0 0.0
        %5613 = vmatprep.subr.mxu0 0.0
        %5614 = vmatpush1.msra.mxu0 0.0
        %5615 = vmatprep.subr.mxu0 0.0
        %5616 = vmatpush1.msra.mxu0 0.0
        %5617 = vmatprep.subr.mxu0 0.0
        %5618 = vmatpush1.msra.mxu0 0.0
        %5619 = vmatprep.subr.mxu0 0.0
        %5620 = vmatpush1.msra.mxu0 0.0
        %5621 = vmatprep.subr.mxu0 0.0
        %5622 = vmatpush1.msra.mxu0 0.0
        %5623 = vmatprep.subr.mxu0 0.0
        %5624 = vmatpush1.msra.mxu0 0.0
        %5625 = vmatprep.subr.mxu0 0.0
        %5626 = vmatpush1.msra.mxu0 0.0
        %5627 = vmatprep.subr.mxu0 0.0
        %5628 = vmatpush1.msra.mxu0 0.0
        %5629 = vmatprep.subr.mxu0 0.0
        %5630 = vmatpush1.msra.mxu0 0.0
        %5631 = vmatprep.subr.mxu0 0.0
        %5632 = vmatpush1.msra.mxu0 0.0
        %5633 = vmatprep.subr.mxu0 0.0
        %5634 = vmatpush1.msra.mxu0 0.0
        %5635 = vmatprep.subr.mxu0 0.0
        %5636 = vmatpush1.msra.mxu0 0.0
        %5637 = vmatprep.subr.mxu0 0.0
        %5638 = vmatpush1.msra.mxu0 0.0
        %5639 = vmatprep.subr.mxu0 0.0
        %5640 = vmatpush1.msra.mxu0 0.0
        %5641 = vmatprep.subr.mxu0 0.0
        %5642 = vmatpush1.msra.mxu0 0.0
        %5643 = vmatprep.subr.mxu0 0.0
        %5644 = vmatpush1.msra.mxu0 0.0
        %5645 = vmatprep.subr.mxu0 0.0
        %5646 = vmatpush1.msra.mxu0 0.0
        %5647 = vmatprep.subr.mxu0 0.0
        %5648 = vmatpush1.msra.mxu0 0.0
        %5649 = vmatprep.subr.mxu0 0.0
        %5650 = vmatpush1.msra.mxu0 0.0
        %5651 = vmatprep.subr.mxu0 0.0
        %5652 = vmatpush1.msra.mxu0 0.0
        %5653 = vmatprep.subr.mxu0 0.0
        %5654 = vmatpush1.msra.mxu0 0.0
        %5655 = vmatprep.subr.mxu0 0.0
        %5656 = vmatpush1.msra.mxu0 0.0
        %5657 = vmatprep.mubr.f32.mxu0 0.0
        %v5658 = vand.u32 %v5216, 4294901760
        %5659 = vmatmul.mubr.f32.gmra.mrb[0].mxu0 %v5658
        %v5660 = vpop.f32.mrb[0].mxu0
        %v5661 = vadd.f32 %v5589, %v5660
        %v5662 = vpop.f32.mrb[0].mxu0
        %5663 = vdwg.mxu0
        %5665 = vrot.lane.b32.xlu0 %v3825, 8
        %v5666 = vpop.permute.xlu0 %5665
        %5669 = vrot.lane.b32.xlu0 %v4743, 16
        %v5670 = vpop.permute.xlu0 %5669
        %5673 = vrot.lane.b32.xlu0 %v5661, 24
        %v5674 = vpop.permute.xlu0 %5673
        %v5676 = vsel %vm1995, %v2906, %v5666
        %vm5677 = vcmask 130048
        %v5678 = vsel %vm5677, %v5676, %v5670
        %vm5679 = vcmask 195584
        %v5680 = vsel %vm5679, %v5678, %v5674
        %v5681 = vld [vmem:[#allocation5] sm:$0xff]
        %v5682 = vld [vmem:[#allocation5 + $0x8] sm:$0xff]
        %v5683 = vld [vmem:[#allocation5 + $0x10] sm:$0xff]
        %v5684 = vld [vmem:[#allocation5 + $0x18] sm:$0xff]
        %v5686 = vsel %vm488, %v5680, 0
        %5688 = vmatprep.subr.mxu0 0.0
        %v5689 = vand.u32 %v5681, 4294901760
        %5690 = vmatpush1.msra.mxu0 %v5689
        %5691 = vmatprep.subr.mxu0 0.0
        %v5692 = vand.u32 %v5682, 4294901760
        %5693 = vmatpush1.msra.mxu0 %v5692
        %5694 = vmatprep.subr.mxu0 0.0
        %v5695 = vand.u32 %v5683, 4294901760
        %5696 = vmatpush1.msra.mxu0 %v5695
        %5697 = vmatprep.subr.mxu0 0.0
        %v5698 = vand.u32 %v5684, 4294901760
        %5699 = vmatpush1.msra.mxu0 %v5698
        %5700 = vmatprep.subr.mxu0 0.0
        %5701 = vmatpush1.msra.mxu0 0.0
        %5702 = vmatprep.subr.mxu0 0.0
        %5703 = vmatpush1.msra.mxu0 0.0
        %5704 = vmatprep.subr.mxu0 0.0
        %5705 = vmatpush1.msra.mxu0 0.0
        %5706 = vmatprep.subr.mxu0 0.0
        %5707 = vmatpush1.msra.mxu0 0.0
        %5708 = vmatprep.subr.mxu0 0.0
        %5709 = vmatpush1.msra.mxu0 0.0
        %5710 = vmatprep.subr.mxu0 0.0
        %5711 = vmatpush1.msra.mxu0 0.0
        %5712 = vmatprep.subr.mxu0 0.0
        %5713 = vmatpush1.msra.mxu0 0.0
        %5714 = vmatprep.subr.mxu0 0.0
        %5715 = vmatpush1.msra.mxu0 0.0
        %5716 = vmatprep.subr.mxu0 0.0
        %5717 = vmatpush1.msra.mxu0 0.0
        %5718 = vmatprep.subr.mxu0 0.0
        %5719 = vmatpush1.msra.mxu0 0.0
        %5720 = vmatprep.subr.mxu0 0.0
        %5721 = vmatpush1.msra.mxu0 0.0
        %5722 = vmatprep.subr.mxu0 0.0
        %5723 = vmatpush1.msra.mxu0 0.0
        %5724 = vmatprep.subr.mxu0 0.0
        %5725 = vmatpush1.msra.mxu0 0.0
        %5726 = vmatprep.subr.mxu0 0.0
        %5727 = vmatpush1.msra.mxu0 0.0
        %5728 = vmatprep.subr.mxu0 0.0
        %5729 = vmatpush1.msra.mxu0 0.0
        %5730 = vmatprep.subr.mxu0 0.0
        %5731 = vmatpush1.msra.mxu0 0.0
        %5732 = vmatprep.subr.mxu0 0.0
        %5733 = vmatpush1.msra.mxu0 0.0
        %5734 = vmatprep.subr.mxu0 0.0
        %5735 = vmatpush1.msra.mxu0 0.0
        %5736 = vmatprep.subr.mxu0 0.0
        %5737 = vmatpush1.msra.mxu0 0.0
        %5738 = vmatprep.subr.mxu0 0.0
        %5739 = vmatpush1.msra.mxu0 0.0
        %5740 = vmatprep.subr.mxu0 0.0
        %5741 = vmatpush1.msra.mxu0 0.0
        %5742 = vmatprep.subr.mxu0 0.0
        %5743 = vmatpush1.msra.mxu0 0.0
        %5744 = vmatprep.subr.mxu0 0.0
        %5745 = vmatpush1.msra.mxu0 0.0
        %5746 = vmatprep.subr.mxu0 0.0
        %5747 = vmatpush1.msra.mxu0 0.0
        %5748 = vmatprep.subr.mxu0 0.0
        %5749 = vmatpush1.msra.mxu0 0.0
        %5750 = vmatprep.subr.mxu0 0.0
        %5751 = vmatpush1.msra.mxu0 0.0
        %5752 = vmatprep.subr.mxu0 0.0
        %5753 = vmatpush1.msra.mxu0 0.0
        %5754 = vmatprep.subr.mxu0 0.0
        %5755 = vmatpush1.msra.mxu0 0.0
        %5756 = vmatprep.mubr.f32.mxu0 0.0
        %v5757 = vand.u32 %v5686, 4294901760
        %v5758 = vsub.f32 %v5686, %v5757
        %v5759 = vand.u32 %v5758, 4294901760
        %v5760 = vsub.f32 %v5758, %v5759
        %v5761 = vand.u32 %v5760, 4294901760
        %5762 = vmatmul.mubr.f32.gmra.mrb[0].mxu0 %v5761
        %v5763 = vpop.f32.mrb[0].mxu0
        %v5764 = vadd.f32 0.0, %v5763
        %v5765 = vpop.f32.mrb[0].mxu0
        %5766 = vdwg.mxu0
        %5767 = vmatprep.subr.mxu0 0.0
        %v5768 = vand.u32 %v5681, 4294901760
        %v5769 = vsub.f32 %v5681, %v5768
        %v5770 = vand.u32 %v5769, 4294901760
        %v5771 = vsub.f32 %v5769, %v5770
        %v5772 = vand.u32 %v5771, 4294901760
        %5773 = vmatpush1.msra.mxu0 %v5772
        %5774 = vmatprep.subr.mxu0 0.0
        %v5775 = vand.u32 %v5682, 4294901760
        %v5776 = vsub.f32 %v5682, %v5775
        %v5777 = vand.u32 %v5776, 4294901760
        %v5778 = vsub.f32 %v5776, %v5777
        %v5779 = vand.u32 %v5778, 4294901760
        %5780 = vmatpush1.msra.mxu0 %v5779
        %5781 = vmatprep.subr.mxu0 0.0
        %v5782 = vand.u32 %v5683, 4294901760
        %v5783 = vsub.f32 %v5683, %v5782
        %v5784 = vand.u32 %v5783, 4294901760
        %v5785 = vsub.f32 %v5783, %v5784
        %v5786 = vand.u32 %v5785, 4294901760
        %5787 = vmatpush1.msra.mxu0 %v5786
        %5788 = vmatprep.subr.mxu0 0.0
        %v5789 = vand.u32 %v5684, 4294901760
        %v5790 = vsub.f32 %v5684, %v5789
        %v5791 = vand.u32 %v5790, 4294901760
        %v5792 = vsub.f32 %v5790, %v5791
        %v5793 = vand.u32 %v5792, 4294901760
        %5794 = vmatpush1.msra.mxu0 %v5793
        %5795 = vmatprep.subr.mxu0 0.0
        %5796 = vmatpush1.msra.mxu0 0.0
        %5797 = vmatprep.subr.mxu0 0.0
        %5798 = vmatpush1.msra.mxu0 0.0
        %5799 = vmatprep.subr.mxu0 0.0
        %5800 = vmatpush1.msra.mxu0 0.0
        %5801 = vmatprep.subr.mxu0 0.0
        %5802 = vmatpush1.msra.mxu0 0.0
        %5803 = vmatprep.subr.mxu0 0.0
        %5804 = vmatpush1.msra.mxu0 0.0
        %5805 = vmatprep.subr.mxu0 0.0
        %5806 = vmatpush1.msra.mxu0 0.0
        %5807 = vmatprep.subr.mxu0 0.0
        %5808 = vmatpush1.msra.mxu0 0.0
        %5809 = vmatprep.subr.mxu0 0.0
        %5810 = vmatpush1.msra.mxu0 0.0
        %5811 = vmatprep.subr.mxu0 0.0
        %5812 = vmatpush1.msra.mxu0 0.0
        %5813 = vmatprep.subr.mxu0 0.0
        %5814 = vmatpush1.msra.mxu0 0.0
        %5815 = vmatprep.subr.mxu0 0.0
        %5816 = vmatpush1.msra.mxu0 0.0
        %5817 = vmatprep.subr.mxu0 0.0
        %5818 = vmatpush1.msra.mxu0 0.0
        %5819 = vmatprep.subr.mxu0 0.0
        %5820 = vmatpush1.msra.mxu0 0.0
        %5821 = vmatprep.subr.mxu0 0.0
        %5822 = vmatpush1.msra.mxu0 0.0
        %5823 = vmatprep.subr.mxu0 0.0
        %5824 = vmatpush1.msra.mxu0 0.0
        %5825 = vmatprep.subr.mxu0 0.0
        %5826 = vmatpush1.msra.mxu0 0.0
        %5827 = vmatprep.subr.mxu0 0.0
        %5828 = vmatpush1.msra.mxu0 0.0
        %5829 = vmatprep.subr.mxu0 0.0
        %5830 = vmatpush1.msra.mxu0 0.0
        %5831 = vmatprep.subr.mxu0 0.0
        %5832 = vmatpush1.msra.mxu0 0.0
        %5833 = vmatprep.subr.mxu0 0.0
        %5834 = vmatpush1.msra.mxu0 0.0
        %5835 = vmatprep.subr.mxu0 0.0
        %5836 = vmatpush1.msra.mxu0 0.0
        %5837 = vmatprep.subr.mxu0 0.0
        %5838 = vmatpush1.msra.mxu0 0.0
        %5839 = vmatprep.subr.mxu0 0.0
        %5840 = vmatpush1.msra.mxu0 0.0
        %5841 = vmatprep.subr.mxu0 0.0
        %5842 = vmatpush1.msra.mxu0 0.0
        %5843 = vmatprep.subr.mxu0 0.0
        %5844 = vmatpush1.msra.mxu0 0.0
        %5845 = vmatprep.subr.mxu0 0.0
        %5846 = vmatpush1.msra.mxu0 0.0
        %5847 = vmatprep.subr.mxu0 0.0
        %5848 = vmatpush1.msra.mxu0 0.0
        %5849 = vmatprep.subr.mxu0 0.0
        %5850 = vmatpush1.msra.mxu0 0.0
        %5851 = vmatprep.mubr.f32.mxu0 0.0
        %v5852 = vand.u32 %v5686, 4294901760
        %5853 = vmatmul.mubr.f32.gmra.mrb[0].mxu0 %v5852
        %v5854 = vpop.f32.mrb[0].mxu0
        %v5855 = vadd.f32 %v5764, %v5854
        %v5856 = vpop.f32.mrb[0].mxu0
        %5857 = vdwg.mxu0
        %5858 = vmatprep.subr.mxu0 0.0
        %v5859 = vand.u32 %v5681, 4294901760
        %v5860 = vsub.f32 %v5681, %v5859
        %5861 = vmatpush1.msra.mxu0 %v5860
        %5862 = vmatprep.subr.mxu0 0.0
        %v5863 = vand.u32 %v5682, 4294901760
        %v5864 = vsub.f32 %v5682, %v5863
        %5865 = vmatpush1.msra.mxu0 %v5864
        %5866 = vmatprep.subr.mxu0 0.0
        %v5867 = vand.u32 %v5683, 4294901760
        %v5868 = vsub.f32 %v5683, %v5867
        %5869 = vmatpush1.msra.mxu0 %v5868
        %5870 = vmatprep.subr.mxu0 0.0
        %v5871 = vand.u32 %v5684, 4294901760
        %v5872 = vsub.f32 %v5684, %v5871
        %5873 = vmatpush1.msra.mxu0 %v5872
        %5874 = vmatprep.subr.mxu0 0.0
        %5875 = vmatpush1.msra.mxu0 0.0
        %5876 = vmatprep.subr.mxu0 0.0
        %5877 = vmatpush1.msra.mxu0 0.0
        %5878 = vmatprep.subr.mxu0 0.0
        %5879 = vmatpush1.msra.mxu0 0.0
        %5880 = vmatprep.subr.mxu0 0.0
        %5881 = vmatpush1.msra.mxu0 0.0
        %5882 = vmatprep.subr.mxu0 0.0
        %5883 = vmatpush1.msra.mxu0 0.0
        %5884 = vmatprep.subr.mxu0 0.0
        %5885 = vmatpush1.msra.mxu0 0.0
        %5886 = vmatprep.subr.mxu0 0.0
        %5887 = vmatpush1.msra.mxu0 0.0
        %5888 = vmatprep.subr.mxu0 0.0
        %5889 = vmatpush1.msra.mxu0 0.0
        %5890 = vmatprep.subr.mxu0 0.0
        %5891 = vmatpush1.msra.mxu0 0.0
        %5892 = vmatprep.subr.mxu0 0.0
        %5893 = vmatpush1.msra.mxu0 0.0
        %5894 = vmatprep.subr.mxu0 0.0
        %5895 = vmatpush1.msra.mxu0 0.0
        %5896 = vmatprep.subr.mxu0 0.0
        %5897 = vmatpush1.msra.mxu0 0.0
        %5898 = vmatprep.subr.mxu0 0.0
        %5899 = vmatpush1.msra.mxu0 0.0
        %5900 = vmatprep.subr.mxu0 0.0
        %5901 = vmatpush1.msra.mxu0 0.0
        %5902 = vmatprep.subr.mxu0 0.0
        %5903 = vmatpush1.msra.mxu0 0.0
        %5904 = vmatprep.subr.mxu0 0.0
        %5905 = vmatpush1.msra.mxu0 0.0
        %5906 = vmatprep.subr.mxu0 0.0
        %5907 = vmatpush1.msra.mxu0 0.0
        %5908 = vmatprep.subr.mxu0 0.0
        %5909 = vmatpush1.msra.mxu0 0.0
        %5910 = vmatprep.subr.mxu0 0.0
        %5911 = vmatpush1.msra.mxu0 0.0
        %5912 = vmatprep.subr.mxu0 0.0
        %5913 = vmatpush1.msra.mxu0 0.0
        %5914 = vmatprep.subr.mxu0 0.0
        %5915 = vmatpush1.msra.mxu0 0.0
        %5916 = vmatprep.subr.mxu0 0.0
        %5917 = vmatpush1.msra.mxu0 0.0
        %5918 = vmatprep.subr.mxu0 0.0
        %5919 = vmatpush1.msra.mxu0 0.0
        %5920 = vmatprep.subr.mxu0 0.0
        %5921 = vmatpush1.msra.mxu0 0.0
        %5922 = vmatprep.subr.mxu0 0.0
        %5923 = vmatpush1.msra.mxu0 0.0
        %5924 = vmatprep.subr.mxu0 0.0
        %5925 = vmatpush1.msra.mxu0 0.0
        %5926 = vmatprep.subr.mxu0 0.0
        %5927 = vmatpush1.msra.mxu0 0.0
        %5928 = vmatprep.subr.mxu0 0.0
        %5929 = vmatpush1.msra.mxu0 0.0
        %5930 = vmatprep.mubr.f32.mxu0 0.0
        %v5931 = vand.u32 %v5686, 4294901760
        %v5932 = vsub.f32 %v5686, %v5931
        %5933 = vmatmul.mubr.f32.gmra.mrb[0].mxu0 %v5932
        %v5934 = vpop.f32.mrb[0].mxu0
        %v5935 = vadd.f32 %v5855, %v5934
        %v5936 = vpop.f32.mrb[0].mxu0
        %5937 = vdwg.mxu0
        %5938 = vmatprep.subr.mxu0 0.0
        %v5939 = vand.u32 %v5681, 4294901760
        %5940 = vmatpush1.msra.mxu0 %v5939
        %5941 = vmatprep.subr.mxu0 0.0
        %v5942 = vand.u32 %v5682, 4294901760
        %5943 = vmatpush1.msra.mxu0 %v5942
        %5944 = vmatprep.subr.mxu0 0.0
        %v5945 = vand.u32 %v5683, 4294901760
        %5946 = vmatpush1.msra.mxu0 %v5945
        %5947 = vmatprep.subr.mxu0 0.0
        %v5948 = vand.u32 %v5684, 4294901760
        %5949 = vmatpush1.msra.mxu0 %v5948
        %5950 = vmatprep.subr.mxu0 0.0
        %5951 = vmatpush1.msra.mxu0 0.0
        %5952 = vmatprep.subr.mxu0 0.0
        %5953 = vmatpush1.msra.mxu0 0.0
        %5954 = vmatprep.subr.mxu0 0.0
        %5955 = vmatpush1.msra.mxu0 0.0
        %5956 = vmatprep.subr.mxu0 0.0
        %5957 = vmatpush1.msra.mxu0 0.0
        %5958 = vmatprep.subr.mxu0 0.0
        %5959 = vmatpush1.msra.mxu0 0.0
        %5960 = vmatprep.subr.mxu0 0.0
        %5961 = vmatpush1.msra.mxu0 0.0
        %5962 = vmatprep.subr.mxu0 0.0
        %5963 = vmatpush1.msra.mxu0 0.0
        %5964 = vmatprep.subr.mxu0 0.0
        %5965 = vmatpush1.msra.mxu0 0.0
        %5966 = vmatprep.subr.mxu0 0.0
        %5967 = vmatpush1.msra.mxu0 0.0
        %5968 = vmatprep.subr.mxu0 0.0
        %5969 = vmatpush1.msra.mxu0 0.0
        %5970 = vmatprep.subr.mxu0 0.0
        %5971 = vmatpush1.msra.mxu0 0.0
        %5972 = vmatprep.subr.mxu0 0.0
        %5973 = vmatpush1.msra.mxu0 0.0
        %5974 = vmatprep.subr.mxu0 0.0
        %5975 = vmatpush1.msra.mxu0 0.0
        %5976 = vmatprep.subr.mxu0 0.0
        %5977 = vmatpush1.msra.mxu0 0.0
        %5978 = vmatprep.subr.mxu0 0.0
        %5979 = vmatpush1.msra.mxu0 0.0
        %5980 = vmatprep.subr.mxu0 0.0
        %5981 = vmatpush1.msra.mxu0 0.0
        %5982 = vmatprep.subr.mxu0 0.0
        %5983 = vmatpush1.msra.mxu0 0.0
        %5984 = vmatprep.subr.mxu0 0.0
        %5985 = vmatpush1.msra.mxu0 0.0
        %5986 = vmatprep.subr.mxu0 0.0
        %5987 = vmatpush1.msra.mxu0 0.0
        %5988 = vmatprep.subr.mxu0 0.0
        %5989 = vmatpush1.msra.mxu0 0.0
        %5990 = vmatprep.subr.mxu0 0.0
        %5991 = vmatpush1.msra.mxu0 0.0
        %5992 = vmatprep.subr.mxu0 0.0
        %5993 = vmatpush1.msra.mxu0 0.0
        %5994 = vmatprep.subr.mxu0 0.0
        %5995 = vmatpush1.msra.mxu0 0.0
        %5996 = vmatprep.subr.mxu0 0.0
        %5997 = vmatpush1.msra.mxu0 0.0
        %5998 = vmatprep.subr.mxu0 0.0
        %5999 = vmatpush1.msra.mxu0 0.0
        %6000 = vmatprep.subr.mxu0 0.0
        %6001 = vmatpush1.msra.mxu0 0.0
        %6002 = vmatprep.subr.mxu0 0.0
        %6003 = vmatpush1.msra.mxu0 0.0
        %6004 = vmatprep.subr.mxu0 0.0
        %6005 = vmatpush1.msra.mxu0 0.0
        %6006 = vmatprep.mubr.f32.mxu0 0.0
        %v6007 = vand.u32 %v5686, 4294901760
        %v6008 = vsub.f32 %v5686, %v6007
        %v6009 = vand.u32 %v6008, 4294901760
        %6010 = vmatmul.mubr.f32.gmra.mrb[0].mxu0 %v6009
        %v6011 = vpop.f32.mrb[0].mxu0
        %v6012 = vadd.f32 %v5935, %v6011
        %v6013 = vpop.f32.mrb[0].mxu0
        %6014 = vdwg.mxu0
        %6015 = vmatprep.subr.mxu0 0.0
        %v6016 = vand.u32 %v5681, 4294901760
        %v6017 = vsub.f32 %v5681, %v6016
        %v6018 = vand.u32 %v6017, 4294901760
        %6019 = vmatpush1.msra.mxu0 %v6018
        %6020 = vmatprep.subr.mxu0 0.0
        %v6021 = vand.u32 %v5682, 4294901760
        %v6022 = vsub.f32 %v5682, %v6021
        %v6023 = vand.u32 %v6022, 4294901760
        %6024 = vmatpush1.msra.mxu0 %v6023
        %6025 = vmatprep.subr.mxu0 0.0
        %v6026 = vand.u32 %v5683, 4294901760
        %v6027 = vsub.f32 %v5683, %v6026
        %v6028 = vand.u32 %v6027, 4294901760
        %6029 = vmatpush1.msra.mxu0 %v6028
        %6030 = vmatprep.subr.mxu0 0.0
        %v6031 = vand.u32 %v5684, 4294901760
        %v6032 = vsub.f32 %v5684, %v6031
        %v6033 = vand.u32 %v6032, 4294901760
        %6034 = vmatpush1.msra.mxu0 %v6033
        %6035 = vmatprep.subr.mxu0 0.0
        %6036 = vmatpush1.msra.mxu0 0.0
        %6037 = vmatprep.subr.mxu0 0.0
        %6038 = vmatpush1.msra.mxu0 0.0
        %6039 = vmatprep.subr.mxu0 0.0
        %6040 = vmatpush1.msra.mxu0 0.0
        %6041 = vmatprep.subr.mxu0 0.0
        %6042 = vmatpush1.msra.mxu0 0.0
        %6043 = vmatprep.subr.mxu0 0.0
        %6044 = vmatpush1.msra.mxu0 0.0
        %6045 = vmatprep.subr.mxu0 0.0
        %6046 = vmatpush1.msra.mxu0 0.0
        %6047 = vmatprep.subr.mxu0 0.0
        %6048 = vmatpush1.msra.mxu0 0.0
        %6049 = vmatprep.subr.mxu0 0.0
        %6050 = vmatpush1.msra.mxu0 0.0
        %6051 = vmatprep.subr.mxu0 0.0
        %6052 = vmatpush1.msra.mxu0 0.0
        %6053 = vmatprep.subr.mxu0 0.0
        %6054 = vmatpush1.msra.mxu0 0.0
        %6055 = vmatprep.subr.mxu0 0.0
        %6056 = vmatpush1.msra.mxu0 0.0
        %6057 = vmatprep.subr.mxu0 0.0
        %6058 = vmatpush1.msra.mxu0 0.0
        %6059 = vmatprep.subr.mxu0 0.0
        %6060 = vmatpush1.msra.mxu0 0.0
        %6061 = vmatprep.subr.mxu0 0.0
        %6062 = vmatpush1.msra.mxu0 0.0
        %6063 = vmatprep.subr.mxu0 0.0
        %6064 = vmatpush1.msra.mxu0 0.0
        %6065 = vmatprep.subr.mxu0 0.0
        %6066 = vmatpush1.msra.mxu0 0.0
        %6067 = vmatprep.subr.mxu0 0.0
        %6068 = vmatpush1.msra.mxu0 0.0
        %6069 = vmatprep.subr.mxu0 0.0
        %6070 = vmatpush1.msra.mxu0 0.0
        %6071 = vmatprep.subr.mxu0 0.0
        %6072 = vmatpush1.msra.mxu0 0.0
        %6073 = vmatprep.subr.mxu0 0.0
        %6074 = vmatpush1.msra.mxu0 0.0
        %6075 = vmatprep.subr.mxu0 0.0
        %6076 = vmatpush1.msra.mxu0 0.0
        %6077 = vmatprep.subr.mxu0 0.0
        %6078 = vmatpush1.msra.mxu0 0.0
        %6079 = vmatprep.subr.mxu0 0.0
        %6080 = vmatpush1.msra.mxu0 0.0
        %6081 = vmatprep.subr.mxu0 0.0
        %6082 = vmatpush1.msra.mxu0 0.0
        %6083 = vmatprep.subr.mxu0 0.0
        %6084 = vmatpush1.msra.mxu0 0.0
        %6085 = vmatprep.subr.mxu0 0.0
        %6086 = vmatpush1.msra.mxu0 0.0
        %6087 = vmatprep.subr.mxu0 0.0
        %6088 = vmatpush1.msra.mxu0 0.0
        %6089 = vmatprep.subr.mxu0 0.0
        %6090 = vmatpush1.msra.mxu0 0.0
        %6091 = vmatprep.mubr.f32.mxu0 0.0
        %v6092 = vand.u32 %v5686, 4294901760
        %6093 = vmatmul.mubr.f32.gmra.mrb[0].mxu0 %v6092
        %v6094 = vpop.f32.mrb[0].mxu0
        %v6095 = vadd.f32 %v6012, %v6094
        %v6096 = vpop.f32.mrb[0].mxu0
        %6097 = vdwg.mxu0
        %6098 = vmatprep.subr.mxu0 0.0
        %v6099 = vand.u32 %v5681, 4294901760
        %6100 = vmatpush1.msra.mxu0 %v6099
        %6101 = vmatprep.subr.mxu0 0.0
        %v6102 = vand.u32 %v5682, 4294901760
        %6103 = vmatpush1.msra.mxu0 %v6102
        %6104 = vmatprep.subr.mxu0 0.0
        %v6105 = vand.u32 %v5683, 4294901760
        %6106 = vmatpush1.msra.mxu0 %v6105
        %6107 = vmatprep.subr.mxu0 0.0
        %v6108 = vand.u32 %v5684, 4294901760
        %6109 = vmatpush1.msra.mxu0 %v6108
        %6110 = vmatprep.subr.mxu0 0.0
        %6111 = vmatpush1.msra.mxu0 0.0
        %6112 = vmatprep.subr.mxu0 0.0
        %6113 = vmatpush1.msra.mxu0 0.0
        %6114 = vmatprep.subr.mxu0 0.0
        %6115 = vmatpush1.msra.mxu0 0.0
        %6116 = vmatprep.subr.mxu0 0.0
        %6117 = vmatpush1.msra.mxu0 0.0
        %6118 = vmatprep.subr.mxu0 0.0
        %6119 = vmatpush1.msra.mxu0 0.0
        %6120 = vmatprep.subr.mxu0 0.0
        %6121 = vmatpush1.msra.mxu0 0.0
        %6122 = vmatprep.subr.mxu0 0.0
        %6123 = vmatpush1.msra.mxu0 0.0
        %6124 = vmatprep.subr.mxu0 0.0
        %6125 = vmatpush1.msra.mxu0 0.0
        %6126 = vmatprep.subr.mxu0 0.0
        %6127 = vmatpush1.msra.mxu0 0.0
        %6128 = vmatprep.subr.mxu0 0.0
        %6129 = vmatpush1.msra.mxu0 0.0
        %6130 = vmatprep.subr.mxu0 0.0
        %6131 = vmatpush1.msra.mxu0 0.0
        %6132 = vmatprep.subr.mxu0 0.0
        %6133 = vmatpush1.msra.mxu0 0.0
        %6134 = vmatprep.subr.mxu0 0.0
        %6135 = vmatpush1.msra.mxu0 0.0
        %6136 = vmatprep.subr.mxu0 0.0
        %6137 = vmatpush1.msra.mxu0 0.0
        %6138 = vmatprep.subr.mxu0 0.0
        %6139 = vmatpush1.msra.mxu0 0.0
        %6140 = vmatprep.subr.mxu0 0.0
        %6141 = vmatpush1.msra.mxu0 0.0
        %6142 = vmatprep.subr.mxu0 0.0
        %6143 = vmatpush1.msra.mxu0 0.0
        %6144 = vmatprep.subr.mxu0 0.0
        %6145 = vmatpush1.msra.mxu0 0.0
        %6146 = vmatprep.subr.mxu0 0.0
        %6147 = vmatpush1.msra.mxu0 0.0
        %6148 = vmatprep.subr.mxu0 0.0
        %6149 = vmatpush1.msra.mxu0 0.0
        %6150 = vmatprep.subr.mxu0 0.0
        %6151 = vmatpush1.msra.mxu0 0.0
        %6152 = vmatprep.subr.mxu0 0.0
        %6153 = vmatpush1.msra.mxu0 0.0
        %6154 = vmatprep.subr.mxu0 0.0
        %6155 = vmatpush1.msra.mxu0 0.0
        %6156 = vmatprep.subr.mxu0 0.0
        %6157 = vmatpush1.msra.mxu0 0.0
        %6158 = vmatprep.subr.mxu0 0.0
        %6159 = vmatpush1.msra.mxu0 0.0
        %6160 = vmatprep.subr.mxu0 0.0
        %6161 = vmatpush1.msra.mxu0 0.0
        %6162 = vmatprep.subr.mxu0 0.0
        %6163 = vmatpush1.msra.mxu0 0.0
        %6164 = vmatprep.subr.mxu0 0.0
        %6165 = vmatpush1.msra.mxu0 0.0
        %6166 = vmatprep.mubr.f32.mxu0 0.0
        %v6167 = vand.u32 %v5686, 4294901760
        %6168 = vmatmul.mubr.f32.gmra.mrb[0].mxu0 %v6167
        %v6169 = vpop.f32.mrb[0].mxu0
        %v6170 = vadd.f32 %v6095, %v6169
        %v6171 = vpop.f32.mrb[0].mxu0
        %6172 = vdwg.mxu0
        %v6173 = vadd.f32 %v485, %v6170
        %v6174 = vld [vmem:[%s7] sm:$0x1]
        %v6175 = vld [vmem:[%s8] sm:$0x1]
        %v6176 = vsel %vm488, %v6173, 0.0
        %6177 = vadd.xlane.f32.xlu0 %v6176
        %v6178 = vpop.xlane.xlu0 %6177
        %v6179 = vmul.f32 %v6178, %v492
        %v6180 = vsub.f32 %v6173, %v6179
        %v6181 = vmul.f32 %v6180, %v6180
        %v6182 = vsel %vm488, %v6181, 0.0
        %6183 = vadd.xlane.f32.xlu0 %v6182
        %v6184 = vpop.xlane.xlu0 %6183
        %v6185 = vmul.f32 %v6184, %v499
        %v6186 = vrsqrt.pop %v6185
        %v6187 = vmul.f32 %v6185, %v6186
        %vm6188 = vcmp.eq.f32.partialorder %v6185, inf
        %v6189 = vsel %vm6188, %v6185, %v6187
        %vm6190 = vcmp.eq.f32.partialorder %v6185, 0.0
        %v6191 = vand.u32 %v6185, 2147483648
        %v6192 = vsel %vm6190, %v6191, %v6189
        %v6194 = vlaneseq
        %v6195 = vshrl.u32 %v6194, 7
        %v6196 = vsub.s32 0, %v6195
        %v6197 = vrot.slane %v6174, %v6196
        %v6199 = vmul.f32 %v6197, %v6180
        %v6200 = vadd.f32 %v6192, 1e-06
        %v6201 = vrcp.pop %v6200
        %v6202 = vmul.f32 %v6199, %v6201
        %v6204 = vlaneseq
        %v6205 = vshrl.u32 %v6204, 7
        %v6206 = vsub.s32 0, %v6205
        %v6207 = vrot.slane %v6175, %v6206
        %v6209 = vadd.f32 %v6202, %v6207
        %v6210 = vld [vmem:[#allocation7] sm:$0xff]
        %v6211 = vld [vmem:[#allocation7 + $0x8] sm:$0xff]
        %v6212 = vld [vmem:[#allocation7 + $0x10] sm:$0xff]
        %v6213 = vld [vmem:[#allocation7 + $0x18] sm:$0xff]
        %v6214 = vld [vmem:[%s10] sm:$0x1]
        %v6216 = vlaneseq
        %v6217 = vshrl.u32 %v6216, 7
        %v6218 = vsub.s32 0, %v6217
        %v6219 = vrot.slane %v6214, %v6218
        %v6222 = vsel %vm488, %v6209, 0
        %6224 = vmatprep.subr.mxu0 0.0
        %v6225 = vand.u32 %v6210, 4294901760
        %6226 = vmatpush1.msra.mxu0 %v6225
        %6227 = vmatprep.subr.mxu0 0.0
        %v6228 = vand.u32 %v6211, 4294901760
        %6229 = vmatpush1.msra.mxu0 %v6228
        %6230 = vmatprep.subr.mxu0 0.0
        %v6231 = vand.u32 %v6212, 4294901760
        %6232 = vmatpush1.msra.mxu0 %v6231
        %6233 = vmatprep.subr.mxu0 0.0
        %v6234 = vand.u32 %v6213, 4294901760
        %6235 = vmatpush1.msra.mxu0 %v6234
        %6236 = vmatprep.subr.mxu0 0.0
        %6237 = vmatpush1.msra.mxu0 0.0
        %6238 = vmatprep.subr.mxu0 0.0
        %6239 = vmatpush1.msra.mxu0 0.0
        %6240 = vmatprep.subr.mxu0 0.0
        %6241 = vmatpush1.msra.mxu0 0.0
        %6242 = vmatprep.subr.mxu0 0.0
        %6243 = vmatpush1.msra.mxu0 0.0
        %6244 = vmatprep.subr.mxu0 0.0
        %6245 = vmatpush1.msra.mxu0 0.0
        %6246 = vmatprep.subr.mxu0 0.0
        %6247 = vmatpush1.msra.mxu0 0.0
        %6248 = vmatprep.subr.mxu0 0.0
        %6249 = vmatpush1.msra.mxu0 0.0
        %6250 = vmatprep.subr.mxu0 0.0
        %6251 = vmatpush1.msra.mxu0 0.0
        %6252 = vmatprep.subr.mxu0 0.0
        %6253 = vmatpush1.msra.mxu0 0.0
        %6254 = vmatprep.subr.mxu0 0.0
        %6255 = vmatpush1.msra.mxu0 0.0
        %6256 = vmatprep.subr.mxu0 0.0
        %6257 = vmatpush1.msra.mxu0 0.0
        %6258 = vmatprep.subr.mxu0 0.0
        %6259 = vmatpush1.msra.mxu0 0.0
        %6260 = vmatprep.subr.mxu0 0.0
        %6261 = vmatpush1.msra.mxu0 0.0
        %6262 = vmatprep.subr.mxu0 0.0
        %6263 = vmatpush1.msra.mxu0 0.0
        %6264 = vmatprep.subr.mxu0 0.0
        %6265 = vmatpush1.msra.mxu0 0.0
        %6266 = vmatprep.subr.mxu0 0.0
        %6267 = vmatpush1.msra.mxu0 0.0
        %6268 = vmatprep.subr.mxu0 0.0
        %6269 = vmatpush1.msra.mxu0 0.0
        %6270 = vmatprep.subr.mxu0 0.0
        %6271 = vmatpush1.msra.mxu0 0.0
        %6272 = vmatprep.subr.mxu0 0.0
        %6273 = vmatpush1.msra.mxu0 0.0
        %6274 = vmatprep.subr.mxu0 0.0
        %6275 = vmatpush1.msra.mxu0 0.0
        %6276 = vmatprep.subr.mxu0 0.0
        %6277 = vmatpush1.msra.mxu0 0.0
        %6278 = vmatprep.subr.mxu0 0.0
        %6279 = vmatpush1.msra.mxu0 0.0
        %6280 = vmatprep.subr.mxu0 0.0
        %6281 = vmatpush1.msra.mxu0 0.0
        %6282 = vmatprep.subr.mxu0 0.0
        %6283 = vmatpush1.msra.mxu0 0.0
        %6284 = vmatprep.subr.mxu0 0.0
        %6285 = vmatpush1.msra.mxu0 0.0
        %6286 = vmatprep.subr.mxu0 0.0
        %6287 = vmatpush1.msra.mxu0 0.0
        %6288 = vmatprep.subr.mxu0 0.0
        %6289 = vmatpush1.msra.mxu0 0.0
        %6290 = vmatprep.subr.mxu0 0.0
        %6291 = vmatpush1.msra.mxu0 0.0
        %6292 = vmatprep.mubr.f32.mxu0 0.0
        %v6293 = vand.u32 %v6222, 4294901760
        %v6294 = vsub.f32 %v6222, %v6293
        %v6295 = vand.u32 %v6294, 4294901760
        %v6296 = vsub.f32 %v6294, %v6295
        %v6297 = vand.u32 %v6296, 4294901760
        %6298 = vmatmul.mubr.f32.gmra.mrb[0].mxu0 %v6297
        %v6299 = vpop.f32.mrb[0].mxu0
        %v6300 = vadd.f32 %v6219, %v6299
        %v6301 = vpop.f32.mrb[0].mxu0
        %6302 = vdwg.mxu0
        %6303 = vmatprep.subr.mxu0 0.0
        %v6304 = vand.u32 %v6210, 4294901760
        %v6305 = vsub.f32 %v6210, %v6304
        %v6306 = vand.u32 %v6305, 4294901760
        %v6307 = vsub.f32 %v6305, %v6306
        %v6308 = vand.u32 %v6307, 4294901760
        %6309 = vmatpush1.msra.mxu0 %v6308
        %6310 = vmatprep.subr.mxu0 0.0
        %v6311 = vand.u32 %v6211, 4294901760
        %v6312 = vsub.f32 %v6211, %v6311
        %v6313 = vand.u32 %v6312, 4294901760
        %v6314 = vsub.f32 %v6312, %v6313
        %v6315 = vand.u32 %v6314, 4294901760
        %6316 = vmatpush1.msra.mxu0 %v6315
        %6317 = vmatprep.subr.mxu0 0.0
        %v6318 = vand.u32 %v6212, 4294901760
        %v6319 = vsub.f32 %v6212, %v6318
        %v6320 = vand.u32 %v6319, 4294901760
        %v6321 = vsub.f32 %v6319, %v6320
        %v6322 = vand.u32 %v6321, 4294901760
        %6323 = vmatpush1.msra.mxu0 %v6322
        %6324 = vmatprep.subr.mxu0 0.0
        %v6325 = vand.u32 %v6213, 4294901760
        %v6326 = vsub.f32 %v6213, %v6325
        %v6327 = vand.u32 %v6326, 4294901760
        %v6328 = vsub.f32 %v6326, %v6327
        %v6329 = vand.u32 %v6328, 4294901760
        %6330 = vmatpush1.msra.mxu0 %v6329
        %6331 = vmatprep.subr.mxu0 0.0
        %6332 = vmatpush1.msra.mxu0 0.0
        %6333 = vmatprep.subr.mxu0 0.0
        %6334 = vmatpush1.msra.mxu0 0.0
        %6335 = vmatprep.subr.mxu0 0.0
        %6336 = vmatpush1.msra.mxu0 0.0
        %6337 = vmatprep.subr.mxu0 0.0
        %6338 = vmatpush1.msra.mxu0 0.0
        %6339 = vmatprep.subr.mxu0 0.0
        %6340 = vmatpush1.msra.mxu0 0.0
        %6341 = vmatprep.subr.mxu0 0.0
        %6342 = vmatpush1.msra.mxu0 0.0
        %6343 = vmatprep.subr.mxu0 0.0
        %6344 = vmatpush1.msra.mxu0 0.0
        %6345 = vmatprep.subr.mxu0 0.0
        %6346 = vmatpush1.msra.mxu0 0.0
        %6347 = vmatprep.subr.mxu0 0.0
        %6348 = vmatpush1.msra.mxu0 0.0
        %6349 = vmatprep.subr.mxu0 0.0
        %6350 = vmatpush1.msra.mxu0 0.0
        %6351 = vmatprep.subr.mxu0 0.0
        %6352 = vmatpush1.msra.mxu0 0.0
        %6353 = vmatprep.subr.mxu0 0.0
        %6354 = vmatpush1.msra.mxu0 0.0
        %6355 = vmatprep.subr.mxu0 0.0
        %6356 = vmatpush1.msra.mxu0 0.0
        %6357 = vmatprep.subr.mxu0 0.0
        %6358 = vmatpush1.msra.mxu0 0.0
        %6359 = vmatprep.subr.mxu0 0.0
        %6360 = vmatpush1.msra.mxu0 0.0
        %6361 = vmatprep.subr.mxu0 0.0
        %6362 = vmatpush1.msra.mxu0 0.0
        %6363 = vmatprep.subr.mxu0 0.0
        %6364 = vmatpush1.msra.mxu0 0.0
        %6365 = vmatprep.subr.mxu0 0.0
        %6366 = vmatpush1.msra.mxu0 0.0
        %6367 = vmatprep.subr.mxu0 0.0
        %6368 = vmatpush1.msra.mxu0 0.0
        %6369 = vmatprep.subr.mxu0 0.0
        %6370 = vmatpush1.msra.mxu0 0.0
        %6371 = vmatprep.subr.mxu0 0.0
        %6372 = vmatpush1.msra.mxu0 0.0
        %6373 = vmatprep.subr.mxu0 0.0
        %6374 = vmatpush1.msra.mxu0 0.0
        %6375 = vmatprep.subr.mxu0 0.0
        %6376 = vmatpush1.msra.mxu0 0.0
        %6377 = vmatprep.subr.mxu0 0.0
        %6378 = vmatpush1.msra.mxu0 0.0
        %6379 = vmatprep.subr.mxu0 0.0
        %6380 = vmatpush1.msra.mxu0 0.0
        %6381 = vmatprep.subr.mxu0 0.0
        %6382 = vmatpush1.msra.mxu0 0.0
        %6383 = vmatprep.subr.mxu0 0.0
        %6384 = vmatpush1.msra.mxu0 0.0
        %6385 = vmatprep.subr.mxu0 0.0
        %6386 = vmatpush1.msra.mxu0 0.0
        %6387 = vmatprep.mubr.f32.mxu0 0.0
        %v6388 = vand.u32 %v6222, 4294901760
        %6389 = vmatmul.mubr.f32.gmra.mrb[0].mxu0 %v6388
        %v6390 = vpop.f32.mrb[0].mxu0
        %v6391 = vadd.f32 %v6300, %v6390
        %v6392 = vpop.f32.mrb[0].mxu0
        %6393 = vdwg.mxu0
        %6394 = vmatprep.subr.mxu0 0.0
        %v6395 = vand.u32 %v6210, 4294901760
        %v6396 = vsub.f32 %v6210, %v6395
        %6397 = vmatpush1.msra.mxu0 %v6396
        %6398 = vmatprep.subr.mxu0 0.0
        %v6399 = vand.u32 %v6211, 4294901760
        %v6400 = vsub.f32 %v6211, %v6399
        %6401 = vmatpush1.msra.mxu0 %v6400
        %6402 = vmatprep.subr.mxu0 0.0
        %v6403 = vand.u32 %v6212, 4294901760
        %v6404 = vsub.f32 %v6212, %v6403
        %6405 = vmatpush1.msra.mxu0 %v6404
        %6406 = vmatprep.subr.mxu0 0.0
        %v6407 = vand.u32 %v6213, 4294901760
        %v6408 = vsub.f32 %v6213, %v6407
        %6409 = vmatpush1.msra.mxu0 %v6408
        %6410 = vmatprep.subr.mxu0 0.0
        %6411 = vmatpush1.msra.mxu0 0.0
        %6412 = vmatprep.subr.mxu0 0.0
        %6413 = vmatpush1.msra.mxu0 0.0
        %6414 = vmatprep.subr.mxu0 0.0
        %6415 = vmatpush1.msra.mxu0 0.0
        %6416 = vmatprep.subr.mxu0 0.0
        %6417 = vmatpush1.msra.mxu0 0.0
        %6418 = vmatprep.subr.mxu0 0.0
        %6419 = vmatpush1.msra.mxu0 0.0
        %6420 = vmatprep.subr.mxu0 0.0
        %6421 = vmatpush1.msra.mxu0 0.0
        %6422 = vmatprep.subr.mxu0 0.0
        %6423 = vmatpush1.msra.mxu0 0.0
        %6424 = vmatprep.subr.mxu0 0.0
        %6425 = vmatpush1.msra.mxu0 0.0
        %6426 = vmatprep.subr.mxu0 0.0
        %6427 = vmatpush1.msra.mxu0 0.0
        %6428 = vmatprep.subr.mxu0 0.0
        %6429 = vmatpush1.msra.mxu0 0.0
        %6430 = vmatprep.subr.mxu0 0.0
        %6431 = vmatpush1.msra.mxu0 0.0
        %6432 = vmatprep.subr.mxu0 0.0
        %6433 = vmatpush1.msra.mxu0 0.0
        %6434 = vmatprep.subr.mxu0 0.0
        %6435 = vmatpush1.msra.mxu0 0.0
        %6436 = vmatprep.subr.mxu0 0.0
        %6437 = vmatpush1.msra.mxu0 0.0
        %6438 = vmatprep.subr.mxu0 0.0
        %6439 = vmatpush1.msra.mxu0 0.0
        %6440 = vmatprep.subr.mxu0 0.0
        %6441 = vmatpush1.msra.mxu0 0.0
        %6442 = vmatprep.subr.mxu0 0.0
        %6443 = vmatpush1.msra.mxu0 0.0
        %6444 = vmatprep.subr.mxu0 0.0
        %6445 = vmatpush1.msra.mxu0 0.0
        %6446 = vmatprep.subr.mxu0 0.0
        %6447 = vmatpush1.msra.mxu0 0.0
        %6448 = vmatprep.subr.mxu0 0.0
        %6449 = vmatpush1.msra.mxu0 0.0
        %6450 = vmatprep.subr.mxu0 0.0
        %6451 = vmatpush1.msra.mxu0 0.0
        %6452 = vmatprep.subr.mxu0 0.0
        %6453 = vmatpush1.msra.mxu0 0.0
        %6454 = vmatprep.subr.mxu0 0.0
        %6455 = vmatpush1.msra.mxu0 0.0
        %6456 = vmatprep.subr.mxu0 0.0
        %6457 = vmatpush1.msra.mxu0 0.0
        %6458 = vmatprep.subr.mxu0 0.0
        %6459 = vmatpush1.msra.mxu0 0.0
        %6460 = vmatprep.subr.mxu0 0.0
        %6461 = vmatpush1.msra.mxu0 0.0
        %6462 = vmatprep.subr.mxu0 0.0
        %6463 = vmatpush1.msra.mxu0 0.0
        %6464 = vmatprep.subr.mxu0 0.0
        %6465 = vmatpush1.msra.mxu0 0.0
        %6466 = vmatprep.mubr.f32.mxu0 0.0
        %v6467 = vand.u32 %v6222, 4294901760
        %v6468 = vsub.f32 %v6222, %v6467
        %6469 = vmatmul.mubr.f32.gmra.mrb[0].mxu0 %v6468
        %v6470 = vpop.f32.mrb[0].mxu0
        %v6471 = vadd.f32 %v6391, %v6470
        %v6472 = vpop.f32.mrb[0].mxu0
        %6473 = vdwg.mxu0
        %6474 = vmatprep.subr.mxu0 0.0
        %v6475 = vand.u32 %v6210, 4294901760
        %6476 = vmatpush1.msra.mxu0 %v6475
        %6477 = vmatprep.subr.mxu0 0.0
        %v6478 = vand.u32 %v6211, 4294901760
        %6479 = vmatpush1.msra.mxu0 %v6478
        %6480 = vmatprep.subr.mxu0 0.0
        %v6481 = vand.u32 %v6212, 4294901760
        %6482 = vmatpush1.msra.mxu0 %v6481
        %6483 = vmatprep.subr.mxu0 0.0
        %v6484 = vand.u32 %v6213, 4294901760
        %6485 = vmatpush1.msra.mxu0 %v6484
        %6486 = vmatprep.subr.mxu0 0.0
        %6487 = vmatpush1.msra.mxu0 0.0
        %6488 = vmatprep.subr.mxu0 0.0
        %6489 = vmatpush1.msra.mxu0 0.0
        %6490 = vmatprep.subr.mxu0 0.0
        %6491 = vmatpush1.msra.mxu0 0.0
        %6492 = vmatprep.subr.mxu0 0.0
        %6493 = vmatpush1.msra.mxu0 0.0
        %6494 = vmatprep.subr.mxu0 0.0
        %6495 = vmatpush1.msra.mxu0 0.0
        %6496 = vmatprep.subr.mxu0 0.0
        %6497 = vmatpush1.msra.mxu0 0.0
        %6498 = vmatprep.subr.mxu0 0.0
        %6499 = vmatpush1.msra.mxu0 0.0
        %6500 = vmatprep.subr.mxu0 0.0
        %6501 = vmatpush1.msra.mxu0 0.0
        %6502 = vmatprep.subr.mxu0 0.0
        %6503 = vmatpush1.msra.mxu0 0.0
        %6504 = vmatprep.subr.mxu0 0.0
        %6505 = vmatpush1.msra.mxu0 0.0
        %6506 = vmatprep.subr.mxu0 0.0
        %6507 = vmatpush1.msra.mxu0 0.0
        %6508 = vmatprep.subr.mxu0 0.0
        %6509 = vmatpush1.msra.mxu0 0.0
        %6510 = vmatprep.subr.mxu0 0.0
        %6511 = vmatpush1.msra.mxu0 0.0
        %6512 = vmatprep.subr.mxu0 0.0
        %6513 = vmatpush1.msra.mxu0 0.0
        %6514 = vmatprep.subr.mxu0 0.0
        %6515 = vmatpush1.msra.mxu0 0.0
        %6516 = vmatprep.subr.mxu0 0.0
        %6517 = vmatpush1.msra.mxu0 0.0
        %6518 = vmatprep.subr.mxu0 0.0
        %6519 = vmatpush1.msra.mxu0 0.0
        %6520 = vmatprep.subr.mxu0 0.0
        %6521 = vmatpush1.msra.mxu0 0.0
        %6522 = vmatprep.subr.mxu0 0.0
        %6523 = vmatpush1.msra.mxu0 0.0
        %6524 = vmatprep.subr.mxu0 0.0
        %6525 = vmatpush1.msra.mxu0 0.0
        %6526 = vmatprep.subr.mxu0 0.0
        %6527 = vmatpush1.msra.mxu0 0.0
        %6528 = vmatprep.subr.mxu0 0.0
        %6529 = vmatpush1.msra.mxu0 0.0
        %6530 = vmatprep.subr.mxu0 0.0
        %6531 = vmatpush1.msra.mxu0 0.0
        %6532 = vmatprep.subr.mxu0 0.0
        %6533 = vmatpush1.msra.mxu0 0.0
        %6534 = vmatprep.subr.mxu0 0.0
        %6535 = vmatpush1.msra.mxu0 0.0
        %6536 = vmatprep.subr.mxu0 0.0
        %6537 = vmatpush1.msra.mxu0 0.0
        %6538 = vmatprep.subr.mxu0 0.0
        %6539 = vmatpush1.msra.mxu0 0.0
        %6540 = vmatprep.subr.mxu0 0.0
        %6541 = vmatpush1.msra.mxu0 0.0
        %6542 = vmatprep.mubr.f32.mxu0 0.0
        %v6543 = vand.u32 %v6222, 4294901760
        %v6544 = vsub.f32 %v6222, %v6543
        %v6545 = vand.u32 %v6544, 4294901760
        %6546 = vmatmul.mubr.f32.gmra.mrb[0].mxu0 %v6545
        %v6547 = vpop.f32.mrb[0].mxu0
        %v6548 = vadd.f32 %v6471, %v6547
        %v6549 = vpop.f32.mrb[0].mxu0
        %6550 = vdwg.mxu0
        %6551 = vmatprep.subr.mxu0 0.0
        %v6552 = vand.u32 %v6210, 4294901760
        %v6553 = vsub.f32 %v6210, %v6552
        %v6554 = vand.u32 %v6553, 4294901760
        %6555 = vmatpush1.msra.mxu0 %v6554
        %6556 = vmatprep.subr.mxu0 0.0
        %v6557 = vand.u32 %v6211, 4294901760
        %v6558 = vsub.f32 %v6211, %v6557
        %v6559 = vand.u32 %v6558, 4294901760
        %6560 = vmatpush1.msra.mxu0 %v6559
        %6561 = vmatprep.subr.mxu0 0.0
        %v6562 = vand.u32 %v6212, 4294901760
        %v6563 = vsub.f32 %v6212, %v6562
        %v6564 = vand.u32 %v6563, 4294901760
        %6565 = vmatpush1.msra.mxu0 %v6564
        %6566 = vmatprep.subr.mxu0 0.0
        %v6567 = vand.u32 %v6213, 4294901760
        %v6568 = vsub.f32 %v6213, %v6567
        %v6569 = vand.u32 %v6568, 4294901760
        %6570 = vmatpush1.msra.mxu0 %v6569
        %6571 = vmatprep.subr.mxu0 0.0
        %6572 = vmatpush1.msra.mxu0 0.0
        %6573 = vmatprep.subr.mxu0 0.0
        %6574 = vmatpush1.msra.mxu0 0.0
        %6575 = vmatprep.subr.mxu0 0.0
        %6576 = vmatpush1.msra.mxu0 0.0
        %6577 = vmatprep.subr.mxu0 0.0
        %6578 = vmatpush1.msra.mxu0 0.0
        %6579 = vmatprep.subr.mxu0 0.0
        %6580 = vmatpush1.msra.mxu0 0.0
        %6581 = vmatprep.subr.mxu0 0.0
        %6582 = vmatpush1.msra.mxu0 0.0
        %6583 = vmatprep.subr.mxu0 0.0
        %6584 = vmatpush1.msra.mxu0 0.0
        %6585 = vmatprep.subr.mxu0 0.0
        %6586 = vmatpush1.msra.mxu0 0.0
        %6587 = vmatprep.subr.mxu0 0.0
        %6588 = vmatpush1.msra.mxu0 0.0
        %6589 = vmatprep.subr.mxu0 0.0
        %6590 = vmatpush1.msra.mxu0 0.0
        %6591 = vmatprep.subr.mxu0 0.0
        %6592 = vmatpush1.msra.mxu0 0.0
        %6593 = vmatprep.subr.mxu0 0.0
        %6594 = vmatpush1.msra.mxu0 0.0
        %6595 = vmatprep.subr.mxu0 0.0
        %6596 = vmatpush1.msra.mxu0 0.0
        %6597 = vmatprep.subr.mxu0 0.0
        %6598 = vmatpush1.msra.mxu0 0.0
        %6599 = vmatprep.subr.mxu0 0.0
        %6600 = vmatpush1.msra.mxu0 0.0
        %6601 = vmatprep.subr.mxu0 0.0
        %6602 = vmatpush1.msra.mxu0 0.0
        %6603 = vmatprep.subr.mxu0 0.0
        %6604 = vmatpush1.msra.mxu0 0.0
        %6605 = vmatprep.subr.mxu0 0.0
        %6606 = vmatpush1.msra.mxu0 0.0
        %6607 = vmatprep.subr.mxu0 0.0
        %6608 = vmatpush1.msra.mxu0 0.0
        %6609 = vmatprep.subr.mxu0 0.0
        %6610 = vmatpush1.msra.mxu0 0.0
        %6611 = vmatprep.subr.mxu0 0.0
        %6612 = vmatpush1.msra.mxu0 0.0
        %6613 = vmatprep.subr.mxu0 0.0
        %6614 = vmatpush1.msra.mxu0 0.0
        %6615 = vmatprep.subr.mxu0 0.0
        %6616 = vmatpush1.msra.mxu0 0.0
        %6617 = vmatprep.subr.mxu0 0.0
        %6618 = vmatpush1.msra.mxu0 0.0
        %6619 = vmatprep.subr.mxu0 0.0
        %6620 = vmatpush1.msra.mxu0 0.0
        %6621 = vmatprep.subr.mxu0 0.0
        %6622 = vmatpush1.msra.mxu0 0.0
        %6623 = vmatprep.subr.mxu0 0.0
        %6624 = vmatpush1.msra.mxu0 0.0
        %6625 = vmatprep.subr.mxu0 0.0
        %6626 = vmatpush1.msra.mxu0 0.0
        %6627 = vmatprep.mubr.f32.mxu0 0.0
        %v6628 = vand.u32 %v6222, 4294901760
        %6629 = vmatmul.mubr.f32.gmra.mrb[0].mxu0 %v6628
        %v6630 = vpop.f32.mrb[0].mxu0
        %v6631 = vadd.f32 %v6548, %v6630
        %v6632 = vpop.f32.mrb[0].mxu0
        %6633 = vdwg.mxu0
        %6634 = vmatprep.subr.mxu0 0.0
        %v6635 = vand.u32 %v6210, 4294901760
        %6636 = vmatpush1.msra.mxu0 %v6635
        %6637 = vmatprep.subr.mxu0 0.0
        %v6638 = vand.u32 %v6211, 4294901760
        %6639 = vmatpush1.msra.mxu0 %v6638
        %6640 = vmatprep.subr.mxu0 0.0
        %v6641 = vand.u32 %v6212, 4294901760
        %6642 = vmatpush1.msra.mxu0 %v6641
        %6643 = vmatprep.subr.mxu0 0.0
        %v6644 = vand.u32 %v6213, 4294901760
        %6645 = vmatpush1.msra.mxu0 %v6644
        %6646 = vmatprep.subr.mxu0 0.0
        %6647 = vmatpush1.msra.mxu0 0.0
        %6648 = vmatprep.subr.mxu0 0.0
        %6649 = vmatpush1.msra.mxu0 0.0
        %6650 = vmatprep.subr.mxu0 0.0
        %6651 = vmatpush1.msra.mxu0 0.0
        %6652 = vmatprep.subr.mxu0 0.0
        %6653 = vmatpush1.msra.mxu0 0.0
        %6654 = vmatprep.subr.mxu0 0.0
        %6655 = vmatpush1.msra.mxu0 0.0
        %6656 = vmatprep.subr.mxu0 0.0
        %6657 = vmatpush1.msra.mxu0 0.0
        %6658 = vmatprep.subr.mxu0 0.0
        %6659 = vmatpush1.msra.mxu0 0.0
        %6660 = vmatprep.subr.mxu0 0.0
        %6661 = vmatpush1.msra.mxu0 0.0
        %6662 = vmatprep.subr.mxu0 0.0
        %6663 = vmatpush1.msra.mxu0 0.0
        %6664 = vmatprep.subr.mxu0 0.0
        %6665 = vmatpush1.msra.mxu0 0.0
        %6666 = vmatprep.subr.mxu0 0.0
        %6667 = vmatpush1.msra.mxu0 0.0
        %6668 = vmatprep.subr.mxu0 0.0
        %6669 = vmatpush1.msra.mxu0 0.0
        %6670 = vmatprep.subr.mxu0 0.0
        %6671 = vmatpush1.msra.mxu0 0.0
        %6672 = vmatprep.subr.mxu0 0.0
        %6673 = vmatpush1.msra.mxu0 0.0
        %6674 = vmatprep.subr.mxu0 0.0
        %6675 = vmatpush1.msra.mxu0 0.0
        %6676 = vmatprep.subr.mxu0 0.0
        %6677 = vmatpush1.msra.mxu0 0.0
        %6678 = vmatprep.subr.mxu0 0.0
        %6679 = vmatpush1.msra.mxu0 0.0
        %6680 = vmatprep.subr.mxu0 0.0
        %6681 = vmatpush1.msra.mxu0 0.0
        %6682 = vmatprep.subr.mxu0 0.0
        %6683 = vmatpush1.msra.mxu0 0.0
        %6684 = vmatprep.subr.mxu0 0.0
        %6685 = vmatpush1.msra.mxu0 0.0
        %6686 = vmatprep.subr.mxu0 0.0
        %6687 = vmatpush1.msra.mxu0 0.0
        %6688 = vmatprep.subr.mxu0 0.0
        %6689 = vmatpush1.msra.mxu0 0.0
        %6690 = vmatprep.subr.mxu0 0.0
        %6691 = vmatpush1.msra.mxu0 0.0
        %6692 = vmatprep.subr.mxu0 0.0
        %6693 = vmatpush1.msra.mxu0 0.0
        %6694 = vmatprep.subr.mxu0 0.0
        %6695 = vmatpush1.msra.mxu0 0.0
        %6696 = vmatprep.subr.mxu0 0.0
        %6697 = vmatpush1.msra.mxu0 0.0
        %6698 = vmatprep.subr.mxu0 0.0
        %6699 = vmatpush1.msra.mxu0 0.0
        %6700 = vmatprep.subr.mxu0 0.0
        %6701 = vmatpush1.msra.mxu0 0.0
        %6702 = vmatprep.mubr.f32.mxu0 0.0
        %v6703 = vand.u32 %v6222, 4294901760
        %6704 = vmatmul.mubr.f32.gmra.mrb[0].mxu0 %v6703
        %v6705 = vpop.f32.mrb[0].mxu0
        %v6706 = vadd.f32 %v6631, %v6705
        %v6707 = vpop.f32.mrb[0].mxu0
        %6708 = vdwg.mxu0
        %v6709 = vmul.f32 %v6706, 0.5
        %v6710 = vmul.f32 %v6706, 0.044715
        %v6711 = vmul.f32 %v6710, %v6706
        %v6712 = vmul.f32 %v6711, %v6706
        %v6713 = vadd.f32 %v6706, %v6712
        %v6714 = vmul.f32 %v6713, 0.7978846
        %v6715 = vtanh.pop %v6714
        %v6716 = vadd.f32 %v6715, 1.0
        %v6717 = vmul.f32 %v6709, %v6716
        %v6718 = vld [vmem:[%s11] sm:$0xff]
        %v6719 = vld [vmem:[%s11 + $0x8] sm:$0xff]
        %v6720 = vld [vmem:[%s11 + $0x10] sm:$0xff]
        %v6721 = vld [vmem:[%s11 + $0x18] sm:$0xff]
        %v6722 = vld [vmem:[%s11 + $0x20] sm:$0xff]
        %v6723 = vld [vmem:[%s11 + $0x28] sm:$0xff]
        %v6724 = vld [vmem:[%s11 + $0x30] sm:$0xff]
        %v6725 = vld [vmem:[%s11 + $0x38] sm:$0xff]
        %v6726 = vld [vmem:[%s12] sm:$0x1]
        %v6728 = vlaneseq
        %v6729 = vshrl.u32 %v6728, 7
        %v6730 = vsub.s32 0, %v6729
        %v6731 = vrot.slane %v6726, %v6730
        %vm6733 = vcmask 523264
        %v6735 = vsel %vm6733, %v6717, 0
        %6737 = vmatprep.subr.mxu0 0.0
        %v6738 = vand.u32 %v6718, 4294901760
        %6739 = vmatpush1.msra.mxu0 %v6738
        %6740 = vmatprep.subr.mxu0 0.0
        %v6741 = vand.u32 %v6719, 4294901760
        %6742 = vmatpush1.msra.mxu0 %v6741
        %6743 = vmatprep.subr.mxu0 0.0
        %v6744 = vand.u32 %v6720, 4294901760
        %6745 = vmatpush1.msra.mxu0 %v6744
        %6746 = vmatprep.subr.mxu0 0.0
        %v6747 = vand.u32 %v6721, 4294901760
        %6748 = vmatpush1.msra.mxu0 %v6747
        %6749 = vmatprep.subr.mxu0 0.0
        %v6750 = vand.u32 %v6722, 4294901760
        %6751 = vmatpush1.msra.mxu0 %v6750
        %6752 = vmatprep.subr.mxu0 0.0
        %v6753 = vand.u32 %v6723, 4294901760
        %6754 = vmatpush1.msra.mxu0 %v6753
        %6755 = vmatprep.subr.mxu0 0.0
        %v6756 = vand.u32 %v6724, 4294901760
        %6757 = vmatpush1.msra.mxu0 %v6756
        %6758 = vmatprep.subr.mxu0 0.0
        %v6759 = vand.u32 %v6725, 4294901760
        %6760 = vmatpush1.msra.mxu0 %v6759
        %6761 = vmatprep.subr.mxu0 0.0
        %6762 = vmatpush1.msra.mxu0 0.0
        %6763 = vmatprep.subr.mxu0 0.0
        %6764 = vmatpush1.msra.mxu0 0.0
        %6765 = vmatprep.subr.mxu0 0.0
        %6766 = vmatpush1.msra.mxu0 0.0
        %6767 = vmatprep.subr.mxu0 0.0
        %6768 = vmatpush1.msra.mxu0 0.0
        %6769 = vmatprep.subr.mxu0 0.0
        %6770 = vmatpush1.msra.mxu0 0.0
        %6771 = vmatprep.subr.mxu0 0.0
        %6772 = vmatpush1.msra.mxu0 0.0
        %6773 = vmatprep.subr.mxu0 0.0
        %6774 = vmatpush1.msra.mxu0 0.0
        %6775 = vmatprep.subr.mxu0 0.0
        %6776 = vmatpush1.msra.mxu0 0.0
        %6777 = vmatprep.subr.mxu0 0.0
        %6778 = vmatpush1.msra.mxu0 0.0
        %6779 = vmatprep.subr.mxu0 0.0
        %6780 = vmatpush1.msra.mxu0 0.0
        %6781 = vmatprep.subr.mxu0 0.0
        %6782 = vmatpush1.msra.mxu0 0.0
        %6783 = vmatprep.subr.mxu0 0.0
        %6784 = vmatpush1.msra.mxu0 0.0
        %6785 = vmatprep.subr.mxu0 0.0
        %6786 = vmatpush1.msra.mxu0 0.0
        %6787 = vmatprep.subr.mxu0 0.0
        %6788 = vmatpush1.msra.mxu0 0.0
        %6789 = vmatprep.subr.mxu0 0.0
        %6790 = vmatpush1.msra.mxu0 0.0
        %6791 = vmatprep.subr.mxu0 0.0
        %6792 = vmatpush1.msra.mxu0 0.0
        %6793 = vmatprep.subr.mxu0 0.0
        %6794 = vmatpush1.msra.mxu0 0.0
        %6795 = vmatprep.subr.mxu0 0.0
        %6796 = vmatpush1.msra.mxu0 0.0
        %6797 = vmatprep.subr.mxu0 0.0
        %6798 = vmatpush1.msra.mxu0 0.0
        %6799 = vmatprep.subr.mxu0 0.0
        %6800 = vmatpush1.msra.mxu0 0.0
        %6801 = vmatprep.subr.mxu0 0.0
        %6802 = vmatpush1.msra.mxu0 0.0
        %6803 = vmatprep.subr.mxu0 0.0
        %6804 = vmatpush1.msra.mxu0 0.0
        %6805 = vmatprep.subr.mxu0 0.0
        %6806 = vmatpush1.msra.mxu0 0.0
        %6807 = vmatprep.subr.mxu0 0.0
        %6808 = vmatpush1.msra.mxu0 0.0
        %6809 = vmatprep.mubr.f32.mxu0 0.0
        %v6810 = vand.u32 %v6735, 4294901760
        %v6811 = vsub.f32 %v6735, %v6810
        %v6812 = vand.u32 %v6811, 4294901760
        %v6813 = vsub.f32 %v6811, %v6812
        %v6814 = vand.u32 %v6813, 4294901760
        %6815 = vmatmul.mubr.f32.gmra.mrb[0].mxu0 %v6814
        %v6816 = vpop.f32.mrb[0].mxu0
        %v6817 = vadd.f32 %v6731, %v6816
        %v6818 = vpop.f32.mrb[0].mxu0
        %6819 = vdwg.mxu0
        %6820 = vmatprep.subr.mxu0 0.0
        %v6821 = vand.u32 %v6718, 4294901760
        %v6822 = vsub.f32 %v6718, %v6821
        %v6823 = vand.u32 %v6822, 4294901760
        %v6824 = vsub.f32 %v6822, %v6823
        %v6825 = vand.u32 %v6824, 4294901760
        %6826 = vmatpush1.msra.mxu0 %v6825
        %6827 = vmatprep.subr.mxu0 0.0
        %v6828 = vand.u32 %v6719, 4294901760
        %v6829 = vsub.f32 %v6719, %v6828
        %v6830 = vand.u32 %v6829, 4294901760
        %v6831 = vsub.f32 %v6829, %v6830
        %v6832 = vand.u32 %v6831, 4294901760
        %6833 = vmatpush1.msra.mxu0 %v6832
        %6834 = vmatprep.subr.mxu0 0.0
        %v6835 = vand.u32 %v6720, 4294901760
        %v6836 = vsub.f32 %v6720, %v6835
        %v6837 = vand.u32 %v6836, 4294901760
        %v6838 = vsub.f32 %v6836, %v6837
        %v6839 = vand.u32 %v6838, 4294901760
        %6840 = vmatpush1.msra.mxu0 %v6839
        %6841 = vmatprep.subr.mxu0 0.0
        %v6842 = vand.u32 %v6721, 4294901760
        %v6843 = vsub.f32 %v6721, %v6842
        %v6844 = vand.u32 %v6843, 4294901760
        %v6845 = vsub.f32 %v6843, %v6844
        %v6846 = vand.u32 %v6845, 4294901760
        %6847 = vmatpush1.msra.mxu0 %v6846
        %6848 = vmatprep.subr.mxu0 0.0
        %v6849 = vand.u32 %v6722, 4294901760
        %v6850 = vsub.f32 %v6722, %v6849
        %v6851 = vand.u32 %v6850, 4294901760
        %v6852 = vsub.f32 %v6850, %v6851
        %v6853 = vand.u32 %v6852, 4294901760
        %6854 = vmatpush1.msra.mxu0 %v6853
        %6855 = vmatprep.subr.mxu0 0.0
        %v6856 = vand.u32 %v6723, 4294901760
        %v6857 = vsub.f32 %v6723, %v6856
        %v6858 = vand.u32 %v6857, 4294901760
        %v6859 = vsub.f32 %v6857, %v6858
        %v6860 = vand.u32 %v6859, 4294901760
        %6861 = vmatpush1.msra.mxu0 %v6860
        %6862 = vmatprep.subr.mxu0 0.0
        %v6863 = vand.u32 %v6724, 4294901760
        %v6864 = vsub.f32 %v6724, %v6863
        %v6865 = vand.u32 %v6864, 4294901760
        %v6866 = vsub.f32 %v6864, %v6865
        %v6867 = vand.u32 %v6866, 4294901760
        %6868 = vmatpush1.msra.mxu0 %v6867
        %6869 = vmatprep.subr.mxu0 0.0
        %v6870 = vand.u32 %v6725, 4294901760
        %v6871 = vsub.f32 %v6725, %v6870
        %v6872 = vand.u32 %v6871, 4294901760
        %v6873 = vsub.f32 %v6871, %v6872
        %v6874 = vand.u32 %v6873, 4294901760
        %6875 = vmatpush1.msra.mxu0 %v6874
        %6876 = vmatprep.subr.mxu0 0.0
        %6877 = vmatpush1.msra.mxu0 0.0
        %6878 = vmatprep.subr.mxu0 0.0
        %6879 = vmatpush1.msra.mxu0 0.0
        %6880 = vmatprep.subr.mxu0 0.0
        %6881 = vmatpush1.msra.mxu0 0.0
        %6882 = vmatprep.subr.mxu0 0.0
        %6883 = vmatpush1.msra.mxu0 0.0
        %6884 = vmatprep.subr.mxu0 0.0
        %6885 = vmatpush1.msra.mxu0 0.0
        %6886 = vmatprep.subr.mxu0 0.0
        %6887 = vmatpush1.msra.mxu0 0.0
        %6888 = vmatprep.subr.mxu0 0.0
        %6889 = vmatpush1.msra.mxu0 0.0
        %6890 = vmatprep.subr.mxu0 0.0
        %6891 = vmatpush1.msra.mxu0 0.0
        %6892 = vmatprep.subr.mxu0 0.0
        %6893 = vmatpush1.msra.mxu0 0.0
        %6894 = vmatprep.subr.mxu0 0.0
        %6895 = vmatpush1.msra.mxu0 0.0
        %6896 = vmatprep.subr.mxu0 0.0
        %6897 = vmatpush1.msra.mxu0 0.0
        %6898 = vmatprep.subr.mxu0 0.0
        %6899 = vmatpush1.msra.mxu0 0.0
        %6900 = vmatprep.subr.mxu0 0.0
        %6901 = vmatpush1.msra.mxu0 0.0
        %6902 = vmatprep.subr.mxu0 0.0
        %6903 = vmatpush1.msra.mxu0 0.0
        %6904 = vmatprep.subr.mxu0 0.0
        %6905 = vmatpush1.msra.mxu0 0.0
        %6906 = vmatprep.subr.mxu0 0.0
        %6907 = vmatpush1.msra.mxu0 0.0
        %6908 = vmatprep.subr.mxu0 0.0
        %6909 = vmatpush1.msra.mxu0 0.0
        %6910 = vmatprep.subr.mxu0 0.0
        %6911 = vmatpush1.msra.mxu0 0.0
        %6912 = vmatprep.subr.mxu0 0.0
        %6913 = vmatpush1.msra.mxu0 0.0
        %6914 = vmatprep.subr.mxu0 0.0
        %6915 = vmatpush1.msra.mxu0 0.0
        %6916 = vmatprep.subr.mxu0 0.0
        %6917 = vmatpush1.msra.mxu0 0.0
        %6918 = vmatprep.subr.mxu0 0.0
        %6919 = vmatpush1.msra.mxu0 0.0
        %6920 = vmatprep.subr.mxu0 0.0
        %6921 = vmatpush1.msra.mxu0 0.0
        %6922 = vmatprep.subr.mxu0 0.0
        %6923 = vmatpush1.msra.mxu0 0.0
        %6924 = vmatprep.mubr.f32.mxu0 0.0
        %v6925 = vand.u32 %v6735, 4294901760
        %6926 = vmatmul.mubr.f32.gmra.mrb[0].mxu0 %v6925
        %v6927 = vpop.f32.mrb[0].mxu0
        %v6928 = vadd.f32 %v6817, %v6927
        %v6929 = vpop.f32.mrb[0].mxu0
        %6930 = vdwg.mxu0
        %6931 = vmatprep.subr.mxu0 0.0
        %v6932 = vand.u32 %v6718, 4294901760
        %v6933 = vsub.f32 %v6718, %v6932
        %6934 = vmatpush1.msra.mxu0 %v6933
        %6935 = vmatprep.subr.mxu0 0.0
        %v6936 = vand.u32 %v6719, 4294901760
        %v6937 = vsub.f32 %v6719, %v6936
        %6938 = vmatpush1.msra.mxu0 %v6937
        %6939 = vmatprep.subr.mxu0 0.0
        %v6940 = vand.u32 %v6720, 4294901760
        %v6941 = vsub.f32 %v6720, %v6940
        %6942 = vmatpush1.msra.mxu0 %v6941
        %6943 = vmatprep.subr.mxu0 0.0
        %v6944 = vand.u32 %v6721, 4294901760
        %v6945 = vsub.f32 %v6721, %v6944
        %6946 = vmatpush1.msra.mxu0 %v6945
        %6947 = vmatprep.subr.mxu0 0.0
        %v6948 = vand.u32 %v6722, 4294901760
        %v6949 = vsub.f32 %v6722, %v6948
        %6950 = vmatpush1.msra.mxu0 %v6949
        %6951 = vmatprep.subr.mxu0 0.0
        %v6952 = vand.u32 %v6723, 4294901760
        %v6953 = vsub.f32 %v6723, %v6952
        %6954 = vmatpush1.msra.mxu0 %v6953
        %6955 = vmatprep.subr.mxu0 0.0
        %v6956 = vand.u32 %v6724, 4294901760
        %v6957 = vsub.f32 %v6724, %v6956
        %6958 = vmatpush1.msra.mxu0 %v6957
        %6959 = vmatprep.subr.mxu0 0.0
        %v6960 = vand.u32 %v6725, 4294901760
        %v6961 = vsub.f32 %v6725, %v6960
        %6962 = vmatpush1.msra.mxu0 %v6961
        %6963 = vmatprep.subr.mxu0 0.0
        %6964 = vmatpush1.msra.mxu0 0.0
        %6965 = vmatprep.subr.mxu0 0.0
        %6966 = vmatpush1.msra.mxu0 0.0
        %6967 = vmatprep.subr.mxu0 0.0
        %6968 = vmatpush1.msra.mxu0 0.0
        %6969 = vmatprep.subr.mxu0 0.0
        %6970 = vmatpush1.msra.mxu0 0.0
        %6971 = vmatprep.subr.mxu0 0.0
        %6972 = vmatpush1.msra.mxu0 0.0
        %6973 = vmatprep.subr.mxu0 0.0
        %6974 = vmatpush1.msra.mxu0 0.0
        %6975 = vmatprep.subr.mxu0 0.0
        %6976 = vmatpush1.msra.mxu0 0.0
        %6977 = vmatprep.subr.mxu0 0.0
        %6978 = vmatpush1.msra.mxu0 0.0
        %6979 = vmatprep.subr.mxu0 0.0
        %6980 = vmatpush1.msra.mxu0 0.0
        %6981 = vmatprep.subr.mxu0 0.0
        %6982 = vmatpush1.msra.mxu0 0.0
        %6983 = vmatprep.subr.mxu0 0.0
        %6984 = vmatpush1.msra.mxu0 0.0
        %6985 = vmatprep.subr.mxu0 0.0
        %6986 = vmatpush1.msra.mxu0 0.0
        %6987 = vmatprep.subr.mxu0 0.0
        %6988 = vmatpush1.msra.mxu0 0.0
        %6989 = vmatprep.subr.mxu0 0.0
        %6990 = vmatpush1.msra.mxu0 0.0
        %6991 = vmatprep.subr.mxu0 0.0
        %6992 = vmatpush1.msra.mxu0 0.0
        %6993 = vmatprep.subr.mxu0 0.0
        %6994 = vmatpush1.msra.mxu0 0.0
        %6995 = vmatprep.subr.mxu0 0.0
        %6996 = vmatpush1.msra.mxu0 0.0
        %6997 = vmatprep.subr.mxu0 0.0
        %6998 = vmatpush1.msra.mxu0 0.0
        %6999 = vmatprep.subr.mxu0 0.0
        %7000 = vmatpush1.msra.mxu0 0.0
        %7001 = vmatprep.subr.mxu0 0.0
        %7002 = vmatpush1.msra.mxu0 0.0
        %7003 = vmatprep.subr.mxu0 0.0
        %7004 = vmatpush1.msra.mxu0 0.0
        %7005 = vmatprep.subr.mxu0 0.0
        %7006 = vmatpush1.msra.mxu0 0.0
        %7007 = vmatprep.subr.mxu0 0.0
        %7008 = vmatpush1.msra.mxu0 0.0
        %7009 = vmatprep.subr.mxu0 0.0
        %7010 = vmatpush1.msra.mxu0 0.0
        %7011 = vmatprep.mubr.f32.mxu0 0.0
        %v7012 = vand.u32 %v6735, 4294901760
        %v7013 = vsub.f32 %v6735, %v7012
        %7014 = vmatmul.mubr.f32.gmra.mrb[0].mxu0 %v7013
        %v7015 = vpop.f32.mrb[0].mxu0
        %v7016 = vadd.f32 %v6928, %v7015
        %v7017 = vpop.f32.mrb[0].mxu0
        %7018 = vdwg.mxu0
        %7019 = vmatprep.subr.mxu0 0.0
        %v7020 = vand.u32 %v6718, 4294901760
        %7021 = vmatpush1.msra.mxu0 %v7020
        %7022 = vmatprep.subr.mxu0 0.0
        %v7023 = vand.u32 %v6719, 4294901760
        %7024 = vmatpush1.msra.mxu0 %v7023
        %7025 = vmatprep.subr.mxu0 0.0
        %v7026 = vand.u32 %v6720, 4294901760
        %7027 = vmatpush1.msra.mxu0 %v7026
        %7028 = vmatprep.subr.mxu0 0.0
        %v7029 = vand.u32 %v6721, 4294901760
        %7030 = vmatpush1.msra.mxu0 %v7029
        %7031 = vmatprep.subr.mxu0 0.0
        %v7032 = vand.u32 %v6722, 4294901760
        %7033 = vmatpush1.msra.mxu0 %v7032
        %7034 = vmatprep.subr.mxu0 0.0
        %v7035 = vand.u32 %v6723, 4294901760
        %7036 = vmatpush1.msra.mxu0 %v7035
        %7037 = vmatprep.subr.mxu0 0.0
        %v7038 = vand.u32 %v6724, 4294901760
        %7039 = vmatpush1.msra.mxu0 %v7038
        %7040 = vmatprep.subr.mxu0 0.0
        %v7041 = vand.u32 %v6725, 4294901760
        %7042 = vmatpush1.msra.mxu0 %v7041
        %7043 = vmatprep.subr.mxu0 0.0
        %7044 = vmatpush1.msra.mxu0 0.0
        %7045 = vmatprep.subr.mxu0 0.0
        %7046 = vmatpush1.msra.mxu0 0.0
        %7047 = vmatprep.subr.mxu0 0.0
        %7048 = vmatpush1.msra.mxu0 0.0
        %7049 = vmatprep.subr.mxu0 0.0
        %7050 = vmatpush1.msra.mxu0 0.0
        %7051 = vmatprep.subr.mxu0 0.0
        %7052 = vmatpush1.msra.mxu0 0.0
        %7053 = vmatprep.subr.mxu0 0.0
        %7054 = vmatpush1.msra.mxu0 0.0
        %7055 = vmatprep.subr.mxu0 0.0
        %7056 = vmatpush1.msra.mxu0 0.0
        %7057 = vmatprep.subr.mxu0 0.0
        %7058 = vmatpush1.msra.mxu0 0.0
        %7059 = vmatprep.subr.mxu0 0.0
        %7060 = vmatpush1.msra.mxu0 0.0
        %7061 = vmatprep.subr.mxu0 0.0
        %7062 = vmatpush1.msra.mxu0 0.0
        %7063 = vmatprep.subr.mxu0 0.0
        %7064 = vmatpush1.msra.mxu0 0.0
        %7065 = vmatprep.subr.mxu0 0.0
        %7066 = vmatpush1.msra.mxu0 0.0
        %7067 = vmatprep.subr.mxu0 0.0
        %7068 = vmatpush1.msra.mxu0 0.0
        %7069 = vmatprep.subr.mxu0 0.0
        %7070 = vmatpush1.msra.mxu0 0.0
        %7071 = vmatprep.subr.mxu0 0.0
        %7072 = vmatpush1.msra.mxu0 0.0
        %7073 = vmatprep.subr.mxu0 0.0
        %7074 = vmatpush1.msra.mxu0 0.0
        %7075 = vmatprep.subr.mxu0 0.0
        %7076 = vmatpush1.msra.mxu0 0.0
        %7077 = vmatprep.subr.mxu0 0.0
        %7078 = vmatpush1.msra.mxu0 0.0
        %7079 = vmatprep.subr.mxu0 0.0
        %7080 = vmatpush1.msra.mxu0 0.0
        %7081 = vmatprep.subr.mxu0 0.0
        %7082 = vmatpush1.msra.mxu0 0.0
        %7083 = vmatprep.subr.mxu0 0.0
        %7084 = vmatpush1.msra.mxu0 0.0
        %7085 = vmatprep.subr.mxu0 0.0
        %7086 = vmatpush1.msra.mxu0 0.0
        %7087 = vmatprep.subr.mxu0 0.0
        %7088 = vmatpush1.msra.mxu0 0.0
        %7089 = vmatprep.subr.mxu0 0.0
        %7090 = vmatpush1.msra.mxu0 0.0
        %7091 = vmatprep.mubr.f32.mxu0 0.0
        %v7092 = vand.u32 %v6735, 4294901760
        %v7093 = vsub.f32 %v6735, %v7092
        %v7094 = vand.u32 %v7093, 4294901760
        %7095 = vmatmul.mubr.f32.gmra.mrb[0].mxu0 %v7094
        %v7096 = vpop.f32.mrb[0].mxu0
        %v7097 = vadd.f32 %v7016, %v7096
        %v7098 = vpop.f32.mrb[0].mxu0
        %7099 = vdwg.mxu0
        %7100 = vmatprep.subr.mxu0 0.0
        %v7101 = vand.u32 %v6718, 4294901760
        %v7102 = vsub.f32 %v6718, %v7101
        %v7103 = vand.u32 %v7102, 4294901760
        %7104 = vmatpush1.msra.mxu0 %v7103
        %7105 = vmatprep.subr.mxu0 0.0
        %v7106 = vand.u32 %v6719, 4294901760
        %v7107 = vsub.f32 %v6719, %v7106
        %v7108 = vand.u32 %v7107, 4294901760
        %7109 = vmatpush1.msra.mxu0 %v7108
        %7110 = vmatprep.subr.mxu0 0.0
        %v7111 = vand.u32 %v6720, 4294901760
        %v7112 = vsub.f32 %v6720, %v7111
        %v7113 = vand.u32 %v7112, 4294901760
        %7114 = vmatpush1.msra.mxu0 %v7113
        %7115 = vmatprep.subr.mxu0 0.0
        %v7116 = vand.u32 %v6721, 4294901760
        %v7117 = vsub.f32 %v6721, %v7116
        %v7118 = vand.u32 %v7117, 4294901760
        %7119 = vmatpush1.msra.mxu0 %v7118
        %7120 = vmatprep.subr.mxu0 0.0
        %v7121 = vand.u32 %v6722, 4294901760
        %v7122 = vsub.f32 %v6722, %v7121
        %v7123 = vand.u32 %v7122, 4294901760
        %7124 = vmatpush1.msra.mxu0 %v7123
        %7125 = vmatprep.subr.mxu0 0.0
        %v7126 = vand.u32 %v6723, 4294901760
        %v7127 = vsub.f32 %v6723, %v7126
        %v7128 = vand.u32 %v7127, 4294901760
        %7129 = vmatpush1.msra.mxu0 %v7128
        %7130 = vmatprep.subr.mxu0 0.0
        %v7131 = vand.u32 %v6724, 4294901760
        %v7132 = vsub.f32 %v6724, %v7131
        %v7133 = vand.u32 %v7132, 4294901760
        %7134 = vmatpush1.msra.mxu0 %v7133
        %7135 = vmatprep.subr.mxu0 0.0
        %v7136 = vand.u32 %v6725, 4294901760
        %v7137 = vsub.f32 %v6725, %v7136
        %v7138 = vand.u32 %v7137, 4294901760
        %7139 = vmatpush1.msra.mxu0 %v7138
        %7140 = vmatprep.subr.mxu0 0.0
        %7141 = vmatpush1.msra.mxu0 0.0
        %7142 = vmatprep.subr.mxu0 0.0
        %7143 = vmatpush1.msra.mxu0 0.0
        %7144 = vmatprep.subr.mxu0 0.0
        %7145 = vmatpush1.msra.mxu0 0.0
        %7146 = vmatprep.subr.mxu0 0.0
        %7147 = vmatpush1.msra.mxu0 0.0
        %7148 = vmatprep.subr.mxu0 0.0
        %7149 = vmatpush1.msra.mxu0 0.0
        %7150 = vmatprep.subr.mxu0 0.0
        %7151 = vmatpush1.msra.mxu0 0.0
        %7152 = vmatprep.subr.mxu0 0.0
        %7153 = vmatpush1.msra.mxu0 0.0
        %7154 = vmatprep.subr.mxu0 0.0
        %7155 = vmatpush1.msra.mxu0 0.0
        %7156 = vmatprep.subr.mxu0 0.0
        %7157 = vmatpush1.msra.mxu0 0.0
        %7158 = vmatprep.subr.mxu0 0.0
        %7159 = vmatpush1.msra.mxu0 0.0
        %7160 = vmatprep.subr.mxu0 0.0
        %7161 = vmatpush1.msra.mxu0 0.0
        %7162 = vmatprep.subr.mxu0 0.0
        %7163 = vmatpush1.msra.mxu0 0.0
        %7164 = vmatprep.subr.mxu0 0.0
        %7165 = vmatpush1.msra.mxu0 0.0
        %7166 = vmatprep.subr.mxu0 0.0
        %7167 = vmatpush1.msra.mxu0 0.0
        %7168 = vmatprep.subr.mxu0 0.0
        %7169 = vmatpush1.msra.mxu0 0.0
        %7170 = vmatprep.subr.mxu0 0.0
        %7171 = vmatpush1.msra.mxu0 0.0
        %7172 = vmatprep.subr.mxu0 0.0
        %7173 = vmatpush1.msra.mxu0 0.0
        %7174 = vmatprep.subr.mxu0 0.0
        %7175 = vmatpush1.msra.mxu0 0.0
        %7176 = vmatprep.subr.mxu0 0.0
        %7177 = vmatpush1.msra.mxu0 0.0
        %7178 = vmatprep.subr.mxu0 0.0
        %7179 = vmatpush1.msra.mxu0 0.0
        %7180 = vmatprep.subr.mxu0 0.0
        %7181 = vmatpush1.msra.mxu0 0.0
        %7182 = vmatprep.subr.mxu0 0.0
        %7183 = vmatpush1.msra.mxu0 0.0
        %7184 = vmatprep.subr.mxu0 0.0
        %7185 = vmatpush1.msra.mxu0 0.0
        %7186 = vmatprep.subr.mxu0 0.0
        %7187 = vmatpush1.msra.mxu0 0.0
        %7188 = vmatprep.mubr.f32.mxu0 0.0
        %v7189 = vand.u32 %v6735, 4294901760
        %7190 = vmatmul.mubr.f32.gmra.mrb[0].mxu0 %v7189
        %v7191 = vpop.f32.mrb[0].mxu0
        %v7192 = vadd.f32 %v7097, %v7191
        %v7193 = vpop.f32.mrb[0].mxu0
        %7194 = vdwg.mxu0
        %7195 = vmatprep.subr.mxu0 0.0
        %v7196 = vand.u32 %v6718, 4294901760
        %7197 = vmatpush1.msra.mxu0 %v7196
        %7198 = vmatprep.subr.mxu0 0.0
        %v7199 = vand.u32 %v6719, 4294901760
        %7200 = vmatpush1.msra.mxu0 %v7199
        %7201 = vmatprep.subr.mxu0 0.0
        %v7202 = vand.u32 %v6720, 4294901760
        %7203 = vmatpush1.msra.mxu0 %v7202
        %7204 = vmatprep.subr.mxu0 0.0
        %v7205 = vand.u32 %v6721, 4294901760
        %7206 = vmatpush1.msra.mxu0 %v7205
        %7207 = vmatprep.subr.mxu0 0.0
        %v7208 = vand.u32 %v6722, 4294901760
        %7209 = vmatpush1.msra.mxu0 %v7208
        %7210 = vmatprep.subr.mxu0 0.0
        %v7211 = vand.u32 %v6723, 4294901760
        %7212 = vmatpush1.msra.mxu0 %v7211
        %7213 = vmatprep.subr.mxu0 0.0
        %v7214 = vand.u32 %v6724, 4294901760
        %7215 = vmatpush1.msra.mxu0 %v7214
        %7216 = vmatprep.subr.mxu0 0.0
        %v7217 = vand.u32 %v6725, 4294901760
        %7218 = vmatpush1.msra.mxu0 %v7217
        %7219 = vmatprep.subr.mxu0 0.0
        %7220 = vmatpush1.msra.mxu0 0.0
        %7221 = vmatprep.subr.mxu0 0.0
        %7222 = vmatpush1.msra.mxu0 0.0
        %7223 = vmatprep.subr.mxu0 0.0
        %7224 = vmatpush1.msra.mxu0 0.0
        %7225 = vmatprep.subr.mxu0 0.0
        %7226 = vmatpush1.msra.mxu0 0.0
        %7227 = vmatprep.subr.mxu0 0.0
        %7228 = vmatpush1.msra.mxu0 0.0
        %7229 = vmatprep.subr.mxu0 0.0
        %7230 = vmatpush1.msra.mxu0 0.0
        %7231 = vmatprep.subr.mxu0 0.0
        %7232 = vmatpush1.msra.mxu0 0.0
        %7233 = vmatprep.subr.mxu0 0.0
        %7234 = vmatpush1.msra.mxu0 0.0
        %7235 = vmatprep.subr.mxu0 0.0
        %7236 = vmatpush1.msra.mxu0 0.0
        %7237 = vmatprep.subr.mxu0 0.0
        %7238 = vmatpush1.msra.mxu0 0.0
        %7239 = vmatprep.subr.mxu0 0.0
        %7240 = vmatpush1.msra.mxu0 0.0
        %7241 = vmatprep.subr.mxu0 0.0
        %7242 = vmatpush1.msra.mxu0 0.0
        %7243 = vmatprep.subr.mxu0 0.0
        %7244 = vmatpush1.msra.mxu0 0.0
        %7245 = vmatprep.subr.mxu0 0.0
        %7246 = vmatpush1.msra.mxu0 0.0
        %7247 = vmatprep.subr.mxu0 0.0
        %7248 = vmatpush1.msra.mxu0 0.0
        %7249 = vmatprep.subr.mxu0 0.0
        %7250 = vmatpush1.msra.mxu0 0.0
        %7251 = vmatprep.subr.mxu0 0.0
        %7252 = vmatpush1.msra.mxu0 0.0
        %7253 = vmatprep.subr.mxu0 0.0
        %7254 = vmatpush1.msra.mxu0 0.0
        %7255 = vmatprep.subr.mxu0 0.0
        %7256 = vmatpush1.msra.mxu0 0.0
        %7257 = vmatprep.subr.mxu0 0.0
        %7258 = vmatpush1.msra.mxu0 0.0
        %7259 = vmatprep.subr.mxu0 0.0
        %7260 = vmatpush1.msra.mxu0 0.0
        %7261 = vmatprep.subr.mxu0 0.0
        %7262 = vmatpush1.msra.mxu0 0.0
        %7263 = vmatprep.subr.mxu0 0.0
        %7264 = vmatpush1.msra.mxu0 0.0
        %7265 = vmatprep.subr.mxu0 0.0
        %7266 = vmatpush1.msra.mxu0 0.0
        %7267 = vmatprep.mubr.f32.mxu0 0.0
        %v7268 = vand.u32 %v6735, 4294901760
        %7269 = vmatmul.mubr.f32.gmra.mrb[0].mxu0 %v7268
        %v7270 = vpop.f32.mrb[0].mxu0
        %v7271 = vadd.f32 %v7192, %v7270
        %v7272 = vpop.f32.mrb[0].mxu0
        %7273 = vdwg.mxu0
        %v7274 = vadd.f32 %v6173, %v7271
        %7275 = vst.msk [vmem:[%s484] sm:$0xff] %vm488, %v7274
        %s7276 = sand.u32 %s317, 1
        %s7277 = scalar_lea.sflag [#allocation4], %s7276
        %s7278 = sand.u32 %s317, 1
        %s7279 = smul.addr %s7278, 8
        %s7280 = scalar_lea.vmem [#allocation8], %s7279
        // Predicated region
        $region85: #{tpu_custom_call.1} parent=71 // pred_check
          %p7281 = pneg %p327
        $region86: #{tpu_custom_call.1} parent=71 // pred_check_branch
          %7283 = sbr.rel (%p7281) target = $region88
        $region87: #{tpu_custom_call.1} parent=71 // pred_region
          %s7285 = ssub.s32 128, 128
          %7286 = vsyncadd %s7277, %s7285
          %s7287 = smul.addr %s31, 128
          %s7288 = scalar_lea.hbm %s13, %s7287
          %s7290 = sshll.u32 %s7280, 4
          %s7291 = int_to_ptr.vmem [resolvable:$true] %s7290
          %7293 = dma.vmem_to_hbm [thread:$0]  %s7291, 128, %s7288, %s7277
        $region88: #{tpu_custom_call.1} parent=71 // pred_fallthru
          _
      $region72: #{tpu_custom_call.1} parent=5 // pred_fallthru
        _
      %p7294 = scmp.le.s32.totalorder 2, %s26
      // Predicated region
      $region89: #{tpu_custom_call.1} parent=5 // pred_check
        %p7295 = pneg %p7294
      $region90: #{tpu_custom_call.1} parent=5 // pred_check_branch
        %7297 = sbr.rel (%p7295) target = $region92
      $region91: #{tpu_custom_call.1} parent=5 // pred_region
        %s7298 = ssub.s32 %s26, 2
        // Predicated region
        $region93: #{tpu_custom_call.1} parent=91 // pred_check
          %p7299 = pneg %p333
        $region94: #{tpu_custom_call.1} parent=91 // pred_check_branch
          %7301 = sbr.rel (%p7299) target = $region96
        $region95: #{tpu_custom_call.1} parent=91 // pred_region
          %s7302 = sand.u32 %s318, 1
          %s7303 = scalar_lea.sflag [#allocation4], %s7302
          %s7304 = sand.u32 %s318, 1
          %s7305 = smul.addr %s7304, 8
          %s7306 = scalar_lea.vmem [#allocation8], %s7305
          %7307 = dma.done %s7303, 128
        $region96: #{tpu_custom_call.1} parent=91 // pred_fallthru
          _
      $region92: #{tpu_custom_call.1} parent=5 // pred_fallthru
        _
    $region6: #{tpu_custom_call.1} parent=1 // loop_footer
      %s30 = sadd.s32 1, %s26
    $region7: #{tpu_custom_call.1} parent=1 // loop_footer_branch
      %25 = sbr.rel target = $region3
    $region8: #{tpu_custom_call.1} parent=1 // loop_exit
      _
    %7308 = vsyncpa [#allocation3], 1
    %s7309 = scalar_lea.sflag [#allocation3], 1
    %7310 = vsyncpa %s7309, 1
    %7311 = vsyncpa [#allocation6], 1
    %7312 = vsyncpa [#allocation4], 1
    %s7313 = scalar_lea.sflag [#allocation4], 1
    %7314 = vsyncpa %s7313, 1

</llo_original>
